<compile_context>
chip_gen: v7x
topology: tpu7x:2x2x1
jax: 0.10.0
libtpu: 0.0.40
codegen_flags: <defaults>
</compile_context>

<pallas_src>
import math
from functools import partial

import jax
import jax.numpy as jnp
from jax.experimental import pallas as pl
from jax.experimental.pallas import tpu as pltpu

NEG_SLOPE = 0.2   # LeakyReLU negative slope of the VN activation (backbone_args default)
EPS = 1e-12       # matches torch.nn.functional.normalize default eps


# ---------------------------------------------------------------------------
# In-kernel helpers
# ---------------------------------------------------------------------------
def _pool_mats(n, tb):
    """Constant per-cloud mean-pool (TB*N, TB) and broadcast-back (TB, TB*N) matrices.

    Lane l = t*n + i belongs to cloud t of the block; built with iota/compare only (no int div).
    """
    tbn = tb * n
    lane = jax.lax.broadcasted_iota(jnp.int32, (tbn, tb), 0)
    col = jax.lax.broadcasted_iota(jnp.int32, (tbn, tb), 1)
    in_cloud = (lane >= col * n) & (lane < col * n + n)
    pool = jnp.where(in_cloud, 1.0 / n, 0.0).astype(jnp.float32)       # (TBN, TB): mean over points
    row = jax.lax.broadcasted_iota(jnp.int32, (tb, tbn), 0)
    lane2 = jax.lax.broadcasted_iota(jnp.int32, (tb, tbn), 1)
    in_cloud2 = (lane2 >= row * n) & (lane2 < row * n + n)
    scat = jnp.where(in_cloud2, 1.0, 0.0).astype(jnp.float32)          # (TB, TBN): broadcast back
    return pool, scat


def _vn_linear(v, w):
    # VecLinear: out[o] = sum_c w[o, c] * in[c], applied independently to x/y/z slabs.
    return [jnp.dot(w, vd, preferred_element_type=jnp.float32) for vd in v]


def _vn_act(v, w_dir):
    # VN-LeakyReLU: learn a direction k per channel, apply LeakyReLU to <v, k_hat>.
    k = _vn_linear(v, w_dir)
    ksq = k[0] * k[0] + k[1] * k[1] + k[2] * k[2]
    inv_norm = jax.lax.rsqrt(jnp.maximum(ksq, EPS * EPS))              # EUP rsqrt (== 1/max(|k|,EPS))
    kd = [ki * inv_norm for ki in k]
    dot = v[0] * kd[0] + v[1] * kd[1] + v[2] * kd[2]
    acted = jnp.where(dot >= 0.0, dot, NEG_SLOPE * dot)
    delta = acted - dot
    return [vd + delta * kdi for vd, kdi in zip(v, kd)]


# ---------------------------------------------------------------------------
# Kernel 1: centroid + SIM(3) scale normalization (TB clouds per grid step, lane-dense)
# ---------------------------------------------------------------------------
def _center_scale_kernel(n, tb, target_norm, p_ref, np_ref, c_ref, s_ref):
    pool, scat = _pool_mats(n, tb)
    p = p_ref[0]                                                        # (3, TB*N)
    c = jnp.dot(p, pool, preferred_element_type=jnp.float32)            # (3, TB) centroid per cloud
    q = p - jnp.dot(c, scat, preferred_element_type=jnp.float32)        # centered points
    nrm = jnp.sqrt(jnp.sum(q * q, axis=0, keepdims=True))               # (1, TB*N) per-point norm
    s = jnp.dot(nrm, pool, preferred_element_type=jnp.float32) * (1.0 / target_norm)  # (1, TB)
    s_b = jnp.dot(s, scat, preferred_element_type=jnp.float32)          # (1, TB*N)
    np_ref[0] = q / s_b
    c_ref[0] = c
    s_ref[0] = s


def center_scale(p_blk, n, tb, target_norm=1.0):
    nb, _, tbn = p_blk.shape
    return pl.pallas_call(
        partial(_center_scale_kernel, n, tb, target_norm),
        grid=(nb,),
        in_specs=[pl.BlockSpec((1, 3, tbn), lambda b: (b, 0, 0))],
        out_specs=[
            pl.BlockSpec((1, 3, tbn), lambda b: (b, 0, 0)),
            pl.BlockSpec((1, 3, tb), lambda b: (b, 0, 0)),
            pl.BlockSpec((1, 1, tb), lambda b: (b, 0, 0)),
        ],
        out_shape=[
            jax.ShapeDtypeStruct((nb, 3, tbn), jnp.float32),
            jax.ShapeDtypeStruct((nb, 3, tb), jnp.float32),
            jax.ShapeDtypeStruct((nb, 1, tb), jnp.float32),
        ],
        compiler_params=pltpu.CompilerParams(dimension_semantics=("parallel",)),
    )(p_blk)


# ---------------------------------------------------------------------------
# Kernel 2: graph feature + VN-PointNet backbone + fc_inv head
# ---------------------------------------------------------------------------
def _backbone_kernel(cfg, with_pp, pts_ref, nbrs_ref, w_in_ref, wd_in_ref,
                     w_lay_ref, wd_lay_ref, w_glob_ref, wd_glob_ref,
                     w_out_ref, w_inv_ref, so3_ref, inv_ref, *pp_refs):
    N, K, H, L, TB = cfg["n"], cfg["knn"], cfg["h_dim"], cfg["num_layers"], cfg["tb"]
    TBN = TB * N
    pool, scat = _pool_mats(N, TB)

    # ---- graph feature (cross, nbr - x, x) built in-kernel; lanes ordered (k, cloud, point) ----
    pts = pts_ref[0]                                                    # (3, TBN)
    nbr = nbrs_ref[0]                                                   # (3, K*TBN)
    nsq = jnp.sum(pts * pts, axis=0, keepdims=True)                     # (1, TBN)
    x_dir = pts * jax.lax.rsqrt(jnp.maximum(nsq, EPS * EPS))            # normalized point direction
    xp = jnp.concatenate([pts] * K, axis=1)                             # (3, K*TBN) point over K
    xd = jnp.concatenate([x_dir] * K, axis=1)                           # (3, K*TBN)
    diff = nbr - xp
    cross = [xd[1:2] * nbr[2:3] - xd[2:3] * nbr[1:2],
             xd[2:3] * nbr[0:1] - xd[0:1] * nbr[2:3],
             xd[0:1] * nbr[1:2] - xd[1:2] * nbr[0:1]]
    feat = [jnp.concatenate([cross[d], diff[d:d + 1], xp[d:d + 1]], axis=0)   # (3, K*TBN)
            for d in range(3)]

    # ---- conv_in: VecLinear(3->H) + VN-LeakyReLU over all K neighbours at once, mean over K ----
    v = _vn_act(_vn_linear(feat, w_in_ref[...]), wd_in_ref[...])        # 3 x (H, K*TBN)
    y = []
    for d in range(3):
        acc = v[d][:, :TBN]
        for k in range(1, K):
            acc = acc + v[d][:, k * TBN:(k + 1) * TBN]
        y.append(acc * (1.0 / K))                                       # (H, TBN)

    # ---- local/global VN layers; accumulate conv_out projection in-loop ----
    w_out = w_out_ref[...]                                              # (C, H*L)
    z_acc = None                                                        # 3 x (C, TB)   (pooled path)
    x_acc = None                                                        # 3 x (C, TBN)  (per-point path)
    for i in range(L):
        y = _vn_act(_vn_linear(y, w_lay_ref[i]), wd_lay_ref[i])
        w_g = w_glob_ref[i]                                             # (H, 2H)
        w_loc, w_glb = w_g[:, :H], w_g[:, H:]
        lin = []
        for d in range(3):
            g = jnp.dot(w_glb, jnp.dot(y[d], pool, preferred_element_type=jnp.float32),
                        preferred_element_type=jnp.float32)             # (H, TB) per-cloud global
            lin.append(jnp.dot(w_loc, y[d], preferred_element_type=jnp.float32)
                       + jnp.dot(g, scat, preferred_element_type=jnp.float32))
        y = _vn_act(lin, wd_glob_ref[i])
        w_out_i = w_out[:, i * H:(i + 1) * H]                           # (C, H)
        if with_pp:
            proj = [jnp.dot(w_out_i, y[d], preferred_element_type=jnp.float32) for d in range(3)]
            x_acc = proj if x_acc is None else [a + b for a, b in zip(x_acc, proj)]
        else:
            proj = [jnp.dot(w_out_i, jnp.dot(y[d], pool, preferred_element_type=jnp.float32),
                            preferred_element_type=jnp.float32) for d in range(3)]
            z_acc = proj if z_acc is None else [a + b for a, b in zip(z_acc, proj)]

    if with_pp:
        pp_ref = pp_refs[0]
        for d in range(3):
            pp_ref[0, d] = x_acc[d]                                     # (C, TBN) lane-dense store
        z_acc = [jnp.dot(x_acc[d], pool, preferred_element_type=jnp.float32) for d in range(3)]

    for d in range(3):
        so3_ref[0, d] = z_acc[d]                                        # (C, TB)

    # fc_inv (VecLinear C->C) and invariant: z_inv = sum_d z_dual * z_so3
    z_dual = [jnp.dot(w_inv_ref[...], z_acc[d], preferred_element_type=jnp.float32)
              for d in range(3)]
    inv_ref[0] = z_dual[0] * z_acc[0] + z_dual[1] * z_acc[1] + z_dual[2] * z_acc[2]


def backbone_and_head(pts_blk, nbrs_blk, params, cfg, with_pp):
    nb = pts_blk.shape[0]
    N, K, H, L, C, TB = (cfg["n"], cfg["knn"], cfg["h_dim"],
                         cfg["num_layers"], cfg["c_dim"], cfg["tb"])
    TBN = TB * N
    out_shape = [jax.ShapeDtypeStruct((nb, 3, C, TB), jnp.float32),
                 jax.ShapeDtypeStruct((nb, C, TB), jnp.float32)]
    out_specs = [pl.BlockSpec((1, 3, C, TB), lambda b: (b, 0, 0, 0)),
                 pl.BlockSpec((1, C, TB), lambda b: (b, 0, 0))]
    if with_pp:
        out_shape.append(jax.ShapeDtypeStruct((nb, 3, C, TBN), jnp.float32))
        out_specs.append(pl.BlockSpec((1, 3, C, TBN), lambda b: (b, 0, 0, 0)))
    return pl.pallas_call(
        partial(_backbone_kernel, cfg, with_pp),
        grid=(nb,),
        in_specs=[
            pl.BlockSpec((1, 3, TBN), lambda b: (b, 0, 0)),
            pl.BlockSpec((1, 3, K * TBN), lambda b: (b, 0, 0)),
            pl.BlockSpec((H, 3), lambda b: (0, 0)),
            pl.BlockSpec((H, H), lambda b: (0, 0)),
            pl.BlockSpec((L, H, H), lambda b: (0, 0, 0)),
            pl.BlockSpec((L, H, H), lambda b: (0, 0, 0)),
            pl.BlockSpec((L, H, 2 * H), lambda b: (0, 0, 0)),
            pl.BlockSpec((L, H, H), lambda b: (0, 0, 0)),
            pl.BlockSpec((C, H * L), lambda b: (0, 0)),
            pl.BlockSpec((C, C), lambda b: (0, 0)),
        ],
        out_specs=out_specs,
        out_shape=out_shape,
        compiler_params=pltpu.CompilerParams(dimension_semantics=("parallel",)),
    )(pts_blk, nbrs_blk, params["w_in"], params["wd_in"], params["w_lay"],
      params["wd_lay"], params["w_glob"], params["wd_glob"],
      params["w_out"], params["w_inv"])


# ---------------------------------------------------------------------------
# Full forward (mirrors SIM3Vec4Latent.forward)
# ---------------------------------------------------------------------------
def choose_tb(bt, n, max_lanes=512):
    """Largest divisor of BT such that TB*N lanes stays modest (128-dense for N=32)."""
    best = 1
    for tb in range(1, bt + 1):
        if bt % tb == 0 and tb * n <= max_lanes:
            best = tb
    return best


def sim3vec4latent_forward(pcl, params, cfg, ret_perpoint_feat=False, target_norm=1.0):
    B, T, N, _ = pcl.shape
    BT = B * T
    K, C, TB = cfg["knn"], cfg["c_dim"], cfg["tb"]
    assert BT % TB == 0, "TB must divide B*T"
    nb = BT // TB
    TBN = TB * N

    # (B,T,N,3) -> lane-dense blocks (nb, 3, TB*N); lane = cloud_in_block * N + point
    p = jnp.transpose(pcl.reshape(nb, TB, N, 3), (0, 3, 1, 2)).reshape(nb, 3, TBN)
    npcl, center, scale = center_scale(p, N, TB, target_norm)

    z_center = jnp.transpose(center, (0, 2, 1)).reshape(BT, 3)[:, None, :]   # (BT, 1, 3)
    z_scale = scale.reshape(BT)                                              # (BT,)

    # TODO(synk): KNN neighbour search + gather (pytorch3d.knn_points equivalent) is a
    # data-dependent gather with no clean Pallas equivalent; done in plain JAX glue.
    pts_bt = jnp.transpose(npcl.reshape(nb, 3, TB, N), (0, 2, 3, 1)).reshape(BT, N, 3)
    d2 = jnp.sum((pts_bt[:, :, None, :] - pts_bt[:, None, :, :]) ** 2, axis=-1)
    _, idx = jax.lax.top_k(-d2, K)                                           # (BT, N, K)
    nbrs = jax.vmap(lambda pp, ii: pp[ii])(pts_bt, idx)                      # (BT, N, K, 3)
    # -> (nb, 3, K*TB*N) with lane = k*TB*N + t*N + n  (matches the in-kernel tiling of pts)
    nbrs = jnp.transpose(nbrs.reshape(nb, TB, N, K, 3), (0, 4, 3, 1, 2)).reshape(nb, 3, K * TBN)

    outs = backbone_and_head(npcl, nbrs, params, cfg, ret_perpoint_feat)
    z_so3 = jnp.transpose(outs[0], (0, 3, 2, 1)).reshape(BT, C, 3)
    z_inv = jnp.transpose(outs[1], (0, 2, 1)).reshape(BT, C)

    ret = {"inv": z_inv, "so3": z_so3, "scale": z_scale, "center": z_center}
    if ret_perpoint_feat:
        pp_blk = outs[2]                                                     # (nb, 3, C, TB*N)
        ret["per_point_so3"] = jnp.transpose(
            pp_blk.reshape(nb, 3, C, TB, N), (0, 3, 2, 1, 4)).reshape(BT, C, 3, N)
    return ret


def init_params(key, h_dim, c_dim, num_layers):
    def lin(k, o, i):
        return jax.random.normal(k, (o, i), jnp.float32) * (1.0 / math.sqrt(i))

    ks = jax.random.split(key, 8)

    def stacked(k, o, i):
        return jnp.stack([lin(kk, o, i) for kk in jax.random.split(k, num_layers)])

    return {
        "w_in": lin(ks[0], h_dim, 3),
        "wd_in": lin(ks[1], h_dim, h_dim),
        "w_lay": stacked(ks[2], h_dim, h_dim),
        "wd_lay": stacked(ks[3], h_dim, h_dim),
        "w_glob": stacked(ks[4], h_dim, 2 * h_dim),
        "wd_glob": stacked(ks[5], h_dim, h_dim),
        "w_out": lin(ks[6], c_dim, h_dim * num_layers),
        "w_inv": lin(ks[7], c_dim, c_dim),
    }


if __name__ == "__main__":
    B, T, N = 2, 2, 32
    H, C, L, K = 16, 32, 2, 8
    BT = B * T
    TB = choose_tb(BT, N)                      # = 4 -> lane axis TB*N = 128
    cfg = {"n": N, "knn": K, "h_dim": H, "c_dim": C, "num_layers": L, "tb": TB}

    key = jax.random.PRNGKey(0)
    k_param, k_pcl = jax.random.split(key)
    params = init_params(k_param, H, C, L)
    pcl = jax.random.normal(k_pcl, (B, T, N, 3), jnp.float32)

    fwd = jax.jit(lambda x, p: sim3vec4latent_forward(x, p, cfg, False, 1.0))
    fwd_pp = jax.jit(lambda x, p: sim3vec4latent_forward(x, p, cfg, True, 1.0))

    out = jax.tree_util.tree_map(lambda a: a.block_until_ready(), fwd(pcl, params))
    assert out["inv"].shape == (BT, C)
    assert out["so3"].shape == (BT, C, 3)
    assert out["scale"].shape == (BT,)
    assert out["center"].shape == (BT, 1, 3)
    assert bool(jnp.all(jnp.isfinite(out["inv"])))

    # per-point-feature variant (separate pallas_call; the default path skips that writeback)
    out_pp = jax.tree_util.tree_map(lambda a: a.block_until_ready(), fwd_pp(pcl, params))
    assert out_pp["per_point_so3"].shape == (BT, C, 3, N)
    # the two variants only differ by pool/projection associativity -> must agree closely
    assert bool(jnp.allclose(out["so3"], out_pp["so3"], rtol=1e-3, atol=1e-3))
    assert bool(jnp.allclose(out["inv"], out_pp["inv"], rtol=1e-3, atol=1e-3))

    print("KERNEL_OK")
</pallas_src>

<mosaic_0001>
module attributes {stable_mosaic.version = 11 : i64} {
  func.func @_center_scale_kernel(%arg0: i32, %arg1: memref<1x3x128xf32, #tpu.memory_space<vmem>>, %arg2: memref<1x3x128xf32, #tpu.memory_space<vmem>>, %arg3: memref<1x3x4xf32, #tpu.memory_space<vmem>>, %arg4: memref<1x1x4xf32, #tpu.memory_space<vmem>>) attributes {dimension_semantics = [#tpu.dimension_semantics<parallel>], iteration_bounds = array<i64: 1>, scalar_prefetch = 0 : i64, scratch_operands = 0 : i64, tpu.core_type = #tpu.core_type<tc>, window_params = [{transform_indices = @transform_0, window_bounds = array<i64: 1, 3, 128>}, {transform_indices = @transform_1, window_bounds = array<i64: 1, 3, 128>}, {transform_indices = @transform_2, window_bounds = array<i64: 1, 3, 4>}, {transform_indices = @transform_3, window_bounds = array<i64: 1, 1, 4>}]} {
    %0 = tpu.iota {dimensions = array<i32: 0>} : vector<128x4xi32>
    %1 = tpu.iota {dimensions = array<i32: 1>} : vector<128x4xi32>
    %c32_i32 = arith.constant 32 : i32
    %2 = vector.broadcast %c32_i32 : i32 to vector<128x4xi32>
    %3 = arith.muli %1, %2 : vector<128x4xi32>
    %4 = arith.cmpi sge, %0, %3 : vector<128x4xi32>
    %c32_i32_0 = arith.constant 32 : i32
    %5 = vector.broadcast %c32_i32_0 : i32 to vector<128x4xi32>
    %6 = arith.muli %1, %5 : vector<128x4xi32>
    %c32_i32_1 = arith.constant 32 : i32
    %7 = vector.broadcast %c32_i32_1 : i32 to vector<128x4xi32>
    %8 = arith.addi %6, %7 : vector<128x4xi32>
    %9 = arith.cmpi slt, %0, %8 : vector<128x4xi32>
    %10 = arith.andi %4, %9 : vector<128x4xi1>
    %cst = arith.constant 3.125000e-02 : f32
    %cst_2 = arith.constant 0.000000e+00 : f32
    %11 = vector.broadcast %cst : f32 to vector<128x4xf32>
    %12 = vector.broadcast %cst_2 : f32 to vector<128x4xf32>
    %13 = arith.select %10, %11, %12 : vector<128x4xi1>, vector<128x4xf32>
    %14 = tpu.iota {dimensions = array<i32: 0>} : vector<4x128xi32>
    %15 = tpu.iota {dimensions = array<i32: 1>} : vector<4x128xi32>
    %c32_i32_3 = arith.constant 32 : i32
    %16 = vector.broadcast %c32_i32_3 : i32 to vector<4x128xi32>
    %17 = arith.muli %14, %16 : vector<4x128xi32>
    %18 = arith.cmpi sge, %15, %17 : vector<4x128xi32>
    %c32_i32_4 = arith.constant 32 : i32
    %19 = vector.broadcast %c32_i32_4 : i32 to vector<4x128xi32>
    %20 = arith.muli %14, %19 : vector<4x128xi32>
    %c32_i32_5 = arith.constant 32 : i32
    %21 = vector.broadcast %c32_i32_5 : i32 to vector<4x128xi32>
    %22 = arith.addi %20, %21 : vector<4x128xi32>
    %23 = arith.cmpi slt, %15, %22 : vector<4x128xi32>
    %24 = arith.andi %18, %23 : vector<4x128xi1>
    %cst_6 = arith.constant 1.000000e+00 : f32
    %cst_7 = arith.constant 0.000000e+00 : f32
    %25 = vector.broadcast %cst_6 : f32 to vector<4x128xf32>
    %26 = vector.broadcast %cst_7 : f32 to vector<4x128xf32>
    %27 = arith.select %24, %25, %26 : vector<4x128xi1>, vector<4x128xf32>
    %c0 = arith.constant 0 : index
    %c0_8 = arith.constant 0 : index
    %c0_9 = arith.constant 0 : index
    %28 = vector.load %arg1[%c0, %c0_8, %c0_9] : memref<1x3x128xf32, #tpu.memory_space<vmem>>, vector<1x3x128xf32>
    %29 = vector.shape_cast %28 : vector<1x3x128xf32> to vector<3x128xf32>
    %cst_10 = arith.constant dense<0.000000e+00> : vector<3x4xf32>
    %30 = tpu.matmul %29, %13, %cst_10 {dimension_numbers = #tpu.dot_dimension_numbers<[1], [0], [0], [1], [0, 0, 1, 1], [], []>} : vector<3x128xf32>, vector<128x4xf32>, vector<3x4xf32> -> vector<3x4xf32>
    %cst_11 = arith.constant dense<0.000000e+00> : vector<3x128xf32>
    %31 = tpu.matmul %30, %27, %cst_11 {dimension_numbers = #tpu.dot_dimension_numbers<[1], [0], [0], [1], [0, 0, 1, 1], [], []>} : vector<3x4xf32>, vector<4x128xf32>, vector<3x128xf32> -> vector<3x128xf32>
    %32 = arith.subf %29, %31 : vector<3x128xf32>
    %33 = arith.mulf %32, %32 : vector<3x128xf32>
    %cst_12 = arith.constant dense<0.000000e+00> : vector<128xf32>
    %34 = vector.multi_reduction <add>, %33, %cst_12 [0] : vector<3x128xf32> to vector<128xf32>
    %35 = vector.shape_cast %34 : vector<128xf32> to vector<1x128xf32>
    %36 = math.sqrt %35 : vector<1x128xf32>
    %cst_13 = arith.constant dense<0.000000e+00> : vector<1x4xf32>
    %37 = tpu.matmul %36, %13, %cst_13 {dimension_numbers = #tpu.dot_dimension_numbers<[1], [0], [0], [1], [0, 0, 1, 1], [], []>} : vector<1x128xf32>, vector<128x4xf32>, vector<1x4xf32> -> vector<1x4xf32>
    %cst_14 = arith.constant 1.000000e+00 : f32
    %38 = vector.broadcast %cst_14 : f32 to vector<1x4xf32>
    %39 = arith.mulf %37, %38 : vector<1x4xf32>
    %cst_15 = arith.constant dense<0.000000e+00> : vector<1x128xf32>
    %40 = tpu.matmul %39, %27, %cst_15 {dimension_numbers = #tpu.dot_dimension_numbers<[1], [0], [0], [1], [0, 0, 1, 1], [], []>} : vector<1x4xf32>, vector<4x128xf32>, vector<1x128xf32> -> vector<1x128xf32>
    %41 = vector.broadcast %40 : vector<1x128xf32> to vector<3x128xf32>
    %42 = arith.divf %32, %41 : vector<3x128xf32>
    %c0_16 = arith.constant 0 : index
    %c0_17 = arith.constant 0 : index
    %c0_18 = arith.constant 0 : index
    %43 = vector.load %arg2[%c0_16, %c0_17, %c0_18] : memref<1x3x128xf32, #tpu.memory_space<vmem>>, vector<1x3x128xf32>
    %44 = vector.shape_cast %43 : vector<1x3x128xf32> to vector<3x128xf32>
    %45 = vector.shape_cast %42 : vector<3x128xf32> to vector<1x3x128xf32>
    tpu.vector_store %arg2[%c0_16, %c0_17, %c0_18], %45 {strides = array<i32>} : memref<1x3x128xf32, #tpu.memory_space<vmem>>, vector<1x3x128xf32>,
    %c0_19 = arith.constant 0 : index
    %c0_20 = arith.constant 0 : index
    %c0_21 = arith.constant 0 : index
    %46 = vector.load %arg3[%c0_19, %c0_20, %c0_21] : memref<1x3x4xf32, #tpu.memory_space<vmem>>, vector<1x3x4xf32>
    %47 = vector.shape_cast %46 : vector<1x3x4xf32> to vector<3x4xf32>
    %48 = vector.shape_cast %30 : vector<3x4xf32> to vector<1x3x4xf32>
    tpu.vector_store %arg3[%c0_19, %c0_20, %c0_21], %48 {strides = array<i32>} : memref<1x3x4xf32, #tpu.memory_space<vmem>>, vector<1x3x4xf32>,
    %c0_22 = arith.constant 0 : index
    %c0_23 = arith.constant 0 : index
    %c0_24 = arith.constant 0 : index
    %49 = vector.load %arg4[%c0_22, %c0_23, %c0_24] : memref<1x1x4xf32, #tpu.memory_space<vmem>>, vector<1x1x4xf32>
    %50 = vector.shape_cast %49 : vector<1x1x4xf32> to vector<1x4xf32>
    %51 = vector.shape_cast %39 : vector<1x4xf32> to vector<1x1x4xf32>
    tpu.vector_store %arg4[%c0_22, %c0_23, %c0_24], %51 {strides = array<i32>} : memref<1x1x4xf32, #tpu.memory_space<vmem>>, vector<1x1x4xf32>,
    return
  }
  func.func @transform_0(%arg0: i32) -> (i32, i32, i32) {
    %c0_i32 = arith.constant 0 : i32
    %c0_i32_0 = arith.constant 0 : i32
    %c0_i32_1 = arith.constant 0 : i32
    return %arg0, %c0_i32, %c0_i32_0 : i32, i32, i32
  }
  func.func @transform_1(%arg0: i32) -> (i32, i32, i32) {
    %c0_i32 = arith.constant 0 : i32
    %c0_i32_0 = arith.constant 0 : i32
    %c0_i32_1 = arith.constant 0 : i32
    return %arg0, %c0_i32, %c0_i32_0 : i32, i32, i32
  }
  func.func @transform_2(%arg0: i32) -> (i32, i32, i32) {
    %c0_i32 = arith.constant 0 : i32
    %c0_i32_0 = arith.constant 0 : i32
    %c0_i32_1 = arith.constant 0 : i32
    return %arg0, %c0_i32, %c0_i32_0 : i32, i32, i32
  }
  func.func @transform_3(%arg0: i32) -> (i32, i32, i32) {
    %c0_i32 = arith.constant 0 : i32
    %c0_i32_0 = arith.constant 0 : i32
    %c0_i32_1 = arith.constant 0 : i32
    return %arg0, %c0_i32, %c0_i32_0 : i32, i32, i32
  }
}

module attributes {stable_mosaic.version = 11 : i64} {
  func.func @_backbone_kernel(%arg0: i32, %arg1: memref<1x3x128xf32, #tpu.memory_space<vmem>>, %arg2: memref<1x3x1024xf32, #tpu.memory_space<vmem>>, %arg3: memref<16x3xf32, #tpu.memory_space<vmem>>, %arg4: memref<16x16xf32, #tpu.memory_space<vmem>>, %arg5: memref<2x16x16xf32, #tpu.memory_space<vmem>>, %arg6: memref<2x16x16xf32, #tpu.memory_space<vmem>>, %arg7: memref<2x16x32xf32, #tpu.memory_space<vmem>>, %arg8: memref<2x16x16xf32, #tpu.memory_space<vmem>>, %arg9: memref<32x32xf32, #tpu.memory_space<vmem>>, %arg10: memref<32x32xf32, #tpu.memory_space<vmem>>, %arg11: memref<1x3x32x4xf32, #tpu.memory_space<vmem>>, %arg12: memref<1x32x4xf32, #tpu.memory_space<vmem>>) attributes {dimension_semantics = [#tpu.dimension_semantics<parallel>], iteration_bounds = array<i64: 1>, scalar_prefetch = 0 : i64, scratch_operands = 0 : i64, tpu.core_type = #tpu.core_type<tc>, window_params = [{transform_indices = @transform_0, window_bounds = array<i64: 1, 3, 128>}, {transform_indices = @transform_1, window_bounds = array<i64: 1, 3, 1024>}, {pipeline_mode = #tpu.pipeline_mode<synchronous>, transform_indices = @transform_2, window_bounds = array<i64: 16, 3>}, {pipeline_mode = #tpu.pipeline_mode<synchronous>, transform_indices = @transform_3, window_bounds = array<i64: 16, 16>}, {pipeline_mode = #tpu.pipeline_mode<synchronous>, transform_indices = @transform_4, window_bounds = array<i64: 2, 16, 16>}, {pipeline_mode = #tpu.pipeline_mode<synchronous>, transform_indices = @transform_5, window_bounds = array<i64: 2, 16, 16>}, {pipeline_mode = #tpu.pipeline_mode<synchronous>, transform_indices = @transform_6, window_bounds = array<i64: 2, 16, 32>}, {pipeline_mode = #tpu.pipeline_mode<synchronous>, transform_indices = @transform_7, window_bounds = array<i64: 2, 16, 16>}, {pipeline_mode = #tpu.pipeline_mode<synchronous>, transform_indices = @transform_8, window_bounds = array<i64: 32, 32>}, {pipeline_mode = #tpu.pipeline_mode<synchronous>, transform_indices = @transform_9, window_bounds = array<i64: 32, 32>}, {transform_indices = @transform_10, window_bounds = array<i64: 1, 3, 32, 4>}, {transform_indices = @transform_11, window_bounds = array<i64: 1, 32, 4>}]} {
    %0 = tpu.iota {dimensions = array<i32: 0>} : vector<128x4xi32>
    %1 = tpu.iota {dimensions = array<i32: 1>} : vector<128x4xi32>
    %c32_i32 = arith.constant 32 : i32
    %2 = vector.broadcast %c32_i32 : i32 to vector<128x4xi32>
    %3 = arith.muli %1, %2 : vector<128x4xi32>
    %4 = arith.cmpi sge, %0, %3 : vector<128x4xi32>
    %c32_i32_0 = arith.constant 32 : i32
    %5 = vector.broadcast %c32_i32_0 : i32 to vector<128x4xi32>
    %6 = arith.muli %1, %5 : vector<128x4xi32>
    %c32_i32_1 = arith.constant 32 : i32
    %7 = vector.broadcast %c32_i32_1 : i32 to vector<128x4xi32>
    %8 = arith.addi %6, %7 : vector<128x4xi32>
    %9 = arith.cmpi slt, %0, %8 : vector<128x4xi32>
    %10 = arith.andi %4, %9 : vector<128x4xi1>
    %cst = arith.constant 3.125000e-02 : f32
    %cst_2 = arith.constant 0.000000e+00 : f32
    %11 = vector.broadcast %cst : f32 to vector<128x4xf32>
    %12 = vector.broadcast %cst_2 : f32 to vector<128x4xf32>
    %13 = arith.select %10, %11, %12 : vector<128x4xi1>, vector<128x4xf32>
    %14 = tpu.iota {dimensions = array<i32: 0>} : vector<4x128xi32>
    %15 = tpu.iota {dimensions = array<i32: 1>} : vector<4x128xi32>
    %c32_i32_3 = arith.constant 32 : i32
    %16 = vector.broadcast %c32_i32_3 : i32 to vector<4x128xi32>
    %17 = arith.muli %14, %16 : vector<4x128xi32>
    %18 = arith.cmpi sge, %15, %17 : vector<4x128xi32>
    %c32_i32_4 = arith.constant 32 : i32
    %19 = vector.broadcast %c32_i32_4 : i32 to vector<4x128xi32>
    %20 = arith.muli %14, %19 : vector<4x128xi32>
    %c32_i32_5 = arith.constant 32 : i32
    %21 = vector.broadcast %c32_i32_5 : i32 to vector<4x128xi32>
    %22 = arith.addi %20, %21 : vector<4x128xi32>
    %23 = arith.cmpi slt, %15, %22 : vector<4x128xi32>
    %24 = arith.andi %18, %23 : vector<4x128xi1>
    %cst_6 = arith.constant 1.000000e+00 : f32
    %cst_7 = arith.constant 0.000000e+00 : f32
    %25 = vector.broadcast %cst_6 : f32 to vector<4x128xf32>
    %26 = vector.broadcast %cst_7 : f32 to vector<4x128xf32>
    %27 = arith.select %24, %25, %26 : vector<4x128xi1>, vector<4x128xf32>
    %c0 = arith.constant 0 : index
    %c0_8 = arith.constant 0 : index
    %c0_9 = arith.constant 0 : index
    %28 = vector.load %arg1[%c0, %c0_8, %c0_9] : memref<1x3x128xf32, #tpu.memory_space<vmem>>, vector<1x3x128xf32>
    %29 = vector.shape_cast %28 : vector<1x3x128xf32> to vector<3x128xf32>
    %c0_10 = arith.constant 0 : index
    %c0_11 = arith.constant 0 : index
    %c0_12 = arith.constant 0 : index
    %30 = vector.load %arg2[%c0_10, %c0_11, %c0_12] : memref<1x3x1024xf32, #tpu.memory_space<vmem>>, vector<1x3x1024xf32>
    %31 = vector.shape_cast %30 : vector<1x3x1024xf32> to vector<3x1024xf32>
    %32 = arith.mulf %29, %29 : vector<3x128xf32>
    %cst_13 = arith.constant dense<0.000000e+00> : vector<128xf32>
    %33 = vector.multi_reduction <add>, %32, %cst_13 [0] : vector<3x128xf32> to vector<128xf32>
    %34 = vector.shape_cast %33 : vector<128xf32> to vector<1x128xf32>
    %cst_14 = arith.constant 1.000000e-24 : f32
    %35 = vector.broadcast %cst_14 : f32 to vector<1x128xf32>
    %36 = arith.maximumf %34, %35 : vector<1x128xf32>
    %37 = math.rsqrt %36 : vector<1x128xf32>
    %38 = vector.broadcast %37 : vector<1x128xf32> to vector<3x128xf32>
    %39 = arith.mulf %29, %38 : vector<3x128xf32>
    %40 = tpu.concatenate %29, %29, %29, %29, %29, %29, %29, %29 in 1 : vector<3x128xf32>, vector<3x128xf32>, vector<3x128xf32>, vector<3x128xf32>, vector<3x128xf32>, vector<3x128xf32>, vector<3x128xf32>, vector<3x128xf32> -> vector<3x1024xf32>
    %41 = tpu.concatenate %39, %39, %39, %39, %39, %39, %39, %39 in 1 : vector<3x128xf32>, vector<3x128xf32>, vector<3x128xf32>, vector<3x128xf32>, vector<3x128xf32>, vector<3x128xf32>, vector<3x128xf32>, vector<3x128xf32> -> vector<3x1024xf32>
    %42 = arith.subf %31, %40 : vector<3x1024xf32>
    %43 = vector.extract_strided_slice %41 {offsets = [1, 0], sizes = [1, 1024], strides = [1, 1]} : vector<3x1024xf32> to vector<1x1024xf32>
    %44 = vector.extract_strided_slice %31 {offsets = [2, 0], sizes = [1, 1024], strides = [1, 1]} : vector<3x1024xf32> to vector<1x1024xf32>
    %45 = arith.mulf %43, %44 : vector<1x1024xf32>
    %46 = vector.extract_strided_slice %41 {offsets = [2, 0], sizes = [1, 1024], strides = [1, 1]} : vector<3x1024xf32> to vector<1x1024xf32>
    %47 = vector.extract_strided_slice %31 {offsets = [1, 0], sizes = [1, 1024], strides = [1, 1]} : vector<3x1024xf32> to vector<1x1024xf32>
    %48 = arith.mulf %46, %47 : vector<1x1024xf32>
    %49 = arith.subf %45, %48 : vector<1x1024xf32>
    %50 = vector.extract_strided_slice %41 {offsets = [2, 0], sizes = [1, 1024], strides = [1, 1]} : vector<3x1024xf32> to vector<1x1024xf32>
    %51 = vector.extract_strided_slice %31 {offsets = [0, 0], sizes = [1, 1024], strides = [1, 1]} : vector<3x1024xf32> to vector<1x1024xf32>
    %52 = arith.mulf %50, %51 : vector<1x1024xf32>
    %53 = vector.extract_strided_slice %41 {offsets = [0, 0], sizes = [1, 1024], strides = [1, 1]} : vector<3x1024xf32> to vector<1x1024xf32>
    %54 = vector.extract_strided_slice %31 {offsets = [2, 0], sizes = [1, 1024], strides = [1, 1]} : vector<3x1024xf32> to vector<1x1024xf32>
    %55 = arith.mulf %53, %54 : vector<1x1024xf32>
    %56 = arith.subf %52, %55 : vector<1x1024xf32>
    %57 = vector.extract_strided_slice %41 {offsets = [0, 0], sizes = [1, 1024], strides = [1, 1]} : vector<3x1024xf32> to vector<1x1024xf32>
    %58 = vector.extract_strided_slice %31 {offsets = [1, 0], sizes = [1, 1024], strides = [1, 1]} : vector<3x1024xf32> to vector<1x1024xf32>
    %59 = arith.mulf %57, %58 : vector<1x1024xf32>
    %60 = vector.extract_strided_slice %41 {offsets = [1, 0], sizes = [1, 1024], strides = [1, 1]} : vector<3x1024xf32> to vector<1x1024xf32>
    %61 = vector.extract_strided_slice %31 {offsets = [0, 0], sizes = [1, 1024], strides = [1, 1]} : vector<3x1024xf32> to vector<1x1024xf32>
    %62 = arith.mulf %60, %61 : vector<1x1024xf32>
    %63 = arith.subf %59, %62 : vector<1x1024xf32>
    %64 = vector.extract_strided_slice %42 {offsets = [0, 0], sizes = [1, 1024], strides = [1, 1]} : vector<3x1024xf32> to vector<1x1024xf32>
    %65 = vector.extract_strided_slice %40 {offsets = [0, 0], sizes = [1, 1024], strides = [1, 1]} : vector<3x1024xf32> to vector<1x1024xf32>
    %66 = tpu.concatenate %49, %64, %65 in 0 : vector<1x1024xf32>, vector<1x1024xf32>, vector<1x1024xf32> -> vector<3x1024xf32>
    %67 = vector.extract_strided_slice %42 {offsets = [1, 0], sizes = [1, 1024], strides = [1, 1]} : vector<3x1024xf32> to vector<1x1024xf32>
    %68 = vector.extract_strided_slice %40 {offsets = [1, 0], sizes = [1, 1024], strides = [1, 1]} : vector<3x1024xf32> to vector<1x1024xf32>
    %69 = tpu.concatenate %56, %67, %68 in 0 : vector<1x1024xf32>, vector<1x1024xf32>, vector<1x1024xf32> -> vector<3x1024xf32>
    %70 = vector.extract_strided_slice %42 {offsets = [2, 0], sizes = [1, 1024], strides = [1, 1]} : vector<3x1024xf32> to vector<1x1024xf32>
    %71 = vector.extract_strided_slice %40 {offsets = [2, 0], sizes = [1, 1024], strides = [1, 1]} : vector<3x1024xf32> to vector<1x1024xf32>
    %72 = tpu.concatenate %63, %70, %71 in 0 : vector<1x1024xf32>, vector<1x1024xf32>, vector<1x1024xf32> -> vector<3x1024xf32>
    %c0_15 = arith.constant 0 : index
    %c0_16 = arith.constant 0 : index
    %73 = vector.load %arg3[%c0_15, %c0_16] : memref<16x3xf32, #tpu.memory_space<vmem>>, vector<16x3xf32>
    %cst_17 = arith.constant dense<0.000000e+00> : vector<16x1024xf32>
    %74 = tpu.matmul %73, %66, %cst_17 {dimension_numbers = #tpu.dot_dimension_numbers<[1], [0], [0], [1], [0, 0, 1, 1], [], []>} : vector<16x3xf32>, vector<3x1024xf32>, vector<16x1024xf32> -> vector<16x1024xf32>
    %cst_18 = arith.constant dense<0.000000e+00> : vector<16x1024xf32>
    %75 = tpu.matmul %73, %69, %cst_18 {dimension_numbers = #tpu.dot_dimension_numbers<[1], [0], [0], [1], [0, 0, 1, 1], [], []>} : vector<16x3xf32>, vector<3x1024xf32>, vector<16x1024xf32> -> vector<16x1024xf32>
    %cst_19 = arith.constant dense<0.000000e+00> : vector<16x1024xf32>
    %76 = tpu.matmul %73, %72, %cst_19 {dimension_numbers = #tpu.dot_dimension_numbers<[1], [0], [0], [1], [0, 0, 1, 1], [], []>} : vector<16x3xf32>, vector<3x1024xf32>, vector<16x1024xf32> -> vector<16x1024xf32>
    %c0_20 = arith.constant 0 : index
    %c0_21 = arith.constant 0 : index
    %77 = vector.load %arg4[%c0_20, %c0_21] : memref<16x16xf32, #tpu.memory_space<vmem>>, vector<16x16xf32>
    %cst_22 = arith.constant dense<0.000000e+00> : vector<16x1024xf32>
    %78 = tpu.matmul %77, %74, %cst_22 {dimension_numbers = #tpu.dot_dimension_numbers<[1], [0], [0], [1], [0, 0, 1, 1], [], []>} : vector<16x16xf32>, vector<16x1024xf32>, vector<16x1024xf32> -> vector<16x1024xf32>
    %cst_23 = arith.constant dense<0.000000e+00> : vector<16x1024xf32>
    %79 = tpu.matmul %77, %75, %cst_23 {dimension_numbers = #tpu.dot_dimension_numbers<[1], [0], [0], [1], [0, 0, 1, 1], [], []>} : vector<16x16xf32>, vector<16x1024xf32>, vector<16x1024xf32> -> vector<16x1024xf32>
    %cst_24 = arith.constant dense<0.000000e+00> : vector<16x1024xf32>
    %80 = tpu.matmul %77, %76, %cst_24 {dimension_numbers = #tpu.dot_dimension_numbers<[1], [0], [0], [1], [0, 0, 1, 1], [], []>} : vector<16x16xf32>, vector<16x1024xf32>, vector<16x1024xf32> -> vector<16x1024xf32>
    %81 = arith.mulf %78, %78 : vector<16x1024xf32>
    %82 = arith.mulf %79, %79 : vector<16x1024xf32>
    %83 = arith.addf %81, %82 : vector<16x1024xf32>
    %84 = arith.mulf %80, %80 : vector<16x1024xf32>
    %85 = arith.addf %83, %84 : vector<16x1024xf32>
    %cst_25 = arith.constant 1.000000e-24 : f32
    %86 = vector.broadcast %cst_25 : f32 to vector<16x1024xf32>
    %87 = arith.maximumf %85, %86 : vector<16x1024xf32>
    %88 = math.rsqrt %87 : vector<16x1024xf32>
    %89 = arith.mulf %78, %88 : vector<16x1024xf32>
    %90 = arith.mulf %79, %88 : vector<16x1024xf32>
    %91 = arith.mulf %80, %88 : vector<16x1024xf32>
    %92 = arith.mulf %74, %89 : vector<16x1024xf32>
    %93 = arith.mulf %75, %90 : vector<16x1024xf32>
    %94 = arith.addf %92, %93 : vector<16x1024xf32>
    %95 = arith.mulf %76, %91 : vector<16x1024xf32>
    %96 = arith.addf %94, %95 : vector<16x1024xf32>
    %cst_26 = arith.constant 0.000000e+00 : f32
    %97 = vector.broadcast %cst_26 : f32 to vector<16x1024xf32>
    %98 = arith.cmpf oge, %96, %97 : vector<16x1024xf32>
    %cst_27 = arith.constant 2.000000e-01 : f32
    %99 = vector.broadcast %cst_27 : f32 to vector<16x1024xf32>
    %100 = arith.mulf %99, %96 : vector<16x1024xf32>
    %101 = arith.select %98, %96, %100 : vector<16x1024xi1>, vector<16x1024xf32>
    %102 = arith.subf %101, %96 : vector<16x1024xf32>
    %103 = arith.mulf %102, %89 : vector<16x1024xf32>
    %104 = arith.addf %74, %103 : vector<16x1024xf32>
    %105 = arith.mulf %102, %90 : vector<16x1024xf32>
    %106 = arith.addf %75, %105 : vector<16x1024xf32>
    %107 = arith.mulf %102, %91 : vector<16x1024xf32>
    %108 = arith.addf %76, %107 : vector<16x1024xf32>
    %109 = vector.extract_strided_slice %104 {offsets = [0, 0], sizes = [16, 128], strides = [1, 1]} : vector<16x1024xf32> to vector<16x128xf32>
    %110 = vector.extract_strided_slice %104 {offsets = [0, 128], sizes = [16, 128], strides = [1, 1]} : vector<16x1024xf32> to vector<16x128xf32>
    %111 = arith.addf %109, %110 : vector<16x128xf32>
    %112 = vector.extract_strided_slice %104 {offsets = [0, 256], sizes = [16, 128], strides = [1, 1]} : vector<16x1024xf32> to vector<16x128xf32>
    %113 = arith.addf %111, %112 : vector<16x128xf32>
    %114 = vector.extract_strided_slice %104 {offsets = [0, 384], sizes = [16, 128], strides = [1, 1]} : vector<16x1024xf32> to vector<16x128xf32>
    %115 = arith.addf %113, %114 : vector<16x128xf32>
    %116 = vector.extract_strided_slice %104 {offsets = [0, 512], sizes = [16, 128], strides = [1, 1]} : vector<16x1024xf32> to vector<16x128xf32>
    %117 = arith.addf %115, %116 : vector<16x128xf32>
    %118 = vector.extract_strided_slice %104 {offsets = [0, 640], sizes = [16, 128], strides = [1, 1]} : vector<16x1024xf32> to vector<16x128xf32>
    %119 = arith.addf %117, %118 : vector<16x128xf32>
    %120 = vector.extract_strided_slice %104 {offsets = [0, 768], sizes = [16, 128], strides = [1, 1]} : vector<16x1024xf32> to vector<16x128xf32>
    %121 = arith.addf %119, %120 : vector<16x128xf32>
    %122 = vector.extract_strided_slice %104 {offsets = [0, 896], sizes = [16, 128], strides = [1, 1]} : vector<16x1024xf32> to vector<16x128xf32>
    %123 = arith.addf %121, %122 : vector<16x128xf32>
    %cst_28 = arith.constant 1.250000e-01 : f32
    %124 = vector.broadcast %cst_28 : f32 to vector<16x128xf32>
    %125 = arith.mulf %123, %124 : vector<16x128xf32>
    %126 = vector.extract_strided_slice %106 {offsets = [0, 0], sizes = [16, 128], strides = [1, 1]} : vector<16x1024xf32> to vector<16x128xf32>
    %127 = vector.extract_strided_slice %106 {offsets = [0, 128], sizes = [16, 128], strides = [1, 1]} : vector<16x1024xf32> to vector<16x128xf32>
    %128 = arith.addf %126, %127 : vector<16x128xf32>
    %129 = vector.extract_strided_slice %106 {offsets = [0, 256], sizes = [16, 128], strides = [1, 1]} : vector<16x1024xf32> to vector<16x128xf32>
    %130 = arith.addf %128, %129 : vector<16x128xf32>
    %131 = vector.extract_strided_slice %106 {offsets = [0, 384], sizes = [16, 128], strides = [1, 1]} : vector<16x1024xf32> to vector<16x128xf32>
    %132 = arith.addf %130, %131 : vector<16x128xf32>
    %133 = vector.extract_strided_slice %106 {offsets = [0, 512], sizes = [16, 128], strides = [1, 1]} : vector<16x1024xf32> to vector<16x128xf32>
    %134 = arith.addf %132, %133 : vector<16x128xf32>
    %135 = vector.extract_strided_slice %106 {offsets = [0, 640], sizes = [16, 128], strides = [1, 1]} : vector<16x1024xf32> to vector<16x128xf32>
    %136 = arith.addf %134, %135 : vector<16x128xf32>
    %137 = vector.extract_strided_slice %106 {offsets = [0, 768], sizes = [16, 128], strides = [1, 1]} : vector<16x1024xf32> to vector<16x128xf32>
    %138 = arith.addf %136, %137 : vector<16x128xf32>
    %139 = vector.extract_strided_slice %106 {offsets = [0, 896], sizes = [16, 128], strides = [1, 1]} : vector<16x1024xf32> to vector<16x128xf32>
    %140 = arith.addf %138, %139 : vector<16x128xf32>
    %cst_29 = arith.constant 1.250000e-01 : f32
    %141 = vector.broadcast %cst_29 : f32 to vector<16x128xf32>
    %142 = arith.mulf %140, %141 : vector<16x128xf32>
    %143 = vector.extract_strided_slice %108 {offsets = [0, 0], sizes = [16, 128], strides = [1, 1]} : vector<16x1024xf32> to vector<16x128xf32>
    %144 = vector.extract_strided_slice %108 {offsets = [0, 128], sizes = [16, 128], strides = [1, 1]} : vector<16x1024xf32> to vector<16x128xf32>
    %145 = arith.addf %143, %144 : vector<16x128xf32>
    %146 = vector.extract_strided_slice %108 {offsets = [0, 256], sizes = [16, 128], strides = [1, 1]} : vector<16x1024xf32> to vector<16x128xf32>
    %147 = arith.addf %145, %146 : vector<16x128xf32>
    %148 = vector.extract_strided_slice %108 {offsets = [0, 384], sizes = [16, 128], strides = [1, 1]} : vector<16x1024xf32> to vector<16x128xf32>
    %149 = arith.addf %147, %148 : vector<16x128xf32>
    %150 = vector.extract_strided_slice %108 {offsets = [0, 512], sizes = [16, 128], strides = [1, 1]} : vector<16x1024xf32> to vector<16x128xf32>
    %151 = arith.addf %149, %150 : vector<16x128xf32>
    %152 = vector.extract_strided_slice %108 {offsets = [0, 640], sizes = [16, 128], strides = [1, 1]} : vector<16x1024xf32> to vector<16x128xf32>
    %153 = arith.addf %151, %152 : vector<16x128xf32>
    %154 = vector.extract_strided_slice %108 {offsets = [0, 768], sizes = [16, 128], strides = [1, 1]} : vector<16x1024xf32> to vector<16x128xf32>
    %155 = arith.addf %153, %154 : vector<16x128xf32>
    %156 = vector.extract_strided_slice %108 {offsets = [0, 896], sizes = [16, 128], strides = [1, 1]} : vector<16x1024xf32> to vector<16x128xf32>
    %157 = arith.addf %155, %156 : vector<16x128xf32>
    %cst_30 = arith.constant 1.250000e-01 : f32
    %158 = vector.broadcast %cst_30 : f32 to vector<16x128xf32>
    %159 = arith.mulf %157, %158 : vector<16x128xf32>
    %c0_31 = arith.constant 0 : index
    %c0_32 = arith.constant 0 : index
    %160 = vector.load %arg9[%c0_31, %c0_32] : memref<32x32xf32, #tpu.memory_space<vmem>>, vector<32x32xf32>
    %c0_33 = arith.constant 0 : index
    %c0_34 = arith.constant 0 : index
    %c0_35 = arith.constant 0 : index
    %161 = vector.load %arg5[%c0_33, %c0_34, %c0_35] : memref<2x16x16xf32, #tpu.memory_space<vmem>>, vector<1x16x16xf32>
    %162 = vector.shape_cast %161 : vector<1x16x16xf32> to vector<16x16xf32>
    %cst_36 = arith.constant dense<0.000000e+00> : vector<16x128xf32>
    %163 = tpu.matmul %162, %125, %cst_36 {dimension_numbers = #tpu.dot_dimension_numbers<[1], [0], [0], [1], [0, 0, 1, 1], [], []>} : vector<16x16xf32>, vector<16x128xf32>, vector<16x128xf32> -> vector<16x128xf32>
    %cst_37 = arith.constant dense<0.000000e+00> : vector<16x128xf32>
    %164 = tpu.matmul %162, %142, %cst_37 {dimension_numbers = #tpu.dot_dimension_numbers<[1], [0], [0], [1], [0, 0, 1, 1], [], []>} : vector<16x16xf32>, vector<16x128xf32>, vector<16x128xf32> -> vector<16x128xf32>
    %cst_38 = arith.constant dense<0.000000e+00> : vector<16x128xf32>
    %165 = tpu.matmul %162, %159, %cst_38 {dimension_numbers = #tpu.dot_dimension_numbers<[1], [0], [0], [1], [0, 0, 1, 1], [], []>} : vector<16x16xf32>, vector<16x128xf32>, vector<16x128xf32> -> vector<16x128xf32>
    %c0_39 = arith.constant 0 : index
    %c0_40 = arith.constant 0 : index
    %c0_41 = arith.constant 0 : index
    %166 = vector.load %arg6[%c0_39, %c0_40, %c0_41] : memref<2x16x16xf32, #tpu.memory_space<vmem>>, vector<1x16x16xf32>
    %167 = vector.shape_cast %166 : vector<1x16x16xf32> to vector<16x16xf32>
    %cst_42 = arith.constant dense<0.000000e+00> : vector<16x128xf32>
    %168 = tpu.matmul %167, %163, %cst_42 {dimension_numbers = #tpu.dot_dimension_numbers<[1], [0], [0], [1], [0, 0, 1, 1], [], []>} : vector<16x16xf32>, vector<16x128xf32>, vector<16x128xf32> -> vector<16x128xf32>
    %cst_43 = arith.constant dense<0.000000e+00> : vector<16x128xf32>
    %169 = tpu.matmul %167, %164, %cst_43 {dimension_numbers = #tpu.dot_dimension_numbers<[1], [0], [0], [1], [0, 0, 1, 1], [], []>} : vector<16x16xf32>, vector<16x128xf32>, vector<16x128xf32> -> vector<16x128xf32>
    %cst_44 = arith.constant dense<0.000000e+00> : vector<16x128xf32>
    %170 = tpu.matmul %167, %165, %cst_44 {dimension_numbers = #tpu.dot_dimension_numbers<[1], [0], [0], [1], [0, 0, 1, 1], [], []>} : vector<16x16xf32>, vector<16x128xf32>, vector<16x128xf32> -> vector<16x128xf32>
    %171 = arith.mulf %168, %168 : vector<16x128xf32>
    %172 = arith.mulf %169, %169 : vector<16x128xf32>
    %173 = arith.addf %171, %172 : vector<16x128xf32>
    %174 = arith.mulf %170, %170 : vector<16x128xf32>
    %175 = arith.addf %173, %174 : vector<16x128xf32>
    %cst_45 = arith.constant 1.000000e-24 : f32
    %176 = vector.broadcast %cst_45 : f32 to vector<16x128xf32>
    %177 = arith.maximumf %175, %176 : vector<16x128xf32>
    %178 = math.rsqrt %177 : vector<16x128xf32>
    %179 = arith.mulf %168, %178 : vector<16x128xf32>
    %180 = arith.mulf %169, %178 : vector<16x128xf32>
    %181 = arith.mulf %170, %178 : vector<16x128xf32>
    %182 = arith.mulf %163, %179 : vector<16x128xf32>
    %183 = arith.mulf %164, %180 : vector<16x128xf32>
    %184 = arith.addf %182, %183 : vector<16x128xf32>
    %185 = arith.mulf %165, %181 : vector<16x128xf32>
    %186 = arith.addf %184, %185 : vector<16x128xf32>
    %cst_46 = arith.constant 0.000000e+00 : f32
    %187 = vector.broadcast %cst_46 : f32 to vector<16x128xf32>
    %188 = arith.cmpf oge, %186, %187 : vector<16x128xf32>
    %cst_47 = arith.constant 2.000000e-01 : f32
    %189 = vector.broadcast %cst_47 : f32 to vector<16x128xf32>
    %190 = arith.mulf %189, %186 : vector<16x128xf32>
    %191 = arith.select %188, %186, %190 : vector<16x128xi1>, vector<16x128xf32>
    %192 = arith.subf %191, %186 : vector<16x128xf32>
    %193 = arith.mulf %192, %179 : vector<16x128xf32>
    %194 = arith.addf %163, %193 : vector<16x128xf32>
    %195 = arith.mulf %192, %180 : vector<16x128xf32>
    %196 = arith.addf %164, %195 : vector<16x128xf32>
    %197 = arith.mulf %192, %181 : vector<16x128xf32>
    %198 = arith.addf %165, %197 : vector<16x128xf32>
    %c0_48 = arith.constant 0 : index
    %c0_49 = arith.constant 0 : index
    %c0_50 = arith.constant 0 : index
    %199 = vector.load %arg7[%c0_48, %c0_49, %c0_50] : memref<2x16x32xf32, #tpu.memory_space<vmem>>, vector<1x16x32xf32>
    %200 = vector.shape_cast %199 : vector<1x16x32xf32> to vector<16x32xf32>
    %201 = vector.extract_strided_slice %200 {offsets = [0, 0], sizes = [16, 16], strides = [1, 1]} : vector<16x32xf32> to vector<16x16xf32>
    %202 = vector.extract_strided_slice %200 {offsets = [0, 16], sizes = [16, 16], strides = [1, 1]} : vector<16x32xf32> to vector<16x16xf32>
    %cst_51 = arith.constant dense<0.000000e+00> : vector<16x4xf32>
    %203 = tpu.matmul %194, %13, %cst_51 {dimension_numbers = #tpu.dot_dimension_numbers<[1], [0], [0], [1], [0, 0, 1, 1], [], []>} : vector<16x128xf32>, vector<128x4xf32>, vector<16x4xf32> -> vector<16x4xf32>
    %cst_52 = arith.constant dense<0.000000e+00> : vector<16x4xf32>
    %204 = tpu.matmul %202, %203, %cst_52 {dimension_numbers = #tpu.dot_dimension_numbers<[1], [0], [0], [1], [0, 0, 1, 1], [], []>} : vector<16x16xf32>, vector<16x4xf32>, vector<16x4xf32> -> vector<16x4xf32>
    %cst_53 = arith.constant dense<0.000000e+00> : vector<16x128xf32>
    %205 = tpu.matmul %201, %194, %cst_53 {dimension_numbers = #tpu.dot_dimension_numbers<[1], [0], [0], [1], [0, 0, 1, 1], [], []>} : vector<16x16xf32>, vector<16x128xf32>, vector<16x128xf32> -> vector<16x128xf32>
    %cst_54 = arith.constant dense<0.000000e+00> : vector<16x128xf32>
    %206 = tpu.matmul %204, %27, %cst_54 {dimension_numbers = #tpu.dot_dimension_numbers<[1], [0], [0], [1], [0, 0, 1, 1], [], []>} : vector<16x4xf32>, vector<4x128xf32>, vector<16x128xf32> -> vector<16x128xf32>
    %207 = arith.addf %205, %206 : vector<16x128xf32>
    %cst_55 = arith.constant dense<0.000000e+00> : vector<16x4xf32>
    %208 = tpu.matmul %196, %13, %cst_55 {dimension_numbers = #tpu.dot_dimension_numbers<[1], [0], [0], [1], [0, 0, 1, 1], [], []>} : vector<16x128xf32>, vector<128x4xf32>, vector<16x4xf32> -> vector<16x4xf32>
    %cst_56 = arith.constant dense<0.000000e+00> : vector<16x4xf32>
    %209 = tpu.matmul %202, %208, %cst_56 {dimension_numbers = #tpu.dot_dimension_numbers<[1], [0], [0], [1], [0, 0, 1, 1], [], []>} : vector<16x16xf32>, vector<16x4xf32>, vector<16x4xf32> -> vector<16x4xf32>
    %cst_57 = arith.constant dense<0.000000e+00> : vector<16x128xf32>
    %210 = tpu.matmul %201, %196, %cst_57 {dimension_numbers = #tpu.dot_dimension_numbers<[1], [0], [0], [1], [0, 0, 1, 1], [], []>} : vector<16x16xf32>, vector<16x128xf32>, vector<16x128xf32> -> vector<16x128xf32>
    %cst_58 = arith.constant dense<0.000000e+00> : vector<16x128xf32>
    %211 = tpu.matmul %209, %27, %cst_58 {dimension_numbers = #tpu.dot_dimension_numbers<[1], [0], [0], [1], [0, 0, 1, 1], [], []>} : vector<16x4xf32>, vector<4x128xf32>, vector<16x128xf32> -> vector<16x128xf32>
    %212 = arith.addf %210, %211 : vector<16x128xf32>
    %cst_59 = arith.constant dense<0.000000e+00> : vector<16x4xf32>
    %213 = tpu.matmul %198, %13, %cst_59 {dimension_numbers = #tpu.dot_dimension_numbers<[1], [0], [0], [1], [0, 0, 1, 1], [], []>} : vector<16x128xf32>, vector<128x4xf32>, vector<16x4xf32> -> vector<16x4xf32>
    %cst_60 = arith.constant dense<0.000000e+00> : vector<16x4xf32>
    %214 = tpu.matmul %202, %213, %cst_60 {dimension_numbers = #tpu.dot_dimension_numbers<[1], [0], [0], [1], [0, 0, 1, 1], [], []>} : vector<16x16xf32>, vector<16x4xf32>, vector<16x4xf32> -> vector<16x4xf32>
    %cst_61 = arith.constant dense<0.000000e+00> : vector<16x128xf32>
    %215 = tpu.matmul %201, %198, %cst_61 {dimension_numbers = #tpu.dot_dimension_numbers<[1], [0], [0], [1], [0, 0, 1, 1], [], []>} : vector<16x16xf32>, vector<16x128xf32>, vector<16x128xf32> -> vector<16x128xf32>
    %cst_62 = arith.constant dense<0.000000e+00> : vector<16x128xf32>
    %216 = tpu.matmul %214, %27, %cst_62 {dimension_numbers = #tpu.dot_dimension_numbers<[1], [0], [0], [1], [0, 0, 1, 1], [], []>} : vector<16x4xf32>, vector<4x128xf32>, vector<16x128xf32> -> vector<16x128xf32>
    %217 = arith.addf %215, %216 : vector<16x128xf32>
    %c0_63 = arith.constant 0 : index
    %c0_64 = arith.constant 0 : index
    %c0_65 = arith.constant 0 : index
    %218 = vector.load %arg8[%c0_63, %c0_64, %c0_65] : memref<2x16x16xf32, #tpu.memory_space<vmem>>, vector<1x16x16xf32>
    %219 = vector.shape_cast %218 : vector<1x16x16xf32> to vector<16x16xf32>
    %cst_66 = arith.constant dense<0.000000e+00> : vector<16x128xf32>
    %220 = tpu.matmul %219, %207, %cst_66 {dimension_numbers = #tpu.dot_dimension_numbers<[1], [0], [0], [1], [0, 0, 1, 1], [], []>} : vector<16x16xf32>, vector<16x128xf32>, vector<16x128xf32> -> vector<16x128xf32>
    %cst_67 = arith.constant dense<0.000000e+00> : vector<16x128xf32>
    %221 = tpu.matmul %219, %212, %cst_67 {dimension_numbers = #tpu.dot_dimension_numbers<[1], [0], [0], [1], [0, 0, 1, 1], [], []>} : vector<16x16xf32>, vector<16x128xf32>, vector<16x128xf32> -> vector<16x128xf32>
    %cst_68 = arith.constant dense<0.000000e+00> : vector<16x128xf32>
    %222 = tpu.matmul %219, %217, %cst_68 {dimension_numbers = #tpu.dot_dimension_numbers<[1], [0], [0], [1], [0, 0, 1, 1], [], []>} : vector<16x16xf32>, vector<16x128xf32>, vector<16x128xf32> -> vector<16x128xf32>
    %223 = arith.mulf %220, %220 : vector<16x128xf32>
    %224 = arith.mulf %221, %221 : vector<16x128xf32>
    %225 = arith.addf %223, %224 : vector<16x128xf32>
    %226 = arith.mulf %222, %222 : vector<16x128xf32>
    %227 = arith.addf %225, %226 : vector<16x128xf32>
    %cst_69 = arith.constant 1.000000e-24 : f32
    %228 = vector.broadcast %cst_69 : f32 to vector<16x128xf32>
    %229 = arith.maximumf %227, %228 : vector<16x128xf32>
    %230 = math.rsqrt %229 : vector<16x128xf32>
    %231 = arith.mulf %220, %230 : vector<16x128xf32>
    %232 = arith.mulf %221, %230 : vector<16x128xf32>
    %233 = arith.mulf %222, %230 : vector<16x128xf32>
    %234 = arith.mulf %207, %231 : vector<16x128xf32>
    %235 = arith.mulf %212, %232 : vector<16x128xf32>
    %236 = arith.addf %234, %235 : vector<16x128xf32>
    %237 = arith.mulf %217, %233 : vector<16x128xf32>
    %238 = arith.addf %236, %237 : vector<16x128xf32>
    %cst_70 = arith.constant 0.000000e+00 : f32
    %239 = vector.broadcast %cst_70 : f32 to vector<16x128xf32>
    %240 = arith.cmpf oge, %238, %239 : vector<16x128xf32>
    %cst_71 = arith.constant 2.000000e-01 : f32
    %241 = vector.broadcast %cst_71 : f32 to vector<16x128xf32>
    %242 = arith.mulf %241, %238 : vector<16x128xf32>
    %243 = arith.select %240, %238, %242 : vector<16x128xi1>, vector<16x128xf32>
    %244 = arith.subf %243, %238 : vector<16x128xf32>
    %245 = arith.mulf %244, %231 : vector<16x128xf32>
    %246 = arith.addf %207, %245 : vector<16x128xf32>
    %247 = arith.mulf %244, %232 : vector<16x128xf32>
    %248 = arith.addf %212, %247 : vector<16x128xf32>
    %249 = arith.mulf %244, %233 : vector<16x128xf32>
    %250 = arith.addf %217, %249 : vector<16x128xf32>
    %251 = vector.extract_strided_slice %160 {offsets = [0, 0], sizes = [32, 16], strides = [1, 1]} : vector<32x32xf32> to vector<32x16xf32>
    %cst_72 = arith.constant dense<0.000000e+00> : vector<16x4xf32>
    %252 = tpu.matmul %246, %13, %cst_72 {dimension_numbers = #tpu.dot_dimension_numbers<[1], [0], [0], [1], [0, 0, 1, 1], [], []>} : vector<16x128xf32>, vector<128x4xf32>, vector<16x4xf32> -> vector<16x4xf32>
    %cst_73 = arith.constant dense<0.000000e+00> : vector<32x4xf32>
    %253 = tpu.matmul %251, %252, %cst_73 {dimension_numbers = #tpu.dot_dimension_numbers<[1], [0], [0], [1], [0, 0, 1, 1], [], []>} : vector<32x16xf32>, vector<16x4xf32>, vector<32x4xf32> -> vector<32x4xf32>
    %cst_74 = arith.constant dense<0.000000e+00> : vector<16x4xf32>
    %254 = tpu.matmul %248, %13, %cst_74 {dimension_numbers = #tpu.dot_dimension_numbers<[1], [0], [0], [1], [0, 0, 1, 1], [], []>} : vector<16x128xf32>, vector<128x4xf32>, vector<16x4xf32> -> vector<16x4xf32>
    %cst_75 = arith.constant dense<0.000000e+00> : vector<32x4xf32>
    %255 = tpu.matmul %251, %254, %cst_75 {dimension_numbers = #tpu.dot_dimension_numbers<[1], [0], [0], [1], [0, 0, 1, 1], [], []>} : vector<32x16xf32>, vector<16x4xf32>, vector<32x4xf32> -> vector<32x4xf32>
    %cst_76 = arith.constant dense<0.000000e+00> : vector<16x4xf32>
    %256 = tpu.matmul %250, %13, %cst_76 {dimension_numbers = #tpu.dot_dimension_numbers<[1], [0], [0], [1], [0, 0, 1, 1], [], []>} : vector<16x128xf32>, vector<128x4xf32>, vector<16x4xf32> -> vector<16x4xf32>
    %cst_77 = arith.constant dense<0.000000e+00> : vector<32x4xf32>
    %257 = tpu.matmul %251, %256, %cst_77 {dimension_numbers = #tpu.dot_dimension_numbers<[1], [0], [0], [1], [0, 0, 1, 1], [], []>} : vector<32x16xf32>, vector<16x4xf32>, vector<32x4xf32> -> vector<32x4xf32>
    %c1 = arith.constant 1 : index
    %c0_78 = arith.constant 0 : index
    %c0_79 = arith.constant 0 : index
    %258 = vector.load %arg5[%c1, %c0_78, %c0_79] : memref<2x16x16xf32, #tpu.memory_space<vmem>>, vector<1x16x16xf32>
    %259 = vector.shape_cast %258 : vector<1x16x16xf32> to vector<16x16xf32>
    %cst_80 = arith.constant dense<0.000000e+00> : vector<16x128xf32>
    %260 = tpu.matmul %259, %246, %cst_80 {dimension_numbers = #tpu.dot_dimension_numbers<[1], [0], [0], [1], [0, 0, 1, 1], [], []>} : vector<16x16xf32>, vector<16x128xf32>, vector<16x128xf32> -> vector<16x128xf32>
    %cst_81 = arith.constant dense<0.000000e+00> : vector<16x128xf32>
    %261 = tpu.matmul %259, %248, %cst_81 {dimension_numbers = #tpu.dot_dimension_numbers<[1], [0], [0], [1], [0, 0, 1, 1], [], []>} : vector<16x16xf32>, vector<16x128xf32>, vector<16x128xf32> -> vector<16x128xf32>
    %cst_82 = arith.constant dense<0.000000e+00> : vector<16x128xf32>
    %262 = tpu.matmul %259, %250, %cst_82 {dimension_numbers = #tpu.dot_dimension_numbers<[1], [0], [0], [1], [0, 0, 1, 1], [], []>} : vector<16x16xf32>, vector<16x128xf32>, vector<16x128xf32> -> vector<16x128xf32>
    %c1_83 = arith.constant 1 : index
    %c0_84 = arith.constant 0 : index
    %c0_85 = arith.constant 0 : index
    %263 = vector.load %arg6[%c1_83, %c0_84, %c0_85] : memref<2x16x16xf32, #tpu.memory_space<vmem>>, vector<1x16x16xf32>
    %264 = vector.shape_cast %263 : vector<1x16x16xf32> to vector<16x16xf32>
    %cst_86 = arith.constant dense<0.000000e+00> : vector<16x128xf32>
    %265 = tpu.matmul %264, %260, %cst_86 {dimension_numbers = #tpu.dot_dimension_numbers<[1], [0], [0], [1], [0, 0, 1, 1], [], []>} : vector<16x16xf32>, vector<16x128xf32>, vector<16x128xf32> -> vector<16x128xf32>
    %cst_87 = arith.constant dense<0.000000e+00> : vector<16x128xf32>
    %266 = tpu.matmul %264, %261, %cst_87 {dimension_numbers = #tpu.dot_dimension_numbers<[1], [0], [0], [1], [0, 0, 1, 1], [], []>} : vector<16x16xf32>, vector<16x128xf32>, vector<16x128xf32> -> vector<16x128xf32>
    %cst_88 = arith.constant dense<0.000000e+00> : vector<16x128xf32>
    %267 = tpu.matmul %264, %262, %cst_88 {dimension_numbers = #tpu.dot_dimension_numbers<[1], [0], [0], [1], [0, 0, 1, 1], [], []>} : vector<16x16xf32>, vector<16x128xf32>, vector<16x128xf32> -> vector<16x128xf32>
    %268 = arith.mulf %265, %265 : vector<16x128xf32>
    %269 = arith.mulf %266, %266 : vector<16x128xf32>
    %270 = arith.addf %268, %269 : vector<16x128xf32>
    %271 = arith.mulf %267, %267 : vector<16x128xf32>
    %272 = arith.addf %270, %271 : vector<16x128xf32>
    %cst_89 = arith.constant 1.000000e-24 : f32
    %273 = vector.broadcast %cst_89 : f32 to vector<16x128xf32>
    %274 = arith.maximumf %272, %273 : vector<16x128xf32>
    %275 = math.rsqrt %274 : vector<16x128xf32>
    %276 = arith.mulf %265, %275 : vector<16x128xf32>
    %277 = arith.mulf %266, %275 : vector<16x128xf32>
    %278 = arith.mulf %267, %275 : vector<16x128xf32>
    %279 = arith.mulf %260, %276 : vector<16x128xf32>
    %280 = arith.mulf %261, %277 : vector<16x128xf32>
    %281 = arith.addf %279, %280 : vector<16x128xf32>
    %282 = arith.mulf %262, %278 : vector<16x128xf32>
    %283 = arith.addf %281, %282 : vector<16x128xf32>
    %cst_90 = arith.constant 0.000000e+00 : f32
    %284 = vector.broadcast %cst_90 : f32 to vector<16x128xf32>
    %285 = arith.cmpf oge, %283, %284 : vector<16x128xf32>
    %cst_91 = arith.constant 2.000000e-01 : f32
    %286 = vector.broadcast %cst_91 : f32 to vector<16x128xf32>
    %287 = arith.mulf %286, %283 : vector<16x128xf32>
    %288 = arith.select %285, %283, %287 : vector<16x128xi1>, vector<16x128xf32>
    %289 = arith.subf %288, %283 : vector<16x128xf32>
    %290 = arith.mulf %289, %276 : vector<16x128xf32>
    %291 = arith.addf %260, %290 : vector<16x128xf32>
    %292 = arith.mulf %289, %277 : vector<16x128xf32>
    %293 = arith.addf %261, %292 : vector<16x128xf32>
    %294 = arith.mulf %289, %278 : vector<16x128xf32>
    %295 = arith.addf %262, %294 : vector<16x128xf32>
    %c1_92 = arith.constant 1 : index
    %c0_93 = arith.constant 0 : index
    %c0_94 = arith.constant 0 : index
    %296 = vector.load %arg7[%c1_92, %c0_93, %c0_94] : memref<2x16x32xf32, #tpu.memory_space<vmem>>, vector<1x16x32xf32>
    %297 = vector.shape_cast %296 : vector<1x16x32xf32> to vector<16x32xf32>
    %298 = vector.extract_strided_slice %297 {offsets = [0, 0], sizes = [16, 16], strides = [1, 1]} : vector<16x32xf32> to vector<16x16xf32>
    %299 = vector.extract_strided_slice %297 {offsets = [0, 16], sizes = [16, 16], strides = [1, 1]} : vector<16x32xf32> to vector<16x16xf32>
    %cst_95 = arith.constant dense<0.000000e+00> : vector<16x4xf32>
    %300 = tpu.matmul %291, %13, %cst_95 {dimension_numbers = #tpu.dot_dimension_numbers<[1], [0], [0], [1], [0, 0, 1, 1], [], []>} : vector<16x128xf32>, vector<128x4xf32>, vector<16x4xf32> -> vector<16x4xf32>
    %cst_96 = arith.constant dense<0.000000e+00> : vector<16x4xf32>
    %301 = tpu.matmul %299, %300, %cst_96 {dimension_numbers = #tpu.dot_dimension_numbers<[1], [0], [0], [1], [0, 0, 1, 1], [], []>} : vector<16x16xf32>, vector<16x4xf32>, vector<16x4xf32> -> vector<16x4xf32>
    %cst_97 = arith.constant dense<0.000000e+00> : vector<16x128xf32>
    %302 = tpu.matmul %298, %291, %cst_97 {dimension_numbers = #tpu.dot_dimension_numbers<[1], [0], [0], [1], [0, 0, 1, 1], [], []>} : vector<16x16xf32>, vector<16x128xf32>, vector<16x128xf32> -> vector<16x128xf32>
    %cst_98 = arith.constant dense<0.000000e+00> : vector<16x128xf32>
    %303 = tpu.matmul %301, %27, %cst_98 {dimension_numbers = #tpu.dot_dimension_numbers<[1], [0], [0], [1], [0, 0, 1, 1], [], []>} : vector<16x4xf32>, vector<4x128xf32>, vector<16x128xf32> -> vector<16x128xf32>
    %304 = arith.addf %302, %303 : vector<16x128xf32>
    %cst_99 = arith.constant dense<0.000000e+00> : vector<16x4xf32>
    %305 = tpu.matmul %293, %13, %cst_99 {dimension_numbers = #tpu.dot_dimension_numbers<[1], [0], [0], [1], [0, 0, 1, 1], [], []>} : vector<16x128xf32>, vector<128x4xf32>, vector<16x4xf32> -> vector<16x4xf32>
    %cst_100 = arith.constant dense<0.000000e+00> : vector<16x4xf32>
    %306 = tpu.matmul %299, %305, %cst_100 {dimension_numbers = #tpu.dot_dimension_numbers<[1], [0], [0], [1], [0, 0, 1, 1], [], []>} : vector<16x16xf32>, vector<16x4xf32>, vector<16x4xf32> -> vector<16x4xf32>
    %cst_101 = arith.constant dense<0.000000e+00> : vector<16x128xf32>
    %307 = tpu.matmul %298, %293, %cst_101 {dimension_numbers = #tpu.dot_dimension_numbers<[1], [0], [0], [1], [0, 0, 1, 1], [], []>} : vector<16x16xf32>, vector<16x128xf32>, vector<16x128xf32> -> vector<16x128xf32>
    %cst_102 = arith.constant dense<0.000000e+00> : vector<16x128xf32>
    %308 = tpu.matmul %306, %27, %cst_102 {dimension_numbers = #tpu.dot_dimension_numbers<[1], [0], [0], [1], [0, 0, 1, 1], [], []>} : vector<16x4xf32>, vector<4x128xf32>, vector<16x128xf32> -> vector<16x128xf32>
    %309 = arith.addf %307, %308 : vector<16x128xf32>
    %cst_103 = arith.constant dense<0.000000e+00> : vector<16x4xf32>
    %310 = tpu.matmul %295, %13, %cst_103 {dimension_numbers = #tpu.dot_dimension_numbers<[1], [0], [0], [1], [0, 0, 1, 1], [], []>} : vector<16x128xf32>, vector<128x4xf32>, vector<16x4xf32> -> vector<16x4xf32>
    %cst_104 = arith.constant dense<0.000000e+00> : vector<16x4xf32>
    %311 = tpu.matmul %299, %310, %cst_104 {dimension_numbers = #tpu.dot_dimension_numbers<[1], [0], [0], [1], [0, 0, 1, 1], [], []>} : vector<16x16xf32>, vector<16x4xf32>, vector<16x4xf32> -> vector<16x4xf32>
    %cst_105 = arith.constant dense<0.000000e+00> : vector<16x128xf32>
    %312 = tpu.matmul %298, %295, %cst_105 {dimension_numbers = #tpu.dot_dimension_numbers<[1], [0], [0], [1], [0, 0, 1, 1], [], []>} : vector<16x16xf32>, vector<16x128xf32>, vector<16x128xf32> -> vector<16x128xf32>
    %cst_106 = arith.constant dense<0.000000e+00> : vector<16x128xf32>
    %313 = tpu.matmul %311, %27, %cst_106 {dimension_numbers = #tpu.dot_dimension_numbers<[1], [0], [0], [1], [0, 0, 1, 1], [], []>} : vector<16x4xf32>, vector<4x128xf32>, vector<16x128xf32> -> vector<16x128xf32>
    %314 = arith.addf %312, %313 : vector<16x128xf32>
    %c1_107 = arith.constant 1 : index
    %c0_108 = arith.constant 0 : index
    %c0_109 = arith.constant 0 : index
    %315 = vector.load %arg8[%c1_107, %c0_108, %c0_109] : memref<2x16x16xf32, #tpu.memory_space<vmem>>, vector<1x16x16xf32>
    %316 = vector.shape_cast %315 : vector<1x16x16xf32> to vector<16x16xf32>
    %cst_110 = arith.constant dense<0.000000e+00> : vector<16x128xf32>
    %317 = tpu.matmul %316, %304, %cst_110 {dimension_numbers = #tpu.dot_dimension_numbers<[1], [0], [0], [1], [0, 0, 1, 1], [], []>} : vector<16x16xf32>, vector<16x128xf32>, vector<16x128xf32> -> vector<16x128xf32>
    %cst_111 = arith.constant dense<0.000000e+00> : vector<16x128xf32>
    %318 = tpu.matmul %316, %309, %cst_111 {dimension_numbers = #tpu.dot_dimension_numbers<[1], [0], [0], [1], [0, 0, 1, 1], [], []>} : vector<16x16xf32>, vector<16x128xf32>, vector<16x128xf32> -> vector<16x128xf32>
    %cst_112 = arith.constant dense<0.000000e+00> : vector<16x128xf32>
    %319 = tpu.matmul %316, %314, %cst_112 {dimension_numbers = #tpu.dot_dimension_numbers<[1], [0], [0], [1], [0, 0, 1, 1], [], []>} : vector<16x16xf32>, vector<16x128xf32>, vector<16x128xf32> -> vector<16x128xf32>
    %320 = arith.mulf %317, %317 : vector<16x128xf32>
    %321 = arith.mulf %318, %318 : vector<16x128xf32>
    %322 = arith.addf %320, %321 : vector<16x128xf32>
    %323 = arith.mulf %319, %319 : vector<16x128xf32>
    %324 = arith.addf %322, %323 : vector<16x128xf32>
    %cst_113 = arith.constant 1.000000e-24 : f32
    %325 = vector.broadcast %cst_113 : f32 to vector<16x128xf32>
    %326 = arith.maximumf %324, %325 : vector<16x128xf32>
    %327 = math.rsqrt %326 : vector<16x128xf32>
    %328 = arith.mulf %317, %327 : vector<16x128xf32>
    %329 = arith.mulf %318, %327 : vector<16x128xf32>
    %330 = arith.mulf %319, %327 : vector<16x128xf32>
    %331 = arith.mulf %304, %328 : vector<16x128xf32>
    %332 = arith.mulf %309, %329 : vector<16x128xf32>
    %333 = arith.addf %331, %332 : vector<16x128xf32>
    %334 = arith.mulf %314, %330 : vector<16x128xf32>
    %335 = arith.addf %333, %334 : vector<16x128xf32>
    %cst_114 = arith.constant 0.000000e+00 : f32
    %336 = vector.broadcast %cst_114 : f32 to vector<16x128xf32>
    %337 = arith.cmpf oge, %335, %336 : vector<16x128xf32>
    %cst_115 = arith.constant 2.000000e-01 : f32
    %338 = vector.broadcast %cst_115 : f32 to vector<16x128xf32>
    %339 = arith.mulf %338, %335 : vector<16x128xf32>
    %340 = arith.select %337, %335, %339 : vector<16x128xi1>, vector<16x128xf32>
    %341 = arith.subf %340, %335 : vector<16x128xf32>
    %342 = arith.mulf %341, %328 : vector<16x128xf32>
    %343 = arith.addf %304, %342 : vector<16x128xf32>
    %344 = arith.mulf %341, %329 : vector<16x128xf32>
    %345 = arith.addf %309, %344 : vector<16x128xf32>
    %346 = arith.mulf %341, %330 : vector<16x128xf32>
    %347 = arith.addf %314, %346 : vector<16x128xf32>
    %348 = vector.extract_strided_slice %160 {offsets = [0, 16], sizes = [32, 16], strides = [1, 1]} : vector<32x32xf32> to vector<32x16xf32>
    %cst_116 = arith.constant dense<0.000000e+00> : vector<16x4xf32>
    %349 = tpu.matmul %343, %13, %cst_116 {dimension_numbers = #tpu.dot_dimension_numbers<[1], [0], [0], [1], [0, 0, 1, 1], [], []>} : vector<16x128xf32>, vector<128x4xf32>, vector<16x4xf32> -> vector<16x4xf32>
    %cst_117 = arith.constant dense<0.000000e+00> : vector<32x4xf32>
    %350 = tpu.matmul %348, %349, %cst_117 {dimension_numbers = #tpu.dot_dimension_numbers<[1], [0], [0], [1], [0, 0, 1, 1], [], []>} : vector<32x16xf32>, vector<16x4xf32>, vector<32x4xf32> -> vector<32x4xf32>
    %cst_118 = arith.constant dense<0.000000e+00> : vector<16x4xf32>
    %351 = tpu.matmul %345, %13, %cst_118 {dimension_numbers = #tpu.dot_dimension_numbers<[1], [0], [0], [1], [0, 0, 1, 1], [], []>} : vector<16x128xf32>, vector<128x4xf32>, vector<16x4xf32> -> vector<16x4xf32>
    %cst_119 = arith.constant dense<0.000000e+00> : vector<32x4xf32>
    %352 = tpu.matmul %348, %351, %cst_119 {dimension_numbers = #tpu.dot_dimension_numbers<[1], [0], [0], [1], [0, 0, 1, 1], [], []>} : vector<32x16xf32>, vector<16x4xf32>, vector<32x4xf32> -> vector<32x4xf32>
    %cst_120 = arith.constant dense<0.000000e+00> : vector<16x4xf32>
    %353 = tpu.matmul %347, %13, %cst_120 {dimension_numbers = #tpu.dot_dimension_numbers<[1], [0], [0], [1], [0, 0, 1, 1], [], []>} : vector<16x128xf32>, vector<128x4xf32>, vector<16x4xf32> -> vector<16x4xf32>
    %cst_121 = arith.constant dense<0.000000e+00> : vector<32x4xf32>
    %354 = tpu.matmul %348, %353, %cst_121 {dimension_numbers = #tpu.dot_dimension_numbers<[1], [0], [0], [1], [0, 0, 1, 1], [], []>} : vector<32x16xf32>, vector<16x4xf32>, vector<32x4xf32> -> vector<32x4xf32>
    %355 = arith.addf %253, %350 : vector<32x4xf32>
    %356 = arith.addf %255, %352 : vector<32x4xf32>
    %357 = arith.addf %257, %354 : vector<32x4xf32>
    %c0_122 = arith.constant 0 : index
    %c0_123 = arith.constant 0 : index
    %c0_124 = arith.constant 0 : index
    %c0_125 = arith.constant 0 : index
    %358 = vector.load %arg11[%c0_122, %c0_123, %c0_124, %c0_125] : memref<1x3x32x4xf32, #tpu.memory_space<vmem>>, vector<1x1x32x4xf32>
    %359 = vector.shape_cast %358 : vector<1x1x32x4xf32> to vector<32x4xf32>
    %360 = vector.shape_cast %355 : vector<32x4xf32> to vector<1x1x32x4xf32>
    tpu.vector_store %arg11[%c0_122, %c0_123, %c0_124, %c0_125], %360 {strides = array<i32>} : memref<1x3x32x4xf32, #tpu.memory_space<vmem>>, vector<1x1x32x4xf32>,
    %c0_126 = arith.constant 0 : index
    %c1_127 = arith.constant 1 : index
    %c0_128 = arith.constant 0 : index
    %c0_129 = arith.constant 0 : index
    %361 = vector.load %arg11[%c0_126, %c1_127, %c0_128, %c0_129] : memref<1x3x32x4xf32, #tpu.memory_space<vmem>>, vector<1x1x32x4xf32>
    %362 = vector.shape_cast %361 : vector<1x1x32x4xf32> to vector<32x4xf32>
    %363 = vector.shape_cast %356 : vector<32x4xf32> to vector<1x1x32x4xf32>
    tpu.vector_store %arg11[%c0_126, %c1_127, %c0_128, %c0_129], %363 {strides = array<i32>} : memref<1x3x32x4xf32, #tpu.memory_space<vmem>>, vector<1x1x32x4xf32>,
    %c0_130 = arith.constant 0 : index
    %c2 = arith.constant 2 : index
    %c0_131 = arith.constant 0 : index
    %c0_132 = arith.constant 0 : index
    %364 = vector.load %arg11[%c0_130, %c2, %c0_131, %c0_132] : memref<1x3x32x4xf32, #tpu.memory_space<vmem>>, vector<1x1x32x4xf32>
    %365 = vector.shape_cast %364 : vector<1x1x32x4xf32> to vector<32x4xf32>
    %366 = vector.shape_cast %357 : vector<32x4xf32> to vector<1x1x32x4xf32>
    tpu.vector_store %arg11[%c0_130, %c2, %c0_131, %c0_132], %366 {strides = array<i32>} : memref<1x3x32x4xf32, #tpu.memory_space<vmem>>, vector<1x1x32x4xf32>,
    %c0_133 = arith.constant 0 : index
    %c0_134 = arith.constant 0 : index
    %367 = vector.load %arg10[%c0_133, %c0_134] : memref<32x32xf32, #tpu.memory_space<vmem>>, vector<32x32xf32>
    %cst_135 = arith.constant dense<0.000000e+00> : vector<32x4xf32>
    %368 = tpu.matmul %367, %355, %cst_135 {dimension_numbers = #tpu.dot_dimension_numbers<[1], [0], [0], [1], [0, 0, 1, 1], [], []>} : vector<32x32xf32>, vector<32x4xf32>, vector<32x4xf32> -> vector<32x4xf32>
    %c0_136 = arith.constant 0 : index
    %c0_137 = arith.constant 0 : index
    %369 = vector.load %arg10[%c0_136, %c0_137] : memref<32x32xf32, #tpu.memory_space<vmem>>, vector<32x32xf32>
    %cst_138 = arith.constant dense<0.000000e+00> : vector<32x4xf32>
    %370 = tpu.matmul %369, %356, %cst_138 {dimension_numbers = #tpu.dot_dimension_numbers<[1], [0], [0], [1], [0, 0, 1, 1], [], []>} : vector<32x32xf32>, vector<32x4xf32>, vector<32x4xf32> -> vector<32x4xf32>
    %c0_139 = arith.constant 0 : index
    %c0_140 = arith.constant 0 : index
    %371 = vector.load %arg10[%c0_139, %c0_140] : memref<32x32xf32, #tpu.memory_space<vmem>>, vector<32x32xf32>
    %cst_141 = arith.constant dense<0.000000e+00> : vector<32x4xf32>
    %372 = tpu.matmul %371, %357, %cst_141 {dimension_numbers = #tpu.dot_dimension_numbers<[1], [0], [0], [1], [0, 0, 1, 1], [], []>} : vector<32x32xf32>, vector<32x4xf32>, vector<32x4xf32> -> vector<32x4xf32>
    %373 = arith.mulf %368, %355 : vector<32x4xf32>
    %374 = arith.mulf %370, %356 : vector<32x4xf32>
    %375 = arith.addf %373, %374 : vector<32x4xf32>
    %376 = arith.mulf %372, %357 : vector<32x4xf32>
    %377 = arith.addf %375, %376 : vector<32x4xf32>
    %c0_142 = arith.constant 0 : index
    %c0_143 = arith.constant 0 : index
    %c0_144 = arith.constant 0 : index
    %378 = vector.load %arg12[%c0_142, %c0_143, %c0_144] : memref<1x32x4xf32, #tpu.memory_space<vmem>>, vector<1x32x4xf32>
    %379 = vector.shape_cast %378 : vector<1x32x4xf32> to vector<32x4xf32>
    %380 = vector.shape_cast %377 : vector<32x4xf32> to vector<1x32x4xf32>
    tpu.vector_store %arg12[%c0_142, %c0_143, %c0_144], %380 {strides = array<i32>} : memref<1x32x4xf32, #tpu.memory_space<vmem>>, vector<1x32x4xf32>,
    return
  }
  func.func @transform_0(%arg0: i32) -> (i32, i32, i32) {
    %c0_i32 = arith.constant 0 : i32
    %c0_i32_0 = arith.constant 0 : i32
    %c0_i32_1 = arith.constant 0 : i32
    return %arg0, %c0_i32, %c0_i32_0 : i32, i32, i32
  }
  func.func @transform_1(%arg0: i32) -> (i32, i32, i32) {
    %c0_i32 = arith.constant 0 : i32
    %c0_i32_0 = arith.constant 0 : i32
    %c0_i32_1 = arith.constant 0 : i32
    return %arg0, %c0_i32, %c0_i32_0 : i32, i32, i32
  }
  func.func @transform_2(%arg0: i32) -> (i32, i32) {
    %c0_i32 = arith.constant 0 : i32
    %c0_i32_0 = arith.constant 0 : i32
    %c0_i32_1 = arith.constant 0 : i32
    return %c0_i32, %c0_i32_0 : i32, i32
  }
  func.func @transform_3(%arg0: i32) -> (i32, i32) {
    %c0_i32 = arith.constant 0 : i32
    %c0_i32_0 = arith.constant 0 : i32
    %c0_i32_1 = arith.constant 0 : i32
    return %c0_i32, %c0_i32_0 : i32, i32
  }
  func.func @transform_4(%arg0: i32) -> (i32, i32, i32) {
    %c0_i32 = arith.constant 0 : i32
    %c0_i32_0 = arith.constant 0 : i32
    %c0_i32_1 = arith.constant 0 : i32
    %c0_i32_2 = arith.constant 0 : i32
    return %c0_i32, %c0_i32_0, %c0_i32_1 : i32, i32, i32
  }
  func.func @transform_5(%arg0: i32) -> (i32, i32, i32) {
    %c0_i32 = arith.constant 0 : i32
    %c0_i32_0 = arith.constant 0 : i32
    %c0_i32_1 = arith.constant 0 : i32
    %c0_i32_2 = arith.constant 0 : i32
    return %c0_i32, %c0_i32_0, %c0_i32_1 : i32, i32, i32
  }
  func.func @transform_6(%arg0: i32) -> (i32, i32, i32) {
    %c0_i32 = arith.constant 0 : i32
    %c0_i32_0 = arith.constant 0 : i32
    %c0_i32_1 = arith.constant 0 : i32
    %c0_i32_2 = arith.constant 0 : i32
    return %c0_i32, %c0_i32_0, %c0_i32_1 : i32, i32, i32
  }
  func.func @transform_7(%arg0: i32) -> (i32, i32, i32) {
    %c0_i32 = arith.constant 0 : i32
    %c0_i32_0 = arith.constant 0 : i32
    %c0_i32_1 = arith.constant 0 : i32
    %c0_i32_2 = arith.constant 0 : i32
    return %c0_i32, %c0_i32_0, %c0_i32_1 : i32, i32, i32
  }
  func.func @transform_8(%arg0: i32) -> (i32, i32) {
    %c0_i32 = arith.constant 0 : i32
    %c0_i32_0 = arith.constant 0 : i32
    %c0_i32_1 = arith.constant 0 : i32
    return %c0_i32, %c0_i32_0 : i32, i32
  }
  func.func @transform_9(%arg0: i32) -> (i32, i32) {
    %c0_i32 = arith.constant 0 : i32
    %c0_i32_0 = arith.constant 0 : i32
    %c0_i32_1 = arith.constant 0 : i32
    return %c0_i32, %c0_i32_0 : i32, i32
  }
  func.func @transform_10(%arg0: i32) -> (i32, i32, i32, i32) {
    %c0_i32 = arith.constant 0 : i32
    %c0_i32_0 = arith.constant 0 : i32
    %c0_i32_1 = arith.constant 0 : i32
    %c0_i32_2 = arith.constant 0 : i32
    return %arg0, %c0_i32, %c0_i32_0, %c0_i32_1 : i32, i32, i32, i32
  }
  func.func @transform_11(%arg0: i32) -> (i32, i32, i32) {
    %c0_i32 = arith.constant 0 : i32
    %c0_i32_0 = arith.constant 0 : i32
    %c0_i32_1 = arith.constant 0 : i32
    return %arg0, %c0_i32, %c0_i32_0 : i32, i32, i32
  }
}

</mosaic_0001>

<llo_original>
// kernel: neg.1
$region0: #{neg.1}
  #allocation0 [shape = 's32[1]{0}', space=sflag, size = 0x4, scoped, tag = 'scoped memory for neg.1']
  %s0 = inlined_call_operand.vmem [shape: f32[4,32,32], index: 0, kind: input, shape index: {}]
  %s1 = inlined_call_operand.vmem [shape: f32[4,32,32], index: 1, kind: output, shape index: {}]
  %v2 = vld [vmem:[%s0] sm:$0xff]
  %3 = xla_tuple %v2
  %4 = xla_tuple %3
  %v5 = vxor.u32 %v2, 2147483648
  %6 = xla_tuple %v5
  %7 = vst [vmem:[%s1] sm:$0xff] %v5
  %s8 = scalar_lea.vmem %s0, 32
  %v9 = vld [vmem:[%s8] sm:$0xff]
  %10 = xla_tuple %v9
  %11 = xla_tuple %10
  %v12 = vxor.u32 %v9, 2147483648
  %13 = xla_tuple %v12
  %s14 = scalar_lea.vmem %s1, 32
  %15 = vst [vmem:[%s14] sm:$0xff] %v12
  %s16 = scalar_lea.vmem %s0, 64
  %v17 = vld [vmem:[%s16] sm:$0xff]
  %18 = xla_tuple %v17
  %19 = xla_tuple %18
  %v20 = vxor.u32 %v17, 2147483648
  %21 = xla_tuple %v20
  %s22 = scalar_lea.vmem %s1, 64
  %23 = vst [vmem:[%s22] sm:$0xff] %v20
  %s24 = scalar_lea.vmem %s0, 96
  %v25 = vld [vmem:[%s24] sm:$0xff]
  %26 = xla_tuple %v25
  %27 = xla_tuple %26
  %v28 = vxor.u32 %v25, 2147483648
  %29 = xla_tuple %v28
  %s30 = scalar_lea.vmem %s1, 96
  %31 = vst [vmem:[%s30] sm:$0xff] %v28
  %s32 = scalar_lea.vmem %s0, 8
  %v33 = vld [vmem:[%s32] sm:$0xff]
  %34 = xla_tuple %v33
  %35 = xla_tuple %34
  %v36 = vxor.u32 %v33, 2147483648
  %37 = xla_tuple %v36
  %s38 = scalar_lea.vmem %s1, 8
  %39 = vst [vmem:[%s38] sm:$0xff] %v36
  %s40 = scalar_lea.vmem %s0, 40
  %v41 = vld [vmem:[%s40] sm:$0xff]
  %42 = xla_tuple %v41
  %43 = xla_tuple %42
  %v44 = vxor.u32 %v41, 2147483648
  %45 = xla_tuple %v44
  %s46 = scalar_lea.vmem %s1, 40
  %47 = vst [vmem:[%s46] sm:$0xff] %v44
  %s48 = scalar_lea.vmem %s0, 72
  %v49 = vld [vmem:[%s48] sm:$0xff]
  %50 = xla_tuple %v49
  %51 = xla_tuple %50
  %v52 = vxor.u32 %v49, 2147483648
  %53 = xla_tuple %v52
  %s54 = scalar_lea.vmem %s1, 72
  %55 = vst [vmem:[%s54] sm:$0xff] %v52
  %s56 = scalar_lea.vmem %s0, 104
  %v57 = vld [vmem:[%s56] sm:$0xff]
  %58 = xla_tuple %v57
  %59 = xla_tuple %58
  %v60 = vxor.u32 %v57, 2147483648
  %61 = xla_tuple %v60
  %s62 = scalar_lea.vmem %s1, 104
  %63 = vst [vmem:[%s62] sm:$0xff] %v60
  %s64 = scalar_lea.vmem %s0, 16
  %v65 = vld [vmem:[%s64] sm:$0xff]
  %66 = xla_tuple %v65
  %67 = xla_tuple %66
  %v68 = vxor.u32 %v65, 2147483648
  %69 = xla_tuple %v68
  %s70 = scalar_lea.vmem %s1, 16
  %71 = vst [vmem:[%s70] sm:$0xff] %v68
  %s72 = scalar_lea.vmem %s0, 48
  %v73 = vld [vmem:[%s72] sm:$0xff]
  %74 = xla_tuple %v73
  %75 = xla_tuple %74
  %v76 = vxor.u32 %v73, 2147483648
  %77 = xla_tuple %v76
  %s78 = scalar_lea.vmem %s1, 48
  %79 = vst [vmem:[%s78] sm:$0xff] %v76
  %s80 = scalar_lea.vmem %s0, 80
  %v81 = vld [vmem:[%s80] sm:$0xff]
  %82 = xla_tuple %v81
  %83 = xla_tuple %82
  %v84 = vxor.u32 %v81, 2147483648
  %85 = xla_tuple %v84
  %s86 = scalar_lea.vmem %s1, 80
  %87 = vst [vmem:[%s86] sm:$0xff] %v84
  %s88 = scalar_lea.vmem %s0, 112
  %v89 = vld [vmem:[%s88] sm:$0xff]
  %90 = xla_tuple %v89
  %91 = xla_tuple %90
  %v92 = vxor.u32 %v89, 2147483648
  %93 = xla_tuple %v92
  %s94 = scalar_lea.vmem %s1, 112
  %95 = vst [vmem:[%s94] sm:$0xff] %v92
  %s96 = scalar_lea.vmem %s0, 24
  %v97 = vld [vmem:[%s96] sm:$0xff]
  %98 = xla_tuple %v97
  %99 = xla_tuple %98
  %v100 = vxor.u32 %v97, 2147483648
  %101 = xla_tuple %v100
  %s102 = scalar_lea.vmem %s1, 24
  %103 = vst [vmem:[%s102] sm:$0xff] %v100
  %s104 = scalar_lea.vmem %s0, 56
  %v105 = vld [vmem:[%s104] sm:$0xff]
  %106 = xla_tuple %v105
  %107 = xla_tuple %106
  %v108 = vxor.u32 %v105, 2147483648
  %109 = xla_tuple %v108
  %s110 = scalar_lea.vmem %s1, 56
  %111 = vst [vmem:[%s110] sm:$0xff] %v108
  %s112 = scalar_lea.vmem %s0, 88
  %v113 = vld [vmem:[%s112] sm:$0xff]
  %114 = xla_tuple %v113
  %115 = xla_tuple %114
  %v116 = vxor.u32 %v113, 2147483648
  %117 = xla_tuple %v116
  %s118 = scalar_lea.vmem %s1, 88
  %119 = vst [vmem:[%s118] sm:$0xff] %v116
  %s120 = scalar_lea.vmem %s0, 120
  %v121 = vld [vmem:[%s120] sm:$0xff]
  %122 = xla_tuple %v121
  %123 = xla_tuple %122
  %v124 = vxor.u32 %v121, 2147483648
  %125 = xla_tuple %v124
  %s126 = scalar_lea.vmem %s1, 120
  %127 = vst [vmem:[%s126] sm:$0xff] %v124

// kernel: _lambda_.2
$region0: #{_lambda_.2}
  #allocation0 [shape = 'u32[]', space=smem, size = 0x4, offset = 0x4, fixed_abs, tag = 'smem constant byte address 0x4 - core index']
  #allocation1 [shape = 'u32[144,128]{1,0:T(1,128)}', space=vmem, size = 0x12000, scoped, tag = 'internal scratch']
  %s0 = inlined_call_operand.vmem [shape: f32[1,3,128], index: 0, kind: input, shape index: {}]
  %s1 = inlined_call_operand.vmem [shape: f32[1,3,128], index: 1, kind: output, shape index: {0}]
  %s2 = inlined_call_operand.vmem [shape: f32[1,3,4], index: 2, kind: output, shape index: {1}]
  %s3 = inlined_call_operand.hbm [shape: f32[1,1,4], index: 3, kind: output, shape index: {2}]
  %4 = xla_tuple %s1, %s2, %s3
  %s5 = sld [smem:[#allocation0]]
  $region30: #{_lambda_.2} parent=0
    _
  %s7 = ssub.s32 1, %s5
  %s8 = scalar_select 0, %s7, %s5
  $region1: #{_lambda_.2} parent=0
    #allocation2 [shape = 'u8[512]{0}', space=vmem, size = 0x400, scoped, tag = 'output window, operand 2, single buffered']
    #allocation3 [shape = 's32[1]{0}', space=sflag, size = 0x4, scoped, tag = 'scoped memory for _lambda_.2']
    %9 = vsyncpa [#allocation3], 0
    // Predicated region
    $region2: #{_lambda_.2} parent=1 // pred_check
      _
    $region3: #{_lambda_.2} parent=1 // pred_check_branch
      %11 = sbr.rel (0) target = $region5
    $region4: #{_lambda_.2} parent=1 // pred_region
      _
    $region5: #{_lambda_.2} parent=1 // pred_fallthru
      _
    %v12 = vlaneseq
    %v13 = vshrl.u32 %v12, 7
    %v14 = vadd.s32 %v13, 8
    %v15 = vadd.s32 %v13, 16
    %v16 = vadd.s32 %v13, 24
    %v17 = vadd.s32 %v13, 32
    %v18 = vadd.s32 %v13, 40
    %v19 = vadd.s32 %v13, 48
    %v20 = vadd.s32 %v13, 56
    %v21 = vadd.s32 %v13, 64
    %v22 = vadd.s32 %v13, 72
    %v23 = vadd.s32 %v13, 80
    %v24 = vadd.s32 %v13, 88
    %v25 = vadd.s32 %v13, 96
    %v26 = vadd.s32 %v13, 104
    %v27 = vadd.s32 %v13, 112
    %v28 = vadd.s32 %v13, 120
    %v29 = vlaneseq
    %v30 = vand.u32 %v29, 127
    %v31 = vmul.u32 %v30, 32
    %vm32 = vcmp.ge.s32.totalorder %v13, %v31
    %vm33 = vcmp.ge.s32.totalorder %v14, %v31
    %vm34 = vcmp.ge.s32.totalorder %v15, %v31
    %vm35 = vcmp.ge.s32.totalorder %v16, %v31
    %vm36 = vcmp.ge.s32.totalorder %v17, %v31
    %vm37 = vcmp.ge.s32.totalorder %v18, %v31
    %vm38 = vcmp.ge.s32.totalorder %v19, %v31
    %vm39 = vcmp.ge.s32.totalorder %v20, %v31
    %vm40 = vcmp.ge.s32.totalorder %v21, %v31
    %vm41 = vcmp.ge.s32.totalorder %v22, %v31
    %vm42 = vcmp.ge.s32.totalorder %v23, %v31
    %vm43 = vcmp.ge.s32.totalorder %v24, %v31
    %vm44 = vcmp.ge.s32.totalorder %v25, %v31
    %vm45 = vcmp.ge.s32.totalorder %v26, %v31
    %vm46 = vcmp.ge.s32.totalorder %v27, %v31
    %vm47 = vcmp.ge.s32.totalorder %v28, %v31
    %v48 = vadd.s32 %v31, 32
    %vm49 = vcmp.lt.s32.totalorder %v13, %v48
    %vm50 = vcmp.lt.s32.totalorder %v14, %v48
    %vm51 = vcmp.lt.s32.totalorder %v15, %v48
    %vm52 = vcmp.lt.s32.totalorder %v16, %v48
    %vm53 = vcmp.lt.s32.totalorder %v17, %v48
    %vm54 = vcmp.lt.s32.totalorder %v18, %v48
    %vm55 = vcmp.lt.s32.totalorder %v19, %v48
    %vm56 = vcmp.lt.s32.totalorder %v20, %v48
    %vm57 = vcmp.lt.s32.totalorder %v21, %v48
    %vm58 = vcmp.lt.s32.totalorder %v22, %v48
    %vm59 = vcmp.lt.s32.totalorder %v23, %v48
    %vm60 = vcmp.lt.s32.totalorder %v24, %v48
    %vm61 = vcmp.lt.s32.totalorder %v25, %v48
    %vm62 = vcmp.lt.s32.totalorder %v26, %v48
    %vm63 = vcmp.lt.s32.totalorder %v27, %v48
    %vm64 = vcmp.lt.s32.totalorder %v28, %v48
    %vm65 = vmand %vm32, %vm49
    %vm66 = vmand %vm33, %vm50
    %vm67 = vmand %vm34, %vm51
    %vm68 = vmand %vm35, %vm52
    %vm69 = vmand %vm36, %vm53
    %vm70 = vmand %vm37, %vm54
    %vm71 = vmand %vm38, %vm55
    %vm72 = vmand %vm39, %vm56
    %vm73 = vmand %vm40, %vm57
    %vm74 = vmand %vm41, %vm58
    %vm75 = vmand %vm42, %vm59
    %vm76 = vmand %vm43, %vm60
    %vm77 = vmand %vm44, %vm61
    %vm78 = vmand %vm45, %vm62
    %vm79 = vmand %vm46, %vm63
    %vm80 = vmand %vm47, %vm64
    %v81 = vsel %vm65, 0.03125, 0.0
    %v82 = vsel %vm66, 0.03125, 0.0
    %v83 = vsel %vm67, 0.03125, 0.0
    %v84 = vsel %vm68, 0.03125, 0.0
    %v85 = vsel %vm69, 0.03125, 0.0
    %v86 = vsel %vm70, 0.03125, 0.0
    %v87 = vsel %vm71, 0.03125, 0.0
    %v88 = vsel %vm72, 0.03125, 0.0
    %v89 = vsel %vm73, 0.03125, 0.0
    %v90 = vsel %vm74, 0.03125, 0.0
    %v91 = vsel %vm75, 0.03125, 0.0
    %v92 = vsel %vm76, 0.03125, 0.0
    %v93 = vsel %vm77, 0.03125, 0.0
    %v94 = vsel %vm78, 0.03125, 0.0
    %v95 = vsel %vm79, 0.03125, 0.0
    %v96 = vsel %vm80, 0.03125, 0.0
    %v97 = vmul.u32 %v13, 32
    %vm98 = vcmp.ge.s32.totalorder %v30, %v97
    %v99 = vadd.s32 %v97, 32
    %vm100 = vcmp.lt.s32.totalorder %v30, %v99
    %vm101 = vmand %vm98, %vm100
    %v102 = vsel %vm101, 1.0, 0.0
    %v103 = vld [vmem:[%s0] sm:$0x7]
    %104 = vmatprep.subr.mxu0 0.0
    %105 = vmatpush1.msra.mxu0 %v81
    %106 = vmatprep.subr.mxu0 0.0
    %107 = vmatpush1.msra.mxu0 %v82
    %108 = vmatprep.subr.mxu0 0.0
    %109 = vmatpush1.msra.mxu0 %v83
    %110 = vmatprep.subr.mxu0 0.0
    %111 = vmatpush1.msra.mxu0 %v84
    %112 = vmatprep.subr.mxu0 0.0
    %113 = vmatpush1.msra.mxu0 %v85
    %114 = vmatprep.subr.mxu0 0.0
    %115 = vmatpush1.msra.mxu0 %v86
    %116 = vmatprep.subr.mxu0 0.0
    %117 = vmatpush1.msra.mxu0 %v87
    %118 = vmatprep.subr.mxu0 0.0
    %119 = vmatpush1.msra.mxu0 %v88
    %120 = vmatprep.subr.mxu0 0.0
    %121 = vmatpush1.msra.mxu0 %v89
    %122 = vmatprep.subr.mxu0 0.0
    %123 = vmatpush1.msra.mxu0 %v90
    %124 = vmatprep.subr.mxu0 0.0
    %125 = vmatpush1.msra.mxu0 %v91
    %126 = vmatprep.subr.mxu0 0.0
    %127 = vmatpush1.msra.mxu0 %v92
    %128 = vmatprep.subr.mxu0 0.0
    %129 = vmatpush1.msra.mxu0 %v93
    %130 = vmatprep.subr.mxu0 0.0
    %131 = vmatpush1.msra.mxu0 %v94
    %132 = vmatprep.subr.mxu0 0.0
    %133 = vmatpush1.msra.mxu0 %v95
    %134 = vmatprep.subr.mxu0 0.0
    %135 = vmatpush1.msra.mxu0 %v96
    %136 = vmatprep.subr.mxu0 0.0
    %137 = vmatpush1.msra.mxu0 0.0
    %138 = vmatprep.subr.mxu0 0.0
    %139 = vmatpush1.msra.mxu0 0.0
    %140 = vmatprep.subr.mxu0 0.0
    %141 = vmatpush1.msra.mxu0 0.0
    %142 = vmatprep.subr.mxu0 0.0
    %143 = vmatpush1.msra.mxu0 0.0
    %144 = vmatprep.subr.mxu0 0.0
    %145 = vmatpush1.msra.mxu0 0.0
    %146 = vmatprep.subr.mxu0 0.0
    %147 = vmatpush1.msra.mxu0 0.0
    %148 = vmatprep.subr.mxu0 0.0
    %149 = vmatpush1.msra.mxu0 0.0
    %150 = vmatprep.subr.mxu0 0.0
    %151 = vmatpush1.msra.mxu0 0.0
    %152 = vmatprep.subr.mxu0 0.0
    %153 = vmatpush1.msra.mxu0 0.0
    %154 = vmatprep.subr.mxu0 0.0
    %155 = vmatpush1.msra.mxu0 0.0
    %156 = vmatprep.subr.mxu0 0.0
    %157 = vmatpush1.msra.mxu0 0.0
    %158 = vmatprep.subr.mxu0 0.0
    %159 = vmatpush1.msra.mxu0 0.0
    %160 = vmatprep.subr.mxu0 0.0
    %161 = vmatpush1.msra.mxu0 0.0
    %162 = vmatprep.subr.mxu0 0.0
    %163 = vmatpush1.msra.mxu0 0.0
    %164 = vmatprep.subr.mxu0 0.0
    %165 = vmatpush1.msra.mxu0 0.0
    %166 = vmatprep.subr.mxu0 0.0
    %167 = vmatpush1.msra.mxu0 0.0
    %168 = vmatprep.mubr.f32.mxu0 0.0
    %169 = vmatmul.mubr.f32.gmra.mrb[0].mxu0 %v103
    %v170 = vpop.f32.mrb[0].mxu0
    %v171 = vadd.f32 0.0, %v170
    %v172 = vpop.f32.mrb[0].mxu0
    %173 = vdwg.mxu0
    %vm174 = vcmask 31744
    %v176 = vsel %vm174, %v171, 0
    %vm178 = vcmask 1043456
    %v180 = vsel %vm178, %v102, 0
    %182 = vmatprep.subr.mxu0 0.0
    %183 = vmatpush1.msra.mxu0 %v180
    %184 = vmatprep.subr.mxu0 0.0
    %185 = vmatpush1.msra.mxu0 0.0
    %186 = vmatprep.subr.mxu0 0.0
    %187 = vmatpush1.msra.mxu0 0.0
    %188 = vmatprep.subr.mxu0 0.0
    %189 = vmatpush1.msra.mxu0 0.0
    %190 = vmatprep.subr.mxu0 0.0
    %191 = vmatpush1.msra.mxu0 0.0
    %192 = vmatprep.subr.mxu0 0.0
    %193 = vmatpush1.msra.mxu0 0.0
    %194 = vmatprep.subr.mxu0 0.0
    %195 = vmatpush1.msra.mxu0 0.0
    %196 = vmatprep.subr.mxu0 0.0
    %197 = vmatpush1.msra.mxu0 0.0
    %198 = vmatprep.subr.mxu0 0.0
    %199 = vmatpush1.msra.mxu0 0.0
    %200 = vmatprep.subr.mxu0 0.0
    %201 = vmatpush1.msra.mxu0 0.0
    %202 = vmatprep.subr.mxu0 0.0
    %203 = vmatpush1.msra.mxu0 0.0
    %204 = vmatprep.subr.mxu0 0.0
    %205 = vmatpush1.msra.mxu0 0.0
    %206 = vmatprep.subr.mxu0 0.0
    %207 = vmatpush1.msra.mxu0 0.0
    %208 = vmatprep.subr.mxu0 0.0
    %209 = vmatpush1.msra.mxu0 0.0
    %210 = vmatprep.subr.mxu0 0.0
    %211 = vmatpush1.msra.mxu0 0.0
    %212 = vmatprep.subr.mxu0 0.0
    %213 = vmatpush1.msra.mxu0 0.0
    %214 = vmatprep.subr.mxu0 0.0
    %215 = vmatpush1.msra.mxu0 0.0
    %216 = vmatprep.subr.mxu0 0.0
    %217 = vmatpush1.msra.mxu0 0.0
    %218 = vmatprep.subr.mxu0 0.0
    %219 = vmatpush1.msra.mxu0 0.0
    %220 = vmatprep.subr.mxu0 0.0
    %221 = vmatpush1.msra.mxu0 0.0
    %222 = vmatprep.subr.mxu0 0.0
    %223 = vmatpush1.msra.mxu0 0.0
    %224 = vmatprep.subr.mxu0 0.0
    %225 = vmatpush1.msra.mxu0 0.0
    %226 = vmatprep.subr.mxu0 0.0
    %227 = vmatpush1.msra.mxu0 0.0
    %228 = vmatprep.subr.mxu0 0.0
    %229 = vmatpush1.msra.mxu0 0.0
    %230 = vmatprep.subr.mxu0 0.0
    %231 = vmatpush1.msra.mxu0 0.0
    %232 = vmatprep.subr.mxu0 0.0
    %233 = vmatpush1.msra.mxu0 0.0
    %234 = vmatprep.subr.mxu0 0.0
    %235 = vmatpush1.msra.mxu0 0.0
    %236 = vmatprep.subr.mxu0 0.0
    %237 = vmatpush1.msra.mxu0 0.0
    %238 = vmatprep.subr.mxu0 0.0
    %239 = vmatpush1.msra.mxu0 0.0
    %240 = vmatprep.subr.mxu0 0.0
    %241 = vmatpush1.msra.mxu0 0.0
    %242 = vmatprep.subr.mxu0 0.0
    %243 = vmatpush1.msra.mxu0 0.0
    %244 = vmatprep.subr.mxu0 0.0
    %245 = vmatpush1.msra.mxu0 0.0
    %246 = vmatprep.mubr.f32.mxu0 0.0
    %247 = vmatmul.mubr.f32.gmra.mrb[0].mxu0 %v176
    %v248 = vpop.f32.mrb[0].mxu0
    %v249 = vadd.f32 0.0, %v248
    %v250 = vpop.f32.mrb[0].mxu0
    %251 = vdwg.mxu0
    %v252 = vsub.f32 %v103, %v249
    %v253 = vmul.f32 %v252, %v252
    %vm254 = vcmask 1042432
    %v255 = vsel %vm254, %v253, 0.0
    %v256 = vrot.slane %v255, 4
    %v257 = vadd.f32 %v255, %v256
    %v258 = vrot.slane %v257, 2
    %v259 = vadd.f32 %v257, %v258
    %v260 = vrot.slane %v259, 1
    %v261 = vadd.f32 %v259, %v260
    %v262 = vrsqrt.pop %v261
    %v263 = vmul.f32 %v261, %v262
    %vm264 = vcmp.eq.f32.partialorder %v261, inf
    %v265 = vsel %vm264, %v261, %v263
    %vm266 = vcmp.eq.f32.partialorder %v261, 0.0
    %v267 = vand.u32 %v261, 2147483648
    %v268 = vsel %vm266, %v267, %v265
    %269 = vmatprep.subr.mxu0 0.0
    %270 = vmatpush1.msra.mxu0 %v81
    %271 = vmatprep.subr.mxu0 0.0
    %272 = vmatpush1.msra.mxu0 %v82
    %273 = vmatprep.subr.mxu0 0.0
    %274 = vmatpush1.msra.mxu0 %v83
    %275 = vmatprep.subr.mxu0 0.0
    %276 = vmatpush1.msra.mxu0 %v84
    %277 = vmatprep.subr.mxu0 0.0
    %278 = vmatpush1.msra.mxu0 %v85
    %279 = vmatprep.subr.mxu0 0.0
    %280 = vmatpush1.msra.mxu0 %v86
    %281 = vmatprep.subr.mxu0 0.0
    %282 = vmatpush1.msra.mxu0 %v87
    %283 = vmatprep.subr.mxu0 0.0
    %284 = vmatpush1.msra.mxu0 %v88
    %285 = vmatprep.subr.mxu0 0.0
    %286 = vmatpush1.msra.mxu0 %v89
    %287 = vmatprep.subr.mxu0 0.0
    %288 = vmatpush1.msra.mxu0 %v90
    %289 = vmatprep.subr.mxu0 0.0
    %290 = vmatpush1.msra.mxu0 %v91
    %291 = vmatprep.subr.mxu0 0.0
    %292 = vmatpush1.msra.mxu0 %v92
    %293 = vmatprep.subr.mxu0 0.0
    %294 = vmatpush1.msra.mxu0 %v93
    %295 = vmatprep.subr.mxu0 0.0
    %296 = vmatpush1.msra.mxu0 %v94
    %297 = vmatprep.subr.mxu0 0.0
    %298 = vmatpush1.msra.mxu0 %v95
    %299 = vmatprep.subr.mxu0 0.0
    %300 = vmatpush1.msra.mxu0 %v96
    %301 = vmatprep.subr.mxu0 0.0
    %302 = vmatpush1.msra.mxu0 0.0
    %303 = vmatprep.subr.mxu0 0.0
    %304 = vmatpush1.msra.mxu0 0.0
    %305 = vmatprep.subr.mxu0 0.0
    %306 = vmatpush1.msra.mxu0 0.0
    %307 = vmatprep.subr.mxu0 0.0
    %308 = vmatpush1.msra.mxu0 0.0
    %309 = vmatprep.subr.mxu0 0.0
    %310 = vmatpush1.msra.mxu0 0.0
    %311 = vmatprep.subr.mxu0 0.0
    %312 = vmatpush1.msra.mxu0 0.0
    %313 = vmatprep.subr.mxu0 0.0
    %314 = vmatpush1.msra.mxu0 0.0
    %315 = vmatprep.subr.mxu0 0.0
    %316 = vmatpush1.msra.mxu0 0.0
    %317 = vmatprep.subr.mxu0 0.0
    %318 = vmatpush1.msra.mxu0 0.0
    %319 = vmatprep.subr.mxu0 0.0
    %320 = vmatpush1.msra.mxu0 0.0
    %321 = vmatprep.subr.mxu0 0.0
    %322 = vmatpush1.msra.mxu0 0.0
    %323 = vmatprep.subr.mxu0 0.0
    %324 = vmatpush1.msra.mxu0 0.0
    %325 = vmatprep.subr.mxu0 0.0
    %326 = vmatpush1.msra.mxu0 0.0
    %327 = vmatprep.subr.mxu0 0.0
    %328 = vmatpush1.msra.mxu0 0.0
    %329 = vmatprep.subr.mxu0 0.0
    %330 = vmatpush1.msra.mxu0 0.0
    %331 = vmatprep.subr.mxu0 0.0
    %332 = vmatpush1.msra.mxu0 0.0
    %333 = vmatprep.mubr.f32.mxu0 0.0
    %334 = vmatmul.mubr.f32.gmra.mrb[0].mxu0 %v268
    %v335 = vpop.f32.mrb[0].mxu0
    %v336 = vadd.f32 0.0, %v335
    %v337 = vpop.f32.mrb[0].mxu0
    %338 = vdwg.mxu0
    %v340 = vsel %vm174, %v336, 0
    %342 = vmatprep.subr.mxu0 0.0
    %343 = vmatpush1.msra.mxu0 %v180
    %344 = vmatprep.subr.mxu0 0.0
    %345 = vmatpush1.msra.mxu0 0.0
    %346 = vmatprep.subr.mxu0 0.0
    %347 = vmatpush1.msra.mxu0 0.0
    %348 = vmatprep.subr.mxu0 0.0
    %349 = vmatpush1.msra.mxu0 0.0
    %350 = vmatprep.subr.mxu0 0.0
    %351 = vmatpush1.msra.mxu0 0.0
    %352 = vmatprep.subr.mxu0 0.0
    %353 = vmatpush1.msra.mxu0 0.0
    %354 = vmatprep.subr.mxu0 0.0
    %355 = vmatpush1.msra.mxu0 0.0
    %356 = vmatprep.subr.mxu0 0.0
    %357 = vmatpush1.msra.mxu0 0.0
    %358 = vmatprep.subr.mxu0 0.0
    %359 = vmatpush1.msra.mxu0 0.0
    %360 = vmatprep.subr.mxu0 0.0
    %361 = vmatpush1.msra.mxu0 0.0
    %362 = vmatprep.subr.mxu0 0.0
    %363 = vmatpush1.msra.mxu0 0.0
    %364 = vmatprep.subr.mxu0 0.0
    %365 = vmatpush1.msra.mxu0 0.0
    %366 = vmatprep.subr.mxu0 0.0
    %367 = vmatpush1.msra.mxu0 0.0
    %368 = vmatprep.subr.mxu0 0.0
    %369 = vmatpush1.msra.mxu0 0.0
    %370 = vmatprep.subr.mxu0 0.0
    %371 = vmatpush1.msra.mxu0 0.0
    %372 = vmatprep.subr.mxu0 0.0
    %373 = vmatpush1.msra.mxu0 0.0
    %374 = vmatprep.subr.mxu0 0.0
    %375 = vmatpush1.msra.mxu0 0.0
    %376 = vmatprep.subr.mxu0 0.0
    %377 = vmatpush1.msra.mxu0 0.0
    %378 = vmatprep.subr.mxu0 0.0
    %379 = vmatpush1.msra.mxu0 0.0
    %380 = vmatprep.subr.mxu0 0.0
    %381 = vmatpush1.msra.mxu0 0.0
    %382 = vmatprep.subr.mxu0 0.0
    %383 = vmatpush1.msra.mxu0 0.0
    %384 = vmatprep.subr.mxu0 0.0
    %385 = vmatpush1.msra.mxu0 0.0
    %386 = vmatprep.subr.mxu0 0.0
    %387 = vmatpush1.msra.mxu0 0.0
    %388 = vmatprep.subr.mxu0 0.0
    %389 = vmatpush1.msra.mxu0 0.0
    %390 = vmatprep.subr.mxu0 0.0
    %391 = vmatpush1.msra.mxu0 0.0
    %392 = vmatprep.subr.mxu0 0.0
    %393 = vmatpush1.msra.mxu0 0.0
    %394 = vmatprep.subr.mxu0 0.0
    %395 = vmatpush1.msra.mxu0 0.0
    %396 = vmatprep.subr.mxu0 0.0
    %397 = vmatpush1.msra.mxu0 0.0
    %398 = vmatprep.subr.mxu0 0.0
    %399 = vmatpush1.msra.mxu0 0.0
    %400 = vmatprep.subr.mxu0 0.0
    %401 = vmatpush1.msra.mxu0 0.0
    %402 = vmatprep.subr.mxu0 0.0
    %403 = vmatpush1.msra.mxu0 0.0
    %404 = vmatprep.subr.mxu0 0.0
    %405 = vmatpush1.msra.mxu0 0.0
    %406 = vmatprep.mubr.f32.mxu0 0.0
    %407 = vmatmul.mubr.f32.gmra.mrb[0].mxu0 %v340
    %v408 = vpop.f32.mrb[0].mxu0
    %v409 = vadd.f32 0.0, %v408
    %v410 = vpop.f32.mrb[0].mxu0
    %411 = vdwg.mxu0
    %v412 = vlaneseq
    %v413 = vshrl.u32 %v412, 7
    %v414 = vsub.s32 0, %v413
    %v415 = vrot.slane %v409, %v414
    %v416 = vrcp.pop %v415
    %v417 = vmul.f32 %v252, %v416
    %418 = vst [vmem:[%s1] sm:$0x7] %v417
    %vm419 = vcmask 26624
    %420 = vst.msk [vmem:[%s2] sm:$0x7] %vm419, %v171
    %vm421 = vcmask 24576
    %422 = vst.msk [vmem:[#allocation2] sm:$0x1] %vm421, %v336
    // Predicated region
    $region6: #{_lambda_.2} parent=1 // pred_check
      _
    $region7: #{_lambda_.2} parent=1 // pred_check_branch
      %424 = sbr.rel (0) target = $region9
    $region8: #{_lambda_.2} parent=1 // pred_region
      _
    $region9: #{_lambda_.2} parent=1 // pred_fallthru
      _
    // Predicated region
    $region10: #{_lambda_.2} parent=1 // pred_check
      _
    $region11: #{_lambda_.2} parent=1 // pred_check_branch
      %426 = sbr.rel (0) target = $region13
    $region12: #{_lambda_.2} parent=1 // pred_region
      _
    $region13: #{_lambda_.2} parent=1 // pred_fallthru
      _
    // Predicated region
    $region14: #{_lambda_.2} parent=1 // pred_check
      _
    $region15: #{_lambda_.2} parent=1 // pred_check_branch
      %428 = sbr.rel (0) target = $region17
    $region16: #{_lambda_.2} parent=1 // pred_region
      %s430 = ssub.s32 16, 16
      %431 = vsyncadd [#allocation3], %s430
      %s433 = sshll.u32 [#allocation2], 4
      %s434 = int_to_ptr.vmem [resolvable:$true] %s433
      %436 = dma.vmem_to_hbm [thread:$0]  %s434, 16, %s3, [#allocation3]
    $region17: #{_lambda_.2} parent=1 // pred_fallthru
      _
    // Predicated region
    $region18: #{_lambda_.2} parent=1 // pred_check
      _
    $region19: #{_lambda_.2} parent=1 // pred_check_branch
      %438 = sbr.rel (0) target = $region21
    $region20: #{_lambda_.2} parent=1 // pred_region
      _
    $region21: #{_lambda_.2} parent=1 // pred_fallthru
      _
    // Predicated region
    $region22: #{_lambda_.2} parent=1 // pred_check
      _
    $region23: #{_lambda_.2} parent=1 // pred_check_branch
      %440 = sbr.rel (0) target = $region25
    $region24: #{_lambda_.2} parent=1 // pred_region
      _
    $region25: #{_lambda_.2} parent=1 // pred_fallthru
      _
    // Predicated region
    $region26: #{_lambda_.2} parent=1 // pred_check
      _
    $region27: #{_lambda_.2} parent=1 // pred_check_branch
      %442 = sbr.rel (0) target = $region29
    $region28: #{_lambda_.2} parent=1 // pred_region
      %443 = dma.done [#allocation3], 16
    $region29: #{_lambda_.2} parent=1 // pred_fallthru
      _
    %444 = vsyncpa [#allocation3], 1

// kernel: _lambda_.3
$region0: #{_lambda_.3}
  #allocation0 [shape = 'u32[]', space=smem, size = 0x4, offset = 0x4, fixed_abs, tag = 'smem constant byte address 0x4 - core index']
  #allocation1 [shape = 'u32[144,128]{1,0:T(1,128)}', space=vmem, size = 0x12000, scoped, tag = 'internal scratch']
  %s0 = inlined_call_operand.vmem [shape: f32[1,3,128], index: 0, kind: input, shape index: {}]
  %s1 = inlined_call_operand.vmem [shape: f32[1,3,1024], index: 1, kind: input, shape index: {}]
  %s2 = inlined_call_operand.vmem [shape: f32[16,3], index: 2, kind: input, shape index: {}]
  %s3 = inlined_call_operand.vmem [shape: f32[16,16], index: 3, kind: input, shape index: {}]
  %s4 = inlined_call_operand.vmem [shape: f32[2,16,16], index: 4, kind: input, shape index: {}]
  %s5 = inlined_call_operand.vmem [shape: f32[2,16,16], index: 5, kind: input, shape index: {}]
  %s6 = inlined_call_operand.vmem [shape: f32[2,16,32], index: 6, kind: input, shape index: {}]
  %s7 = inlined_call_operand.vmem [shape: f32[2,16,16], index: 7, kind: input, shape index: {}]
  %s8 = inlined_call_operand.vmem [shape: f32[32,32], index: 8, kind: input, shape index: {}]
  %s9 = inlined_call_operand.vmem [shape: f32[32,32], index: 9, kind: input, shape index: {}]
  %s10 = inlined_call_operand.vmem [shape: f32[1,3,32,4], index: 10, kind: output, shape index: {0}]
  %s11 = inlined_call_operand.vmem [shape: f32[1,32,4], index: 11, kind: output, shape index: {1}]
  %12 = xla_tuple %s10, %s11
  %s13 = sld [smem:[#allocation0]]
  $region58: #{_lambda_.3} parent=0
    _
  %s15 = ssub.s32 1, %s13
  %s16 = scalar_select 0, %s15, %s13
  // Predicated region
  $region2: #{_lambda_.3} parent=0 // pred_check
    _
  $region3: #{_lambda_.3} parent=0 // pred_check_branch
    %18 = sbr.rel (0) target = $region5
  $region4: #{_lambda_.3} parent=0 // pred_region
    _
  $region5: #{_lambda_.3} parent=0 // pred_fallthru
    _
  // Predicated region
  $region6: #{_lambda_.3} parent=0 // pred_check
    _
  $region7: #{_lambda_.3} parent=0 // pred_check_branch
    %20 = sbr.rel (0) target = $region9
  $region8: #{_lambda_.3} parent=0 // pred_region
    _
  $region9: #{_lambda_.3} parent=0 // pred_fallthru
    _
  // Predicated region
  $region10: #{_lambda_.3} parent=0 // pred_check
    _
  $region11: #{_lambda_.3} parent=0 // pred_check_branch
    %22 = sbr.rel (0) target = $region13
  $region12: #{_lambda_.3} parent=0 // pred_region
    _
  $region13: #{_lambda_.3} parent=0 // pred_fallthru
    _
  // Predicated region
  $region14: #{_lambda_.3} parent=0 // pred_check
    _
  $region15: #{_lambda_.3} parent=0 // pred_check_branch
    %24 = sbr.rel (0) target = $region17
  $region16: #{_lambda_.3} parent=0 // pred_region
    _
  $region17: #{_lambda_.3} parent=0 // pred_fallthru
    _
  // Predicated region
  $region18: #{_lambda_.3} parent=0 // pred_check
    _
  $region19: #{_lambda_.3} parent=0 // pred_check_branch
    %26 = sbr.rel (0) target = $region21
  $region20: #{_lambda_.3} parent=0 // pred_region
    _
  $region21: #{_lambda_.3} parent=0 // pred_fallthru
    _
  // Predicated region
  $region22: #{_lambda_.3} parent=0 // pred_check
    _
  $region23: #{_lambda_.3} parent=0 // pred_check_branch
    %28 = sbr.rel (0) target = $region25
  $region24: #{_lambda_.3} parent=0 // pred_region
    _
  $region25: #{_lambda_.3} parent=0 // pred_fallthru
    _
  // Predicated region
  $region26: #{_lambda_.3} parent=0 // pred_check
    _
  $region27: #{_lambda_.3} parent=0 // pred_check_branch
    %30 = sbr.rel (0) target = $region29
  $region28: #{_lambda_.3} parent=0 // pred_region
    _
  $region29: #{_lambda_.3} parent=0 // pred_fallthru
    _
  // Predicated region
  $region30: #{_lambda_.3} parent=0 // pred_check
    _
  $region31: #{_lambda_.3} parent=0 // pred_check_branch
    %32 = sbr.rel (0) target = $region33
  $region32: #{_lambda_.3} parent=0 // pred_region
    _
  $region33: #{_lambda_.3} parent=0 // pred_fallthru
    _
  // Predicated region
  $region34: #{_lambda_.3} parent=0 // pred_check
    _
  $region35: #{_lambda_.3} parent=0 // pred_check_branch
    %34 = sbr.rel (0) target = $region37
  $region36: #{_lambda_.3} parent=0 // pred_region
    _
  $region37: #{_lambda_.3} parent=0 // pred_fallthru
    _
  // Predicated region
  $region38: #{_lambda_.3} parent=0 // pred_check
    _
  $region39: #{_lambda_.3} parent=0 // pred_check_branch
    %36 = sbr.rel (0) target = $region41
  $region40: #{_lambda_.3} parent=0 // pred_region
    _
  $region41: #{_lambda_.3} parent=0 // pred_fallthru
    _
  %v37 = vlaneseq
  %v38 = vshrl.u32 %v37, 7
  %v39 = vadd.s32 %v38, 8
  %v40 = vadd.s32 %v38, 16
  %v41 = vadd.s32 %v38, 24
  %v42 = vadd.s32 %v38, 32
  %v43 = vadd.s32 %v38, 40
  %v44 = vadd.s32 %v38, 48
  %v45 = vadd.s32 %v38, 56
  %v46 = vadd.s32 %v38, 64
  %v47 = vadd.s32 %v38, 72
  %v48 = vadd.s32 %v38, 80
  %v49 = vadd.s32 %v38, 88
  %v50 = vadd.s32 %v38, 96
  %v51 = vadd.s32 %v38, 104
  %v52 = vadd.s32 %v38, 112
  %v53 = vadd.s32 %v38, 120
  %v54 = vlaneseq
  %v55 = vand.u32 %v54, 127
  %v56 = vmul.u32 %v55, 32
  %vm57 = vcmp.ge.s32.totalorder %v38, %v56
  %vm58 = vcmp.ge.s32.totalorder %v39, %v56
  %vm59 = vcmp.ge.s32.totalorder %v40, %v56
  %vm60 = vcmp.ge.s32.totalorder %v41, %v56
  %vm61 = vcmp.ge.s32.totalorder %v42, %v56
  %vm62 = vcmp.ge.s32.totalorder %v43, %v56
  %vm63 = vcmp.ge.s32.totalorder %v44, %v56
  %vm64 = vcmp.ge.s32.totalorder %v45, %v56
  %vm65 = vcmp.ge.s32.totalorder %v46, %v56
  %vm66 = vcmp.ge.s32.totalorder %v47, %v56
  %vm67 = vcmp.ge.s32.totalorder %v48, %v56
  %vm68 = vcmp.ge.s32.totalorder %v49, %v56
  %vm69 = vcmp.ge.s32.totalorder %v50, %v56
  %vm70 = vcmp.ge.s32.totalorder %v51, %v56
  %vm71 = vcmp.ge.s32.totalorder %v52, %v56
  %vm72 = vcmp.ge.s32.totalorder %v53, %v56
  %v73 = vadd.s32 %v56, 32
  %vm74 = vcmp.lt.s32.totalorder %v38, %v73
  %vm75 = vcmp.lt.s32.totalorder %v39, %v73
  %vm76 = vcmp.lt.s32.totalorder %v40, %v73
  %vm77 = vcmp.lt.s32.totalorder %v41, %v73
  %vm78 = vcmp.lt.s32.totalorder %v42, %v73
  %vm79 = vcmp.lt.s32.totalorder %v43, %v73
  %vm80 = vcmp.lt.s32.totalorder %v44, %v73
  %vm81 = vcmp.lt.s32.totalorder %v45, %v73
  %vm82 = vcmp.lt.s32.totalorder %v46, %v73
  %vm83 = vcmp.lt.s32.totalorder %v47, %v73
  %vm84 = vcmp.lt.s32.totalorder %v48, %v73
  %vm85 = vcmp.lt.s32.totalorder %v49, %v73
  %vm86 = vcmp.lt.s32.totalorder %v50, %v73
  %vm87 = vcmp.lt.s32.totalorder %v51, %v73
  %vm88 = vcmp.lt.s32.totalorder %v52, %v73
  %vm89 = vcmp.lt.s32.totalorder %v53, %v73
  %vm90 = vmand %vm57, %vm74
  %vm91 = vmand %vm58, %vm75
  %vm92 = vmand %vm59, %vm76
  %vm93 = vmand %vm60, %vm77
  %vm94 = vmand %vm61, %vm78
  %vm95 = vmand %vm62, %vm79
  %vm96 = vmand %vm63, %vm80
  %vm97 = vmand %vm64, %vm81
  %vm98 = vmand %vm65, %vm82
  %vm99 = vmand %vm66, %vm83
  %vm100 = vmand %vm67, %vm84
  %vm101 = vmand %vm68, %vm85
  %vm102 = vmand %vm69, %vm86
  %vm103 = vmand %vm70, %vm87
  %vm104 = vmand %vm71, %vm88
  %vm105 = vmand %vm72, %vm89
  %v106 = vsel %vm90, 0.03125, 0.0
  %v107 = vsel %vm91, 0.03125, 0.0
  %v108 = vsel %vm92, 0.03125, 0.0
  %v109 = vsel %vm93, 0.03125, 0.0
  %v110 = vsel %vm94, 0.03125, 0.0
  %v111 = vsel %vm95, 0.03125, 0.0
  %v112 = vsel %vm96, 0.03125, 0.0
  %v113 = vsel %vm97, 0.03125, 0.0
  %v114 = vsel %vm98, 0.03125, 0.0
  %v115 = vsel %vm99, 0.03125, 0.0
  %v116 = vsel %vm100, 0.03125, 0.0
  %v117 = vsel %vm101, 0.03125, 0.0
  %v118 = vsel %vm102, 0.03125, 0.0
  %v119 = vsel %vm103, 0.03125, 0.0
  %v120 = vsel %vm104, 0.03125, 0.0
  %v121 = vsel %vm105, 0.03125, 0.0
  %v122 = vmul.u32 %v38, 32
  %vm123 = vcmp.ge.s32.totalorder %v55, %v122
  %v124 = vadd.s32 %v122, 32
  %vm125 = vcmp.lt.s32.totalorder %v55, %v124
  %vm126 = vmand %vm123, %vm125
  %v127 = vsel %vm126, 1.0, 0.0
  %v128 = vld [vmem:[%s0] sm:$0x7]
  %v129 = vld [vmem:[%s1] sm:$0x77]
  %v130 = vld [vmem:[%s1 + $0x8] sm:$0x77]
  %v131 = vld [vmem:[%s1 + $0x10] sm:$0x77]
  %v132 = vld [vmem:[%s1 + $0x18] sm:$0x77]
  %v133 = vmul.f32 %v128, %v128
  %vm134 = vcmask 1042432
  %v135 = vsel %vm134, %v133, 0.0
  %v136 = vrot.slane %v135, 4
  %v137 = vadd.f32 %v135, %v136
  %v138 = vrot.slane %v137, 2
  %v139 = vadd.f32 %v137, %v138
  %v140 = vrot.slane %v139, 1
  %v141 = vadd.f32 %v139, %v140
  %v142 = vmax.f32 %v141, 1e-24
  %v143 = vrsqrt.pop %v142
  %v144 = vmul.f32 %v128, %v143
  %v146 = vcombine.low %v128, %v128
  %v148 = vsub.f32 %v129, %v146
  %v149 = vsub.f32 %v130, %v146
  %v150 = vsub.f32 %v131, %v146
  %v151 = vsub.f32 %v132, %v146
  %v156 = vlaneseq
  %v157 = vshrl.u32 %v156, 7
  %v158 = vsub.s32 2, %v157
  %v159 = vrot.slane %v129, %v158
  %v160 = vlaneseq
  %v161 = vshrl.u32 %v160, 7
  %v162 = vsub.s32 6, %v161
  %v163 = vrot.slane %v129, %v162
  %v164 = vlaneseq
  %v165 = vshrl.u32 %v164, 7
  %v166 = vsub.s32 2, %v165
  %v167 = vrot.slane %v130, %v166
  %v168 = vlaneseq
  %v169 = vshrl.u32 %v168, 7
  %v170 = vsub.s32 6, %v169
  %v171 = vrot.slane %v130, %v170
  %v172 = vlaneseq
  %v173 = vshrl.u32 %v172, 7
  %v174 = vsub.s32 2, %v173
  %v175 = vrot.slane %v131, %v174
  %v176 = vlaneseq
  %v177 = vshrl.u32 %v176, 7
  %v178 = vsub.s32 6, %v177
  %v179 = vrot.slane %v131, %v178
  %v180 = vlaneseq
  %v181 = vshrl.u32 %v180, 7
  %v182 = vsub.s32 2, %v181
  %v183 = vrot.slane %v132, %v182
  %v184 = vlaneseq
  %v185 = vshrl.u32 %v184, 7
  %v186 = vsub.s32 6, %v185
  %v187 = vrot.slane %v132, %v186
  %v196 = vmul.f32 %v144, %v159
  %v197 = vmul.f32 %v144, %v163
  %v198 = vmul.f32 %v144, %v167
  %v199 = vmul.f32 %v144, %v171
  %v200 = vmul.f32 %v144, %v175
  %v201 = vmul.f32 %v144, %v179
  %v202 = vmul.f32 %v144, %v183
  %v203 = vmul.f32 %v144, %v187
  %v204 = vlaneseq
  %v205 = vshrl.u32 %v204, 7
  %v206 = vsub.s32 1, %v205
  %v207 = vrot.slane %v129, %v206
  %v208 = vlaneseq
  %v209 = vshrl.u32 %v208, 7
  %v210 = vsub.s32 5, %v209
  %v211 = vrot.slane %v129, %v210
  %v212 = vlaneseq
  %v213 = vshrl.u32 %v212, 7
  %v214 = vsub.s32 1, %v213
  %v215 = vrot.slane %v130, %v214
  %v216 = vlaneseq
  %v217 = vshrl.u32 %v216, 7
  %v218 = vsub.s32 5, %v217
  %v219 = vrot.slane %v130, %v218
  %v220 = vlaneseq
  %v221 = vshrl.u32 %v220, 7
  %v222 = vsub.s32 1, %v221
  %v223 = vrot.slane %v131, %v222
  %v224 = vlaneseq
  %v225 = vshrl.u32 %v224, 7
  %v226 = vsub.s32 5, %v225
  %v227 = vrot.slane %v131, %v226
  %v228 = vlaneseq
  %v229 = vshrl.u32 %v228, 7
  %v230 = vsub.s32 1, %v229
  %v231 = vrot.slane %v132, %v230
  %v232 = vlaneseq
  %v233 = vshrl.u32 %v232, 7
  %v234 = vsub.s32 5, %v233
  %v235 = vrot.slane %v132, %v234
  %v244 = vmul.f32 %v144, %v207
  %v245 = vmul.f32 %v144, %v211
  %v246 = vmul.f32 %v144, %v215
  %v247 = vmul.f32 %v144, %v219
  %v248 = vmul.f32 %v144, %v223
  %v249 = vmul.f32 %v144, %v227
  %v250 = vmul.f32 %v144, %v231
  %v251 = vmul.f32 %v144, %v235
  %v260 = vrot.slane %v244, 1
  %v261 = vrot.slane %v245, 1
  %v262 = vrot.slane %v246, 1
  %v263 = vrot.slane %v247, 1
  %v264 = vrot.slane %v248, 1
  %v265 = vrot.slane %v249, 1
  %v266 = vrot.slane %v250, 1
  %v267 = vrot.slane %v251, 1
  %v276 = vsub.f32 %v196, %v260
  %v277 = vsub.f32 %v197, %v261
  %v278 = vsub.f32 %v198, %v262
  %v279 = vsub.f32 %v199, %v263
  %v280 = vsub.f32 %v200, %v264
  %v281 = vsub.f32 %v201, %v265
  %v282 = vsub.f32 %v202, %v266
  %v283 = vsub.f32 %v203, %v267
  %v284 = vlaneseq
  %v285 = vshrl.u32 %v284, 7
  %v286 = vsub.s32 0, %v285
  %v287 = vrot.slane %v129, %v286
  %v288 = vlaneseq
  %v289 = vshrl.u32 %v288, 7
  %v290 = vsub.s32 4, %v289
  %v291 = vrot.slane %v129, %v290
  %v292 = vlaneseq
  %v293 = vshrl.u32 %v292, 7
  %v294 = vsub.s32 0, %v293
  %v295 = vrot.slane %v130, %v294
  %v296 = vlaneseq
  %v297 = vshrl.u32 %v296, 7
  %v298 = vsub.s32 4, %v297
  %v299 = vrot.slane %v130, %v298
  %v300 = vlaneseq
  %v301 = vshrl.u32 %v300, 7
  %v302 = vsub.s32 0, %v301
  %v303 = vrot.slane %v131, %v302
  %v304 = vlaneseq
  %v305 = vshrl.u32 %v304, 7
  %v306 = vsub.s32 4, %v305
  %v307 = vrot.slane %v131, %v306
  %v308 = vlaneseq
  %v309 = vshrl.u32 %v308, 7
  %v310 = vsub.s32 0, %v309
  %v311 = vrot.slane %v132, %v310
  %v312 = vlaneseq
  %v313 = vshrl.u32 %v312, 7
  %v314 = vsub.s32 4, %v313
  %v315 = vrot.slane %v132, %v314
  %v324 = vmul.f32 %v144, %v287
  %v325 = vmul.f32 %v144, %v291
  %v326 = vmul.f32 %v144, %v295
  %v327 = vmul.f32 %v144, %v299
  %v328 = vmul.f32 %v144, %v303
  %v329 = vmul.f32 %v144, %v307
  %v330 = vmul.f32 %v144, %v311
  %v331 = vmul.f32 %v144, %v315
  %v340 = vrot.slane %v196, 6
  %v341 = vrot.slane %v197, 6
  %v342 = vrot.slane %v198, 6
  %v343 = vrot.slane %v199, 6
  %v344 = vrot.slane %v200, 6
  %v345 = vrot.slane %v201, 6
  %v346 = vrot.slane %v202, 6
  %v347 = vrot.slane %v203, 6
  %v356 = vsub.f32 %v324, %v340
  %v357 = vsub.f32 %v325, %v341
  %v358 = vsub.f32 %v326, %v342
  %v359 = vsub.f32 %v327, %v343
  %v360 = vsub.f32 %v328, %v344
  %v361 = vsub.f32 %v329, %v345
  %v362 = vsub.f32 %v330, %v346
  %v363 = vsub.f32 %v331, %v347
  %v372 = vrot.slane %v324, 1
  %v373 = vrot.slane %v325, 1
  %v374 = vrot.slane %v326, 1
  %v375 = vrot.slane %v327, 1
  %v376 = vrot.slane %v328, 1
  %v377 = vrot.slane %v329, 1
  %v378 = vrot.slane %v330, 1
  %v379 = vrot.slane %v331, 1
  %v388 = vsub.f32 %v244, %v372
  %v389 = vsub.f32 %v245, %v373
  %v390 = vsub.f32 %v246, %v374
  %v391 = vsub.f32 %v247, %v375
  %v392 = vsub.f32 %v248, %v376
  %v393 = vsub.f32 %v249, %v377
  %v394 = vsub.f32 %v250, %v378
  %v395 = vsub.f32 %v251, %v379
  %v404 = vrot.slane %v276, 1
  %v405 = vrot.slane %v277, 1
  %v406 = vrot.slane %v278, 1
  %v407 = vrot.slane %v279, 1
  %v408 = vrot.slane %v280, 1
  %v409 = vrot.slane %v281, 1
  %v410 = vrot.slane %v282, 1
  %v411 = vrot.slane %v283, 1
  %v424 = vlaneseq
  %v425 = vshrl.u32 %v424, 7
  %v426 = vsub.s32 0, %v425
  %v427 = vrot.slane %v148, %v426
  %v428 = vlaneseq
  %v429 = vshrl.u32 %v428, 7
  %v430 = vsub.s32 4, %v429
  %v431 = vrot.slane %v148, %v430
  %v432 = vlaneseq
  %v433 = vshrl.u32 %v432, 7
  %v434 = vsub.s32 0, %v433
  %v435 = vrot.slane %v149, %v434
  %v436 = vlaneseq
  %v437 = vshrl.u32 %v436, 7
  %v438 = vsub.s32 4, %v437
  %v439 = vrot.slane %v149, %v438
  %v440 = vlaneseq
  %v441 = vshrl.u32 %v440, 7
  %v442 = vsub.s32 0, %v441
  %v443 = vrot.slane %v150, %v442
  %v444 = vlaneseq
  %v445 = vshrl.u32 %v444, 7
  %v446 = vsub.s32 4, %v445
  %v447 = vrot.slane %v150, %v446
  %v448 = vlaneseq
  %v449 = vshrl.u32 %v448, 7
  %v450 = vsub.s32 0, %v449
  %v451 = vrot.slane %v151, %v450
  %v452 = vlaneseq
  %v453 = vshrl.u32 %v452, 7
  %v454 = vsub.s32 4, %v453
  %v455 = vrot.slane %v151, %v454
  %v464 = vrot.slane %v128, 6
  %vm466 = vcmask 1040384
  %v467 = vsel %vm466, %v404, %v427
  %v468 = vsel %vm466, %v405, %v431
  %v469 = vsel %vm466, %v406, %v435
  %v470 = vsel %vm466, %v407, %v439
  %v471 = vsel %vm466, %v408, %v443
  %v472 = vsel %vm466, %v409, %v447
  %v473 = vsel %vm466, %v410, %v451
  %v474 = vsel %vm466, %v411, %v455
  %vm475 = vcmask 1041408
  %v476 = vsel %vm475, %v467, %v464
  %v477 = vsel %vm475, %v468, %v464
  %v478 = vsel %vm475, %v469, %v464
  %v479 = vsel %vm475, %v470, %v464
  %v480 = vsel %vm475, %v471, %v464
  %v481 = vsel %vm475, %v472, %v464
  %v482 = vsel %vm475, %v473, %v464
  %v483 = vsel %vm475, %v474, %v464
  %v492 = vrot.slane %v356, 2
  %v493 = vrot.slane %v357, 2
  %v494 = vrot.slane %v358, 2
  %v495 = vrot.slane %v359, 2
  %v496 = vrot.slane %v360, 2
  %v497 = vrot.slane %v361, 2
  %v498 = vrot.slane %v362, 2
  %v499 = vrot.slane %v363, 2
  %v508 = vlaneseq
  %v509 = vshrl.u32 %v508, 7
  %v510 = vsub.s32 1, %v509
  %v511 = vrot.slane %v148, %v510
  %v512 = vlaneseq
  %v513 = vshrl.u32 %v512, 7
  %v514 = vsub.s32 5, %v513
  %v515 = vrot.slane %v148, %v514
  %v516 = vlaneseq
  %v517 = vshrl.u32 %v516, 7
  %v518 = vsub.s32 1, %v517
  %v519 = vrot.slane %v149, %v518
  %v520 = vlaneseq
  %v521 = vshrl.u32 %v520, 7
  %v522 = vsub.s32 5, %v521
  %v523 = vrot.slane %v149, %v522
  %v524 = vlaneseq
  %v525 = vshrl.u32 %v524, 7
  %v526 = vsub.s32 1, %v525
  %v527 = vrot.slane %v150, %v526
  %v528 = vlaneseq
  %v529 = vshrl.u32 %v528, 7
  %v530 = vsub.s32 5, %v529
  %v531 = vrot.slane %v150, %v530
  %v532 = vlaneseq
  %v533 = vshrl.u32 %v532, 7
  %v534 = vsub.s32 1, %v533
  %v535 = vrot.slane %v151, %v534
  %v536 = vlaneseq
  %v537 = vshrl.u32 %v536, 7
  %v538 = vsub.s32 5, %v537
  %v539 = vrot.slane %v151, %v538
  %v548 = vrot.slane %v128, 7
  %v550 = vsel %vm466, %v492, %v511
  %v551 = vsel %vm466, %v493, %v515
  %v552 = vsel %vm466, %v494, %v519
  %v553 = vsel %vm466, %v495, %v523
  %v554 = vsel %vm466, %v496, %v527
  %v555 = vsel %vm466, %v497, %v531
  %v556 = vsel %vm466, %v498, %v535
  %v557 = vsel %vm466, %v499, %v539
  %v558 = vsel %vm475, %v550, %v548
  %v559 = vsel %vm475, %v551, %v548
  %v560 = vsel %vm475, %v552, %v548
  %v561 = vsel %vm475, %v553, %v548
  %v562 = vsel %vm475, %v554, %v548
  %v563 = vsel %vm475, %v555, %v548
  %v564 = vsel %vm475, %v556, %v548
  %v565 = vsel %vm475, %v557, %v548
  %v566 = vlaneseq
  %v567 = vshrl.u32 %v566, 7
  %v568 = vsub.s32 2, %v567
  %v569 = vrot.slane %v148, %v568
  %v570 = vlaneseq
  %v571 = vshrl.u32 %v570, 7
  %v572 = vsub.s32 6, %v571
  %v573 = vrot.slane %v148, %v572
  %v574 = vlaneseq
  %v575 = vshrl.u32 %v574, 7
  %v576 = vsub.s32 2, %v575
  %v577 = vrot.slane %v149, %v576
  %v578 = vlaneseq
  %v579 = vshrl.u32 %v578, 7
  %v580 = vsub.s32 6, %v579
  %v581 = vrot.slane %v149, %v580
  %v582 = vlaneseq
  %v583 = vshrl.u32 %v582, 7
  %v584 = vsub.s32 2, %v583
  %v585 = vrot.slane %v150, %v584
  %v586 = vlaneseq
  %v587 = vshrl.u32 %v586, 7
  %v588 = vsub.s32 6, %v587
  %v589 = vrot.slane %v150, %v588
  %v590 = vlaneseq
  %v591 = vshrl.u32 %v590, 7
  %v592 = vsub.s32 2, %v591
  %v593 = vrot.slane %v151, %v592
  %v594 = vlaneseq
  %v595 = vshrl.u32 %v594, 7
  %v596 = vsub.s32 6, %v595
  %v597 = vrot.slane %v151, %v596
  %v606 = vsel %vm466, %v388, %v569
  %v607 = vsel %vm466, %v389, %v573
  %v608 = vsel %vm466, %v390, %v577
  %v609 = vsel %vm466, %v391, %v581
  %v610 = vsel %vm466, %v392, %v585
  %v611 = vsel %vm466, %v393, %v589
  %v612 = vsel %vm466, %v394, %v593
  %v613 = vsel %vm466, %v395, %v597
  %v614 = vsel %vm475, %v606, %v128
  %v615 = vsel %vm475, %v607, %v128
  %v616 = vsel %vm475, %v608, %v128
  %v617 = vsel %vm475, %v609, %v128
  %v618 = vsel %vm475, %v610, %v128
  %v619 = vsel %vm475, %v611, %v128
  %v620 = vsel %vm475, %v612, %v128
  %v621 = vsel %vm475, %v613, %v128
  %v622 = vld [vmem:[%s2] sm:$0xff]
  %v623 = vld [vmem:[%s2 + $0x8] sm:$0xff]
  %vm624 = vcmask 23552
  %v626 = vsel %vm624, %v622, 0
  %v629 = vsel %vm624, %v623, 0
  %v632 = vsel %vm134, %v476, 0
  %v635 = vsel %vm134, %v477, 0
  %v638 = vsel %vm134, %v478, 0
  %v641 = vsel %vm134, %v479, 0
  %v644 = vsel %vm134, %v480, 0
  %v647 = vsel %vm134, %v481, 0
  %v650 = vsel %vm134, %v482, 0
  %v653 = vsel %vm134, %v483, 0
  %655 = vmatprep.subr.mxu0 %v635
  %656 = vmatpush1.msra.mxu0 %v632
  %657 = vmatprep.subr.mxu0 0.0
  %658 = vmatpush1.msra.mxu0 0.0
  %659 = vmatprep.subr.mxu0 0.0
  %660 = vmatpush1.msra.mxu0 0.0
  %661 = vmatprep.subr.mxu0 0.0
  %662 = vmatpush1.msra.mxu0 0.0
  %663 = vmatprep.subr.mxu0 0.0
  %664 = vmatpush1.msra.mxu0 0.0
  %665 = vmatprep.subr.mxu0 0.0
  %666 = vmatpush1.msra.mxu0 0.0
  %667 = vmatprep.subr.mxu0 0.0
  %668 = vmatpush1.msra.mxu0 0.0
  %669 = vmatprep.subr.mxu0 0.0
  %670 = vmatpush1.msra.mxu0 0.0
  %671 = vmatprep.subr.mxu0 0.0
  %672 = vmatpush1.msra.mxu0 0.0
  %673 = vmatprep.subr.mxu0 0.0
  %674 = vmatpush1.msra.mxu0 0.0
  %675 = vmatprep.subr.mxu0 0.0
  %676 = vmatpush1.msra.mxu0 0.0
  %677 = vmatprep.subr.mxu0 0.0
  %678 = vmatpush1.msra.mxu0 0.0
  %679 = vmatprep.subr.mxu0 0.0
  %680 = vmatpush1.msra.mxu0 0.0
  %681 = vmatprep.subr.mxu0 0.0
  %682 = vmatpush1.msra.mxu0 0.0
  %683 = vmatprep.subr.mxu0 0.0
  %684 = vmatpush1.msra.mxu0 0.0
  %685 = vmatprep.subr.mxu0 0.0
  %686 = vmatpush1.msra.mxu0 0.0
  %687 = vmatprep.subr.mxu0 0.0
  %688 = vmatpush1.msra.mxu0 0.0
  %689 = vmatprep.subr.mxu0 0.0
  %690 = vmatpush1.msra.mxu0 0.0
  %691 = vmatprep.subr.mxu0 0.0
  %692 = vmatpush1.msra.mxu0 0.0
  %693 = vmatprep.subr.mxu0 0.0
  %694 = vmatpush1.msra.mxu0 0.0
  %695 = vmatprep.subr.mxu0 0.0
  %696 = vmatpush1.msra.mxu0 0.0
  %697 = vmatprep.subr.mxu0 0.0
  %698 = vmatpush1.msra.mxu0 0.0
  %699 = vmatprep.subr.mxu0 0.0
  %700 = vmatpush1.msra.mxu0 0.0
  %701 = vmatprep.subr.mxu0 0.0
  %702 = vmatpush1.msra.mxu0 0.0
  %703 = vmatprep.subr.mxu0 0.0
  %704 = vmatpush1.msra.mxu0 0.0
  %705 = vmatprep.subr.mxu0 0.0
  %706 = vmatpush1.msra.mxu0 0.0
  %707 = vmatprep.subr.mxu0 0.0
  %708 = vmatpush1.msra.mxu0 0.0
  %709 = vmatprep.subr.mxu0 0.0
  %710 = vmatpush1.msra.mxu0 0.0
  %711 = vmatprep.subr.mxu0 0.0
  %712 = vmatpush1.msra.mxu0 0.0
  %713 = vmatprep.subr.mxu0 0.0
  %714 = vmatpush1.msra.mxu0 0.0
  %715 = vmatprep.subr.mxu0 0.0
  %716 = vmatpush1.msra.mxu0 0.0
  %717 = vmatprep.subr.mxu0 0.0
  %718 = vmatpush1.msra.mxu0 0.0
  %719 = vmatprep.mubr.f32.mxu0 0.0
  %720 = vmatmul.mubr.f32.gmra.mrb[0].mxu0 %v626
  %v721 = vpop.f32.mrb[0].mxu0
  %v722 = vadd.f32 0.0, %v721
  %v723 = vpop.f32.mrb[0].mxu0
  %v724 = vadd.f32 0.0, %v723
  %725 = vmatprep.mubr.f32.mxu0 0.0
  %726 = vmatmul.mubr.f32.gmra.mrb[0].mxu0 %v629
  %v727 = vpop.f32.mrb[0].mxu0
  %v728 = vadd.f32 0.0, %v727
  %v729 = vpop.f32.mrb[0].mxu0
  %v730 = vadd.f32 0.0, %v729
  %731 = vdwg.mxu0
  %732 = vmatprep.subr.mxu0 %v641
  %733 = vmatpush1.msra.mxu0 %v638
  %734 = vmatprep.subr.mxu0 0.0
  %735 = vmatpush1.msra.mxu0 0.0
  %736 = vmatprep.subr.mxu0 0.0
  %737 = vmatpush1.msra.mxu0 0.0
  %738 = vmatprep.subr.mxu0 0.0
  %739 = vmatpush1.msra.mxu0 0.0
  %740 = vmatprep.subr.mxu0 0.0
  %741 = vmatpush1.msra.mxu0 0.0
  %742 = vmatprep.subr.mxu0 0.0
  %743 = vmatpush1.msra.mxu0 0.0
  %744 = vmatprep.subr.mxu0 0.0
  %745 = vmatpush1.msra.mxu0 0.0
  %746 = vmatprep.subr.mxu0 0.0
  %747 = vmatpush1.msra.mxu0 0.0
  %748 = vmatprep.subr.mxu0 0.0
  %749 = vmatpush1.msra.mxu0 0.0
  %750 = vmatprep.subr.mxu0 0.0
  %751 = vmatpush1.msra.mxu0 0.0
  %752 = vmatprep.subr.mxu0 0.0
  %753 = vmatpush1.msra.mxu0 0.0
  %754 = vmatprep.subr.mxu0 0.0
  %755 = vmatpush1.msra.mxu0 0.0
  %756 = vmatprep.subr.mxu0 0.0
  %757 = vmatpush1.msra.mxu0 0.0
  %758 = vmatprep.subr.mxu0 0.0
  %759 = vmatpush1.msra.mxu0 0.0
  %760 = vmatprep.subr.mxu0 0.0
  %761 = vmatpush1.msra.mxu0 0.0
  %762 = vmatprep.subr.mxu0 0.0
  %763 = vmatpush1.msra.mxu0 0.0
  %764 = vmatprep.subr.mxu0 0.0
  %765 = vmatpush1.msra.mxu0 0.0
  %766 = vmatprep.subr.mxu0 0.0
  %767 = vmatpush1.msra.mxu0 0.0
  %768 = vmatprep.subr.mxu0 0.0
  %769 = vmatpush1.msra.mxu0 0.0
  %770 = vmatprep.subr.mxu0 0.0
  %771 = vmatpush1.msra.mxu0 0.0
  %772 = vmatprep.subr.mxu0 0.0
  %773 = vmatpush1.msra.mxu0 0.0
  %774 = vmatprep.subr.mxu0 0.0
  %775 = vmatpush1.msra.mxu0 0.0
  %776 = vmatprep.subr.mxu0 0.0
  %777 = vmatpush1.msra.mxu0 0.0
  %778 = vmatprep.subr.mxu0 0.0
  %779 = vmatpush1.msra.mxu0 0.0
  %780 = vmatprep.subr.mxu0 0.0
  %781 = vmatpush1.msra.mxu0 0.0
  %782 = vmatprep.subr.mxu0 0.0
  %783 = vmatpush1.msra.mxu0 0.0
  %784 = vmatprep.subr.mxu0 0.0
  %785 = vmatpush1.msra.mxu0 0.0
  %786 = vmatprep.subr.mxu0 0.0
  %787 = vmatpush1.msra.mxu0 0.0
  %788 = vmatprep.subr.mxu0 0.0
  %789 = vmatpush1.msra.mxu0 0.0
  %790 = vmatprep.subr.mxu0 0.0
  %791 = vmatpush1.msra.mxu0 0.0
  %792 = vmatprep.subr.mxu0 0.0
  %793 = vmatpush1.msra.mxu0 0.0
  %794 = vmatprep.subr.mxu0 0.0
  %795 = vmatpush1.msra.mxu0 0.0
  %796 = vmatprep.mubr.f32.mxu0 0.0
  %797 = vmatmul.mubr.f32.gmra.mrb[0].mxu0 %v626
  %v798 = vpop.f32.mrb[0].mxu0
  %v799 = vadd.f32 0.0, %v798
  %v800 = vpop.f32.mrb[0].mxu0
  %v801 = vadd.f32 0.0, %v800
  %802 = vmatprep.mubr.f32.mxu0 0.0
  %803 = vmatmul.mubr.f32.gmra.mrb[0].mxu0 %v629
  %v804 = vpop.f32.mrb[0].mxu0
  %v805 = vadd.f32 0.0, %v804
  %v806 = vpop.f32.mrb[0].mxu0
  %v807 = vadd.f32 0.0, %v806
  %808 = vdwg.mxu0
  %809 = vmatprep.subr.mxu0 %v647
  %810 = vmatpush1.msra.mxu0 %v644
  %811 = vmatprep.subr.mxu0 0.0
  %812 = vmatpush1.msra.mxu0 0.0
  %813 = vmatprep.subr.mxu0 0.0
  %814 = vmatpush1.msra.mxu0 0.0
  %815 = vmatprep.subr.mxu0 0.0
  %816 = vmatpush1.msra.mxu0 0.0
  %817 = vmatprep.subr.mxu0 0.0
  %818 = vmatpush1.msra.mxu0 0.0
  %819 = vmatprep.subr.mxu0 0.0
  %820 = vmatpush1.msra.mxu0 0.0
  %821 = vmatprep.subr.mxu0 0.0
  %822 = vmatpush1.msra.mxu0 0.0
  %823 = vmatprep.subr.mxu0 0.0
  %824 = vmatpush1.msra.mxu0 0.0
  %825 = vmatprep.subr.mxu0 0.0
  %826 = vmatpush1.msra.mxu0 0.0
  %827 = vmatprep.subr.mxu0 0.0
  %828 = vmatpush1.msra.mxu0 0.0
  %829 = vmatprep.subr.mxu0 0.0
  %830 = vmatpush1.msra.mxu0 0.0
  %831 = vmatprep.subr.mxu0 0.0
  %832 = vmatpush1.msra.mxu0 0.0
  %833 = vmatprep.subr.mxu0 0.0
  %834 = vmatpush1.msra.mxu0 0.0
  %835 = vmatprep.subr.mxu0 0.0
  %836 = vmatpush1.msra.mxu0 0.0
  %837 = vmatprep.subr.mxu0 0.0
  %838 = vmatpush1.msra.mxu0 0.0
  %839 = vmatprep.subr.mxu0 0.0
  %840 = vmatpush1.msra.mxu0 0.0
  %841 = vmatprep.subr.mxu0 0.0
  %842 = vmatpush1.msra.mxu0 0.0
  %843 = vmatprep.subr.mxu0 0.0
  %844 = vmatpush1.msra.mxu0 0.0
  %845 = vmatprep.subr.mxu0 0.0
  %846 = vmatpush1.msra.mxu0 0.0
  %847 = vmatprep.subr.mxu0 0.0
  %848 = vmatpush1.msra.mxu0 0.0
  %849 = vmatprep.subr.mxu0 0.0
  %850 = vmatpush1.msra.mxu0 0.0
  %851 = vmatprep.subr.mxu0 0.0
  %852 = vmatpush1.msra.mxu0 0.0
  %853 = vmatprep.subr.mxu0 0.0
  %854 = vmatpush1.msra.mxu0 0.0
  %855 = vmatprep.subr.mxu0 0.0
  %856 = vmatpush1.msra.mxu0 0.0
  %857 = vmatprep.subr.mxu0 0.0
  %858 = vmatpush1.msra.mxu0 0.0
  %859 = vmatprep.subr.mxu0 0.0
  %860 = vmatpush1.msra.mxu0 0.0
  %861 = vmatprep.subr.mxu0 0.0
  %862 = vmatpush1.msra.mxu0 0.0
  %863 = vmatprep.subr.mxu0 0.0
  %864 = vmatpush1.msra.mxu0 0.0
  %865 = vmatprep.subr.mxu0 0.0
  %866 = vmatpush1.msra.mxu0 0.0
  %867 = vmatprep.subr.mxu0 0.0
  %868 = vmatpush1.msra.mxu0 0.0
  %869 = vmatprep.subr.mxu0 0.0
  %870 = vmatpush1.msra.mxu0 0.0
  %871 = vmatprep.subr.mxu0 0.0
  %872 = vmatpush1.msra.mxu0 0.0
  %873 = vmatprep.mubr.f32.mxu0 0.0
  %874 = vmatmul.mubr.f32.gmra.mrb[0].mxu0 %v626
  %v875 = vpop.f32.mrb[0].mxu0
  %v876 = vadd.f32 0.0, %v875
  %v877 = vpop.f32.mrb[0].mxu0
  %v878 = vadd.f32 0.0, %v877
  %879 = vmatprep.mubr.f32.mxu0 0.0
  %880 = vmatmul.mubr.f32.gmra.mrb[0].mxu0 %v629
  %v881 = vpop.f32.mrb[0].mxu0
  %v882 = vadd.f32 0.0, %v881
  %v883 = vpop.f32.mrb[0].mxu0
  %v884 = vadd.f32 0.0, %v883
  %885 = vdwg.mxu0
  %886 = vmatprep.subr.mxu0 %v653
  %887 = vmatpush1.msra.mxu0 %v650
  %888 = vmatprep.subr.mxu0 0.0
  %889 = vmatpush1.msra.mxu0 0.0
  %890 = vmatprep.subr.mxu0 0.0
  %891 = vmatpush1.msra.mxu0 0.0
  %892 = vmatprep.subr.mxu0 0.0
  %893 = vmatpush1.msra.mxu0 0.0
  %894 = vmatprep.subr.mxu0 0.0
  %895 = vmatpush1.msra.mxu0 0.0
  %896 = vmatprep.subr.mxu0 0.0
  %897 = vmatpush1.msra.mxu0 0.0
  %898 = vmatprep.subr.mxu0 0.0
  %899 = vmatpush1.msra.mxu0 0.0
  %900 = vmatprep.subr.mxu0 0.0
  %901 = vmatpush1.msra.mxu0 0.0
  %902 = vmatprep.subr.mxu0 0.0
  %903 = vmatpush1.msra.mxu0 0.0
  %904 = vmatprep.subr.mxu0 0.0
  %905 = vmatpush1.msra.mxu0 0.0
  %906 = vmatprep.subr.mxu0 0.0
  %907 = vmatpush1.msra.mxu0 0.0
  %908 = vmatprep.subr.mxu0 0.0
  %909 = vmatpush1.msra.mxu0 0.0
  %910 = vmatprep.subr.mxu0 0.0
  %911 = vmatpush1.msra.mxu0 0.0
  %912 = vmatprep.subr.mxu0 0.0
  %913 = vmatpush1.msra.mxu0 0.0
  %914 = vmatprep.subr.mxu0 0.0
  %915 = vmatpush1.msra.mxu0 0.0
  %916 = vmatprep.subr.mxu0 0.0
  %917 = vmatpush1.msra.mxu0 0.0
  %918 = vmatprep.subr.mxu0 0.0
  %919 = vmatpush1.msra.mxu0 0.0
  %920 = vmatprep.subr.mxu0 0.0
  %921 = vmatpush1.msra.mxu0 0.0
  %922 = vmatprep.subr.mxu0 0.0
  %923 = vmatpush1.msra.mxu0 0.0
  %924 = vmatprep.subr.mxu0 0.0
  %925 = vmatpush1.msra.mxu0 0.0
  %926 = vmatprep.subr.mxu0 0.0
  %927 = vmatpush1.msra.mxu0 0.0
  %928 = vmatprep.subr.mxu0 0.0
  %929 = vmatpush1.msra.mxu0 0.0
  %930 = vmatprep.subr.mxu0 0.0
  %931 = vmatpush1.msra.mxu0 0.0
  %932 = vmatprep.subr.mxu0 0.0
  %933 = vmatpush1.msra.mxu0 0.0
  %934 = vmatprep.subr.mxu0 0.0
  %935 = vmatpush1.msra.mxu0 0.0
  %936 = vmatprep.subr.mxu0 0.0
  %937 = vmatpush1.msra.mxu0 0.0
  %938 = vmatprep.subr.mxu0 0.0
  %939 = vmatpush1.msra.mxu0 0.0
  %940 = vmatprep.subr.mxu0 0.0
  %941 = vmatpush1.msra.mxu0 0.0
  %942 = vmatprep.subr.mxu0 0.0
  %943 = vmatpush1.msra.mxu0 0.0
  %944 = vmatprep.subr.mxu0 0.0
  %945 = vmatpush1.msra.mxu0 0.0
  %946 = vmatprep.subr.mxu0 0.0
  %947 = vmatpush1.msra.mxu0 0.0
  %948 = vmatprep.subr.mxu0 0.0
  %949 = vmatpush1.msra.mxu0 0.0
  %950 = vmatprep.mubr.f32.mxu0 0.0
  %951 = vmatmul.mubr.f32.gmra.mrb[0].mxu0 %v626
  %v952 = vpop.f32.mrb[0].mxu0
  %v953 = vadd.f32 0.0, %v952
  %v954 = vpop.f32.mrb[0].mxu0
  %v955 = vadd.f32 0.0, %v954
  %956 = vmatprep.mubr.f32.mxu0 0.0
  %957 = vmatmul.mubr.f32.gmra.mrb[0].mxu0 %v629
  %v958 = vpop.f32.mrb[0].mxu0
  %v959 = vadd.f32 0.0, %v958
  %v960 = vpop.f32.mrb[0].mxu0
  %v961 = vadd.f32 0.0, %v960
  %962 = vdwg.mxu0
  %v964 = vsel %vm134, %v558, 0
  %v967 = vsel %vm134, %v559, 0
  %v970 = vsel %vm134, %v560, 0
  %v973 = vsel %vm134, %v561, 0
  %v976 = vsel %vm134, %v562, 0
  %v979 = vsel %vm134, %v563, 0
  %v982 = vsel %vm134, %v564, 0
  %v985 = vsel %vm134, %v565, 0
  %987 = vmatprep.subr.mxu0 %v967
  %988 = vmatpush1.msra.mxu0 %v964
  %989 = vmatprep.subr.mxu0 0.0
  %990 = vmatpush1.msra.mxu0 0.0
  %991 = vmatprep.subr.mxu0 0.0
  %992 = vmatpush1.msra.mxu0 0.0
  %993 = vmatprep.subr.mxu0 0.0
  %994 = vmatpush1.msra.mxu0 0.0
  %995 = vmatprep.subr.mxu0 0.0
  %996 = vmatpush1.msra.mxu0 0.0
  %997 = vmatprep.subr.mxu0 0.0
  %998 = vmatpush1.msra.mxu0 0.0
  %999 = vmatprep.subr.mxu0 0.0
  %1000 = vmatpush1.msra.mxu0 0.0
  %1001 = vmatprep.subr.mxu0 0.0
  %1002 = vmatpush1.msra.mxu0 0.0
  %1003 = vmatprep.subr.mxu0 0.0
  %1004 = vmatpush1.msra.mxu0 0.0
  %1005 = vmatprep.subr.mxu0 0.0
  %1006 = vmatpush1.msra.mxu0 0.0
  %1007 = vmatprep.subr.mxu0 0.0
  %1008 = vmatpush1.msra.mxu0 0.0
  %1009 = vmatprep.subr.mxu0 0.0
  %1010 = vmatpush1.msra.mxu0 0.0
  %1011 = vmatprep.subr.mxu0 0.0
  %1012 = vmatpush1.msra.mxu0 0.0
  %1013 = vmatprep.subr.mxu0 0.0
  %1014 = vmatpush1.msra.mxu0 0.0
  %1015 = vmatprep.subr.mxu0 0.0
  %1016 = vmatpush1.msra.mxu0 0.0
  %1017 = vmatprep.subr.mxu0 0.0
  %1018 = vmatpush1.msra.mxu0 0.0
  %1019 = vmatprep.subr.mxu0 0.0
  %1020 = vmatpush1.msra.mxu0 0.0
  %1021 = vmatprep.subr.mxu0 0.0
  %1022 = vmatpush1.msra.mxu0 0.0
  %1023 = vmatprep.subr.mxu0 0.0
  %1024 = vmatpush1.msra.mxu0 0.0
  %1025 = vmatprep.subr.mxu0 0.0
  %1026 = vmatpush1.msra.mxu0 0.0
  %1027 = vmatprep.subr.mxu0 0.0
  %1028 = vmatpush1.msra.mxu0 0.0
  %1029 = vmatprep.subr.mxu0 0.0
  %1030 = vmatpush1.msra.mxu0 0.0
  %1031 = vmatprep.subr.mxu0 0.0
  %1032 = vmatpush1.msra.mxu0 0.0
  %1033 = vmatprep.subr.mxu0 0.0
  %1034 = vmatpush1.msra.mxu0 0.0
  %1035 = vmatprep.subr.mxu0 0.0
  %1036 = vmatpush1.msra.mxu0 0.0
  %1037 = vmatprep.subr.mxu0 0.0
  %1038 = vmatpush1.msra.mxu0 0.0
  %1039 = vmatprep.subr.mxu0 0.0
  %1040 = vmatpush1.msra.mxu0 0.0
  %1041 = vmatprep.subr.mxu0 0.0
  %1042 = vmatpush1.msra.mxu0 0.0
  %1043 = vmatprep.subr.mxu0 0.0
  %1044 = vmatpush1.msra.mxu0 0.0
  %1045 = vmatprep.subr.mxu0 0.0
  %1046 = vmatpush1.msra.mxu0 0.0
  %1047 = vmatprep.subr.mxu0 0.0
  %1048 = vmatpush1.msra.mxu0 0.0
  %1049 = vmatprep.subr.mxu0 0.0
  %1050 = vmatpush1.msra.mxu0 0.0
  %1051 = vmatprep.mubr.f32.mxu0 0.0
  %1052 = vmatmul.mubr.f32.gmra.mrb[0].mxu0 %v626
  %v1053 = vpop.f32.mrb[0].mxu0
  %v1054 = vadd.f32 0.0, %v1053
  %v1055 = vpop.f32.mrb[0].mxu0
  %v1056 = vadd.f32 0.0, %v1055
  %1057 = vmatprep.mubr.f32.mxu0 0.0
  %1058 = vmatmul.mubr.f32.gmra.mrb[0].mxu0 %v629
  %v1059 = vpop.f32.mrb[0].mxu0
  %v1060 = vadd.f32 0.0, %v1059
  %v1061 = vpop.f32.mrb[0].mxu0
  %v1062 = vadd.f32 0.0, %v1061
  %1063 = vdwg.mxu0
  %1064 = vmatprep.subr.mxu0 %v973
  %1065 = vmatpush1.msra.mxu0 %v970
  %1066 = vmatprep.subr.mxu0 0.0
  %1067 = vmatpush1.msra.mxu0 0.0
  %1068 = vmatprep.subr.mxu0 0.0
  %1069 = vmatpush1.msra.mxu0 0.0
  %1070 = vmatprep.subr.mxu0 0.0
  %1071 = vmatpush1.msra.mxu0 0.0
  %1072 = vmatprep.subr.mxu0 0.0
  %1073 = vmatpush1.msra.mxu0 0.0
  %1074 = vmatprep.subr.mxu0 0.0
  %1075 = vmatpush1.msra.mxu0 0.0
  %1076 = vmatprep.subr.mxu0 0.0
  %1077 = vmatpush1.msra.mxu0 0.0
  %1078 = vmatprep.subr.mxu0 0.0
  %1079 = vmatpush1.msra.mxu0 0.0
  %1080 = vmatprep.subr.mxu0 0.0
  %1081 = vmatpush1.msra.mxu0 0.0
  %1082 = vmatprep.subr.mxu0 0.0
  %1083 = vmatpush1.msra.mxu0 0.0
  %1084 = vmatprep.subr.mxu0 0.0
  %1085 = vmatpush1.msra.mxu0 0.0
  %1086 = vmatprep.subr.mxu0 0.0
  %1087 = vmatpush1.msra.mxu0 0.0
  %1088 = vmatprep.subr.mxu0 0.0
  %1089 = vmatpush1.msra.mxu0 0.0
  %1090 = vmatprep.subr.mxu0 0.0
  %1091 = vmatpush1.msra.mxu0 0.0
  %1092 = vmatprep.subr.mxu0 0.0
  %1093 = vmatpush1.msra.mxu0 0.0
  %1094 = vmatprep.subr.mxu0 0.0
  %1095 = vmatpush1.msra.mxu0 0.0
  %1096 = vmatprep.subr.mxu0 0.0
  %1097 = vmatpush1.msra.mxu0 0.0
  %1098 = vmatprep.subr.mxu0 0.0
  %1099 = vmatpush1.msra.mxu0 0.0
  %1100 = vmatprep.subr.mxu0 0.0
  %1101 = vmatpush1.msra.mxu0 0.0
  %1102 = vmatprep.subr.mxu0 0.0
  %1103 = vmatpush1.msra.mxu0 0.0
  %1104 = vmatprep.subr.mxu0 0.0
  %1105 = vmatpush1.msra.mxu0 0.0
  %1106 = vmatprep.subr.mxu0 0.0
  %1107 = vmatpush1.msra.mxu0 0.0
  %1108 = vmatprep.subr.mxu0 0.0
  %1109 = vmatpush1.msra.mxu0 0.0
  %1110 = vmatprep.subr.mxu0 0.0
  %1111 = vmatpush1.msra.mxu0 0.0
  %1112 = vmatprep.subr.mxu0 0.0
  %1113 = vmatpush1.msra.mxu0 0.0
  %1114 = vmatprep.subr.mxu0 0.0
  %1115 = vmatpush1.msra.mxu0 0.0
  %1116 = vmatprep.subr.mxu0 0.0
  %1117 = vmatpush1.msra.mxu0 0.0
  %1118 = vmatprep.subr.mxu0 0.0
  %1119 = vmatpush1.msra.mxu0 0.0
  %1120 = vmatprep.subr.mxu0 0.0
  %1121 = vmatpush1.msra.mxu0 0.0
  %1122 = vmatprep.subr.mxu0 0.0
  %1123 = vmatpush1.msra.mxu0 0.0
  %1124 = vmatprep.subr.mxu0 0.0
  %1125 = vmatpush1.msra.mxu0 0.0
  %1126 = vmatprep.subr.mxu0 0.0
  %1127 = vmatpush1.msra.mxu0 0.0
  %1128 = vmatprep.mubr.f32.mxu0 0.0
  %1129 = vmatmul.mubr.f32.gmra.mrb[0].mxu0 %v626
  %v1130 = vpop.f32.mrb[0].mxu0
  %v1131 = vadd.f32 0.0, %v1130
  %v1132 = vpop.f32.mrb[0].mxu0
  %v1133 = vadd.f32 0.0, %v1132
  %1134 = vmatprep.mubr.f32.mxu0 0.0
  %1135 = vmatmul.mubr.f32.gmra.mrb[0].mxu0 %v629
  %v1136 = vpop.f32.mrb[0].mxu0
  %v1137 = vadd.f32 0.0, %v1136
  %v1138 = vpop.f32.mrb[0].mxu0
  %v1139 = vadd.f32 0.0, %v1138
  %1140 = vdwg.mxu0
  %1141 = vmatprep.subr.mxu0 %v979
  %1142 = vmatpush1.msra.mxu0 %v976
  %1143 = vmatprep.subr.mxu0 0.0
  %1144 = vmatpush1.msra.mxu0 0.0
  %1145 = vmatprep.subr.mxu0 0.0
  %1146 = vmatpush1.msra.mxu0 0.0
  %1147 = vmatprep.subr.mxu0 0.0
  %1148 = vmatpush1.msra.mxu0 0.0
  %1149 = vmatprep.subr.mxu0 0.0
  %1150 = vmatpush1.msra.mxu0 0.0
  %1151 = vmatprep.subr.mxu0 0.0
  %1152 = vmatpush1.msra.mxu0 0.0
  %1153 = vmatprep.subr.mxu0 0.0
  %1154 = vmatpush1.msra.mxu0 0.0
  %1155 = vmatprep.subr.mxu0 0.0
  %1156 = vmatpush1.msra.mxu0 0.0
  %1157 = vmatprep.subr.mxu0 0.0
  %1158 = vmatpush1.msra.mxu0 0.0
  %1159 = vmatprep.subr.mxu0 0.0
  %1160 = vmatpush1.msra.mxu0 0.0
  %1161 = vmatprep.subr.mxu0 0.0
  %1162 = vmatpush1.msra.mxu0 0.0
  %1163 = vmatprep.subr.mxu0 0.0
  %1164 = vmatpush1.msra.mxu0 0.0
  %1165 = vmatprep.subr.mxu0 0.0
  %1166 = vmatpush1.msra.mxu0 0.0
  %1167 = vmatprep.subr.mxu0 0.0
  %1168 = vmatpush1.msra.mxu0 0.0
  %1169 = vmatprep.subr.mxu0 0.0
  %1170 = vmatpush1.msra.mxu0 0.0
  %1171 = vmatprep.subr.mxu0 0.0
  %1172 = vmatpush1.msra.mxu0 0.0
  %1173 = vmatprep.subr.mxu0 0.0
  %1174 = vmatpush1.msra.mxu0 0.0
  %1175 = vmatprep.subr.mxu0 0.0
  %1176 = vmatpush1.msra.mxu0 0.0
  %1177 = vmatprep.subr.mxu0 0.0
  %1178 = vmatpush1.msra.mxu0 0.0
  %1179 = vmatprep.subr.mxu0 0.0
  %1180 = vmatpush1.msra.mxu0 0.0
  %1181 = vmatprep.subr.mxu0 0.0
  %1182 = vmatpush1.msra.mxu0 0.0
  %1183 = vmatprep.subr.mxu0 0.0
  %1184 = vmatpush1.msra.mxu0 0.0
  %1185 = vmatprep.subr.mxu0 0.0
  %1186 = vmatpush1.msra.mxu0 0.0
  %1187 = vmatprep.subr.mxu0 0.0
  %1188 = vmatpush1.msra.mxu0 0.0
  %1189 = vmatprep.subr.mxu0 0.0
  %1190 = vmatpush1.msra.mxu0 0.0
  %1191 = vmatprep.subr.mxu0 0.0
  %1192 = vmatpush1.msra.mxu0 0.0
  %1193 = vmatprep.subr.mxu0 0.0
  %1194 = vmatpush1.msra.mxu0 0.0
  %1195 = vmatprep.subr.mxu0 0.0
  %1196 = vmatpush1.msra.mxu0 0.0
  %1197 = vmatprep.subr.mxu0 0.0
  %1198 = vmatpush1.msra.mxu0 0.0
  %1199 = vmatprep.subr.mxu0 0.0
  %1200 = vmatpush1.msra.mxu0 0.0
  %1201 = vmatprep.subr.mxu0 0.0
  %1202 = vmatpush1.msra.mxu0 0.0
  %1203 = vmatprep.subr.mxu0 0.0
  %1204 = vmatpush1.msra.mxu0 0.0
  %1205 = vmatprep.mubr.f32.mxu0 0.0
  %1206 = vmatmul.mubr.f32.gmra.mrb[0].mxu0 %v626
  %v1207 = vpop.f32.mrb[0].mxu0
  %v1208 = vadd.f32 0.0, %v1207
  %v1209 = vpop.f32.mrb[0].mxu0
  %v1210 = vadd.f32 0.0, %v1209
  %1211 = vmatprep.mubr.f32.mxu0 0.0
  %1212 = vmatmul.mubr.f32.gmra.mrb[0].mxu0 %v629
  %v1213 = vpop.f32.mrb[0].mxu0
  %v1214 = vadd.f32 0.0, %v1213
  %v1215 = vpop.f32.mrb[0].mxu0
  %v1216 = vadd.f32 0.0, %v1215
  %1217 = vdwg.mxu0
  %1218 = vmatprep.subr.mxu0 %v985
  %1219 = vmatpush1.msra.mxu0 %v982
  %1220 = vmatprep.subr.mxu0 0.0
  %1221 = vmatpush1.msra.mxu0 0.0
  %1222 = vmatprep.subr.mxu0 0.0
  %1223 = vmatpush1.msra.mxu0 0.0
  %1224 = vmatprep.subr.mxu0 0.0
  %1225 = vmatpush1.msra.mxu0 0.0
  %1226 = vmatprep.subr.mxu0 0.0
  %1227 = vmatpush1.msra.mxu0 0.0
  %1228 = vmatprep.subr.mxu0 0.0
  %1229 = vmatpush1.msra.mxu0 0.0
  %1230 = vmatprep.subr.mxu0 0.0
  %1231 = vmatpush1.msra.mxu0 0.0
  %1232 = vmatprep.subr.mxu0 0.0
  %1233 = vmatpush1.msra.mxu0 0.0
  %1234 = vmatprep.subr.mxu0 0.0
  %1235 = vmatpush1.msra.mxu0 0.0
  %1236 = vmatprep.subr.mxu0 0.0
  %1237 = vmatpush1.msra.mxu0 0.0
  %1238 = vmatprep.subr.mxu0 0.0
  %1239 = vmatpush1.msra.mxu0 0.0
  %1240 = vmatprep.subr.mxu0 0.0
  %1241 = vmatpush1.msra.mxu0 0.0
  %1242 = vmatprep.subr.mxu0 0.0
  %1243 = vmatpush1.msra.mxu0 0.0
  %1244 = vmatprep.subr.mxu0 0.0
  %1245 = vmatpush1.msra.mxu0 0.0
  %1246 = vmatprep.subr.mxu0 0.0
  %1247 = vmatpush1.msra.mxu0 0.0
  %1248 = vmatprep.subr.mxu0 0.0
  %1249 = vmatpush1.msra.mxu0 0.0
  %1250 = vmatprep.subr.mxu0 0.0
  %1251 = vmatpush1.msra.mxu0 0.0
  %1252 = vmatprep.subr.mxu0 0.0
  %1253 = vmatpush1.msra.mxu0 0.0
  %1254 = vmatprep.subr.mxu0 0.0
  %1255 = vmatpush1.msra.mxu0 0.0
  %1256 = vmatprep.subr.mxu0 0.0
  %1257 = vmatpush1.msra.mxu0 0.0
  %1258 = vmatprep.subr.mxu0 0.0
  %1259 = vmatpush1.msra.mxu0 0.0
  %1260 = vmatprep.subr.mxu0 0.0
  %1261 = vmatpush1.msra.mxu0 0.0
  %1262 = vmatprep.subr.mxu0 0.0
  %1263 = vmatpush1.msra.mxu0 0.0
  %1264 = vmatprep.subr.mxu0 0.0
  %1265 = vmatpush1.msra.mxu0 0.0
  %1266 = vmatprep.subr.mxu0 0.0
  %1267 = vmatpush1.msra.mxu0 0.0
  %1268 = vmatprep.subr.mxu0 0.0
  %1269 = vmatpush1.msra.mxu0 0.0
  %1270 = vmatprep.subr.mxu0 0.0
  %1271 = vmatpush1.msra.mxu0 0.0
  %1272 = vmatprep.subr.mxu0 0.0
  %1273 = vmatpush1.msra.mxu0 0.0
  %1274 = vmatprep.subr.mxu0 0.0
  %1275 = vmatpush1.msra.mxu0 0.0
  %1276 = vmatprep.subr.mxu0 0.0
  %1277 = vmatpush1.msra.mxu0 0.0
  %1278 = vmatprep.subr.mxu0 0.0
  %1279 = vmatpush1.msra.mxu0 0.0
  %1280 = vmatprep.subr.mxu0 0.0
  %1281 = vmatpush1.msra.mxu0 0.0
  %1282 = vmatprep.mubr.f32.mxu0 0.0
  %1283 = vmatmul.mubr.f32.gmra.mrb[0].mxu0 %v626
  %v1284 = vpop.f32.mrb[0].mxu0
  %v1285 = vadd.f32 0.0, %v1284
  %v1286 = vpop.f32.mrb[0].mxu0
  %v1287 = vadd.f32 0.0, %v1286
  %1288 = vmatprep.mubr.f32.mxu0 0.0
  %1289 = vmatmul.mubr.f32.gmra.mrb[0].mxu0 %v629
  %v1290 = vpop.f32.mrb[0].mxu0
  %v1291 = vadd.f32 0.0, %v1290
  %v1292 = vpop.f32.mrb[0].mxu0
  %v1293 = vadd.f32 0.0, %v1292
  %1294 = vdwg.mxu0
  %v1296 = vsel %vm134, %v614, 0
  %v1299 = vsel %vm134, %v615, 0
  %v1302 = vsel %vm134, %v616, 0
  %v1305 = vsel %vm134, %v617, 0
  %v1308 = vsel %vm134, %v618, 0
  %v1311 = vsel %vm134, %v619, 0
  %v1314 = vsel %vm134, %v620, 0
  %v1317 = vsel %vm134, %v621, 0
  %1319 = vmatprep.subr.mxu0 %v1299
  %1320 = vmatpush1.msra.mxu0 %v1296
  %1321 = vmatprep.subr.mxu0 0.0
  %1322 = vmatpush1.msra.mxu0 0.0
  %1323 = vmatprep.subr.mxu0 0.0
  %1324 = vmatpush1.msra.mxu0 0.0
  %1325 = vmatprep.subr.mxu0 0.0
  %1326 = vmatpush1.msra.mxu0 0.0
  %1327 = vmatprep.subr.mxu0 0.0
  %1328 = vmatpush1.msra.mxu0 0.0
  %1329 = vmatprep.subr.mxu0 0.0
  %1330 = vmatpush1.msra.mxu0 0.0
  %1331 = vmatprep.subr.mxu0 0.0
  %1332 = vmatpush1.msra.mxu0 0.0
  %1333 = vmatprep.subr.mxu0 0.0
  %1334 = vmatpush1.msra.mxu0 0.0
  %1335 = vmatprep.subr.mxu0 0.0
  %1336 = vmatpush1.msra.mxu0 0.0
  %1337 = vmatprep.subr.mxu0 0.0
  %1338 = vmatpush1.msra.mxu0 0.0
  %1339 = vmatprep.subr.mxu0 0.0
  %1340 = vmatpush1.msra.mxu0 0.0
  %1341 = vmatprep.subr.mxu0 0.0
  %1342 = vmatpush1.msra.mxu0 0.0
  %1343 = vmatprep.subr.mxu0 0.0
  %1344 = vmatpush1.msra.mxu0 0.0
  %1345 = vmatprep.subr.mxu0 0.0
  %1346 = vmatpush1.msra.mxu0 0.0
  %1347 = vmatprep.subr.mxu0 0.0
  %1348 = vmatpush1.msra.mxu0 0.0
  %1349 = vmatprep.subr.mxu0 0.0
  %1350 = vmatpush1.msra.mxu0 0.0
  %1351 = vmatprep.subr.mxu0 0.0
  %1352 = vmatpush1.msra.mxu0 0.0
  %1353 = vmatprep.subr.mxu0 0.0
  %1354 = vmatpush1.msra.mxu0 0.0
  %1355 = vmatprep.subr.mxu0 0.0
  %1356 = vmatpush1.msra.mxu0 0.0
  %1357 = vmatprep.subr.mxu0 0.0
  %1358 = vmatpush1.msra.mxu0 0.0
  %1359 = vmatprep.subr.mxu0 0.0
  %1360 = vmatpush1.msra.mxu0 0.0
  %1361 = vmatprep.subr.mxu0 0.0
  %1362 = vmatpush1.msra.mxu0 0.0
  %1363 = vmatprep.subr.mxu0 0.0
  %1364 = vmatpush1.msra.mxu0 0.0
  %1365 = vmatprep.subr.mxu0 0.0
  %1366 = vmatpush1.msra.mxu0 0.0
  %1367 = vmatprep.subr.mxu0 0.0
  %1368 = vmatpush1.msra.mxu0 0.0
  %1369 = vmatprep.subr.mxu0 0.0
  %1370 = vmatpush1.msra.mxu0 0.0
  %1371 = vmatprep.subr.mxu0 0.0
  %1372 = vmatpush1.msra.mxu0 0.0
  %1373 = vmatprep.subr.mxu0 0.0
  %1374 = vmatpush1.msra.mxu0 0.0
  %1375 = vmatprep.subr.mxu0 0.0
  %1376 = vmatpush1.msra.mxu0 0.0
  %1377 = vmatprep.subr.mxu0 0.0
  %1378 = vmatpush1.msra.mxu0 0.0
  %1379 = vmatprep.subr.mxu0 0.0
  %1380 = vmatpush1.msra.mxu0 0.0
  %1381 = vmatprep.subr.mxu0 0.0
  %1382 = vmatpush1.msra.mxu0 0.0
  %1383 = vmatprep.mubr.f32.mxu0 0.0
  %1384 = vmatmul.mubr.f32.gmra.mrb[0].mxu0 %v626
  %v1385 = vpop.f32.mrb[0].mxu0
  %v1386 = vadd.f32 0.0, %v1385
  %v1387 = vpop.f32.mrb[0].mxu0
  %v1388 = vadd.f32 0.0, %v1387
  %1389 = vmatprep.mubr.f32.mxu0 0.0
  %1390 = vmatmul.mubr.f32.gmra.mrb[0].mxu0 %v629
  %v1391 = vpop.f32.mrb[0].mxu0
  %v1392 = vadd.f32 0.0, %v1391
  %v1393 = vpop.f32.mrb[0].mxu0
  %v1394 = vadd.f32 0.0, %v1393
  %1395 = vdwg.mxu0
  %1396 = vmatprep.subr.mxu0 %v1305
  %1397 = vmatpush1.msra.mxu0 %v1302
  %1398 = vmatprep.subr.mxu0 0.0
  %1399 = vmatpush1.msra.mxu0 0.0
  %1400 = vmatprep.subr.mxu0 0.0
  %1401 = vmatpush1.msra.mxu0 0.0
  %1402 = vmatprep.subr.mxu0 0.0
  %1403 = vmatpush1.msra.mxu0 0.0
  %1404 = vmatprep.subr.mxu0 0.0
  %1405 = vmatpush1.msra.mxu0 0.0
  %1406 = vmatprep.subr.mxu0 0.0
  %1407 = vmatpush1.msra.mxu0 0.0
  %1408 = vmatprep.subr.mxu0 0.0
  %1409 = vmatpush1.msra.mxu0 0.0
  %1410 = vmatprep.subr.mxu0 0.0
  %1411 = vmatpush1.msra.mxu0 0.0
  %1412 = vmatprep.subr.mxu0 0.0
  %1413 = vmatpush1.msra.mxu0 0.0
  %1414 = vmatprep.subr.mxu0 0.0
  %1415 = vmatpush1.msra.mxu0 0.0
  %1416 = vmatprep.subr.mxu0 0.0
  %1417 = vmatpush1.msra.mxu0 0.0
  %1418 = vmatprep.subr.mxu0 0.0
  %1419 = vmatpush1.msra.mxu0 0.0
  %1420 = vmatprep.subr.mxu0 0.0
  %1421 = vmatpush1.msra.mxu0 0.0
  %1422 = vmatprep.subr.mxu0 0.0
  %1423 = vmatpush1.msra.mxu0 0.0
  %1424 = vmatprep.subr.mxu0 0.0
  %1425 = vmatpush1.msra.mxu0 0.0
  %1426 = vmatprep.subr.mxu0 0.0
  %1427 = vmatpush1.msra.mxu0 0.0
  %1428 = vmatprep.subr.mxu0 0.0
  %1429 = vmatpush1.msra.mxu0 0.0
  %1430 = vmatprep.subr.mxu0 0.0
  %1431 = vmatpush1.msra.mxu0 0.0
  %1432 = vmatprep.subr.mxu0 0.0
  %1433 = vmatpush1.msra.mxu0 0.0
  %1434 = vmatprep.subr.mxu0 0.0
  %1435 = vmatpush1.msra.mxu0 0.0
  %1436 = vmatprep.subr.mxu0 0.0
  %1437 = vmatpush1.msra.mxu0 0.0
  %1438 = vmatprep.subr.mxu0 0.0
  %1439 = vmatpush1.msra.mxu0 0.0
  %1440 = vmatprep.subr.mxu0 0.0
  %1441 = vmatpush1.msra.mxu0 0.0
  %1442 = vmatprep.subr.mxu0 0.0
  %1443 = vmatpush1.msra.mxu0 0.0
  %1444 = vmatprep.subr.mxu0 0.0
  %1445 = vmatpush1.msra.mxu0 0.0
  %1446 = vmatprep.subr.mxu0 0.0
  %1447 = vmatpush1.msra.mxu0 0.0
  %1448 = vmatprep.subr.mxu0 0.0
  %1449 = vmatpush1.msra.mxu0 0.0
  %1450 = vmatprep.subr.mxu0 0.0
  %1451 = vmatpush1.msra.mxu0 0.0
  %1452 = vmatprep.subr.mxu0 0.0
  %1453 = vmatpush1.msra.mxu0 0.0
  %1454 = vmatprep.subr.mxu0 0.0
  %1455 = vmatpush1.msra.mxu0 0.0
  %1456 = vmatprep.subr.mxu0 0.0
  %1457 = vmatpush1.msra.mxu0 0.0
  %1458 = vmatprep.subr.mxu0 0.0
  %1459 = vmatpush1.msra.mxu0 0.0
  %1460 = vmatprep.mubr.f32.mxu0 0.0
  %1461 = vmatmul.mubr.f32.gmra.mrb[0].mxu0 %v626
  %v1462 = vpop.f32.mrb[0].mxu0
  %v1463 = vadd.f32 0.0, %v1462
  %v1464 = vpop.f32.mrb[0].mxu0
  %v1465 = vadd.f32 0.0, %v1464
  %1466 = vmatprep.mubr.f32.mxu0 0.0
  %1467 = vmatmul.mubr.f32.gmra.mrb[0].mxu0 %v629
  %v1468 = vpop.f32.mrb[0].mxu0
  %v1469 = vadd.f32 0.0, %v1468
  %v1470 = vpop.f32.mrb[0].mxu0
  %v1471 = vadd.f32 0.0, %v1470
  %1472 = vdwg.mxu0
  %1473 = vmatprep.subr.mxu0 %v1311
  %1474 = vmatpush1.msra.mxu0 %v1308
  %1475 = vmatprep.subr.mxu0 0.0
  %1476 = vmatpush1.msra.mxu0 0.0
  %1477 = vmatprep.subr.mxu0 0.0
  %1478 = vmatpush1.msra.mxu0 0.0
  %1479 = vmatprep.subr.mxu0 0.0
  %1480 = vmatpush1.msra.mxu0 0.0
  %1481 = vmatprep.subr.mxu0 0.0
  %1482 = vmatpush1.msra.mxu0 0.0
  %1483 = vmatprep.subr.mxu0 0.0
  %1484 = vmatpush1.msra.mxu0 0.0
  %1485 = vmatprep.subr.mxu0 0.0
  %1486 = vmatpush1.msra.mxu0 0.0
  %1487 = vmatprep.subr.mxu0 0.0
  %1488 = vmatpush1.msra.mxu0 0.0
  %1489 = vmatprep.subr.mxu0 0.0
  %1490 = vmatpush1.msra.mxu0 0.0
  %1491 = vmatprep.subr.mxu0 0.0
  %1492 = vmatpush1.msra.mxu0 0.0
  %1493 = vmatprep.subr.mxu0 0.0
  %1494 = vmatpush1.msra.mxu0 0.0
  %1495 = vmatprep.subr.mxu0 0.0
  %1496 = vmatpush1.msra.mxu0 0.0
  %1497 = vmatprep.subr.mxu0 0.0
  %1498 = vmatpush1.msra.mxu0 0.0
  %1499 = vmatprep.subr.mxu0 0.0
  %1500 = vmatpush1.msra.mxu0 0.0
  %1501 = vmatprep.subr.mxu0 0.0
  %1502 = vmatpush1.msra.mxu0 0.0
  %1503 = vmatprep.subr.mxu0 0.0
  %1504 = vmatpush1.msra.mxu0 0.0
  %1505 = vmatprep.subr.mxu0 0.0
  %1506 = vmatpush1.msra.mxu0 0.0
  %1507 = vmatprep.subr.mxu0 0.0
  %1508 = vmatpush1.msra.mxu0 0.0
  %1509 = vmatprep.subr.mxu0 0.0
  %1510 = vmatpush1.msra.mxu0 0.0
  %1511 = vmatprep.subr.mxu0 0.0
  %1512 = vmatpush1.msra.mxu0 0.0
  %1513 = vmatprep.subr.mxu0 0.0
  %1514 = vmatpush1.msra.mxu0 0.0
  %1515 = vmatprep.subr.mxu0 0.0
  %1516 = vmatpush1.msra.mxu0 0.0
  %1517 = vmatprep.subr.mxu0 0.0
  %1518 = vmatpush1.msra.mxu0 0.0
  %1519 = vmatprep.subr.mxu0 0.0
  %1520 = vmatpush1.msra.mxu0 0.0
  %1521 = vmatprep.subr.mxu0 0.0
  %1522 = vmatpush1.msra.mxu0 0.0
  %1523 = vmatprep.subr.mxu0 0.0
  %1524 = vmatpush1.msra.mxu0 0.0
  %1525 = vmatprep.subr.mxu0 0.0
  %1526 = vmatpush1.msra.mxu0 0.0
  %1527 = vmatprep.subr.mxu0 0.0
  %1528 = vmatpush1.msra.mxu0 0.0
  %1529 = vmatprep.subr.mxu0 0.0
  %1530 = vmatpush1.msra.mxu0 0.0
  %1531 = vmatprep.subr.mxu0 0.0
  %1532 = vmatpush1.msra.mxu0 0.0
  %1533 = vmatprep.subr.mxu0 0.0
  %1534 = vmatpush1.msra.mxu0 0.0
  %1535 = vmatprep.subr.mxu0 0.0
  %1536 = vmatpush1.msra.mxu0 0.0
  %1537 = vmatprep.mubr.f32.mxu0 0.0
  %1538 = vmatmul.mubr.f32.gmra.mrb[0].mxu0 %v626
  %v1539 = vpop.f32.mrb[0].mxu0
  %v1540 = vadd.f32 0.0, %v1539
  %v1541 = vpop.f32.mrb[0].mxu0
  %v1542 = vadd.f32 0.0, %v1541
  %1543 = vmatprep.mubr.f32.mxu0 0.0
  %1544 = vmatmul.mubr.f32.gmra.mrb[0].mxu0 %v629
  %v1545 = vpop.f32.mrb[0].mxu0
  %v1546 = vadd.f32 0.0, %v1545
  %v1547 = vpop.f32.mrb[0].mxu0
  %v1548 = vadd.f32 0.0, %v1547
  %1549 = vdwg.mxu0
  %1550 = vmatprep.subr.mxu0 %v1317
  %1551 = vmatpush1.msra.mxu0 %v1314
  %1552 = vmatprep.subr.mxu0 0.0
  %1553 = vmatpush1.msra.mxu0 0.0
  %1554 = vmatprep.subr.mxu0 0.0
  %1555 = vmatpush1.msra.mxu0 0.0
  %1556 = vmatprep.subr.mxu0 0.0
  %1557 = vmatpush1.msra.mxu0 0.0
  %1558 = vmatprep.subr.mxu0 0.0
  %1559 = vmatpush1.msra.mxu0 0.0
  %1560 = vmatprep.subr.mxu0 0.0
  %1561 = vmatpush1.msra.mxu0 0.0
  %1562 = vmatprep.subr.mxu0 0.0
  %1563 = vmatpush1.msra.mxu0 0.0
  %1564 = vmatprep.subr.mxu0 0.0
  %1565 = vmatpush1.msra.mxu0 0.0
  %1566 = vmatprep.subr.mxu0 0.0
  %1567 = vmatpush1.msra.mxu0 0.0
  %1568 = vmatprep.subr.mxu0 0.0
  %1569 = vmatpush1.msra.mxu0 0.0
  %1570 = vmatprep.subr.mxu0 0.0
  %1571 = vmatpush1.msra.mxu0 0.0
  %1572 = vmatprep.subr.mxu0 0.0
  %1573 = vmatpush1.msra.mxu0 0.0
  %1574 = vmatprep.subr.mxu0 0.0
  %1575 = vmatpush1.msra.mxu0 0.0
  %1576 = vmatprep.subr.mxu0 0.0
  %1577 = vmatpush1.msra.mxu0 0.0
  %1578 = vmatprep.subr.mxu0 0.0
  %1579 = vmatpush1.msra.mxu0 0.0
  %1580 = vmatprep.subr.mxu0 0.0
  %1581 = vmatpush1.msra.mxu0 0.0
  %1582 = vmatprep.subr.mxu0 0.0
  %1583 = vmatpush1.msra.mxu0 0.0
  %1584 = vmatprep.subr.mxu0 0.0
  %1585 = vmatpush1.msra.mxu0 0.0
  %1586 = vmatprep.subr.mxu0 0.0
  %1587 = vmatpush1.msra.mxu0 0.0
  %1588 = vmatprep.subr.mxu0 0.0
  %1589 = vmatpush1.msra.mxu0 0.0
  %1590 = vmatprep.subr.mxu0 0.0
  %1591 = vmatpush1.msra.mxu0 0.0
  %1592 = vmatprep.subr.mxu0 0.0
  %1593 = vmatpush1.msra.mxu0 0.0
  %1594 = vmatprep.subr.mxu0 0.0
  %1595 = vmatpush1.msra.mxu0 0.0
  %1596 = vmatprep.subr.mxu0 0.0
  %1597 = vmatpush1.msra.mxu0 0.0
  %1598 = vmatprep.subr.mxu0 0.0
  %1599 = vmatpush1.msra.mxu0 0.0
  %1600 = vmatprep.subr.mxu0 0.0
  %1601 = vmatpush1.msra.mxu0 0.0
  %1602 = vmatprep.subr.mxu0 0.0
  %1603 = vmatpush1.msra.mxu0 0.0
  %1604 = vmatprep.subr.mxu0 0.0
  %1605 = vmatpush1.msra.mxu0 0.0
  %1606 = vmatprep.subr.mxu0 0.0
  %1607 = vmatpush1.msra.mxu0 0.0
  %1608 = vmatprep.subr.mxu0 0.0
  %1609 = vmatpush1.msra.mxu0 0.0
  %1610 = vmatprep.subr.mxu0 0.0
  %1611 = vmatpush1.msra.mxu0 0.0
  %1612 = vmatprep.subr.mxu0 0.0
  %1613 = vmatpush1.msra.mxu0 0.0
  %1614 = vmatprep.mubr.f32.mxu0 0.0
  %1615 = vmatmul.mubr.f32.gmra.mrb[0].mxu0 %v626
  %v1616 = vpop.f32.mrb[0].mxu0
  %v1617 = vadd.f32 0.0, %v1616
  %v1618 = vpop.f32.mrb[0].mxu0
  %v1619 = vadd.f32 0.0, %v1618
  %1620 = vmatprep.mubr.f32.mxu0 0.0
  %1621 = vmatmul.mubr.f32.gmra.mrb[0].mxu0 %v629
  %v1622 = vpop.f32.mrb[0].mxu0
  %v1623 = vadd.f32 0.0, %v1622
  %v1624 = vpop.f32.mrb[0].mxu0
  %v1625 = vadd.f32 0.0, %v1624
  %1626 = vdwg.mxu0
  %v1627 = vld [vmem:[%s3] sm:$0xff]
  %v1628 = vld [vmem:[%s3 + $0x8] sm:$0xff]
  %vm1629 = vcmask 130048
  %v1631 = vsel %vm1629, %v1627, 0
  %v1634 = vsel %vm1629, %v1628, 0
  %1636 = vmatprep.subr.mxu0 %v724
  %1637 = vmatpush1.msra.mxu0 %v722
  %1638 = vmatprep.subr.mxu0 %v730
  %1639 = vmatpush1.msra.mxu0 %v728
  %1640 = vmatprep.subr.mxu0 0.0
  %1641 = vmatpush1.msra.mxu0 0.0
  %1642 = vmatprep.subr.mxu0 0.0
  %1643 = vmatpush1.msra.mxu0 0.0
  %1644 = vmatprep.subr.mxu0 0.0
  %1645 = vmatpush1.msra.mxu0 0.0
  %1646 = vmatprep.subr.mxu0 0.0
  %1647 = vmatpush1.msra.mxu0 0.0
  %1648 = vmatprep.subr.mxu0 0.0
  %1649 = vmatpush1.msra.mxu0 0.0
  %1650 = vmatprep.subr.mxu0 0.0
  %1651 = vmatpush1.msra.mxu0 0.0
  %1652 = vmatprep.subr.mxu0 0.0
  %1653 = vmatpush1.msra.mxu0 0.0
  %1654 = vmatprep.subr.mxu0 0.0
  %1655 = vmatpush1.msra.mxu0 0.0
  %1656 = vmatprep.subr.mxu0 0.0
  %1657 = vmatpush1.msra.mxu0 0.0
  %1658 = vmatprep.subr.mxu0 0.0
  %1659 = vmatpush1.msra.mxu0 0.0
  %1660 = vmatprep.subr.mxu0 0.0
  %1661 = vmatpush1.msra.mxu0 0.0
  %1662 = vmatprep.subr.mxu0 0.0
  %1663 = vmatpush1.msra.mxu0 0.0
  %1664 = vmatprep.subr.mxu0 0.0
  %1665 = vmatpush1.msra.mxu0 0.0
  %1666 = vmatprep.subr.mxu0 0.0
  %1667 = vmatpush1.msra.mxu0 0.0
  %1668 = vmatprep.subr.mxu0 0.0
  %1669 = vmatpush1.msra.mxu0 0.0
  %1670 = vmatprep.subr.mxu0 0.0
  %1671 = vmatpush1.msra.mxu0 0.0
  %1672 = vmatprep.subr.mxu0 0.0
  %1673 = vmatpush1.msra.mxu0 0.0
  %1674 = vmatprep.subr.mxu0 0.0
  %1675 = vmatpush1.msra.mxu0 0.0
  %1676 = vmatprep.subr.mxu0 0.0
  %1677 = vmatpush1.msra.mxu0 0.0
  %1678 = vmatprep.subr.mxu0 0.0
  %1679 = vmatpush1.msra.mxu0 0.0
  %1680 = vmatprep.subr.mxu0 0.0
  %1681 = vmatpush1.msra.mxu0 0.0
  %1682 = vmatprep.subr.mxu0 0.0
  %1683 = vmatpush1.msra.mxu0 0.0
  %1684 = vmatprep.subr.mxu0 0.0
  %1685 = vmatpush1.msra.mxu0 0.0
  %1686 = vmatprep.subr.mxu0 0.0
  %1687 = vmatpush1.msra.mxu0 0.0
  %1688 = vmatprep.subr.mxu0 0.0
  %1689 = vmatpush1.msra.mxu0 0.0
  %1690 = vmatprep.subr.mxu0 0.0
  %1691 = vmatpush1.msra.mxu0 0.0
  %1692 = vmatprep.subr.mxu0 0.0
  %1693 = vmatpush1.msra.mxu0 0.0
  %1694 = vmatprep.subr.mxu0 0.0
  %1695 = vmatpush1.msra.mxu0 0.0
  %1696 = vmatprep.subr.mxu0 0.0
  %1697 = vmatpush1.msra.mxu0 0.0
  %1698 = vmatprep.subr.mxu0 0.0
  %1699 = vmatpush1.msra.mxu0 0.0
  %1700 = vmatprep.mubr.f32.mxu0 0.0
  %1701 = vmatmul.mubr.f32.gmra.mrb[0].mxu0 %v1631
  %v1702 = vpop.f32.mrb[0].mxu0
  %v1703 = vadd.f32 0.0, %v1702
  %v1704 = vpop.f32.mrb[0].mxu0
  %v1705 = vadd.f32 0.0, %v1704
  %1706 = vmatprep.mubr.f32.mxu0 0.0
  %1707 = vmatmul.mubr.f32.gmra.mrb[0].mxu0 %v1634
  %v1708 = vpop.f32.mrb[0].mxu0
  %v1709 = vadd.f32 0.0, %v1708
  %v1710 = vpop.f32.mrb[0].mxu0
  %v1711 = vadd.f32 0.0, %v1710
  %1712 = vdwg.mxu0
  %1713 = vmatprep.subr.mxu0 %v801
  %1714 = vmatpush1.msra.mxu0 %v799
  %1715 = vmatprep.subr.mxu0 %v807
  %1716 = vmatpush1.msra.mxu0 %v805
  %1717 = vmatprep.subr.mxu0 0.0
  %1718 = vmatpush1.msra.mxu0 0.0
  %1719 = vmatprep.subr.mxu0 0.0
  %1720 = vmatpush1.msra.mxu0 0.0
  %1721 = vmatprep.subr.mxu0 0.0
  %1722 = vmatpush1.msra.mxu0 0.0
  %1723 = vmatprep.subr.mxu0 0.0
  %1724 = vmatpush1.msra.mxu0 0.0
  %1725 = vmatprep.subr.mxu0 0.0
  %1726 = vmatpush1.msra.mxu0 0.0
  %1727 = vmatprep.subr.mxu0 0.0
  %1728 = vmatpush1.msra.mxu0 0.0
  %1729 = vmatprep.subr.mxu0 0.0
  %1730 = vmatpush1.msra.mxu0 0.0
  %1731 = vmatprep.subr.mxu0 0.0
  %1732 = vmatpush1.msra.mxu0 0.0
  %1733 = vmatprep.subr.mxu0 0.0
  %1734 = vmatpush1.msra.mxu0 0.0
  %1735 = vmatprep.subr.mxu0 0.0
  %1736 = vmatpush1.msra.mxu0 0.0
  %1737 = vmatprep.subr.mxu0 0.0
  %1738 = vmatpush1.msra.mxu0 0.0
  %1739 = vmatprep.subr.mxu0 0.0
  %1740 = vmatpush1.msra.mxu0 0.0
  %1741 = vmatprep.subr.mxu0 0.0
  %1742 = vmatpush1.msra.mxu0 0.0
  %1743 = vmatprep.subr.mxu0 0.0
  %1744 = vmatpush1.msra.mxu0 0.0
  %1745 = vmatprep.subr.mxu0 0.0
  %1746 = vmatpush1.msra.mxu0 0.0
  %1747 = vmatprep.subr.mxu0 0.0
  %1748 = vmatpush1.msra.mxu0 0.0
  %1749 = vmatprep.subr.mxu0 0.0
  %1750 = vmatpush1.msra.mxu0 0.0
  %1751 = vmatprep.subr.mxu0 0.0
  %1752 = vmatpush1.msra.mxu0 0.0
  %1753 = vmatprep.subr.mxu0 0.0
  %1754 = vmatpush1.msra.mxu0 0.0
  %1755 = vmatprep.subr.mxu0 0.0
  %1756 = vmatpush1.msra.mxu0 0.0
  %1757 = vmatprep.subr.mxu0 0.0
  %1758 = vmatpush1.msra.mxu0 0.0
  %1759 = vmatprep.subr.mxu0 0.0
  %1760 = vmatpush1.msra.mxu0 0.0
  %1761 = vmatprep.subr.mxu0 0.0
  %1762 = vmatpush1.msra.mxu0 0.0
  %1763 = vmatprep.subr.mxu0 0.0
  %1764 = vmatpush1.msra.mxu0 0.0
  %1765 = vmatprep.subr.mxu0 0.0
  %1766 = vmatpush1.msra.mxu0 0.0
  %1767 = vmatprep.subr.mxu0 0.0
  %1768 = vmatpush1.msra.mxu0 0.0
  %1769 = vmatprep.subr.mxu0 0.0
  %1770 = vmatpush1.msra.mxu0 0.0
  %1771 = vmatprep.subr.mxu0 0.0
  %1772 = vmatpush1.msra.mxu0 0.0
  %1773 = vmatprep.subr.mxu0 0.0
  %1774 = vmatpush1.msra.mxu0 0.0
  %1775 = vmatprep.subr.mxu0 0.0
  %1776 = vmatpush1.msra.mxu0 0.0
  %1777 = vmatprep.mubr.f32.mxu0 0.0
  %1778 = vmatmul.mubr.f32.gmra.mrb[0].mxu0 %v1631
  %v1779 = vpop.f32.mrb[0].mxu0
  %v1780 = vadd.f32 0.0, %v1779
  %v1781 = vpop.f32.mrb[0].mxu0
  %v1782 = vadd.f32 0.0, %v1781
  %1783 = vmatprep.mubr.f32.mxu0 0.0
  %1784 = vmatmul.mubr.f32.gmra.mrb[0].mxu0 %v1634
  %v1785 = vpop.f32.mrb[0].mxu0
  %v1786 = vadd.f32 0.0, %v1785
  %v1787 = vpop.f32.mrb[0].mxu0
  %v1788 = vadd.f32 0.0, %v1787
  %1789 = vdwg.mxu0
  %1790 = vmatprep.subr.mxu0 %v878
  %1791 = vmatpush1.msra.mxu0 %v876
  %1792 = vmatprep.subr.mxu0 %v884
  %1793 = vmatpush1.msra.mxu0 %v882
  %1794 = vmatprep.subr.mxu0 0.0
  %1795 = vmatpush1.msra.mxu0 0.0
  %1796 = vmatprep.subr.mxu0 0.0
  %1797 = vmatpush1.msra.mxu0 0.0
  %1798 = vmatprep.subr.mxu0 0.0
  %1799 = vmatpush1.msra.mxu0 0.0
  %1800 = vmatprep.subr.mxu0 0.0
  %1801 = vmatpush1.msra.mxu0 0.0
  %1802 = vmatprep.subr.mxu0 0.0
  %1803 = vmatpush1.msra.mxu0 0.0
  %1804 = vmatprep.subr.mxu0 0.0
  %1805 = vmatpush1.msra.mxu0 0.0
  %1806 = vmatprep.subr.mxu0 0.0
  %1807 = vmatpush1.msra.mxu0 0.0
  %1808 = vmatprep.subr.mxu0 0.0
  %1809 = vmatpush1.msra.mxu0 0.0
  %1810 = vmatprep.subr.mxu0 0.0
  %1811 = vmatpush1.msra.mxu0 0.0
  %1812 = vmatprep.subr.mxu0 0.0
  %1813 = vmatpush1.msra.mxu0 0.0
  %1814 = vmatprep.subr.mxu0 0.0
  %1815 = vmatpush1.msra.mxu0 0.0
  %1816 = vmatprep.subr.mxu0 0.0
  %1817 = vmatpush1.msra.mxu0 0.0
  %1818 = vmatprep.subr.mxu0 0.0
  %1819 = vmatpush1.msra.mxu0 0.0
  %1820 = vmatprep.subr.mxu0 0.0
  %1821 = vmatpush1.msra.mxu0 0.0
  %1822 = vmatprep.subr.mxu0 0.0
  %1823 = vmatpush1.msra.mxu0 0.0
  %1824 = vmatprep.subr.mxu0 0.0
  %1825 = vmatpush1.msra.mxu0 0.0
  %1826 = vmatprep.subr.mxu0 0.0
  %1827 = vmatpush1.msra.mxu0 0.0
  %1828 = vmatprep.subr.mxu0 0.0
  %1829 = vmatpush1.msra.mxu0 0.0
  %1830 = vmatprep.subr.mxu0 0.0
  %1831 = vmatpush1.msra.mxu0 0.0
  %1832 = vmatprep.subr.mxu0 0.0
  %1833 = vmatpush1.msra.mxu0 0.0
  %1834 = vmatprep.subr.mxu0 0.0
  %1835 = vmatpush1.msra.mxu0 0.0
  %1836 = vmatprep.subr.mxu0 0.0
  %1837 = vmatpush1.msra.mxu0 0.0
  %1838 = vmatprep.subr.mxu0 0.0
  %1839 = vmatpush1.msra.mxu0 0.0
  %1840 = vmatprep.subr.mxu0 0.0
  %1841 = vmatpush1.msra.mxu0 0.0
  %1842 = vmatprep.subr.mxu0 0.0
  %1843 = vmatpush1.msra.mxu0 0.0
  %1844 = vmatprep.subr.mxu0 0.0
  %1845 = vmatpush1.msra.mxu0 0.0
  %1846 = vmatprep.subr.mxu0 0.0
  %1847 = vmatpush1.msra.mxu0 0.0
  %1848 = vmatprep.subr.mxu0 0.0
  %1849 = vmatpush1.msra.mxu0 0.0
  %1850 = vmatprep.subr.mxu0 0.0
  %1851 = vmatpush1.msra.mxu0 0.0
  %1852 = vmatprep.subr.mxu0 0.0
  %1853 = vmatpush1.msra.mxu0 0.0
  %1854 = vmatprep.mubr.f32.mxu0 0.0
  %1855 = vmatmul.mubr.f32.gmra.mrb[0].mxu0 %v1631
  %v1856 = vpop.f32.mrb[0].mxu0
  %v1857 = vadd.f32 0.0, %v1856
  %v1858 = vpop.f32.mrb[0].mxu0
  %v1859 = vadd.f32 0.0, %v1858
  %1860 = vmatprep.mubr.f32.mxu0 0.0
  %1861 = vmatmul.mubr.f32.gmra.mrb[0].mxu0 %v1634
  %v1862 = vpop.f32.mrb[0].mxu0
  %v1863 = vadd.f32 0.0, %v1862
  %v1864 = vpop.f32.mrb[0].mxu0
  %v1865 = vadd.f32 0.0, %v1864
  %1866 = vdwg.mxu0
  %1867 = vmatprep.subr.mxu0 %v955
  %1868 = vmatpush1.msra.mxu0 %v953
  %1869 = vmatprep.subr.mxu0 %v961
  %1870 = vmatpush1.msra.mxu0 %v959
  %1871 = vmatprep.subr.mxu0 0.0
  %1872 = vmatpush1.msra.mxu0 0.0
  %1873 = vmatprep.subr.mxu0 0.0
  %1874 = vmatpush1.msra.mxu0 0.0
  %1875 = vmatprep.subr.mxu0 0.0
  %1876 = vmatpush1.msra.mxu0 0.0
  %1877 = vmatprep.subr.mxu0 0.0
  %1878 = vmatpush1.msra.mxu0 0.0
  %1879 = vmatprep.subr.mxu0 0.0
  %1880 = vmatpush1.msra.mxu0 0.0
  %1881 = vmatprep.subr.mxu0 0.0
  %1882 = vmatpush1.msra.mxu0 0.0
  %1883 = vmatprep.subr.mxu0 0.0
  %1884 = vmatpush1.msra.mxu0 0.0
  %1885 = vmatprep.subr.mxu0 0.0
  %1886 = vmatpush1.msra.mxu0 0.0
  %1887 = vmatprep.subr.mxu0 0.0
  %1888 = vmatpush1.msra.mxu0 0.0
  %1889 = vmatprep.subr.mxu0 0.0
  %1890 = vmatpush1.msra.mxu0 0.0
  %1891 = vmatprep.subr.mxu0 0.0
  %1892 = vmatpush1.msra.mxu0 0.0
  %1893 = vmatprep.subr.mxu0 0.0
  %1894 = vmatpush1.msra.mxu0 0.0
  %1895 = vmatprep.subr.mxu0 0.0
  %1896 = vmatpush1.msra.mxu0 0.0
  %1897 = vmatprep.subr.mxu0 0.0
  %1898 = vmatpush1.msra.mxu0 0.0
  %1899 = vmatprep.subr.mxu0 0.0
  %1900 = vmatpush1.msra.mxu0 0.0
  %1901 = vmatprep.subr.mxu0 0.0
  %1902 = vmatpush1.msra.mxu0 0.0
  %1903 = vmatprep.subr.mxu0 0.0
  %1904 = vmatpush1.msra.mxu0 0.0
  %1905 = vmatprep.subr.mxu0 0.0
  %1906 = vmatpush1.msra.mxu0 0.0
  %1907 = vmatprep.subr.mxu0 0.0
  %1908 = vmatpush1.msra.mxu0 0.0
  %1909 = vmatprep.subr.mxu0 0.0
  %1910 = vmatpush1.msra.mxu0 0.0
  %1911 = vmatprep.subr.mxu0 0.0
  %1912 = vmatpush1.msra.mxu0 0.0
  %1913 = vmatprep.subr.mxu0 0.0
  %1914 = vmatpush1.msra.mxu0 0.0
  %1915 = vmatprep.subr.mxu0 0.0
  %1916 = vmatpush1.msra.mxu0 0.0
  %1917 = vmatprep.subr.mxu0 0.0
  %1918 = vmatpush1.msra.mxu0 0.0
  %1919 = vmatprep.subr.mxu0 0.0
  %1920 = vmatpush1.msra.mxu0 0.0
  %1921 = vmatprep.subr.mxu0 0.0
  %1922 = vmatpush1.msra.mxu0 0.0
  %1923 = vmatprep.subr.mxu0 0.0
  %1924 = vmatpush1.msra.mxu0 0.0
  %1925 = vmatprep.subr.mxu0 0.0
  %1926 = vmatpush1.msra.mxu0 0.0
  %1927 = vmatprep.subr.mxu0 0.0
  %1928 = vmatpush1.msra.mxu0 0.0
  %1929 = vmatprep.subr.mxu0 0.0
  %1930 = vmatpush1.msra.mxu0 0.0
  %1931 = vmatprep.mubr.f32.mxu0 0.0
  %1932 = vmatmul.mubr.f32.gmra.mrb[0].mxu0 %v1631
  %v1933 = vpop.f32.mrb[0].mxu0
  %v1934 = vadd.f32 0.0, %v1933
  %v1935 = vpop.f32.mrb[0].mxu0
  %v1936 = vadd.f32 0.0, %v1935
  %1937 = vmatprep.mubr.f32.mxu0 0.0
  %1938 = vmatmul.mubr.f32.gmra.mrb[0].mxu0 %v1634
  %v1939 = vpop.f32.mrb[0].mxu0
  %v1940 = vadd.f32 0.0, %v1939
  %v1941 = vpop.f32.mrb[0].mxu0
  %v1942 = vadd.f32 0.0, %v1941
  %1943 = vdwg.mxu0
  %1944 = vmatprep.subr.mxu0 %v1056
  %1945 = vmatpush1.msra.mxu0 %v1054
  %1946 = vmatprep.subr.mxu0 %v1062
  %1947 = vmatpush1.msra.mxu0 %v1060
  %1948 = vmatprep.subr.mxu0 0.0
  %1949 = vmatpush1.msra.mxu0 0.0
  %1950 = vmatprep.subr.mxu0 0.0
  %1951 = vmatpush1.msra.mxu0 0.0
  %1952 = vmatprep.subr.mxu0 0.0
  %1953 = vmatpush1.msra.mxu0 0.0
  %1954 = vmatprep.subr.mxu0 0.0
  %1955 = vmatpush1.msra.mxu0 0.0
  %1956 = vmatprep.subr.mxu0 0.0
  %1957 = vmatpush1.msra.mxu0 0.0
  %1958 = vmatprep.subr.mxu0 0.0
  %1959 = vmatpush1.msra.mxu0 0.0
  %1960 = vmatprep.subr.mxu0 0.0
  %1961 = vmatpush1.msra.mxu0 0.0
  %1962 = vmatprep.subr.mxu0 0.0
  %1963 = vmatpush1.msra.mxu0 0.0
  %1964 = vmatprep.subr.mxu0 0.0
  %1965 = vmatpush1.msra.mxu0 0.0
  %1966 = vmatprep.subr.mxu0 0.0
  %1967 = vmatpush1.msra.mxu0 0.0
  %1968 = vmatprep.subr.mxu0 0.0
  %1969 = vmatpush1.msra.mxu0 0.0
  %1970 = vmatprep.subr.mxu0 0.0
  %1971 = vmatpush1.msra.mxu0 0.0
  %1972 = vmatprep.subr.mxu0 0.0
  %1973 = vmatpush1.msra.mxu0 0.0
  %1974 = vmatprep.subr.mxu0 0.0
  %1975 = vmatpush1.msra.mxu0 0.0
  %1976 = vmatprep.subr.mxu0 0.0
  %1977 = vmatpush1.msra.mxu0 0.0
  %1978 = vmatprep.subr.mxu0 0.0
  %1979 = vmatpush1.msra.mxu0 0.0
  %1980 = vmatprep.subr.mxu0 0.0
  %1981 = vmatpush1.msra.mxu0 0.0
  %1982 = vmatprep.subr.mxu0 0.0
  %1983 = vmatpush1.msra.mxu0 0.0
  %1984 = vmatprep.subr.mxu0 0.0
  %1985 = vmatpush1.msra.mxu0 0.0
  %1986 = vmatprep.subr.mxu0 0.0
  %1987 = vmatpush1.msra.mxu0 0.0
  %1988 = vmatprep.subr.mxu0 0.0
  %1989 = vmatpush1.msra.mxu0 0.0
  %1990 = vmatprep.subr.mxu0 0.0
  %1991 = vmatpush1.msra.mxu0 0.0
  %1992 = vmatprep.subr.mxu0 0.0
  %1993 = vmatpush1.msra.mxu0 0.0
  %1994 = vmatprep.subr.mxu0 0.0
  %1995 = vmatpush1.msra.mxu0 0.0
  %1996 = vmatprep.subr.mxu0 0.0
  %1997 = vmatpush1.msra.mxu0 0.0
  %1998 = vmatprep.subr.mxu0 0.0
  %1999 = vmatpush1.msra.mxu0 0.0
  %2000 = vmatprep.subr.mxu0 0.0
  %2001 = vmatpush1.msra.mxu0 0.0
  %2002 = vmatprep.subr.mxu0 0.0
  %2003 = vmatpush1.msra.mxu0 0.0
  %2004 = vmatprep.subr.mxu0 0.0
  %2005 = vmatpush1.msra.mxu0 0.0
  %2006 = vmatprep.subr.mxu0 0.0
  %2007 = vmatpush1.msra.mxu0 0.0
  %2008 = vmatprep.mubr.f32.mxu0 0.0
  %2009 = vmatmul.mubr.f32.gmra.mrb[0].mxu0 %v1631
  %v2010 = vpop.f32.mrb[0].mxu0
  %v2011 = vadd.f32 0.0, %v2010
  %v2012 = vpop.f32.mrb[0].mxu0
  %v2013 = vadd.f32 0.0, %v2012
  %2014 = vmatprep.mubr.f32.mxu0 0.0
  %2015 = vmatmul.mubr.f32.gmra.mrb[0].mxu0 %v1634
  %v2016 = vpop.f32.mrb[0].mxu0
  %v2017 = vadd.f32 0.0, %v2016
  %v2018 = vpop.f32.mrb[0].mxu0
  %v2019 = vadd.f32 0.0, %v2018
  %2020 = vdwg.mxu0
  %2021 = vmatprep.subr.mxu0 %v1133
  %2022 = vmatpush1.msra.mxu0 %v1131
  %2023 = vmatprep.subr.mxu0 %v1139
  %2024 = vmatpush1.msra.mxu0 %v1137
  %2025 = vmatprep.subr.mxu0 0.0
  %2026 = vmatpush1.msra.mxu0 0.0
  %2027 = vmatprep.subr.mxu0 0.0
  %2028 = vmatpush1.msra.mxu0 0.0
  %2029 = vmatprep.subr.mxu0 0.0
  %2030 = vmatpush1.msra.mxu0 0.0
  %2031 = vmatprep.subr.mxu0 0.0
  %2032 = vmatpush1.msra.mxu0 0.0
  %2033 = vmatprep.subr.mxu0 0.0
  %2034 = vmatpush1.msra.mxu0 0.0
  %2035 = vmatprep.subr.mxu0 0.0
  %2036 = vmatpush1.msra.mxu0 0.0
  %2037 = vmatprep.subr.mxu0 0.0
  %2038 = vmatpush1.msra.mxu0 0.0
  %2039 = vmatprep.subr.mxu0 0.0
  %2040 = vmatpush1.msra.mxu0 0.0
  %2041 = vmatprep.subr.mxu0 0.0
  %2042 = vmatpush1.msra.mxu0 0.0
  %2043 = vmatprep.subr.mxu0 0.0
  %2044 = vmatpush1.msra.mxu0 0.0
  %2045 = vmatprep.subr.mxu0 0.0
  %2046 = vmatpush1.msra.mxu0 0.0
  %2047 = vmatprep.subr.mxu0 0.0
  %2048 = vmatpush1.msra.mxu0 0.0
  %2049 = vmatprep.subr.mxu0 0.0
  %2050 = vmatpush1.msra.mxu0 0.0
  %2051 = vmatprep.subr.mxu0 0.0
  %2052 = vmatpush1.msra.mxu0 0.0
  %2053 = vmatprep.subr.mxu0 0.0
  %2054 = vmatpush1.msra.mxu0 0.0
  %2055 = vmatprep.subr.mxu0 0.0
  %2056 = vmatpush1.msra.mxu0 0.0
  %2057 = vmatprep.subr.mxu0 0.0
  %2058 = vmatpush1.msra.mxu0 0.0
  %2059 = vmatprep.subr.mxu0 0.0
  %2060 = vmatpush1.msra.mxu0 0.0
  %2061 = vmatprep.subr.mxu0 0.0
  %2062 = vmatpush1.msra.mxu0 0.0
  %2063 = vmatprep.subr.mxu0 0.0
  %2064 = vmatpush1.msra.mxu0 0.0
  %2065 = vmatprep.subr.mxu0 0.0
  %2066 = vmatpush1.msra.mxu0 0.0
  %2067 = vmatprep.subr.mxu0 0.0
  %2068 = vmatpush1.msra.mxu0 0.0
  %2069 = vmatprep.subr.mxu0 0.0
  %2070 = vmatpush1.msra.mxu0 0.0
  %2071 = vmatprep.subr.mxu0 0.0
  %2072 = vmatpush1.msra.mxu0 0.0
  %2073 = vmatprep.subr.mxu0 0.0
  %2074 = vmatpush1.msra.mxu0 0.0
  %2075 = vmatprep.subr.mxu0 0.0
  %2076 = vmatpush1.msra.mxu0 0.0
  %2077 = vmatprep.subr.mxu0 0.0
  %2078 = vmatpush1.msra.mxu0 0.0
  %2079 = vmatprep.subr.mxu0 0.0
  %2080 = vmatpush1.msra.mxu0 0.0
  %2081 = vmatprep.subr.mxu0 0.0
  %2082 = vmatpush1.msra.mxu0 0.0
  %2083 = vmatprep.subr.mxu0 0.0
  %2084 = vmatpush1.msra.mxu0 0.0
  %2085 = vmatprep.mubr.f32.mxu0 0.0
  %2086 = vmatmul.mubr.f32.gmra.mrb[0].mxu0 %v1631
  %v2087 = vpop.f32.mrb[0].mxu0
  %v2088 = vadd.f32 0.0, %v2087
  %v2089 = vpop.f32.mrb[0].mxu0
  %v2090 = vadd.f32 0.0, %v2089
  %2091 = vmatprep.mubr.f32.mxu0 0.0
  %2092 = vmatmul.mubr.f32.gmra.mrb[0].mxu0 %v1634
  %v2093 = vpop.f32.mrb[0].mxu0
  %v2094 = vadd.f32 0.0, %v2093
  %v2095 = vpop.f32.mrb[0].mxu0
  %v2096 = vadd.f32 0.0, %v2095
  %2097 = vdwg.mxu0
  %2098 = vmatprep.subr.mxu0 %v1210
  %2099 = vmatpush1.msra.mxu0 %v1208
  %2100 = vmatprep.subr.mxu0 %v1216
  %2101 = vmatpush1.msra.mxu0 %v1214
  %2102 = vmatprep.subr.mxu0 0.0
  %2103 = vmatpush1.msra.mxu0 0.0
  %2104 = vmatprep.subr.mxu0 0.0
  %2105 = vmatpush1.msra.mxu0 0.0
  %2106 = vmatprep.subr.mxu0 0.0
  %2107 = vmatpush1.msra.mxu0 0.0
  %2108 = vmatprep.subr.mxu0 0.0
  %2109 = vmatpush1.msra.mxu0 0.0
  %2110 = vmatprep.subr.mxu0 0.0
  %2111 = vmatpush1.msra.mxu0 0.0
  %2112 = vmatprep.subr.mxu0 0.0
  %2113 = vmatpush1.msra.mxu0 0.0
  %2114 = vmatprep.subr.mxu0 0.0
  %2115 = vmatpush1.msra.mxu0 0.0
  %2116 = vmatprep.subr.mxu0 0.0
  %2117 = vmatpush1.msra.mxu0 0.0
  %2118 = vmatprep.subr.mxu0 0.0
  %2119 = vmatpush1.msra.mxu0 0.0
  %2120 = vmatprep.subr.mxu0 0.0
  %2121 = vmatpush1.msra.mxu0 0.0
  %2122 = vmatprep.subr.mxu0 0.0
  %2123 = vmatpush1.msra.mxu0 0.0
  %2124 = vmatprep.subr.mxu0 0.0
  %2125 = vmatpush1.msra.mxu0 0.0
  %2126 = vmatprep.subr.mxu0 0.0
  %2127 = vmatpush1.msra.mxu0 0.0
  %2128 = vmatprep.subr.mxu0 0.0
  %2129 = vmatpush1.msra.mxu0 0.0
  %2130 = vmatprep.subr.mxu0 0.0
  %2131 = vmatpush1.msra.mxu0 0.0
  %2132 = vmatprep.subr.mxu0 0.0
  %2133 = vmatpush1.msra.mxu0 0.0
  %2134 = vmatprep.subr.mxu0 0.0
  %2135 = vmatpush1.msra.mxu0 0.0
  %2136 = vmatprep.subr.mxu0 0.0
  %2137 = vmatpush1.msra.mxu0 0.0
  %2138 = vmatprep.subr.mxu0 0.0
  %2139 = vmatpush1.msra.mxu0 0.0
  %2140 = vmatprep.subr.mxu0 0.0
  %2141 = vmatpush1.msra.mxu0 0.0
  %2142 = vmatprep.subr.mxu0 0.0
  %2143 = vmatpush1.msra.mxu0 0.0
  %2144 = vmatprep.subr.mxu0 0.0
  %2145 = vmatpush1.msra.mxu0 0.0
  %2146 = vmatprep.subr.mxu0 0.0
  %2147 = vmatpush1.msra.mxu0 0.0
  %2148 = vmatprep.subr.mxu0 0.0
  %2149 = vmatpush1.msra.mxu0 0.0
  %2150 = vmatprep.subr.mxu0 0.0
  %2151 = vmatpush1.msra.mxu0 0.0
  %2152 = vmatprep.subr.mxu0 0.0
  %2153 = vmatpush1.msra.mxu0 0.0
  %2154 = vmatprep.subr.mxu0 0.0
  %2155 = vmatpush1.msra.mxu0 0.0
  %2156 = vmatprep.subr.mxu0 0.0
  %2157 = vmatpush1.msra.mxu0 0.0
  %2158 = vmatprep.subr.mxu0 0.0
  %2159 = vmatpush1.msra.mxu0 0.0
  %2160 = vmatprep.subr.mxu0 0.0
  %2161 = vmatpush1.msra.mxu0 0.0
  %2162 = vmatprep.mubr.f32.mxu0 0.0
  %2163 = vmatmul.mubr.f32.gmra.mrb[0].mxu0 %v1631
  %v2164 = vpop.f32.mrb[0].mxu0
  %v2165 = vadd.f32 0.0, %v2164
  %v2166 = vpop.f32.mrb[0].mxu0
  %v2167 = vadd.f32 0.0, %v2166
  %2168 = vmatprep.mubr.f32.mxu0 0.0
  %2169 = vmatmul.mubr.f32.gmra.mrb[0].mxu0 %v1634
  %v2170 = vpop.f32.mrb[0].mxu0
  %v2171 = vadd.f32 0.0, %v2170
  %v2172 = vpop.f32.mrb[0].mxu0
  %v2173 = vadd.f32 0.0, %v2172
  %2174 = vdwg.mxu0
  %2175 = vmatprep.subr.mxu0 %v1287
  %2176 = vmatpush1.msra.mxu0 %v1285
  %2177 = vmatprep.subr.mxu0 %v1293
  %2178 = vmatpush1.msra.mxu0 %v1291
  %2179 = vmatprep.subr.mxu0 0.0
  %2180 = vmatpush1.msra.mxu0 0.0
  %2181 = vmatprep.subr.mxu0 0.0
  %2182 = vmatpush1.msra.mxu0 0.0
  %2183 = vmatprep.subr.mxu0 0.0
  %2184 = vmatpush1.msra.mxu0 0.0
  %2185 = vmatprep.subr.mxu0 0.0
  %2186 = vmatpush1.msra.mxu0 0.0
  %2187 = vmatprep.subr.mxu0 0.0
  %2188 = vmatpush1.msra.mxu0 0.0
  %2189 = vmatprep.subr.mxu0 0.0
  %2190 = vmatpush1.msra.mxu0 0.0
  %2191 = vmatprep.subr.mxu0 0.0
  %2192 = vmatpush1.msra.mxu0 0.0
  %2193 = vmatprep.subr.mxu0 0.0
  %2194 = vmatpush1.msra.mxu0 0.0
  %2195 = vmatprep.subr.mxu0 0.0
  %2196 = vmatpush1.msra.mxu0 0.0
  %2197 = vmatprep.subr.mxu0 0.0
  %2198 = vmatpush1.msra.mxu0 0.0
  %2199 = vmatprep.subr.mxu0 0.0
  %2200 = vmatpush1.msra.mxu0 0.0
  %2201 = vmatprep.subr.mxu0 0.0
  %2202 = vmatpush1.msra.mxu0 0.0
  %2203 = vmatprep.subr.mxu0 0.0
  %2204 = vmatpush1.msra.mxu0 0.0
  %2205 = vmatprep.subr.mxu0 0.0
  %2206 = vmatpush1.msra.mxu0 0.0
  %2207 = vmatprep.subr.mxu0 0.0
  %2208 = vmatpush1.msra.mxu0 0.0
  %2209 = vmatprep.subr.mxu0 0.0
  %2210 = vmatpush1.msra.mxu0 0.0
  %2211 = vmatprep.subr.mxu0 0.0
  %2212 = vmatpush1.msra.mxu0 0.0
  %2213 = vmatprep.subr.mxu0 0.0
  %2214 = vmatpush1.msra.mxu0 0.0
  %2215 = vmatprep.subr.mxu0 0.0
  %2216 = vmatpush1.msra.mxu0 0.0
  %2217 = vmatprep.subr.mxu0 0.0
  %2218 = vmatpush1.msra.mxu0 0.0
  %2219 = vmatprep.subr.mxu0 0.0
  %2220 = vmatpush1.msra.mxu0 0.0
  %2221 = vmatprep.subr.mxu0 0.0
  %2222 = vmatpush1.msra.mxu0 0.0
  %2223 = vmatprep.subr.mxu0 0.0
  %2224 = vmatpush1.msra.mxu0 0.0
  %2225 = vmatprep.subr.mxu0 0.0
  %2226 = vmatpush1.msra.mxu0 0.0
  %2227 = vmatprep.subr.mxu0 0.0
  %2228 = vmatpush1.msra.mxu0 0.0
  %2229 = vmatprep.subr.mxu0 0.0
  %2230 = vmatpush1.msra.mxu0 0.0
  %2231 = vmatprep.subr.mxu0 0.0
  %2232 = vmatpush1.msra.mxu0 0.0
  %2233 = vmatprep.subr.mxu0 0.0
  %2234 = vmatpush1.msra.mxu0 0.0
  %2235 = vmatprep.subr.mxu0 0.0
  %2236 = vmatpush1.msra.mxu0 0.0
  %2237 = vmatprep.subr.mxu0 0.0
  %2238 = vmatpush1.msra.mxu0 0.0
  %2239 = vmatprep.mubr.f32.mxu0 0.0
  %2240 = vmatmul.mubr.f32.gmra.mrb[0].mxu0 %v1631
  %v2241 = vpop.f32.mrb[0].mxu0
  %v2242 = vadd.f32 0.0, %v2241
  %v2243 = vpop.f32.mrb[0].mxu0
  %v2244 = vadd.f32 0.0, %v2243
  %2245 = vmatprep.mubr.f32.mxu0 0.0
  %2246 = vmatmul.mubr.f32.gmra.mrb[0].mxu0 %v1634
  %v2247 = vpop.f32.mrb[0].mxu0
  %v2248 = vadd.f32 0.0, %v2247
  %v2249 = vpop.f32.mrb[0].mxu0
  %v2250 = vadd.f32 0.0, %v2249
  %2251 = vdwg.mxu0
  %2252 = vmatprep.subr.mxu0 %v1388
  %2253 = vmatpush1.msra.mxu0 %v1386
  %2254 = vmatprep.subr.mxu0 %v1394
  %2255 = vmatpush1.msra.mxu0 %v1392
  %2256 = vmatprep.subr.mxu0 0.0
  %2257 = vmatpush1.msra.mxu0 0.0
  %2258 = vmatprep.subr.mxu0 0.0
  %2259 = vmatpush1.msra.mxu0 0.0
  %2260 = vmatprep.subr.mxu0 0.0
  %2261 = vmatpush1.msra.mxu0 0.0
  %2262 = vmatprep.subr.mxu0 0.0
  %2263 = vmatpush1.msra.mxu0 0.0
  %2264 = vmatprep.subr.mxu0 0.0
  %2265 = vmatpush1.msra.mxu0 0.0
  %2266 = vmatprep.subr.mxu0 0.0
  %2267 = vmatpush1.msra.mxu0 0.0
  %2268 = vmatprep.subr.mxu0 0.0
  %2269 = vmatpush1.msra.mxu0 0.0
  %2270 = vmatprep.subr.mxu0 0.0
  %2271 = vmatpush1.msra.mxu0 0.0
  %2272 = vmatprep.subr.mxu0 0.0
  %2273 = vmatpush1.msra.mxu0 0.0
  %2274 = vmatprep.subr.mxu0 0.0
  %2275 = vmatpush1.msra.mxu0 0.0
  %2276 = vmatprep.subr.mxu0 0.0
  %2277 = vmatpush1.msra.mxu0 0.0
  %2278 = vmatprep.subr.mxu0 0.0
  %2279 = vmatpush1.msra.mxu0 0.0
  %2280 = vmatprep.subr.mxu0 0.0
  %2281 = vmatpush1.msra.mxu0 0.0
  %2282 = vmatprep.subr.mxu0 0.0
  %2283 = vmatpush1.msra.mxu0 0.0
  %2284 = vmatprep.subr.mxu0 0.0
  %2285 = vmatpush1.msra.mxu0 0.0
  %2286 = vmatprep.subr.mxu0 0.0
  %2287 = vmatpush1.msra.mxu0 0.0
  %2288 = vmatprep.subr.mxu0 0.0
  %2289 = vmatpush1.msra.mxu0 0.0
  %2290 = vmatprep.subr.mxu0 0.0
  %2291 = vmatpush1.msra.mxu0 0.0
  %2292 = vmatprep.subr.mxu0 0.0
  %2293 = vmatpush1.msra.mxu0 0.0
  %2294 = vmatprep.subr.mxu0 0.0
  %2295 = vmatpush1.msra.mxu0 0.0
  %2296 = vmatprep.subr.mxu0 0.0
  %2297 = vmatpush1.msra.mxu0 0.0
  %2298 = vmatprep.subr.mxu0 0.0
  %2299 = vmatpush1.msra.mxu0 0.0
  %2300 = vmatprep.subr.mxu0 0.0
  %2301 = vmatpush1.msra.mxu0 0.0
  %2302 = vmatprep.subr.mxu0 0.0
  %2303 = vmatpush1.msra.mxu0 0.0
  %2304 = vmatprep.subr.mxu0 0.0
  %2305 = vmatpush1.msra.mxu0 0.0
  %2306 = vmatprep.subr.mxu0 0.0
  %2307 = vmatpush1.msra.mxu0 0.0
  %2308 = vmatprep.subr.mxu0 0.0
  %2309 = vmatpush1.msra.mxu0 0.0
  %2310 = vmatprep.subr.mxu0 0.0
  %2311 = vmatpush1.msra.mxu0 0.0
  %2312 = vmatprep.subr.mxu0 0.0
  %2313 = vmatpush1.msra.mxu0 0.0
  %2314 = vmatprep.subr.mxu0 0.0
  %2315 = vmatpush1.msra.mxu0 0.0
  %2316 = vmatprep.mubr.f32.mxu0 0.0
  %2317 = vmatmul.mubr.f32.gmra.mrb[0].mxu0 %v1631
  %v2318 = vpop.f32.mrb[0].mxu0
  %v2319 = vadd.f32 0.0, %v2318
  %v2320 = vpop.f32.mrb[0].mxu0
  %v2321 = vadd.f32 0.0, %v2320
  %2322 = vmatprep.mubr.f32.mxu0 0.0
  %2323 = vmatmul.mubr.f32.gmra.mrb[0].mxu0 %v1634
  %v2324 = vpop.f32.mrb[0].mxu0
  %v2325 = vadd.f32 0.0, %v2324
  %v2326 = vpop.f32.mrb[0].mxu0
  %v2327 = vadd.f32 0.0, %v2326
  %2328 = vdwg.mxu0
  %2329 = vmatprep.subr.mxu0 %v1465
  %2330 = vmatpush1.msra.mxu0 %v1463
  %2331 = vmatprep.subr.mxu0 %v1471
  %2332 = vmatpush1.msra.mxu0 %v1469
  %2333 = vmatprep.subr.mxu0 0.0
  %2334 = vmatpush1.msra.mxu0 0.0
  %2335 = vmatprep.subr.mxu0 0.0
  %2336 = vmatpush1.msra.mxu0 0.0
  %2337 = vmatprep.subr.mxu0 0.0
  %2338 = vmatpush1.msra.mxu0 0.0
  %2339 = vmatprep.subr.mxu0 0.0
  %2340 = vmatpush1.msra.mxu0 0.0
  %2341 = vmatprep.subr.mxu0 0.0
  %2342 = vmatpush1.msra.mxu0 0.0
  %2343 = vmatprep.subr.mxu0 0.0
  %2344 = vmatpush1.msra.mxu0 0.0
  %2345 = vmatprep.subr.mxu0 0.0
  %2346 = vmatpush1.msra.mxu0 0.0
  %2347 = vmatprep.subr.mxu0 0.0
  %2348 = vmatpush1.msra.mxu0 0.0
  %2349 = vmatprep.subr.mxu0 0.0
  %2350 = vmatpush1.msra.mxu0 0.0
  %2351 = vmatprep.subr.mxu0 0.0
  %2352 = vmatpush1.msra.mxu0 0.0
  %2353 = vmatprep.subr.mxu0 0.0
  %2354 = vmatpush1.msra.mxu0 0.0
  %2355 = vmatprep.subr.mxu0 0.0
  %2356 = vmatpush1.msra.mxu0 0.0
  %2357 = vmatprep.subr.mxu0 0.0
  %2358 = vmatpush1.msra.mxu0 0.0
  %2359 = vmatprep.subr.mxu0 0.0
  %2360 = vmatpush1.msra.mxu0 0.0
  %2361 = vmatprep.subr.mxu0 0.0
  %2362 = vmatpush1.msra.mxu0 0.0
  %2363 = vmatprep.subr.mxu0 0.0
  %2364 = vmatpush1.msra.mxu0 0.0
  %2365 = vmatprep.subr.mxu0 0.0
  %2366 = vmatpush1.msra.mxu0 0.0
  %2367 = vmatprep.subr.mxu0 0.0
  %2368 = vmatpush1.msra.mxu0 0.0
  %2369 = vmatprep.subr.mxu0 0.0
  %2370 = vmatpush1.msra.mxu0 0.0
  %2371 = vmatprep.subr.mxu0 0.0
  %2372 = vmatpush1.msra.mxu0 0.0
  %2373 = vmatprep.subr.mxu0 0.0
  %2374 = vmatpush1.msra.mxu0 0.0
  %2375 = vmatprep.subr.mxu0 0.0
  %2376 = vmatpush1.msra.mxu0 0.0
  %2377 = vmatprep.subr.mxu0 0.0
  %2378 = vmatpush1.msra.mxu0 0.0
  %2379 = vmatprep.subr.mxu0 0.0
  %2380 = vmatpush1.msra.mxu0 0.0
  %2381 = vmatprep.subr.mxu0 0.0
  %2382 = vmatpush1.msra.mxu0 0.0
  %2383 = vmatprep.subr.mxu0 0.0
  %2384 = vmatpush1.msra.mxu0 0.0
  %2385 = vmatprep.subr.mxu0 0.0
  %2386 = vmatpush1.msra.mxu0 0.0
  %2387 = vmatprep.subr.mxu0 0.0
  %2388 = vmatpush1.msra.mxu0 0.0
  %2389 = vmatprep.subr.mxu0 0.0
  %2390 = vmatpush1.msra.mxu0 0.0
  %2391 = vmatprep.subr.mxu0 0.0
  %2392 = vmatpush1.msra.mxu0 0.0
  %2393 = vmatprep.mubr.f32.mxu0 0.0
  %2394 = vmatmul.mubr.f32.gmra.mrb[0].mxu0 %v1631
  %v2395 = vpop.f32.mrb[0].mxu0
  %v2396 = vadd.f32 0.0, %v2395
  %v2397 = vpop.f32.mrb[0].mxu0
  %v2398 = vadd.f32 0.0, %v2397
  %2399 = vmatprep.mubr.f32.mxu0 0.0
  %2400 = vmatmul.mubr.f32.gmra.mrb[0].mxu0 %v1634
  %v2401 = vpop.f32.mrb[0].mxu0
  %v2402 = vadd.f32 0.0, %v2401
  %v2403 = vpop.f32.mrb[0].mxu0
  %v2404 = vadd.f32 0.0, %v2403
  %2405 = vdwg.mxu0
  %2406 = vmatprep.subr.mxu0 %v1542
  %2407 = vmatpush1.msra.mxu0 %v1540
  %2408 = vmatprep.subr.mxu0 %v1548
  %2409 = vmatpush1.msra.mxu0 %v1546
  %2410 = vmatprep.subr.mxu0 0.0
  %2411 = vmatpush1.msra.mxu0 0.0
  %2412 = vmatprep.subr.mxu0 0.0
  %2413 = vmatpush1.msra.mxu0 0.0
  %2414 = vmatprep.subr.mxu0 0.0
  %2415 = vmatpush1.msra.mxu0 0.0
  %2416 = vmatprep.subr.mxu0 0.0
  %2417 = vmatpush1.msra.mxu0 0.0
  %2418 = vmatprep.subr.mxu0 0.0
  %2419 = vmatpush1.msra.mxu0 0.0
  %2420 = vmatprep.subr.mxu0 0.0
  %2421 = vmatpush1.msra.mxu0 0.0
  %2422 = vmatprep.subr.mxu0 0.0
  %2423 = vmatpush1.msra.mxu0 0.0
  %2424 = vmatprep.subr.mxu0 0.0
  %2425 = vmatpush1.msra.mxu0 0.0
  %2426 = vmatprep.subr.mxu0 0.0
  %2427 = vmatpush1.msra.mxu0 0.0
  %2428 = vmatprep.subr.mxu0 0.0
  %2429 = vmatpush1.msra.mxu0 0.0
  %2430 = vmatprep.subr.mxu0 0.0
  %2431 = vmatpush1.msra.mxu0 0.0
  %2432 = vmatprep.subr.mxu0 0.0
  %2433 = vmatpush1.msra.mxu0 0.0
  %2434 = vmatprep.subr.mxu0 0.0
  %2435 = vmatpush1.msra.mxu0 0.0
  %2436 = vmatprep.subr.mxu0 0.0
  %2437 = vmatpush1.msra.mxu0 0.0
  %2438 = vmatprep.subr.mxu0 0.0
  %2439 = vmatpush1.msra.mxu0 0.0
  %2440 = vmatprep.subr.mxu0 0.0
  %2441 = vmatpush1.msra.mxu0 0.0
  %2442 = vmatprep.subr.mxu0 0.0
  %2443 = vmatpush1.msra.mxu0 0.0
  %2444 = vmatprep.subr.mxu0 0.0
  %2445 = vmatpush1.msra.mxu0 0.0
  %2446 = vmatprep.subr.mxu0 0.0
  %2447 = vmatpush1.msra.mxu0 0.0
  %2448 = vmatprep.subr.mxu0 0.0
  %2449 = vmatpush1.msra.mxu0 0.0
  %2450 = vmatprep.subr.mxu0 0.0
  %2451 = vmatpush1.msra.mxu0 0.0
  %2452 = vmatprep.subr.mxu0 0.0
  %2453 = vmatpush1.msra.mxu0 0.0
  %2454 = vmatprep.subr.mxu0 0.0
  %2455 = vmatpush1.msra.mxu0 0.0
  %2456 = vmatprep.subr.mxu0 0.0
  %2457 = vmatpush1.msra.mxu0 0.0
  %2458 = vmatprep.subr.mxu0 0.0
  %2459 = vmatpush1.msra.mxu0 0.0
  %2460 = vmatprep.subr.mxu0 0.0
  %2461 = vmatpush1.msra.mxu0 0.0
  %2462 = vmatprep.subr.mxu0 0.0
  %2463 = vmatpush1.msra.mxu0 0.0
  %2464 = vmatprep.subr.mxu0 0.0
  %2465 = vmatpush1.msra.mxu0 0.0
  %2466 = vmatprep.subr.mxu0 0.0
  %2467 = vmatpush1.msra.mxu0 0.0
  %2468 = vmatprep.subr.mxu0 0.0
  %2469 = vmatpush1.msra.mxu0 0.0
  %2470 = vmatprep.mubr.f32.mxu0 0.0
  %2471 = vmatmul.mubr.f32.gmra.mrb[0].mxu0 %v1631
  %v2472 = vpop.f32.mrb[0].mxu0
  %v2473 = vadd.f32 0.0, %v2472
  %v2474 = vpop.f32.mrb[0].mxu0
  %v2475 = vadd.f32 0.0, %v2474
  %2476 = vmatprep.mubr.f32.mxu0 0.0
  %2477 = vmatmul.mubr.f32.gmra.mrb[0].mxu0 %v1634
  %v2478 = vpop.f32.mrb[0].mxu0
  %v2479 = vadd.f32 0.0, %v2478
  %v2480 = vpop.f32.mrb[0].mxu0
  %v2481 = vadd.f32 0.0, %v2480
  %2482 = vdwg.mxu0
  %2483 = vmatprep.subr.mxu0 %v1619
  %2484 = vmatpush1.msra.mxu0 %v1617
  %2485 = vmatprep.subr.mxu0 %v1625
  %2486 = vmatpush1.msra.mxu0 %v1623
  %2487 = vmatprep.subr.mxu0 0.0
  %2488 = vmatpush1.msra.mxu0 0.0
  %2489 = vmatprep.subr.mxu0 0.0
  %2490 = vmatpush1.msra.mxu0 0.0
  %2491 = vmatprep.subr.mxu0 0.0
  %2492 = vmatpush1.msra.mxu0 0.0
  %2493 = vmatprep.subr.mxu0 0.0
  %2494 = vmatpush1.msra.mxu0 0.0
  %2495 = vmatprep.subr.mxu0 0.0
  %2496 = vmatpush1.msra.mxu0 0.0
  %2497 = vmatprep.subr.mxu0 0.0
  %2498 = vmatpush1.msra.mxu0 0.0
  %2499 = vmatprep.subr.mxu0 0.0
  %2500 = vmatpush1.msra.mxu0 0.0
  %2501 = vmatprep.subr.mxu0 0.0
  %2502 = vmatpush1.msra.mxu0 0.0
  %2503 = vmatprep.subr.mxu0 0.0
  %2504 = vmatpush1.msra.mxu0 0.0
  %2505 = vmatprep.subr.mxu0 0.0
  %2506 = vmatpush1.msra.mxu0 0.0
  %2507 = vmatprep.subr.mxu0 0.0
  %2508 = vmatpush1.msra.mxu0 0.0
  %2509 = vmatprep.subr.mxu0 0.0
  %2510 = vmatpush1.msra.mxu0 0.0
  %2511 = vmatprep.subr.mxu0 0.0
  %2512 = vmatpush1.msra.mxu0 0.0
  %2513 = vmatprep.subr.mxu0 0.0
  %2514 = vmatpush1.msra.mxu0 0.0
  %2515 = vmatprep.subr.mxu0 0.0
  %2516 = vmatpush1.msra.mxu0 0.0
  %2517 = vmatprep.subr.mxu0 0.0
  %2518 = vmatpush1.msra.mxu0 0.0
  %2519 = vmatprep.subr.mxu0 0.0
  %2520 = vmatpush1.msra.mxu0 0.0
  %2521 = vmatprep.subr.mxu0 0.0
  %2522 = vmatpush1.msra.mxu0 0.0
  %2523 = vmatprep.subr.mxu0 0.0
  %2524 = vmatpush1.msra.mxu0 0.0
  %2525 = vmatprep.subr.mxu0 0.0
  %2526 = vmatpush1.msra.mxu0 0.0
  %2527 = vmatprep.subr.mxu0 0.0
  %2528 = vmatpush1.msra.mxu0 0.0
  %2529 = vmatprep.subr.mxu0 0.0
  %2530 = vmatpush1.msra.mxu0 0.0
  %2531 = vmatprep.subr.mxu0 0.0
  %2532 = vmatpush1.msra.mxu0 0.0
  %2533 = vmatprep.subr.mxu0 0.0
  %2534 = vmatpush1.msra.mxu0 0.0
  %2535 = vmatprep.subr.mxu0 0.0
  %2536 = vmatpush1.msra.mxu0 0.0
  %2537 = vmatprep.subr.mxu0 0.0
  %2538 = vmatpush1.msra.mxu0 0.0
  %2539 = vmatprep.subr.mxu0 0.0
  %2540 = vmatpush1.msra.mxu0 0.0
  %2541 = vmatprep.subr.mxu0 0.0
  %2542 = vmatpush1.msra.mxu0 0.0
  %2543 = vmatprep.subr.mxu0 0.0
  %2544 = vmatpush1.msra.mxu0 0.0
  %2545 = vmatprep.subr.mxu0 0.0
  %2546 = vmatpush1.msra.mxu0 0.0
  %2547 = vmatprep.mubr.f32.mxu0 0.0
  %2548 = vmatmul.mubr.f32.gmra.mrb[0].mxu0 %v1631
  %v2549 = vpop.f32.mrb[0].mxu0
  %v2550 = vadd.f32 0.0, %v2549
  %v2551 = vpop.f32.mrb[0].mxu0
  %v2552 = vadd.f32 0.0, %v2551
  %2553 = vmatprep.mubr.f32.mxu0 0.0
  %2554 = vmatmul.mubr.f32.gmra.mrb[0].mxu0 %v1634
  %v2555 = vpop.f32.mrb[0].mxu0
  %v2556 = vadd.f32 0.0, %v2555
  %v2557 = vpop.f32.mrb[0].mxu0
  %v2558 = vadd.f32 0.0, %v2557
  %2559 = vdwg.mxu0
  %v2560 = vmul.f32 %v1703, %v1703
  %v2561 = vmul.f32 %v1705, %v1705
  %v2562 = vmul.f32 %v1780, %v1780
  %v2563 = vmul.f32 %v1782, %v1782
  %v2564 = vmul.f32 %v1857, %v1857
  %v2565 = vmul.f32 %v1859, %v1859
  %v2566 = vmul.f32 %v1934, %v1934
  %v2567 = vmul.f32 %v1936, %v1936
  %v2568 = vmul.f32 %v1709, %v1709
  %v2569 = vmul.f32 %v1711, %v1711
  %v2570 = vmul.f32 %v1786, %v1786
  %v2571 = vmul.f32 %v1788, %v1788
  %v2572 = vmul.f32 %v1863, %v1863
  %v2573 = vmul.f32 %v1865, %v1865
  %v2574 = vmul.f32 %v1940, %v1940
  %v2575 = vmul.f32 %v1942, %v1942
  %v2576 = vmul.f32 %v2011, %v2011
  %v2577 = vmul.f32 %v2013, %v2013
  %v2578 = vmul.f32 %v2088, %v2088
  %v2579 = vmul.f32 %v2090, %v2090
  %v2580 = vmul.f32 %v2165, %v2165
  %v2581 = vmul.f32 %v2167, %v2167
  %v2582 = vmul.f32 %v2242, %v2242
  %v2583 = vmul.f32 %v2244, %v2244
  %v2584 = vmul.f32 %v2017, %v2017
  %v2585 = vmul.f32 %v2019, %v2019
  %v2586 = vmul.f32 %v2094, %v2094
  %v2587 = vmul.f32 %v2096, %v2096
  %v2588 = vmul.f32 %v2171, %v2171
  %v2589 = vmul.f32 %v2173, %v2173
  %v2590 = vmul.f32 %v2248, %v2248
  %v2591 = vmul.f32 %v2250, %v2250
  %v2592 = vadd.f32 %v2560, %v2576
  %v2593 = vadd.f32 %v2561, %v2577
  %v2594 = vadd.f32 %v2562, %v2578
  %v2595 = vadd.f32 %v2563, %v2579
  %v2596 = vadd.f32 %v2564, %v2580
  %v2597 = vadd.f32 %v2565, %v2581
  %v2598 = vadd.f32 %v2566, %v2582
  %v2599 = vadd.f32 %v2567, %v2583
  %v2600 = vadd.f32 %v2568, %v2584
  %v2601 = vadd.f32 %v2569, %v2585
  %v2602 = vadd.f32 %v2570, %v2586
  %v2603 = vadd.f32 %v2571, %v2587
  %v2604 = vadd.f32 %v2572, %v2588
  %v2605 = vadd.f32 %v2573, %v2589
  %v2606 = vadd.f32 %v2574, %v2590
  %v2607 = vadd.f32 %v2575, %v2591
  %v2608 = vmul.f32 %v2319, %v2319
  %v2609 = vmul.f32 %v2321, %v2321
  %v2610 = vmul.f32 %v2396, %v2396
  %v2611 = vmul.f32 %v2398, %v2398
  %v2612 = vmul.f32 %v2473, %v2473
  %v2613 = vmul.f32 %v2475, %v2475
  %v2614 = vmul.f32 %v2550, %v2550
  %v2615 = vmul.f32 %v2552, %v2552
  %v2616 = vmul.f32 %v2325, %v2325
  %v2617 = vmul.f32 %v2327, %v2327
  %v2618 = vmul.f32 %v2402, %v2402
  %v2619 = vmul.f32 %v2404, %v2404
  %v2620 = vmul.f32 %v2479, %v2479
  %v2621 = vmul.f32 %v2481, %v2481
  %v2622 = vmul.f32 %v2556, %v2556
  %v2623 = vmul.f32 %v2558, %v2558
  %v2624 = vadd.f32 %v2592, %v2608
  %v2625 = vadd.f32 %v2593, %v2609
  %v2626 = vadd.f32 %v2594, %v2610
  %v2627 = vadd.f32 %v2595, %v2611
  %v2628 = vadd.f32 %v2596, %v2612
  %v2629 = vadd.f32 %v2597, %v2613
  %v2630 = vadd.f32 %v2598, %v2614
  %v2631 = vadd.f32 %v2599, %v2615
  %v2632 = vadd.f32 %v2600, %v2616
  %v2633 = vadd.f32 %v2601, %v2617
  %v2634 = vadd.f32 %v2602, %v2618
  %v2635 = vadd.f32 %v2603, %v2619
  %v2636 = vadd.f32 %v2604, %v2620
  %v2637 = vadd.f32 %v2605, %v2621
  %v2638 = vadd.f32 %v2606, %v2622
  %v2639 = vadd.f32 %v2607, %v2623
  %v2640 = vmax.f32 %v2624, 1e-24
  %v2641 = vmax.f32 %v2625, 1e-24
  %v2642 = vmax.f32 %v2626, 1e-24
  %v2643 = vmax.f32 %v2627, 1e-24
  %v2644 = vmax.f32 %v2628, 1e-24
  %v2645 = vmax.f32 %v2629, 1e-24
  %v2646 = vmax.f32 %v2630, 1e-24
  %v2647 = vmax.f32 %v2631, 1e-24
  %v2648 = vmax.f32 %v2632, 1e-24
  %v2649 = vmax.f32 %v2633, 1e-24
  %v2650 = vmax.f32 %v2634, 1e-24
  %v2651 = vmax.f32 %v2635, 1e-24
  %v2652 = vmax.f32 %v2636, 1e-24
  %v2653 = vmax.f32 %v2637, 1e-24
  %v2654 = vmax.f32 %v2638, 1e-24
  %v2655 = vmax.f32 %v2639, 1e-24
  %v2656 = vrsqrt.pop %v2640
  %v2657 = vrsqrt.pop %v2641
  %v2658 = vrsqrt.pop %v2642
  %v2659 = vrsqrt.pop %v2643
  %v2660 = vrsqrt.pop %v2644
  %v2661 = vrsqrt.pop %v2645
  %v2662 = vrsqrt.pop %v2646
  %v2663 = vrsqrt.pop %v2647
  %v2664 = vrsqrt.pop %v2648
  %v2665 = vrsqrt.pop %v2649
  %v2666 = vrsqrt.pop %v2650
  %v2667 = vrsqrt.pop %v2651
  %v2668 = vrsqrt.pop %v2652
  %v2669 = vrsqrt.pop %v2653
  %v2670 = vrsqrt.pop %v2654
  %v2671 = vrsqrt.pop %v2655
  %v2672 = vmul.f32 %v1703, %v2656
  %v2673 = vmul.f32 %v1705, %v2657
  %v2674 = vmul.f32 %v1780, %v2658
  %v2675 = vmul.f32 %v1782, %v2659
  %v2676 = vmul.f32 %v1857, %v2660
  %v2677 = vmul.f32 %v1859, %v2661
  %v2678 = vmul.f32 %v1934, %v2662
  %v2679 = vmul.f32 %v1936, %v2663
  %v2680 = vmul.f32 %v1709, %v2664
  %v2681 = vmul.f32 %v1711, %v2665
  %v2682 = vmul.f32 %v1786, %v2666
  %v2683 = vmul.f32 %v1788, %v2667
  %v2684 = vmul.f32 %v1863, %v2668
  %v2685 = vmul.f32 %v1865, %v2669
  %v2686 = vmul.f32 %v1940, %v2670
  %v2687 = vmul.f32 %v1942, %v2671
  %v2688 = vmul.f32 %v2011, %v2656
  %v2689 = vmul.f32 %v2013, %v2657
  %v2690 = vmul.f32 %v2088, %v2658
  %v2691 = vmul.f32 %v2090, %v2659
  %v2692 = vmul.f32 %v2165, %v2660
  %v2693 = vmul.f32 %v2167, %v2661
  %v2694 = vmul.f32 %v2242, %v2662
  %v2695 = vmul.f32 %v2244, %v2663
  %v2696 = vmul.f32 %v2017, %v2664
  %v2697 = vmul.f32 %v2019, %v2665
  %v2698 = vmul.f32 %v2094, %v2666
  %v2699 = vmul.f32 %v2096, %v2667
  %v2700 = vmul.f32 %v2171, %v2668
  %v2701 = vmul.f32 %v2173, %v2669
  %v2702 = vmul.f32 %v2248, %v2670
  %v2703 = vmul.f32 %v2250, %v2671
  %v2704 = vmul.f32 %v2319, %v2656
  %v2705 = vmul.f32 %v2321, %v2657
  %v2706 = vmul.f32 %v2396, %v2658
  %v2707 = vmul.f32 %v2398, %v2659
  %v2708 = vmul.f32 %v2473, %v2660
  %v2709 = vmul.f32 %v2475, %v2661
  %v2710 = vmul.f32 %v2550, %v2662
  %v2711 = vmul.f32 %v2552, %v2663
  %v2712 = vmul.f32 %v2325, %v2664
  %v2713 = vmul.f32 %v2327, %v2665
  %v2714 = vmul.f32 %v2402, %v2666
  %v2715 = vmul.f32 %v2404, %v2667
  %v2716 = vmul.f32 %v2479, %v2668
  %v2717 = vmul.f32 %v2481, %v2669
  %v2718 = vmul.f32 %v2556, %v2670
  %v2719 = vmul.f32 %v2558, %v2671
  %v2720 = vmul.f32 %v722, %v2672
  %v2721 = vmul.f32 %v724, %v2673
  %v2722 = vmul.f32 %v799, %v2674
  %v2723 = vmul.f32 %v801, %v2675
  %v2724 = vmul.f32 %v876, %v2676
  %v2725 = vmul.f32 %v878, %v2677
  %v2726 = vmul.f32 %v953, %v2678
  %v2727 = vmul.f32 %v955, %v2679
  %v2728 = vmul.f32 %v728, %v2680
  %v2729 = vmul.f32 %v730, %v2681
  %v2730 = vmul.f32 %v805, %v2682
  %v2731 = vmul.f32 %v807, %v2683
  %v2732 = vmul.f32 %v882, %v2684
  %v2733 = vmul.f32 %v884, %v2685
  %v2734 = vmul.f32 %v959, %v2686
  %v2735 = vmul.f32 %v961, %v2687
  %v2736 = vmul.f32 %v1054, %v2688
  %v2737 = vmul.f32 %v1056, %v2689
  %v2738 = vmul.f32 %v1131, %v2690
  %v2739 = vmul.f32 %v1133, %v2691
  %v2740 = vmul.f32 %v1208, %v2692
  %v2741 = vmul.f32 %v1210, %v2693
  %v2742 = vmul.f32 %v1285, %v2694
  %v2743 = vmul.f32 %v1287, %v2695
  %v2744 = vmul.f32 %v1060, %v2696
  %v2745 = vmul.f32 %v1062, %v2697
  %v2746 = vmul.f32 %v1137, %v2698
  %v2747 = vmul.f32 %v1139, %v2699
  %v2748 = vmul.f32 %v1214, %v2700
  %v2749 = vmul.f32 %v1216, %v2701
  %v2750 = vmul.f32 %v1291, %v2702
  %v2751 = vmul.f32 %v1293, %v2703
  %v2752 = vadd.f32 %v2720, %v2736
  %v2753 = vadd.f32 %v2721, %v2737
  %v2754 = vadd.f32 %v2722, %v2738
  %v2755 = vadd.f32 %v2723, %v2739
  %v2756 = vadd.f32 %v2724, %v2740
  %v2757 = vadd.f32 %v2725, %v2741
  %v2758 = vadd.f32 %v2726, %v2742
  %v2759 = vadd.f32 %v2727, %v2743
  %v2760 = vadd.f32 %v2728, %v2744
  %v2761 = vadd.f32 %v2729, %v2745
  %v2762 = vadd.f32 %v2730, %v2746
  %v2763 = vadd.f32 %v2731, %v2747
  %v2764 = vadd.f32 %v2732, %v2748
  %v2765 = vadd.f32 %v2733, %v2749
  %v2766 = vadd.f32 %v2734, %v2750
  %v2767 = vadd.f32 %v2735, %v2751
  %v2768 = vmul.f32 %v1386, %v2704
  %v2769 = vmul.f32 %v1388, %v2705
  %v2770 = vmul.f32 %v1463, %v2706
  %v2771 = vmul.f32 %v1465, %v2707
  %v2772 = vmul.f32 %v1540, %v2708
  %v2773 = vmul.f32 %v1542, %v2709
  %v2774 = vmul.f32 %v1617, %v2710
  %v2775 = vmul.f32 %v1619, %v2711
  %v2776 = vmul.f32 %v1392, %v2712
  %v2777 = vmul.f32 %v1394, %v2713
  %v2778 = vmul.f32 %v1469, %v2714
  %v2779 = vmul.f32 %v1471, %v2715
  %v2780 = vmul.f32 %v1546, %v2716
  %v2781 = vmul.f32 %v1548, %v2717
  %v2782 = vmul.f32 %v1623, %v2718
  %v2783 = vmul.f32 %v1625, %v2719
  %v2784 = vadd.f32 %v2752, %v2768
  %v2785 = vadd.f32 %v2753, %v2769
  %v2786 = vadd.f32 %v2754, %v2770
  %v2787 = vadd.f32 %v2755, %v2771
  %v2788 = vadd.f32 %v2756, %v2772
  %v2789 = vadd.f32 %v2757, %v2773
  %v2790 = vadd.f32 %v2758, %v2774
  %v2791 = vadd.f32 %v2759, %v2775
  %v2792 = vadd.f32 %v2760, %v2776
  %v2793 = vadd.f32 %v2761, %v2777
  %v2794 = vadd.f32 %v2762, %v2778
  %v2795 = vadd.f32 %v2763, %v2779
  %v2796 = vadd.f32 %v2764, %v2780
  %v2797 = vadd.f32 %v2765, %v2781
  %v2798 = vadd.f32 %v2766, %v2782
  %v2799 = vadd.f32 %v2767, %v2783
  %vm2800 = vcmp.ge.f32.partialorder %v2784, 0.0
  %vm2801 = vcmp.ge.f32.partialorder %v2785, 0.0
  %vm2802 = vcmp.ge.f32.partialorder %v2786, 0.0
  %vm2803 = vcmp.ge.f32.partialorder %v2787, 0.0
  %vm2804 = vcmp.ge.f32.partialorder %v2788, 0.0
  %vm2805 = vcmp.ge.f32.partialorder %v2789, 0.0
  %vm2806 = vcmp.ge.f32.partialorder %v2790, 0.0
  %vm2807 = vcmp.ge.f32.partialorder %v2791, 0.0
  %vm2808 = vcmp.ge.f32.partialorder %v2792, 0.0
  %vm2809 = vcmp.ge.f32.partialorder %v2793, 0.0
  %vm2810 = vcmp.ge.f32.partialorder %v2794, 0.0
  %vm2811 = vcmp.ge.f32.partialorder %v2795, 0.0
  %vm2812 = vcmp.ge.f32.partialorder %v2796, 0.0
  %vm2813 = vcmp.ge.f32.partialorder %v2797, 0.0
  %vm2814 = vcmp.ge.f32.partialorder %v2798, 0.0
  %vm2815 = vcmp.ge.f32.partialorder %v2799, 0.0
  %v2816 = vmul.f32 %v2784, 0.2
  %v2817 = vmul.f32 %v2785, 0.2
  %v2818 = vmul.f32 %v2786, 0.2
  %v2819 = vmul.f32 %v2787, 0.2
  %v2820 = vmul.f32 %v2788, 0.2
  %v2821 = vmul.f32 %v2789, 0.2
  %v2822 = vmul.f32 %v2790, 0.2
  %v2823 = vmul.f32 %v2791, 0.2
  %v2824 = vmul.f32 %v2792, 0.2
  %v2825 = vmul.f32 %v2793, 0.2
  %v2826 = vmul.f32 %v2794, 0.2
  %v2827 = vmul.f32 %v2795, 0.2
  %v2828 = vmul.f32 %v2796, 0.2
  %v2829 = vmul.f32 %v2797, 0.2
  %v2830 = vmul.f32 %v2798, 0.2
  %v2831 = vmul.f32 %v2799, 0.2
  %v2832 = vsel %vm2800, %v2784, %v2816
  %v2833 = vsel %vm2801, %v2785, %v2817
  %v2834 = vsel %vm2802, %v2786, %v2818
  %v2835 = vsel %vm2803, %v2787, %v2819
  %v2836 = vsel %vm2804, %v2788, %v2820
  %v2837 = vsel %vm2805, %v2789, %v2821
  %v2838 = vsel %vm2806, %v2790, %v2822
  %v2839 = vsel %vm2807, %v2791, %v2823
  %v2840 = vsel %vm2808, %v2792, %v2824
  %v2841 = vsel %vm2809, %v2793, %v2825
  %v2842 = vsel %vm2810, %v2794, %v2826
  %v2843 = vsel %vm2811, %v2795, %v2827
  %v2844 = vsel %vm2812, %v2796, %v2828
  %v2845 = vsel %vm2813, %v2797, %v2829
  %v2846 = vsel %vm2814, %v2798, %v2830
  %v2847 = vsel %vm2815, %v2799, %v2831
  %v2848 = vsub.f32 %v2832, %v2784
  %v2849 = vsub.f32 %v2833, %v2785
  %v2850 = vsub.f32 %v2834, %v2786
  %v2851 = vsub.f32 %v2835, %v2787
  %v2852 = vsub.f32 %v2836, %v2788
  %v2853 = vsub.f32 %v2837, %v2789
  %v2854 = vsub.f32 %v2838, %v2790
  %v2855 = vsub.f32 %v2839, %v2791
  %v2856 = vsub.f32 %v2840, %v2792
  %v2857 = vsub.f32 %v2841, %v2793
  %v2858 = vsub.f32 %v2842, %v2794
  %v2859 = vsub.f32 %v2843, %v2795
  %v2860 = vsub.f32 %v2844, %v2796
  %v2861 = vsub.f32 %v2845, %v2797
  %v2862 = vsub.f32 %v2846, %v2798
  %v2863 = vsub.f32 %v2847, %v2799
  %v2864 = vmul.f32 %v2848, %v2672
  %v2865 = vmul.f32 %v2849, %v2673
  %v2866 = vmul.f32 %v2850, %v2674
  %v2867 = vmul.f32 %v2851, %v2675
  %v2868 = vmul.f32 %v2852, %v2676
  %v2869 = vmul.f32 %v2853, %v2677
  %v2870 = vmul.f32 %v2854, %v2678
  %v2871 = vmul.f32 %v2855, %v2679
  %v2872 = vmul.f32 %v2856, %v2680
  %v2873 = vmul.f32 %v2857, %v2681
  %v2874 = vmul.f32 %v2858, %v2682
  %v2875 = vmul.f32 %v2859, %v2683
  %v2876 = vmul.f32 %v2860, %v2684
  %v2877 = vmul.f32 %v2861, %v2685
  %v2878 = vmul.f32 %v2862, %v2686
  %v2879 = vmul.f32 %v2863, %v2687
  %v2880 = vadd.f32 %v722, %v2864
  %v2881 = vadd.f32 %v724, %v2865
  %v2882 = vadd.f32 %v799, %v2866
  %v2883 = vadd.f32 %v801, %v2867
  %v2884 = vadd.f32 %v876, %v2868
  %v2885 = vadd.f32 %v878, %v2869
  %v2886 = vadd.f32 %v953, %v2870
  %v2887 = vadd.f32 %v955, %v2871
  %v2888 = vadd.f32 %v728, %v2872
  %v2889 = vadd.f32 %v730, %v2873
  %v2890 = vadd.f32 %v805, %v2874
  %v2891 = vadd.f32 %v807, %v2875
  %v2892 = vadd.f32 %v882, %v2876
  %v2893 = vadd.f32 %v884, %v2877
  %v2894 = vadd.f32 %v959, %v2878
  %v2895 = vadd.f32 %v961, %v2879
  %v2896 = vmul.f32 %v2848, %v2688
  %v2897 = vmul.f32 %v2849, %v2689
  %v2898 = vmul.f32 %v2850, %v2690
  %v2899 = vmul.f32 %v2851, %v2691
  %v2900 = vmul.f32 %v2852, %v2692
  %v2901 = vmul.f32 %v2853, %v2693
  %v2902 = vmul.f32 %v2854, %v2694
  %v2903 = vmul.f32 %v2855, %v2695
  %v2904 = vmul.f32 %v2856, %v2696
  %v2905 = vmul.f32 %v2857, %v2697
  %v2906 = vmul.f32 %v2858, %v2698
  %v2907 = vmul.f32 %v2859, %v2699
  %v2908 = vmul.f32 %v2860, %v2700
  %v2909 = vmul.f32 %v2861, %v2701
  %v2910 = vmul.f32 %v2862, %v2702
  %v2911 = vmul.f32 %v2863, %v2703
  %v2912 = vadd.f32 %v1054, %v2896
  %v2913 = vadd.f32 %v1056, %v2897
  %v2914 = vadd.f32 %v1131, %v2898
  %v2915 = vadd.f32 %v1133, %v2899
  %v2916 = vadd.f32 %v1208, %v2900
  %v2917 = vadd.f32 %v1210, %v2901
  %v2918 = vadd.f32 %v1285, %v2902
  %v2919 = vadd.f32 %v1287, %v2903
  %v2920 = vadd.f32 %v1060, %v2904
  %v2921 = vadd.f32 %v1062, %v2905
  %v2922 = vadd.f32 %v1137, %v2906
  %v2923 = vadd.f32 %v1139, %v2907
  %v2924 = vadd.f32 %v1214, %v2908
  %v2925 = vadd.f32 %v1216, %v2909
  %v2926 = vadd.f32 %v1291, %v2910
  %v2927 = vadd.f32 %v1293, %v2911
  %v2928 = vmul.f32 %v2848, %v2704
  %v2929 = vmul.f32 %v2849, %v2705
  %v2930 = vmul.f32 %v2850, %v2706
  %v2931 = vmul.f32 %v2851, %v2707
  %v2932 = vmul.f32 %v2852, %v2708
  %v2933 = vmul.f32 %v2853, %v2709
  %v2934 = vmul.f32 %v2854, %v2710
  %v2935 = vmul.f32 %v2855, %v2711
  %v2936 = vmul.f32 %v2856, %v2712
  %v2937 = vmul.f32 %v2857, %v2713
  %v2938 = vmul.f32 %v2858, %v2714
  %v2939 = vmul.f32 %v2859, %v2715
  %v2940 = vmul.f32 %v2860, %v2716
  %v2941 = vmul.f32 %v2861, %v2717
  %v2942 = vmul.f32 %v2862, %v2718
  %v2943 = vmul.f32 %v2863, %v2719
  %v2944 = vadd.f32 %v1386, %v2928
  %v2945 = vadd.f32 %v1388, %v2929
  %v2946 = vadd.f32 %v1463, %v2930
  %v2947 = vadd.f32 %v1465, %v2931
  %v2948 = vadd.f32 %v1540, %v2932
  %v2949 = vadd.f32 %v1542, %v2933
  %v2950 = vadd.f32 %v1617, %v2934
  %v2951 = vadd.f32 %v1619, %v2935
  %v2952 = vadd.f32 %v1392, %v2936
  %v2953 = vadd.f32 %v1394, %v2937
  %v2954 = vadd.f32 %v1469, %v2938
  %v2955 = vadd.f32 %v1471, %v2939
  %v2956 = vadd.f32 %v1546, %v2940
  %v2957 = vadd.f32 %v1548, %v2941
  %v2958 = vadd.f32 %v1623, %v2942
  %v2959 = vadd.f32 %v1625, %v2943
  %v2960 = vadd.f32 %v2880, %v2881
  %v2961 = vadd.f32 %v2888, %v2889
  %v2962 = vadd.f32 %v2960, %v2882
  %v2963 = vadd.f32 %v2961, %v2890
  %v2964 = vadd.f32 %v2962, %v2883
  %v2965 = vadd.f32 %v2963, %v2891
  %v2966 = vadd.f32 %v2964, %v2884
  %v2967 = vadd.f32 %v2965, %v2892
  %v2968 = vadd.f32 %v2966, %v2885
  %v2969 = vadd.f32 %v2967, %v2893
  %v2970 = vadd.f32 %v2968, %v2886
  %v2971 = vadd.f32 %v2969, %v2894
  %v2972 = vadd.f32 %v2970, %v2887
  %v2973 = vadd.f32 %v2971, %v2895
  %v2974 = vmul.f32 %v2972, 0.125
  %v2975 = vmul.f32 %v2973, 0.125
  %v2976 = vadd.f32 %v2912, %v2913
  %v2977 = vadd.f32 %v2920, %v2921
  %v2978 = vadd.f32 %v2976, %v2914
  %v2979 = vadd.f32 %v2977, %v2922
  %v2980 = vadd.f32 %v2978, %v2915
  %v2981 = vadd.f32 %v2979, %v2923
  %v2982 = vadd.f32 %v2980, %v2916
  %v2983 = vadd.f32 %v2981, %v2924
  %v2984 = vadd.f32 %v2982, %v2917
  %v2985 = vadd.f32 %v2983, %v2925
  %v2986 = vadd.f32 %v2984, %v2918
  %v2987 = vadd.f32 %v2985, %v2926
  %v2988 = vadd.f32 %v2986, %v2919
  %v2989 = vadd.f32 %v2987, %v2927
  %v2990 = vmul.f32 %v2988, 0.125
  %v2991 = vmul.f32 %v2989, 0.125
  %v2992 = vadd.f32 %v2944, %v2945
  %v2993 = vadd.f32 %v2952, %v2953
  %v2994 = vadd.f32 %v2992, %v2946
  %v2995 = vadd.f32 %v2993, %v2954
  %v2996 = vadd.f32 %v2994, %v2947
  %v2997 = vadd.f32 %v2995, %v2955
  %v2998 = vadd.f32 %v2996, %v2948
  %v2999 = vadd.f32 %v2997, %v2956
  %v3000 = vadd.f32 %v2998, %v2949
  %v3001 = vadd.f32 %v2999, %v2957
  %v3002 = vadd.f32 %v3000, %v2950
  %v3003 = vadd.f32 %v3001, %v2958
  %v3004 = vadd.f32 %v3002, %v2951
  %v3005 = vadd.f32 %v3003, %v2959
  %v3006 = vmul.f32 %v3004, 0.125
  %v3007 = vmul.f32 %v3005, 0.125
  %v3008 = vld [vmem:[%s8] sm:$0xff]
  %v3009 = vld [vmem:[%s8 + $0x8] sm:$0xff]
  %v3010 = vld [vmem:[%s8 + $0x10] sm:$0xff]
  %v3011 = vld [vmem:[%s8 + $0x18] sm:$0xff]
  %v3012 = vld [vmem:[%s4] sm:$0xff]
  %v3013 = vld [vmem:[%s4 + $0x8] sm:$0xff]
  %v3015 = vsel %vm1629, %v3012, 0
  %v3018 = vsel %vm1629, %v3013, 0
  %3020 = vmatprep.subr.mxu0 0.0
  %3021 = vmatpush1.msra.mxu0 %v2974
  %3022 = vmatprep.subr.mxu0 0.0
  %3023 = vmatpush1.msra.mxu0 %v2975
  %3024 = vmatprep.subr.mxu0 0.0
  %3025 = vmatpush1.msra.mxu0 0.0
  %3026 = vmatprep.subr.mxu0 0.0
  %3027 = vmatpush1.msra.mxu0 0.0
  %3028 = vmatprep.subr.mxu0 0.0
  %3029 = vmatpush1.msra.mxu0 0.0
  %3030 = vmatprep.subr.mxu0 0.0
  %3031 = vmatpush1.msra.mxu0 0.0
  %3032 = vmatprep.subr.mxu0 0.0
  %3033 = vmatpush1.msra.mxu0 0.0
  %3034 = vmatprep.subr.mxu0 0.0
  %3035 = vmatpush1.msra.mxu0 0.0
  %3036 = vmatprep.subr.mxu0 0.0
  %3037 = vmatpush1.msra.mxu0 0.0
  %3038 = vmatprep.subr.mxu0 0.0
  %3039 = vmatpush1.msra.mxu0 0.0
  %3040 = vmatprep.subr.mxu0 0.0
  %3041 = vmatpush1.msra.mxu0 0.0
  %3042 = vmatprep.subr.mxu0 0.0
  %3043 = vmatpush1.msra.mxu0 0.0
  %3044 = vmatprep.subr.mxu0 0.0
  %3045 = vmatpush1.msra.mxu0 0.0
  %3046 = vmatprep.subr.mxu0 0.0
  %3047 = vmatpush1.msra.mxu0 0.0
  %3048 = vmatprep.subr.mxu0 0.0
  %3049 = vmatpush1.msra.mxu0 0.0
  %3050 = vmatprep.subr.mxu0 0.0
  %3051 = vmatpush1.msra.mxu0 0.0
  %3052 = vmatprep.subr.mxu0 0.0
  %3053 = vmatpush1.msra.mxu0 0.0
  %3054 = vmatprep.subr.mxu0 0.0
  %3055 = vmatpush1.msra.mxu0 0.0
  %3056 = vmatprep.subr.mxu0 0.0
  %3057 = vmatpush1.msra.mxu0 0.0
  %3058 = vmatprep.subr.mxu0 0.0
  %3059 = vmatpush1.msra.mxu0 0.0
  %3060 = vmatprep.subr.mxu0 0.0
  %3061 = vmatpush1.msra.mxu0 0.0
  %3062 = vmatprep.subr.mxu0 0.0
  %3063 = vmatpush1.msra.mxu0 0.0
  %3064 = vmatprep.subr.mxu0 0.0
  %3065 = vmatpush1.msra.mxu0 0.0
  %3066 = vmatprep.subr.mxu0 0.0
  %3067 = vmatpush1.msra.mxu0 0.0
  %3068 = vmatprep.subr.mxu0 0.0
  %3069 = vmatpush1.msra.mxu0 0.0
  %3070 = vmatprep.subr.mxu0 0.0
  %3071 = vmatpush1.msra.mxu0 0.0
  %3072 = vmatprep.subr.mxu0 0.0
  %3073 = vmatpush1.msra.mxu0 0.0
  %3074 = vmatprep.subr.mxu0 0.0
  %3075 = vmatpush1.msra.mxu0 0.0
  %3076 = vmatprep.subr.mxu0 0.0
  %3077 = vmatpush1.msra.mxu0 0.0
  %3078 = vmatprep.subr.mxu0 0.0
  %3079 = vmatpush1.msra.mxu0 0.0
  %3080 = vmatprep.subr.mxu0 0.0
  %3081 = vmatpush1.msra.mxu0 0.0
  %3082 = vmatprep.subr.mxu0 0.0
  %3083 = vmatpush1.msra.mxu0 0.0
  %3084 = vmatprep.mubr.f32.mxu0 0.0
  %3085 = vmatmul.mubr.f32.gmra.mrb[0].mxu0 %v3015
  %v3086 = vpop.f32.mrb[0].mxu0
  %v3087 = vadd.f32 0.0, %v3086
  %v3088 = vpop.f32.mrb[0].mxu0
  %3089 = vmatprep.mubr.f32.mxu0 0.0
  %3090 = vmatmul.mubr.f32.gmra.mrb[0].mxu0 %v3018
  %v3091 = vpop.f32.mrb[0].mxu0
  %v3092 = vadd.f32 0.0, %v3091
  %v3093 = vpop.f32.mrb[0].mxu0
  %3094 = vdwg.mxu0
  %3095 = vmatprep.subr.mxu0 0.0
  %3096 = vmatpush1.msra.mxu0 %v2990
  %3097 = vmatprep.subr.mxu0 0.0
  %3098 = vmatpush1.msra.mxu0 %v2991
  %3099 = vmatprep.subr.mxu0 0.0
  %3100 = vmatpush1.msra.mxu0 0.0
  %3101 = vmatprep.subr.mxu0 0.0
  %3102 = vmatpush1.msra.mxu0 0.0
  %3103 = vmatprep.subr.mxu0 0.0
  %3104 = vmatpush1.msra.mxu0 0.0
  %3105 = vmatprep.subr.mxu0 0.0
  %3106 = vmatpush1.msra.mxu0 0.0
  %3107 = vmatprep.subr.mxu0 0.0
  %3108 = vmatpush1.msra.mxu0 0.0
  %3109 = vmatprep.subr.mxu0 0.0
  %3110 = vmatpush1.msra.mxu0 0.0
  %3111 = vmatprep.subr.mxu0 0.0
  %3112 = vmatpush1.msra.mxu0 0.0
  %3113 = vmatprep.subr.mxu0 0.0
  %3114 = vmatpush1.msra.mxu0 0.0
  %3115 = vmatprep.subr.mxu0 0.0
  %3116 = vmatpush1.msra.mxu0 0.0
  %3117 = vmatprep.subr.mxu0 0.0
  %3118 = vmatpush1.msra.mxu0 0.0
  %3119 = vmatprep.subr.mxu0 0.0
  %3120 = vmatpush1.msra.mxu0 0.0
  %3121 = vmatprep.subr.mxu0 0.0
  %3122 = vmatpush1.msra.mxu0 0.0
  %3123 = vmatprep.subr.mxu0 0.0
  %3124 = vmatpush1.msra.mxu0 0.0
  %3125 = vmatprep.subr.mxu0 0.0
  %3126 = vmatpush1.msra.mxu0 0.0
  %3127 = vmatprep.subr.mxu0 0.0
  %3128 = vmatpush1.msra.mxu0 0.0
  %3129 = vmatprep.subr.mxu0 0.0
  %3130 = vmatpush1.msra.mxu0 0.0
  %3131 = vmatprep.subr.mxu0 0.0
  %3132 = vmatpush1.msra.mxu0 0.0
  %3133 = vmatprep.subr.mxu0 0.0
  %3134 = vmatpush1.msra.mxu0 0.0
  %3135 = vmatprep.subr.mxu0 0.0
  %3136 = vmatpush1.msra.mxu0 0.0
  %3137 = vmatprep.subr.mxu0 0.0
  %3138 = vmatpush1.msra.mxu0 0.0
  %3139 = vmatprep.subr.mxu0 0.0
  %3140 = vmatpush1.msra.mxu0 0.0
  %3141 = vmatprep.subr.mxu0 0.0
  %3142 = vmatpush1.msra.mxu0 0.0
  %3143 = vmatprep.subr.mxu0 0.0
  %3144 = vmatpush1.msra.mxu0 0.0
  %3145 = vmatprep.subr.mxu0 0.0
  %3146 = vmatpush1.msra.mxu0 0.0
  %3147 = vmatprep.subr.mxu0 0.0
  %3148 = vmatpush1.msra.mxu0 0.0
  %3149 = vmatprep.subr.mxu0 0.0
  %3150 = vmatpush1.msra.mxu0 0.0
  %3151 = vmatprep.subr.mxu0 0.0
  %3152 = vmatpush1.msra.mxu0 0.0
  %3153 = vmatprep.subr.mxu0 0.0
  %3154 = vmatpush1.msra.mxu0 0.0
  %3155 = vmatprep.subr.mxu0 0.0
  %3156 = vmatpush1.msra.mxu0 0.0
  %3157 = vmatprep.subr.mxu0 0.0
  %3158 = vmatpush1.msra.mxu0 0.0
  %3159 = vmatprep.mubr.f32.mxu0 0.0
  %3160 = vmatmul.mubr.f32.gmra.mrb[0].mxu0 %v3015
  %v3161 = vpop.f32.mrb[0].mxu0
  %v3162 = vadd.f32 0.0, %v3161
  %v3163 = vpop.f32.mrb[0].mxu0
  %3164 = vmatprep.mubr.f32.mxu0 0.0
  %3165 = vmatmul.mubr.f32.gmra.mrb[0].mxu0 %v3018
  %v3166 = vpop.f32.mrb[0].mxu0
  %v3167 = vadd.f32 0.0, %v3166
  %v3168 = vpop.f32.mrb[0].mxu0
  %3169 = vdwg.mxu0
  %3170 = vmatprep.subr.mxu0 0.0
  %3171 = vmatpush1.msra.mxu0 %v3006
  %3172 = vmatprep.subr.mxu0 0.0
  %3173 = vmatpush1.msra.mxu0 %v3007
  %3174 = vmatprep.subr.mxu0 0.0
  %3175 = vmatpush1.msra.mxu0 0.0
  %3176 = vmatprep.subr.mxu0 0.0
  %3177 = vmatpush1.msra.mxu0 0.0
  %3178 = vmatprep.subr.mxu0 0.0
  %3179 = vmatpush1.msra.mxu0 0.0
  %3180 = vmatprep.subr.mxu0 0.0
  %3181 = vmatpush1.msra.mxu0 0.0
  %3182 = vmatprep.subr.mxu0 0.0
  %3183 = vmatpush1.msra.mxu0 0.0
  %3184 = vmatprep.subr.mxu0 0.0
  %3185 = vmatpush1.msra.mxu0 0.0
  %3186 = vmatprep.subr.mxu0 0.0
  %3187 = vmatpush1.msra.mxu0 0.0
  %3188 = vmatprep.subr.mxu0 0.0
  %3189 = vmatpush1.msra.mxu0 0.0
  %3190 = vmatprep.subr.mxu0 0.0
  %3191 = vmatpush1.msra.mxu0 0.0
  %3192 = vmatprep.subr.mxu0 0.0
  %3193 = vmatpush1.msra.mxu0 0.0
  %3194 = vmatprep.subr.mxu0 0.0
  %3195 = vmatpush1.msra.mxu0 0.0
  %3196 = vmatprep.subr.mxu0 0.0
  %3197 = vmatpush1.msra.mxu0 0.0
  %3198 = vmatprep.subr.mxu0 0.0
  %3199 = vmatpush1.msra.mxu0 0.0
  %3200 = vmatprep.subr.mxu0 0.0
  %3201 = vmatpush1.msra.mxu0 0.0
  %3202 = vmatprep.subr.mxu0 0.0
  %3203 = vmatpush1.msra.mxu0 0.0
  %3204 = vmatprep.subr.mxu0 0.0
  %3205 = vmatpush1.msra.mxu0 0.0
  %3206 = vmatprep.subr.mxu0 0.0
  %3207 = vmatpush1.msra.mxu0 0.0
  %3208 = vmatprep.subr.mxu0 0.0
  %3209 = vmatpush1.msra.mxu0 0.0
  %3210 = vmatprep.subr.mxu0 0.0
  %3211 = vmatpush1.msra.mxu0 0.0
  %3212 = vmatprep.subr.mxu0 0.0
  %3213 = vmatpush1.msra.mxu0 0.0
  %3214 = vmatprep.subr.mxu0 0.0
  %3215 = vmatpush1.msra.mxu0 0.0
  %3216 = vmatprep.subr.mxu0 0.0
  %3217 = vmatpush1.msra.mxu0 0.0
  %3218 = vmatprep.subr.mxu0 0.0
  %3219 = vmatpush1.msra.mxu0 0.0
  %3220 = vmatprep.subr.mxu0 0.0
  %3221 = vmatpush1.msra.mxu0 0.0
  %3222 = vmatprep.subr.mxu0 0.0
  %3223 = vmatpush1.msra.mxu0 0.0
  %3224 = vmatprep.subr.mxu0 0.0
  %3225 = vmatpush1.msra.mxu0 0.0
  %3226 = vmatprep.subr.mxu0 0.0
  %3227 = vmatpush1.msra.mxu0 0.0
  %3228 = vmatprep.subr.mxu0 0.0
  %3229 = vmatpush1.msra.mxu0 0.0
  %3230 = vmatprep.subr.mxu0 0.0
  %3231 = vmatpush1.msra.mxu0 0.0
  %3232 = vmatprep.subr.mxu0 0.0
  %3233 = vmatpush1.msra.mxu0 0.0
  %3234 = vmatprep.mubr.f32.mxu0 0.0
  %3235 = vmatmul.mubr.f32.gmra.mrb[0].mxu0 %v3015
  %v3236 = vpop.f32.mrb[0].mxu0
  %v3237 = vadd.f32 0.0, %v3236
  %v3238 = vpop.f32.mrb[0].mxu0
  %3239 = vmatprep.mubr.f32.mxu0 0.0
  %3240 = vmatmul.mubr.f32.gmra.mrb[0].mxu0 %v3018
  %v3241 = vpop.f32.mrb[0].mxu0
  %v3242 = vadd.f32 0.0, %v3241
  %v3243 = vpop.f32.mrb[0].mxu0
  %3244 = vdwg.mxu0
  %v3245 = vld [vmem:[%s5] sm:$0xff]
  %v3246 = vld [vmem:[%s5 + $0x8] sm:$0xff]
  %v3248 = vsel %vm1629, %v3245, 0
  %v3251 = vsel %vm1629, %v3246, 0
  %3253 = vmatprep.subr.mxu0 0.0
  %3254 = vmatpush1.msra.mxu0 %v3087
  %3255 = vmatprep.subr.mxu0 0.0
  %3256 = vmatpush1.msra.mxu0 %v3092
  %3257 = vmatprep.subr.mxu0 0.0
  %3258 = vmatpush1.msra.mxu0 0.0
  %3259 = vmatprep.subr.mxu0 0.0
  %3260 = vmatpush1.msra.mxu0 0.0
  %3261 = vmatprep.subr.mxu0 0.0
  %3262 = vmatpush1.msra.mxu0 0.0
  %3263 = vmatprep.subr.mxu0 0.0
  %3264 = vmatpush1.msra.mxu0 0.0
  %3265 = vmatprep.subr.mxu0 0.0
  %3266 = vmatpush1.msra.mxu0 0.0
  %3267 = vmatprep.subr.mxu0 0.0
  %3268 = vmatpush1.msra.mxu0 0.0
  %3269 = vmatprep.subr.mxu0 0.0
  %3270 = vmatpush1.msra.mxu0 0.0
  %3271 = vmatprep.subr.mxu0 0.0
  %3272 = vmatpush1.msra.mxu0 0.0
  %3273 = vmatprep.subr.mxu0 0.0
  %3274 = vmatpush1.msra.mxu0 0.0
  %3275 = vmatprep.subr.mxu0 0.0
  %3276 = vmatpush1.msra.mxu0 0.0
  %3277 = vmatprep.subr.mxu0 0.0
  %3278 = vmatpush1.msra.mxu0 0.0
  %3279 = vmatprep.subr.mxu0 0.0
  %3280 = vmatpush1.msra.mxu0 0.0
  %3281 = vmatprep.subr.mxu0 0.0
  %3282 = vmatpush1.msra.mxu0 0.0
  %3283 = vmatprep.subr.mxu0 0.0
  %3284 = vmatpush1.msra.mxu0 0.0
  %3285 = vmatprep.subr.mxu0 0.0
  %3286 = vmatpush1.msra.mxu0 0.0
  %3287 = vmatprep.subr.mxu0 0.0
  %3288 = vmatpush1.msra.mxu0 0.0
  %3289 = vmatprep.subr.mxu0 0.0
  %3290 = vmatpush1.msra.mxu0 0.0
  %3291 = vmatprep.subr.mxu0 0.0
  %3292 = vmatpush1.msra.mxu0 0.0
  %3293 = vmatprep.subr.mxu0 0.0
  %3294 = vmatpush1.msra.mxu0 0.0
  %3295 = vmatprep.subr.mxu0 0.0
  %3296 = vmatpush1.msra.mxu0 0.0
  %3297 = vmatprep.subr.mxu0 0.0
  %3298 = vmatpush1.msra.mxu0 0.0
  %3299 = vmatprep.subr.mxu0 0.0
  %3300 = vmatpush1.msra.mxu0 0.0
  %3301 = vmatprep.subr.mxu0 0.0
  %3302 = vmatpush1.msra.mxu0 0.0
  %3303 = vmatprep.subr.mxu0 0.0
  %3304 = vmatpush1.msra.mxu0 0.0
  %3305 = vmatprep.subr.mxu0 0.0
  %3306 = vmatpush1.msra.mxu0 0.0
  %3307 = vmatprep.subr.mxu0 0.0
  %3308 = vmatpush1.msra.mxu0 0.0
  %3309 = vmatprep.subr.mxu0 0.0
  %3310 = vmatpush1.msra.mxu0 0.0
  %3311 = vmatprep.subr.mxu0 0.0
  %3312 = vmatpush1.msra.mxu0 0.0
  %3313 = vmatprep.subr.mxu0 0.0
  %3314 = vmatpush1.msra.mxu0 0.0
  %3315 = vmatprep.subr.mxu0 0.0
  %3316 = vmatpush1.msra.mxu0 0.0
  %3317 = vmatprep.mubr.f32.mxu0 0.0
  %3318 = vmatmul.mubr.f32.gmra.mrb[0].mxu0 %v3248
  %v3319 = vpop.f32.mrb[0].mxu0
  %v3320 = vadd.f32 0.0, %v3319
  %v3321 = vpop.f32.mrb[0].mxu0
  %3322 = vmatprep.mubr.f32.mxu0 0.0
  %3323 = vmatmul.mubr.f32.gmra.mrb[0].mxu0 %v3251
  %v3324 = vpop.f32.mrb[0].mxu0
  %v3325 = vadd.f32 0.0, %v3324
  %v3326 = vpop.f32.mrb[0].mxu0
  %3327 = vdwg.mxu0
  %3328 = vmatprep.subr.mxu0 0.0
  %3329 = vmatpush1.msra.mxu0 %v3162
  %3330 = vmatprep.subr.mxu0 0.0
  %3331 = vmatpush1.msra.mxu0 %v3167
  %3332 = vmatprep.subr.mxu0 0.0
  %3333 = vmatpush1.msra.mxu0 0.0
  %3334 = vmatprep.subr.mxu0 0.0
  %3335 = vmatpush1.msra.mxu0 0.0
  %3336 = vmatprep.subr.mxu0 0.0
  %3337 = vmatpush1.msra.mxu0 0.0
  %3338 = vmatprep.subr.mxu0 0.0
  %3339 = vmatpush1.msra.mxu0 0.0
  %3340 = vmatprep.subr.mxu0 0.0
  %3341 = vmatpush1.msra.mxu0 0.0
  %3342 = vmatprep.subr.mxu0 0.0
  %3343 = vmatpush1.msra.mxu0 0.0
  %3344 = vmatprep.subr.mxu0 0.0
  %3345 = vmatpush1.msra.mxu0 0.0
  %3346 = vmatprep.subr.mxu0 0.0
  %3347 = vmatpush1.msra.mxu0 0.0
  %3348 = vmatprep.subr.mxu0 0.0
  %3349 = vmatpush1.msra.mxu0 0.0
  %3350 = vmatprep.subr.mxu0 0.0
  %3351 = vmatpush1.msra.mxu0 0.0
  %3352 = vmatprep.subr.mxu0 0.0
  %3353 = vmatpush1.msra.mxu0 0.0
  %3354 = vmatprep.subr.mxu0 0.0
  %3355 = vmatpush1.msra.mxu0 0.0
  %3356 = vmatprep.subr.mxu0 0.0
  %3357 = vmatpush1.msra.mxu0 0.0
  %3358 = vmatprep.subr.mxu0 0.0
  %3359 = vmatpush1.msra.mxu0 0.0
  %3360 = vmatprep.subr.mxu0 0.0
  %3361 = vmatpush1.msra.mxu0 0.0
  %3362 = vmatprep.subr.mxu0 0.0
  %3363 = vmatpush1.msra.mxu0 0.0
  %3364 = vmatprep.subr.mxu0 0.0
  %3365 = vmatpush1.msra.mxu0 0.0
  %3366 = vmatprep.subr.mxu0 0.0
  %3367 = vmatpush1.msra.mxu0 0.0
  %3368 = vmatprep.subr.mxu0 0.0
  %3369 = vmatpush1.msra.mxu0 0.0
  %3370 = vmatprep.subr.mxu0 0.0
  %3371 = vmatpush1.msra.mxu0 0.0
  %3372 = vmatprep.subr.mxu0 0.0
  %3373 = vmatpush1.msra.mxu0 0.0
  %3374 = vmatprep.subr.mxu0 0.0
  %3375 = vmatpush1.msra.mxu0 0.0
  %3376 = vmatprep.subr.mxu0 0.0
  %3377 = vmatpush1.msra.mxu0 0.0
  %3378 = vmatprep.subr.mxu0 0.0
  %3379 = vmatpush1.msra.mxu0 0.0
  %3380 = vmatprep.subr.mxu0 0.0
  %3381 = vmatpush1.msra.mxu0 0.0
  %3382 = vmatprep.subr.mxu0 0.0
  %3383 = vmatpush1.msra.mxu0 0.0
  %3384 = vmatprep.subr.mxu0 0.0
  %3385 = vmatpush1.msra.mxu0 0.0
  %3386 = vmatprep.subr.mxu0 0.0
  %3387 = vmatpush1.msra.mxu0 0.0
  %3388 = vmatprep.subr.mxu0 0.0
  %3389 = vmatpush1.msra.mxu0 0.0
  %3390 = vmatprep.subr.mxu0 0.0
  %3391 = vmatpush1.msra.mxu0 0.0
  %3392 = vmatprep.mubr.f32.mxu0 0.0
  %3393 = vmatmul.mubr.f32.gmra.mrb[0].mxu0 %v3248
  %v3394 = vpop.f32.mrb[0].mxu0
  %v3395 = vadd.f32 0.0, %v3394
  %v3396 = vpop.f32.mrb[0].mxu0
  %3397 = vmatprep.mubr.f32.mxu0 0.0
  %3398 = vmatmul.mubr.f32.gmra.mrb[0].mxu0 %v3251
  %v3399 = vpop.f32.mrb[0].mxu0
  %v3400 = vadd.f32 0.0, %v3399
  %v3401 = vpop.f32.mrb[0].mxu0
  %3402 = vdwg.mxu0
  %3403 = vmatprep.subr.mxu0 0.0
  %3404 = vmatpush1.msra.mxu0 %v3237
  %3405 = vmatprep.subr.mxu0 0.0
  %3406 = vmatpush1.msra.mxu0 %v3242
  %3407 = vmatprep.subr.mxu0 0.0
  %3408 = vmatpush1.msra.mxu0 0.0
  %3409 = vmatprep.subr.mxu0 0.0
  %3410 = vmatpush1.msra.mxu0 0.0
  %3411 = vmatprep.subr.mxu0 0.0
  %3412 = vmatpush1.msra.mxu0 0.0
  %3413 = vmatprep.subr.mxu0 0.0
  %3414 = vmatpush1.msra.mxu0 0.0
  %3415 = vmatprep.subr.mxu0 0.0
  %3416 = vmatpush1.msra.mxu0 0.0
  %3417 = vmatprep.subr.mxu0 0.0
  %3418 = vmatpush1.msra.mxu0 0.0
  %3419 = vmatprep.subr.mxu0 0.0
  %3420 = vmatpush1.msra.mxu0 0.0
  %3421 = vmatprep.subr.mxu0 0.0
  %3422 = vmatpush1.msra.mxu0 0.0
  %3423 = vmatprep.subr.mxu0 0.0
  %3424 = vmatpush1.msra.mxu0 0.0
  %3425 = vmatprep.subr.mxu0 0.0
  %3426 = vmatpush1.msra.mxu0 0.0
  %3427 = vmatprep.subr.mxu0 0.0
  %3428 = vmatpush1.msra.mxu0 0.0
  %3429 = vmatprep.subr.mxu0 0.0
  %3430 = vmatpush1.msra.mxu0 0.0
  %3431 = vmatprep.subr.mxu0 0.0
  %3432 = vmatpush1.msra.mxu0 0.0
  %3433 = vmatprep.subr.mxu0 0.0
  %3434 = vmatpush1.msra.mxu0 0.0
  %3435 = vmatprep.subr.mxu0 0.0
  %3436 = vmatpush1.msra.mxu0 0.0
  %3437 = vmatprep.subr.mxu0 0.0
  %3438 = vmatpush1.msra.mxu0 0.0
  %3439 = vmatprep.subr.mxu0 0.0
  %3440 = vmatpush1.msra.mxu0 0.0
  %3441 = vmatprep.subr.mxu0 0.0
  %3442 = vmatpush1.msra.mxu0 0.0
  %3443 = vmatprep.subr.mxu0 0.0
  %3444 = vmatpush1.msra.mxu0 0.0
  %3445 = vmatprep.subr.mxu0 0.0
  %3446 = vmatpush1.msra.mxu0 0.0
  %3447 = vmatprep.subr.mxu0 0.0
  %3448 = vmatpush1.msra.mxu0 0.0
  %3449 = vmatprep.subr.mxu0 0.0
  %3450 = vmatpush1.msra.mxu0 0.0
  %3451 = vmatprep.subr.mxu0 0.0
  %3452 = vmatpush1.msra.mxu0 0.0
  %3453 = vmatprep.subr.mxu0 0.0
  %3454 = vmatpush1.msra.mxu0 0.0
  %3455 = vmatprep.subr.mxu0 0.0
  %3456 = vmatpush1.msra.mxu0 0.0
  %3457 = vmatprep.subr.mxu0 0.0
  %3458 = vmatpush1.msra.mxu0 0.0
  %3459 = vmatprep.subr.mxu0 0.0
  %3460 = vmatpush1.msra.mxu0 0.0
  %3461 = vmatprep.subr.mxu0 0.0
  %3462 = vmatpush1.msra.mxu0 0.0
  %3463 = vmatprep.subr.mxu0 0.0
  %3464 = vmatpush1.msra.mxu0 0.0
  %3465 = vmatprep.subr.mxu0 0.0
  %3466 = vmatpush1.msra.mxu0 0.0
  %3467 = vmatprep.mubr.f32.mxu0 0.0
  %3468 = vmatmul.mubr.f32.gmra.mrb[0].mxu0 %v3248
  %v3469 = vpop.f32.mrb[0].mxu0
  %v3470 = vadd.f32 0.0, %v3469
  %v3471 = vpop.f32.mrb[0].mxu0
  %3472 = vmatprep.mubr.f32.mxu0 0.0
  %3473 = vmatmul.mubr.f32.gmra.mrb[0].mxu0 %v3251
  %v3474 = vpop.f32.mrb[0].mxu0
  %v3475 = vadd.f32 0.0, %v3474
  %v3476 = vpop.f32.mrb[0].mxu0
  %3477 = vdwg.mxu0
  %v3478 = vmul.f32 %v3320, %v3320
  %v3479 = vmul.f32 %v3325, %v3325
  %v3480 = vmul.f32 %v3395, %v3395
  %v3481 = vmul.f32 %v3400, %v3400
  %v3482 = vadd.f32 %v3478, %v3480
  %v3483 = vadd.f32 %v3479, %v3481
  %v3484 = vmul.f32 %v3470, %v3470
  %v3485 = vmul.f32 %v3475, %v3475
  %v3486 = vadd.f32 %v3482, %v3484
  %v3487 = vadd.f32 %v3483, %v3485
  %v3488 = vmax.f32 %v3486, 1e-24
  %v3489 = vmax.f32 %v3487, 1e-24
  %v3490 = vrsqrt.pop %v3488
  %v3491 = vrsqrt.pop %v3489
  %v3492 = vmul.f32 %v3320, %v3490
  %v3493 = vmul.f32 %v3325, %v3491
  %v3494 = vmul.f32 %v3395, %v3490
  %v3495 = vmul.f32 %v3400, %v3491
  %v3496 = vmul.f32 %v3470, %v3490
  %v3497 = vmul.f32 %v3475, %v3491
  %v3498 = vmul.f32 %v3087, %v3492
  %v3499 = vmul.f32 %v3092, %v3493
  %v3500 = vmul.f32 %v3162, %v3494
  %v3501 = vmul.f32 %v3167, %v3495
  %v3502 = vadd.f32 %v3498, %v3500
  %v3503 = vadd.f32 %v3499, %v3501
  %v3504 = vmul.f32 %v3237, %v3496
  %v3505 = vmul.f32 %v3242, %v3497
  %v3506 = vadd.f32 %v3502, %v3504
  %v3507 = vadd.f32 %v3503, %v3505
  %vm3508 = vcmp.ge.f32.partialorder %v3506, 0.0
  %vm3509 = vcmp.ge.f32.partialorder %v3507, 0.0
  %v3510 = vmul.f32 %v3506, 0.2
  %v3511 = vmul.f32 %v3507, 0.2
  %v3512 = vsel %vm3508, %v3506, %v3510
  %v3513 = vsel %vm3509, %v3507, %v3511
  %v3514 = vsub.f32 %v3512, %v3506
  %v3515 = vsub.f32 %v3513, %v3507
  %v3516 = vmul.f32 %v3514, %v3492
  %v3517 = vmul.f32 %v3515, %v3493
  %v3518 = vadd.f32 %v3087, %v3516
  %v3519 = vadd.f32 %v3092, %v3517
  %v3520 = vmul.f32 %v3514, %v3494
  %v3521 = vmul.f32 %v3515, %v3495
  %v3522 = vadd.f32 %v3162, %v3520
  %v3523 = vadd.f32 %v3167, %v3521
  %v3524 = vmul.f32 %v3514, %v3496
  %v3525 = vmul.f32 %v3515, %v3497
  %v3526 = vadd.f32 %v3237, %v3524
  %v3527 = vadd.f32 %v3242, %v3525
  %v3528 = vld [vmem:[%s6] sm:$0xff]
  %v3529 = vld [vmem:[%s6 + $0x8] sm:$0xff]
  %3530 = vmatprep.subr.mxu0 0.0
  %3531 = vmatpush1.msra.mxu0 %v106
  %3532 = vmatprep.subr.mxu0 0.0
  %3533 = vmatpush1.msra.mxu0 %v107
  %3534 = vmatprep.subr.mxu0 0.0
  %3535 = vmatpush1.msra.mxu0 %v108
  %3536 = vmatprep.subr.mxu0 0.0
  %3537 = vmatpush1.msra.mxu0 %v109
  %3538 = vmatprep.subr.mxu0 0.0
  %3539 = vmatpush1.msra.mxu0 %v110
  %3540 = vmatprep.subr.mxu0 0.0
  %3541 = vmatpush1.msra.mxu0 %v111
  %3542 = vmatprep.subr.mxu0 0.0
  %3543 = vmatpush1.msra.mxu0 %v112
  %3544 = vmatprep.subr.mxu0 0.0
  %3545 = vmatpush1.msra.mxu0 %v113
  %3546 = vmatprep.subr.mxu0 0.0
  %3547 = vmatpush1.msra.mxu0 %v114
  %3548 = vmatprep.subr.mxu0 0.0
  %3549 = vmatpush1.msra.mxu0 %v115
  %3550 = vmatprep.subr.mxu0 0.0
  %3551 = vmatpush1.msra.mxu0 %v116
  %3552 = vmatprep.subr.mxu0 0.0
  %3553 = vmatpush1.msra.mxu0 %v117
  %3554 = vmatprep.subr.mxu0 0.0
  %3555 = vmatpush1.msra.mxu0 %v118
  %3556 = vmatprep.subr.mxu0 0.0
  %3557 = vmatpush1.msra.mxu0 %v119
  %3558 = vmatprep.subr.mxu0 0.0
  %3559 = vmatpush1.msra.mxu0 %v120
  %3560 = vmatprep.subr.mxu0 0.0
  %3561 = vmatpush1.msra.mxu0 %v121
  %3562 = vmatprep.subr.mxu0 0.0
  %3563 = vmatpush1.msra.mxu0 0.0
  %3564 = vmatprep.subr.mxu0 0.0
  %3565 = vmatpush1.msra.mxu0 0.0
  %3566 = vmatprep.subr.mxu0 0.0
  %3567 = vmatpush1.msra.mxu0 0.0
  %3568 = vmatprep.subr.mxu0 0.0
  %3569 = vmatpush1.msra.mxu0 0.0
  %3570 = vmatprep.subr.mxu0 0.0
  %3571 = vmatpush1.msra.mxu0 0.0
  %3572 = vmatprep.subr.mxu0 0.0
  %3573 = vmatpush1.msra.mxu0 0.0
  %3574 = vmatprep.subr.mxu0 0.0
  %3575 = vmatpush1.msra.mxu0 0.0
  %3576 = vmatprep.subr.mxu0 0.0
  %3577 = vmatpush1.msra.mxu0 0.0
  %3578 = vmatprep.subr.mxu0 0.0
  %3579 = vmatpush1.msra.mxu0 0.0
  %3580 = vmatprep.subr.mxu0 0.0
  %3581 = vmatpush1.msra.mxu0 0.0
  %3582 = vmatprep.subr.mxu0 0.0
  %3583 = vmatpush1.msra.mxu0 0.0
  %3584 = vmatprep.subr.mxu0 0.0
  %3585 = vmatpush1.msra.mxu0 0.0
  %3586 = vmatprep.subr.mxu0 0.0
  %3587 = vmatpush1.msra.mxu0 0.0
  %3588 = vmatprep.subr.mxu0 0.0
  %3589 = vmatpush1.msra.mxu0 0.0
  %3590 = vmatprep.subr.mxu0 0.0
  %3591 = vmatpush1.msra.mxu0 0.0
  %3592 = vmatprep.subr.mxu0 0.0
  %3593 = vmatpush1.msra.mxu0 0.0
  %3594 = vmatprep.mubr.f32.mxu0 0.0
  %3595 = vmatmul.mubr.f32.gmra.mrb[0].mxu0 %v3518
  %v3596 = vpop.f32.mrb[0].mxu0
  %v3597 = vadd.f32 0.0, %v3596
  %v3598 = vpop.f32.mrb[0].mxu0
  %3599 = vmatprep.mubr.f32.mxu0 0.0
  %3600 = vmatmul.mubr.f32.gmra.mrb[0].mxu0 %v3519
  %v3601 = vpop.f32.mrb[0].mxu0
  %v3602 = vadd.f32 0.0, %v3601
  %v3603 = vpop.f32.mrb[0].mxu0
  %3604 = vdwg.mxu0
  %3607 = vrot.lane.b32.xlu0 %v3528, 112
  %v3608 = vpop.permute.xlu0 %3607
  %3609 = vrot.lane.b32.xlu0 %v3529, 112
  %v3610 = vpop.permute.xlu0 %3609
  %v3611 = vsel %vm1629, %v3608, 0
  %v3613 = vsel %vm1629, %v3610, 0
  %3615 = vmatprep.subr.mxu0 0.0
  %3616 = vmatpush1.msra.mxu0 %v3597
  %3617 = vmatprep.subr.mxu0 0.0
  %3618 = vmatpush1.msra.mxu0 %v3602
  %3619 = vmatprep.subr.mxu0 0.0
  %3620 = vmatpush1.msra.mxu0 0.0
  %3621 = vmatprep.subr.mxu0 0.0
  %3622 = vmatpush1.msra.mxu0 0.0
  %3623 = vmatprep.subr.mxu0 0.0
  %3624 = vmatpush1.msra.mxu0 0.0
  %3625 = vmatprep.subr.mxu0 0.0
  %3626 = vmatpush1.msra.mxu0 0.0
  %3627 = vmatprep.subr.mxu0 0.0
  %3628 = vmatpush1.msra.mxu0 0.0
  %3629 = vmatprep.subr.mxu0 0.0
  %3630 = vmatpush1.msra.mxu0 0.0
  %3631 = vmatprep.subr.mxu0 0.0
  %3632 = vmatpush1.msra.mxu0 0.0
  %3633 = vmatprep.subr.mxu0 0.0
  %3634 = vmatpush1.msra.mxu0 0.0
  %3635 = vmatprep.subr.mxu0 0.0
  %3636 = vmatpush1.msra.mxu0 0.0
  %3637 = vmatprep.subr.mxu0 0.0
  %3638 = vmatpush1.msra.mxu0 0.0
  %3639 = vmatprep.subr.mxu0 0.0
  %3640 = vmatpush1.msra.mxu0 0.0
  %3641 = vmatprep.subr.mxu0 0.0
  %3642 = vmatpush1.msra.mxu0 0.0
  %3643 = vmatprep.subr.mxu0 0.0
  %3644 = vmatpush1.msra.mxu0 0.0
  %3645 = vmatprep.subr.mxu0 0.0
  %3646 = vmatpush1.msra.mxu0 0.0
  %3647 = vmatprep.subr.mxu0 0.0
  %3648 = vmatpush1.msra.mxu0 0.0
  %3649 = vmatprep.subr.mxu0 0.0
  %3650 = vmatpush1.msra.mxu0 0.0
  %3651 = vmatprep.subr.mxu0 0.0
  %3652 = vmatpush1.msra.mxu0 0.0
  %3653 = vmatprep.subr.mxu0 0.0
  %3654 = vmatpush1.msra.mxu0 0.0
  %3655 = vmatprep.subr.mxu0 0.0
  %3656 = vmatpush1.msra.mxu0 0.0
  %3657 = vmatprep.subr.mxu0 0.0
  %3658 = vmatpush1.msra.mxu0 0.0
  %3659 = vmatprep.subr.mxu0 0.0
  %3660 = vmatpush1.msra.mxu0 0.0
  %3661 = vmatprep.subr.mxu0 0.0
  %3662 = vmatpush1.msra.mxu0 0.0
  %3663 = vmatprep.subr.mxu0 0.0
  %3664 = vmatpush1.msra.mxu0 0.0
  %3665 = vmatprep.subr.mxu0 0.0
  %3666 = vmatpush1.msra.mxu0 0.0
  %3667 = vmatprep.subr.mxu0 0.0
  %3668 = vmatpush1.msra.mxu0 0.0
  %3669 = vmatprep.subr.mxu0 0.0
  %3670 = vmatpush1.msra.mxu0 0.0
  %3671 = vmatprep.subr.mxu0 0.0
  %3672 = vmatpush1.msra.mxu0 0.0
  %3673 = vmatprep.subr.mxu0 0.0
  %3674 = vmatpush1.msra.mxu0 0.0
  %3675 = vmatprep.subr.mxu0 0.0
  %3676 = vmatpush1.msra.mxu0 0.0
  %3677 = vmatprep.subr.mxu0 0.0
  %3678 = vmatpush1.msra.mxu0 0.0
  %3679 = vmatprep.mubr.f32.mxu0 0.0
  %3680 = vmatmul.mubr.f32.gmra.mrb[0].mxu0 %v3611
  %v3681 = vpop.f32.mrb[0].mxu0
  %v3682 = vadd.f32 0.0, %v3681
  %v3683 = vpop.f32.mrb[0].mxu0
  %3684 = vmatprep.mubr.f32.mxu0 0.0
  %3685 = vmatmul.mubr.f32.gmra.mrb[0].mxu0 %v3613
  %v3686 = vpop.f32.mrb[0].mxu0
  %v3687 = vadd.f32 0.0, %v3686
  %v3688 = vpop.f32.mrb[0].mxu0
  %3689 = vdwg.mxu0
  %vm3690 = vcmask 31744
  %v3692 = vsel %vm3690, %v3682, 0
  %v3695 = vsel %vm3690, %v3687, 0
  %vm3697 = vcmask 1043456
  %v3699 = vsel %vm3697, %v127, 0
  %3701 = vmatprep.subr.mxu0 0.0
  %3702 = vmatpush1.msra.mxu0 %v3699
  %3703 = vmatprep.subr.mxu0 0.0
  %3704 = vmatpush1.msra.mxu0 0.0
  %3705 = vmatprep.subr.mxu0 0.0
  %3706 = vmatpush1.msra.mxu0 0.0
  %3707 = vmatprep.subr.mxu0 0.0
  %3708 = vmatpush1.msra.mxu0 0.0
  %3709 = vmatprep.subr.mxu0 0.0
  %3710 = vmatpush1.msra.mxu0 0.0
  %3711 = vmatprep.subr.mxu0 0.0
  %3712 = vmatpush1.msra.mxu0 0.0
  %3713 = vmatprep.subr.mxu0 0.0
  %3714 = vmatpush1.msra.mxu0 0.0
  %3715 = vmatprep.subr.mxu0 0.0
  %3716 = vmatpush1.msra.mxu0 0.0
  %3717 = vmatprep.subr.mxu0 0.0
  %3718 = vmatpush1.msra.mxu0 0.0
  %3719 = vmatprep.subr.mxu0 0.0
  %3720 = vmatpush1.msra.mxu0 0.0
  %3721 = vmatprep.subr.mxu0 0.0
  %3722 = vmatpush1.msra.mxu0 0.0
  %3723 = vmatprep.subr.mxu0 0.0
  %3724 = vmatpush1.msra.mxu0 0.0
  %3725 = vmatprep.subr.mxu0 0.0
  %3726 = vmatpush1.msra.mxu0 0.0
  %3727 = vmatprep.subr.mxu0 0.0
  %3728 = vmatpush1.msra.mxu0 0.0
  %3729 = vmatprep.subr.mxu0 0.0
  %3730 = vmatpush1.msra.mxu0 0.0
  %3731 = vmatprep.subr.mxu0 0.0
  %3732 = vmatpush1.msra.mxu0 0.0
  %3733 = vmatprep.subr.mxu0 0.0
  %3734 = vmatpush1.msra.mxu0 0.0
  %3735 = vmatprep.subr.mxu0 0.0
  %3736 = vmatpush1.msra.mxu0 0.0
  %3737 = vmatprep.subr.mxu0 0.0
  %3738 = vmatpush1.msra.mxu0 0.0
  %3739 = vmatprep.subr.mxu0 0.0
  %3740 = vmatpush1.msra.mxu0 0.0
  %3741 = vmatprep.subr.mxu0 0.0
  %3742 = vmatpush1.msra.mxu0 0.0
  %3743 = vmatprep.subr.mxu0 0.0
  %3744 = vmatpush1.msra.mxu0 0.0
  %3745 = vmatprep.subr.mxu0 0.0
  %3746 = vmatpush1.msra.mxu0 0.0
  %3747 = vmatprep.subr.mxu0 0.0
  %3748 = vmatpush1.msra.mxu0 0.0
  %3749 = vmatprep.subr.mxu0 0.0
  %3750 = vmatpush1.msra.mxu0 0.0
  %3751 = vmatprep.subr.mxu0 0.0
  %3752 = vmatpush1.msra.mxu0 0.0
  %3753 = vmatprep.subr.mxu0 0.0
  %3754 = vmatpush1.msra.mxu0 0.0
  %3755 = vmatprep.subr.mxu0 0.0
  %3756 = vmatpush1.msra.mxu0 0.0
  %3757 = vmatprep.subr.mxu0 0.0
  %3758 = vmatpush1.msra.mxu0 0.0
  %3759 = vmatprep.subr.mxu0 0.0
  %3760 = vmatpush1.msra.mxu0 0.0
  %3761 = vmatprep.subr.mxu0 0.0
  %3762 = vmatpush1.msra.mxu0 0.0
  %3763 = vmatprep.subr.mxu0 0.0
  %3764 = vmatpush1.msra.mxu0 0.0
  %3765 = vmatprep.mubr.f32.mxu0 0.0
  %3766 = vmatmul.mubr.f32.gmra.mrb[0].mxu0 %v3692
  %v3767 = vpop.f32.mrb[0].mxu0
  %v3768 = vadd.f32 0.0, %v3767
  %v3769 = vpop.f32.mrb[0].mxu0
  %3770 = vmatprep.mubr.f32.mxu0 0.0
  %3771 = vmatmul.mubr.f32.gmra.mrb[0].mxu0 %v3695
  %v3772 = vpop.f32.mrb[0].mxu0
  %v3773 = vadd.f32 0.0, %v3772
  %v3774 = vpop.f32.mrb[0].mxu0
  %3775 = vdwg.mxu0
  %v3776 = vsel %vm1629, %v3528, 0
  %v3778 = vsel %vm1629, %v3529, 0
  %3780 = vmatprep.subr.mxu0 0.0
  %3781 = vmatpush1.msra.mxu0 %v3518
  %3782 = vmatprep.subr.mxu0 0.0
  %3783 = vmatpush1.msra.mxu0 %v3519
  %3784 = vmatprep.subr.mxu0 0.0
  %3785 = vmatpush1.msra.mxu0 0.0
  %3786 = vmatprep.subr.mxu0 0.0
  %3787 = vmatpush1.msra.mxu0 0.0
  %3788 = vmatprep.subr.mxu0 0.0
  %3789 = vmatpush1.msra.mxu0 0.0
  %3790 = vmatprep.subr.mxu0 0.0
  %3791 = vmatpush1.msra.mxu0 0.0
  %3792 = vmatprep.subr.mxu0 0.0
  %3793 = vmatpush1.msra.mxu0 0.0
  %3794 = vmatprep.subr.mxu0 0.0
  %3795 = vmatpush1.msra.mxu0 0.0
  %3796 = vmatprep.subr.mxu0 0.0
  %3797 = vmatpush1.msra.mxu0 0.0
  %3798 = vmatprep.subr.mxu0 0.0
  %3799 = vmatpush1.msra.mxu0 0.0
  %3800 = vmatprep.subr.mxu0 0.0
  %3801 = vmatpush1.msra.mxu0 0.0
  %3802 = vmatprep.subr.mxu0 0.0
  %3803 = vmatpush1.msra.mxu0 0.0
  %3804 = vmatprep.subr.mxu0 0.0
  %3805 = vmatpush1.msra.mxu0 0.0
  %3806 = vmatprep.subr.mxu0 0.0
  %3807 = vmatpush1.msra.mxu0 0.0
  %3808 = vmatprep.subr.mxu0 0.0
  %3809 = vmatpush1.msra.mxu0 0.0
  %3810 = vmatprep.subr.mxu0 0.0
  %3811 = vmatpush1.msra.mxu0 0.0
  %3812 = vmatprep.subr.mxu0 0.0
  %3813 = vmatpush1.msra.mxu0 0.0
  %3814 = vmatprep.subr.mxu0 0.0
  %3815 = vmatpush1.msra.mxu0 0.0
  %3816 = vmatprep.subr.mxu0 0.0
  %3817 = vmatpush1.msra.mxu0 0.0
  %3818 = vmatprep.subr.mxu0 0.0
  %3819 = vmatpush1.msra.mxu0 0.0
  %3820 = vmatprep.subr.mxu0 0.0
  %3821 = vmatpush1.msra.mxu0 0.0
  %3822 = vmatprep.subr.mxu0 0.0
  %3823 = vmatpush1.msra.mxu0 0.0
  %3824 = vmatprep.subr.mxu0 0.0
  %3825 = vmatpush1.msra.mxu0 0.0
  %3826 = vmatprep.subr.mxu0 0.0
  %3827 = vmatpush1.msra.mxu0 0.0
  %3828 = vmatprep.subr.mxu0 0.0
  %3829 = vmatpush1.msra.mxu0 0.0
  %3830 = vmatprep.subr.mxu0 0.0
  %3831 = vmatpush1.msra.mxu0 0.0
  %3832 = vmatprep.subr.mxu0 0.0
  %3833 = vmatpush1.msra.mxu0 0.0
  %3834 = vmatprep.subr.mxu0 0.0
  %3835 = vmatpush1.msra.mxu0 0.0
  %3836 = vmatprep.subr.mxu0 0.0
  %3837 = vmatpush1.msra.mxu0 0.0
  %3838 = vmatprep.subr.mxu0 0.0
  %3839 = vmatpush1.msra.mxu0 0.0
  %3840 = vmatprep.subr.mxu0 0.0
  %3841 = vmatpush1.msra.mxu0 0.0
  %3842 = vmatprep.subr.mxu0 0.0
  %3843 = vmatpush1.msra.mxu0 0.0
  %3844 = vmatprep.mubr.f32.mxu0 0.0
  %3845 = vmatmul.mubr.f32.gmra.mrb[0].mxu0 %v3776
  %v3846 = vpop.f32.mrb[0].mxu0
  %v3847 = vadd.f32 %v3768, %v3846
  %v3848 = vpop.f32.mrb[0].mxu0
  %3849 = vmatprep.mubr.f32.mxu0 0.0
  %3850 = vmatmul.mubr.f32.gmra.mrb[0].mxu0 %v3778
  %v3851 = vpop.f32.mrb[0].mxu0
  %v3852 = vadd.f32 %v3773, %v3851
  %v3853 = vpop.f32.mrb[0].mxu0
  %3854 = vdwg.mxu0
  %3855 = vmatprep.subr.mxu0 0.0
  %3856 = vmatpush1.msra.mxu0 %v106
  %3857 = vmatprep.subr.mxu0 0.0
  %3858 = vmatpush1.msra.mxu0 %v107
  %3859 = vmatprep.subr.mxu0 0.0
  %3860 = vmatpush1.msra.mxu0 %v108
  %3861 = vmatprep.subr.mxu0 0.0
  %3862 = vmatpush1.msra.mxu0 %v109
  %3863 = vmatprep.subr.mxu0 0.0
  %3864 = vmatpush1.msra.mxu0 %v110
  %3865 = vmatprep.subr.mxu0 0.0
  %3866 = vmatpush1.msra.mxu0 %v111
  %3867 = vmatprep.subr.mxu0 0.0
  %3868 = vmatpush1.msra.mxu0 %v112
  %3869 = vmatprep.subr.mxu0 0.0
  %3870 = vmatpush1.msra.mxu0 %v113
  %3871 = vmatprep.subr.mxu0 0.0
  %3872 = vmatpush1.msra.mxu0 %v114
  %3873 = vmatprep.subr.mxu0 0.0
  %3874 = vmatpush1.msra.mxu0 %v115
  %3875 = vmatprep.subr.mxu0 0.0
  %3876 = vmatpush1.msra.mxu0 %v116
  %3877 = vmatprep.subr.mxu0 0.0
  %3878 = vmatpush1.msra.mxu0 %v117
  %3879 = vmatprep.subr.mxu0 0.0
  %3880 = vmatpush1.msra.mxu0 %v118
  %3881 = vmatprep.subr.mxu0 0.0
  %3882 = vmatpush1.msra.mxu0 %v119
  %3883 = vmatprep.subr.mxu0 0.0
  %3884 = vmatpush1.msra.mxu0 %v120
  %3885 = vmatprep.subr.mxu0 0.0
  %3886 = vmatpush1.msra.mxu0 %v121
  %3887 = vmatprep.subr.mxu0 0.0
  %3888 = vmatpush1.msra.mxu0 0.0
  %3889 = vmatprep.subr.mxu0 0.0
  %3890 = vmatpush1.msra.mxu0 0.0
  %3891 = vmatprep.subr.mxu0 0.0
  %3892 = vmatpush1.msra.mxu0 0.0
  %3893 = vmatprep.subr.mxu0 0.0
  %3894 = vmatpush1.msra.mxu0 0.0
  %3895 = vmatprep.subr.mxu0 0.0
  %3896 = vmatpush1.msra.mxu0 0.0
  %3897 = vmatprep.subr.mxu0 0.0
  %3898 = vmatpush1.msra.mxu0 0.0
  %3899 = vmatprep.subr.mxu0 0.0
  %3900 = vmatpush1.msra.mxu0 0.0
  %3901 = vmatprep.subr.mxu0 0.0
  %3902 = vmatpush1.msra.mxu0 0.0
  %3903 = vmatprep.subr.mxu0 0.0
  %3904 = vmatpush1.msra.mxu0 0.0
  %3905 = vmatprep.subr.mxu0 0.0
  %3906 = vmatpush1.msra.mxu0 0.0
  %3907 = vmatprep.subr.mxu0 0.0
  %3908 = vmatpush1.msra.mxu0 0.0
  %3909 = vmatprep.subr.mxu0 0.0
  %3910 = vmatpush1.msra.mxu0 0.0
  %3911 = vmatprep.subr.mxu0 0.0
  %3912 = vmatpush1.msra.mxu0 0.0
  %3913 = vmatprep.subr.mxu0 0.0
  %3914 = vmatpush1.msra.mxu0 0.0
  %3915 = vmatprep.subr.mxu0 0.0
  %3916 = vmatpush1.msra.mxu0 0.0
  %3917 = vmatprep.subr.mxu0 0.0
  %3918 = vmatpush1.msra.mxu0 0.0
  %3919 = vmatprep.mubr.f32.mxu0 0.0
  %3920 = vmatmul.mubr.f32.gmra.mrb[0].mxu0 %v3522
  %v3921 = vpop.f32.mrb[0].mxu0
  %v3922 = vadd.f32 0.0, %v3921
  %v3923 = vpop.f32.mrb[0].mxu0
  %3924 = vmatprep.mubr.f32.mxu0 0.0
  %3925 = vmatmul.mubr.f32.gmra.mrb[0].mxu0 %v3523
  %v3926 = vpop.f32.mrb[0].mxu0
  %v3927 = vadd.f32 0.0, %v3926
  %v3928 = vpop.f32.mrb[0].mxu0
  %3929 = vdwg.mxu0
  %3930 = vmatprep.subr.mxu0 0.0
  %3931 = vmatpush1.msra.mxu0 %v3922
  %3932 = vmatprep.subr.mxu0 0.0
  %3933 = vmatpush1.msra.mxu0 %v3927
  %3934 = vmatprep.subr.mxu0 0.0
  %3935 = vmatpush1.msra.mxu0 0.0
  %3936 = vmatprep.subr.mxu0 0.0
  %3937 = vmatpush1.msra.mxu0 0.0
  %3938 = vmatprep.subr.mxu0 0.0
  %3939 = vmatpush1.msra.mxu0 0.0
  %3940 = vmatprep.subr.mxu0 0.0
  %3941 = vmatpush1.msra.mxu0 0.0
  %3942 = vmatprep.subr.mxu0 0.0
  %3943 = vmatpush1.msra.mxu0 0.0
  %3944 = vmatprep.subr.mxu0 0.0
  %3945 = vmatpush1.msra.mxu0 0.0
  %3946 = vmatprep.subr.mxu0 0.0
  %3947 = vmatpush1.msra.mxu0 0.0
  %3948 = vmatprep.subr.mxu0 0.0
  %3949 = vmatpush1.msra.mxu0 0.0
  %3950 = vmatprep.subr.mxu0 0.0
  %3951 = vmatpush1.msra.mxu0 0.0
  %3952 = vmatprep.subr.mxu0 0.0
  %3953 = vmatpush1.msra.mxu0 0.0
  %3954 = vmatprep.subr.mxu0 0.0
  %3955 = vmatpush1.msra.mxu0 0.0
  %3956 = vmatprep.subr.mxu0 0.0
  %3957 = vmatpush1.msra.mxu0 0.0
  %3958 = vmatprep.subr.mxu0 0.0
  %3959 = vmatpush1.msra.mxu0 0.0
  %3960 = vmatprep.subr.mxu0 0.0
  %3961 = vmatpush1.msra.mxu0 0.0
  %3962 = vmatprep.subr.mxu0 0.0
  %3963 = vmatpush1.msra.mxu0 0.0
  %3964 = vmatprep.subr.mxu0 0.0
  %3965 = vmatpush1.msra.mxu0 0.0
  %3966 = vmatprep.subr.mxu0 0.0
  %3967 = vmatpush1.msra.mxu0 0.0
  %3968 = vmatprep.subr.mxu0 0.0
  %3969 = vmatpush1.msra.mxu0 0.0
  %3970 = vmatprep.subr.mxu0 0.0
  %3971 = vmatpush1.msra.mxu0 0.0
  %3972 = vmatprep.subr.mxu0 0.0
  %3973 = vmatpush1.msra.mxu0 0.0
  %3974 = vmatprep.subr.mxu0 0.0
  %3975 = vmatpush1.msra.mxu0 0.0
  %3976 = vmatprep.subr.mxu0 0.0
  %3977 = vmatpush1.msra.mxu0 0.0
  %3978 = vmatprep.subr.mxu0 0.0
  %3979 = vmatpush1.msra.mxu0 0.0
  %3980 = vmatprep.subr.mxu0 0.0
  %3981 = vmatpush1.msra.mxu0 0.0
  %3982 = vmatprep.subr.mxu0 0.0
  %3983 = vmatpush1.msra.mxu0 0.0
  %3984 = vmatprep.subr.mxu0 0.0
  %3985 = vmatpush1.msra.mxu0 0.0
  %3986 = vmatprep.subr.mxu0 0.0
  %3987 = vmatpush1.msra.mxu0 0.0
  %3988 = vmatprep.subr.mxu0 0.0
  %3989 = vmatpush1.msra.mxu0 0.0
  %3990 = vmatprep.subr.mxu0 0.0
  %3991 = vmatpush1.msra.mxu0 0.0
  %3992 = vmatprep.subr.mxu0 0.0
  %3993 = vmatpush1.msra.mxu0 0.0
  %3994 = vmatprep.mubr.f32.mxu0 0.0
  %3995 = vmatmul.mubr.f32.gmra.mrb[0].mxu0 %v3611
  %v3996 = vpop.f32.mrb[0].mxu0
  %v3997 = vadd.f32 0.0, %v3996
  %v3998 = vpop.f32.mrb[0].mxu0
  %3999 = vmatprep.mubr.f32.mxu0 0.0
  %4000 = vmatmul.mubr.f32.gmra.mrb[0].mxu0 %v3613
  %v4001 = vpop.f32.mrb[0].mxu0
  %v4002 = vadd.f32 0.0, %v4001
  %v4003 = vpop.f32.mrb[0].mxu0
  %4004 = vdwg.mxu0
  %v4006 = vsel %vm3690, %v3997, 0
  %v4009 = vsel %vm3690, %v4002, 0
  %4011 = vmatprep.subr.mxu0 0.0
  %4012 = vmatpush1.msra.mxu0 %v3699
  %4013 = vmatprep.subr.mxu0 0.0
  %4014 = vmatpush1.msra.mxu0 0.0
  %4015 = vmatprep.subr.mxu0 0.0
  %4016 = vmatpush1.msra.mxu0 0.0
  %4017 = vmatprep.subr.mxu0 0.0
  %4018 = vmatpush1.msra.mxu0 0.0
  %4019 = vmatprep.subr.mxu0 0.0
  %4020 = vmatpush1.msra.mxu0 0.0
  %4021 = vmatprep.subr.mxu0 0.0
  %4022 = vmatpush1.msra.mxu0 0.0
  %4023 = vmatprep.subr.mxu0 0.0
  %4024 = vmatpush1.msra.mxu0 0.0
  %4025 = vmatprep.subr.mxu0 0.0
  %4026 = vmatpush1.msra.mxu0 0.0
  %4027 = vmatprep.subr.mxu0 0.0
  %4028 = vmatpush1.msra.mxu0 0.0
  %4029 = vmatprep.subr.mxu0 0.0
  %4030 = vmatpush1.msra.mxu0 0.0
  %4031 = vmatprep.subr.mxu0 0.0
  %4032 = vmatpush1.msra.mxu0 0.0
  %4033 = vmatprep.subr.mxu0 0.0
  %4034 = vmatpush1.msra.mxu0 0.0
  %4035 = vmatprep.subr.mxu0 0.0
  %4036 = vmatpush1.msra.mxu0 0.0
  %4037 = vmatprep.subr.mxu0 0.0
  %4038 = vmatpush1.msra.mxu0 0.0
  %4039 = vmatprep.subr.mxu0 0.0
  %4040 = vmatpush1.msra.mxu0 0.0
  %4041 = vmatprep.subr.mxu0 0.0
  %4042 = vmatpush1.msra.mxu0 0.0
  %4043 = vmatprep.subr.mxu0 0.0
  %4044 = vmatpush1.msra.mxu0 0.0
  %4045 = vmatprep.subr.mxu0 0.0
  %4046 = vmatpush1.msra.mxu0 0.0
  %4047 = vmatprep.subr.mxu0 0.0
  %4048 = vmatpush1.msra.mxu0 0.0
  %4049 = vmatprep.subr.mxu0 0.0
  %4050 = vmatpush1.msra.mxu0 0.0
  %4051 = vmatprep.subr.mxu0 0.0
  %4052 = vmatpush1.msra.mxu0 0.0
  %4053 = vmatprep.subr.mxu0 0.0
  %4054 = vmatpush1.msra.mxu0 0.0
  %4055 = vmatprep.subr.mxu0 0.0
  %4056 = vmatpush1.msra.mxu0 0.0
  %4057 = vmatprep.subr.mxu0 0.0
  %4058 = vmatpush1.msra.mxu0 0.0
  %4059 = vmatprep.subr.mxu0 0.0
  %4060 = vmatpush1.msra.mxu0 0.0
  %4061 = vmatprep.subr.mxu0 0.0
  %4062 = vmatpush1.msra.mxu0 0.0
  %4063 = vmatprep.subr.mxu0 0.0
  %4064 = vmatpush1.msra.mxu0 0.0
  %4065 = vmatprep.subr.mxu0 0.0
  %4066 = vmatpush1.msra.mxu0 0.0
  %4067 = vmatprep.subr.mxu0 0.0
  %4068 = vmatpush1.msra.mxu0 0.0
  %4069 = vmatprep.subr.mxu0 0.0
  %4070 = vmatpush1.msra.mxu0 0.0
  %4071 = vmatprep.subr.mxu0 0.0
  %4072 = vmatpush1.msra.mxu0 0.0
  %4073 = vmatprep.subr.mxu0 0.0
  %4074 = vmatpush1.msra.mxu0 0.0
  %4075 = vmatprep.mubr.f32.mxu0 0.0
  %4076 = vmatmul.mubr.f32.gmra.mrb[0].mxu0 %v4006
  %v4077 = vpop.f32.mrb[0].mxu0
  %v4078 = vadd.f32 0.0, %v4077
  %v4079 = vpop.f32.mrb[0].mxu0
  %4080 = vmatprep.mubr.f32.mxu0 0.0
  %4081 = vmatmul.mubr.f32.gmra.mrb[0].mxu0 %v4009
  %v4082 = vpop.f32.mrb[0].mxu0
  %v4083 = vadd.f32 0.0, %v4082
  %v4084 = vpop.f32.mrb[0].mxu0
  %4085 = vdwg.mxu0
  %4086 = vmatprep.subr.mxu0 0.0
  %4087 = vmatpush1.msra.mxu0 %v3522
  %4088 = vmatprep.subr.mxu0 0.0
  %4089 = vmatpush1.msra.mxu0 %v3523
  %4090 = vmatprep.subr.mxu0 0.0
  %4091 = vmatpush1.msra.mxu0 0.0
  %4092 = vmatprep.subr.mxu0 0.0
  %4093 = vmatpush1.msra.mxu0 0.0
  %4094 = vmatprep.subr.mxu0 0.0
  %4095 = vmatpush1.msra.mxu0 0.0
  %4096 = vmatprep.subr.mxu0 0.0
  %4097 = vmatpush1.msra.mxu0 0.0
  %4098 = vmatprep.subr.mxu0 0.0
  %4099 = vmatpush1.msra.mxu0 0.0
  %4100 = vmatprep.subr.mxu0 0.0
  %4101 = vmatpush1.msra.mxu0 0.0
  %4102 = vmatprep.subr.mxu0 0.0
  %4103 = vmatpush1.msra.mxu0 0.0
  %4104 = vmatprep.subr.mxu0 0.0
  %4105 = vmatpush1.msra.mxu0 0.0
  %4106 = vmatprep.subr.mxu0 0.0
  %4107 = vmatpush1.msra.mxu0 0.0
  %4108 = vmatprep.subr.mxu0 0.0
  %4109 = vmatpush1.msra.mxu0 0.0
  %4110 = vmatprep.subr.mxu0 0.0
  %4111 = vmatpush1.msra.mxu0 0.0
  %4112 = vmatprep.subr.mxu0 0.0
  %4113 = vmatpush1.msra.mxu0 0.0
  %4114 = vmatprep.subr.mxu0 0.0
  %4115 = vmatpush1.msra.mxu0 0.0
  %4116 = vmatprep.subr.mxu0 0.0
  %4117 = vmatpush1.msra.mxu0 0.0
  %4118 = vmatprep.subr.mxu0 0.0
  %4119 = vmatpush1.msra.mxu0 0.0
  %4120 = vmatprep.subr.mxu0 0.0
  %4121 = vmatpush1.msra.mxu0 0.0
  %4122 = vmatprep.subr.mxu0 0.0
  %4123 = vmatpush1.msra.mxu0 0.0
  %4124 = vmatprep.subr.mxu0 0.0
  %4125 = vmatpush1.msra.mxu0 0.0
  %4126 = vmatprep.subr.mxu0 0.0
  %4127 = vmatpush1.msra.mxu0 0.0
  %4128 = vmatprep.subr.mxu0 0.0
  %4129 = vmatpush1.msra.mxu0 0.0
  %4130 = vmatprep.subr.mxu0 0.0
  %4131 = vmatpush1.msra.mxu0 0.0
  %4132 = vmatprep.subr.mxu0 0.0
  %4133 = vmatpush1.msra.mxu0 0.0
  %4134 = vmatprep.subr.mxu0 0.0
  %4135 = vmatpush1.msra.mxu0 0.0
  %4136 = vmatprep.subr.mxu0 0.0
  %4137 = vmatpush1.msra.mxu0 0.0
  %4138 = vmatprep.subr.mxu0 0.0
  %4139 = vmatpush1.msra.mxu0 0.0
  %4140 = vmatprep.subr.mxu0 0.0
  %4141 = vmatpush1.msra.mxu0 0.0
  %4142 = vmatprep.subr.mxu0 0.0
  %4143 = vmatpush1.msra.mxu0 0.0
  %4144 = vmatprep.subr.mxu0 0.0
  %4145 = vmatpush1.msra.mxu0 0.0
  %4146 = vmatprep.subr.mxu0 0.0
  %4147 = vmatpush1.msra.mxu0 0.0
  %4148 = vmatprep.subr.mxu0 0.0
  %4149 = vmatpush1.msra.mxu0 0.0
  %4150 = vmatprep.mubr.f32.mxu0 0.0
  %4151 = vmatmul.mubr.f32.gmra.mrb[0].mxu0 %v3776
  %v4152 = vpop.f32.mrb[0].mxu0
  %v4153 = vadd.f32 %v4078, %v4152
  %v4154 = vpop.f32.mrb[0].mxu0
  %4155 = vmatprep.mubr.f32.mxu0 0.0
  %4156 = vmatmul.mubr.f32.gmra.mrb[0].mxu0 %v3778
  %v4157 = vpop.f32.mrb[0].mxu0
  %v4158 = vadd.f32 %v4083, %v4157
  %v4159 = vpop.f32.mrb[0].mxu0
  %4160 = vdwg.mxu0
  %4161 = vmatprep.subr.mxu0 0.0
  %4162 = vmatpush1.msra.mxu0 %v106
  %4163 = vmatprep.subr.mxu0 0.0
  %4164 = vmatpush1.msra.mxu0 %v107
  %4165 = vmatprep.subr.mxu0 0.0
  %4166 = vmatpush1.msra.mxu0 %v108
  %4167 = vmatprep.subr.mxu0 0.0
  %4168 = vmatpush1.msra.mxu0 %v109
  %4169 = vmatprep.subr.mxu0 0.0
  %4170 = vmatpush1.msra.mxu0 %v110
  %4171 = vmatprep.subr.mxu0 0.0
  %4172 = vmatpush1.msra.mxu0 %v111
  %4173 = vmatprep.subr.mxu0 0.0
  %4174 = vmatpush1.msra.mxu0 %v112
  %4175 = vmatprep.subr.mxu0 0.0
  %4176 = vmatpush1.msra.mxu0 %v113
  %4177 = vmatprep.subr.mxu0 0.0
  %4178 = vmatpush1.msra.mxu0 %v114
  %4179 = vmatprep.subr.mxu0 0.0
  %4180 = vmatpush1.msra.mxu0 %v115
  %4181 = vmatprep.subr.mxu0 0.0
  %4182 = vmatpush1.msra.mxu0 %v116
  %4183 = vmatprep.subr.mxu0 0.0
  %4184 = vmatpush1.msra.mxu0 %v117
  %4185 = vmatprep.subr.mxu0 0.0
  %4186 = vmatpush1.msra.mxu0 %v118
  %4187 = vmatprep.subr.mxu0 0.0
  %4188 = vmatpush1.msra.mxu0 %v119
  %4189 = vmatprep.subr.mxu0 0.0
  %4190 = vmatpush1.msra.mxu0 %v120
  %4191 = vmatprep.subr.mxu0 0.0
  %4192 = vmatpush1.msra.mxu0 %v121
  %4193 = vmatprep.subr.mxu0 0.0
  %4194 = vmatpush1.msra.mxu0 0.0
  %4195 = vmatprep.subr.mxu0 0.0
  %4196 = vmatpush1.msra.mxu0 0.0
  %4197 = vmatprep.subr.mxu0 0.0
  %4198 = vmatpush1.msra.mxu0 0.0
  %4199 = vmatprep.subr.mxu0 0.0
  %4200 = vmatpush1.msra.mxu0 0.0
  %4201 = vmatprep.subr.mxu0 0.0
  %4202 = vmatpush1.msra.mxu0 0.0
  %4203 = vmatprep.subr.mxu0 0.0
  %4204 = vmatpush1.msra.mxu0 0.0
  %4205 = vmatprep.subr.mxu0 0.0
  %4206 = vmatpush1.msra.mxu0 0.0
  %4207 = vmatprep.subr.mxu0 0.0
  %4208 = vmatpush1.msra.mxu0 0.0
  %4209 = vmatprep.subr.mxu0 0.0
  %4210 = vmatpush1.msra.mxu0 0.0
  %4211 = vmatprep.subr.mxu0 0.0
  %4212 = vmatpush1.msra.mxu0 0.0
  %4213 = vmatprep.subr.mxu0 0.0
  %4214 = vmatpush1.msra.mxu0 0.0
  %4215 = vmatprep.subr.mxu0 0.0
  %4216 = vmatpush1.msra.mxu0 0.0
  %4217 = vmatprep.subr.mxu0 0.0
  %4218 = vmatpush1.msra.mxu0 0.0
  %4219 = vmatprep.subr.mxu0 0.0
  %4220 = vmatpush1.msra.mxu0 0.0
  %4221 = vmatprep.subr.mxu0 0.0
  %4222 = vmatpush1.msra.mxu0 0.0
  %4223 = vmatprep.subr.mxu0 0.0
  %4224 = vmatpush1.msra.mxu0 0.0
  %4225 = vmatprep.mubr.f32.mxu0 0.0
  %4226 = vmatmul.mubr.f32.gmra.mrb[0].mxu0 %v3526
  %v4227 = vpop.f32.mrb[0].mxu0
  %v4228 = vadd.f32 0.0, %v4227
  %v4229 = vpop.f32.mrb[0].mxu0
  %4230 = vmatprep.mubr.f32.mxu0 0.0
  %4231 = vmatmul.mubr.f32.gmra.mrb[0].mxu0 %v3527
  %v4232 = vpop.f32.mrb[0].mxu0
  %v4233 = vadd.f32 0.0, %v4232
  %v4234 = vpop.f32.mrb[0].mxu0
  %4235 = vdwg.mxu0
  %4236 = vmatprep.subr.mxu0 0.0
  %4237 = vmatpush1.msra.mxu0 %v4228
  %4238 = vmatprep.subr.mxu0 0.0
  %4239 = vmatpush1.msra.mxu0 %v4233
  %4240 = vmatprep.subr.mxu0 0.0
  %4241 = vmatpush1.msra.mxu0 0.0
  %4242 = vmatprep.subr.mxu0 0.0
  %4243 = vmatpush1.msra.mxu0 0.0
  %4244 = vmatprep.subr.mxu0 0.0
  %4245 = vmatpush1.msra.mxu0 0.0
  %4246 = vmatprep.subr.mxu0 0.0
  %4247 = vmatpush1.msra.mxu0 0.0
  %4248 = vmatprep.subr.mxu0 0.0
  %4249 = vmatpush1.msra.mxu0 0.0
  %4250 = vmatprep.subr.mxu0 0.0
  %4251 = vmatpush1.msra.mxu0 0.0
  %4252 = vmatprep.subr.mxu0 0.0
  %4253 = vmatpush1.msra.mxu0 0.0
  %4254 = vmatprep.subr.mxu0 0.0
  %4255 = vmatpush1.msra.mxu0 0.0
  %4256 = vmatprep.subr.mxu0 0.0
  %4257 = vmatpush1.msra.mxu0 0.0
  %4258 = vmatprep.subr.mxu0 0.0
  %4259 = vmatpush1.msra.mxu0 0.0
  %4260 = vmatprep.subr.mxu0 0.0
  %4261 = vmatpush1.msra.mxu0 0.0
  %4262 = vmatprep.subr.mxu0 0.0
  %4263 = vmatpush1.msra.mxu0 0.0
  %4264 = vmatprep.subr.mxu0 0.0
  %4265 = vmatpush1.msra.mxu0 0.0
  %4266 = vmatprep.subr.mxu0 0.0
  %4267 = vmatpush1.msra.mxu0 0.0
  %4268 = vmatprep.subr.mxu0 0.0
  %4269 = vmatpush1.msra.mxu0 0.0
  %4270 = vmatprep.subr.mxu0 0.0
  %4271 = vmatpush1.msra.mxu0 0.0
  %4272 = vmatprep.subr.mxu0 0.0
  %4273 = vmatpush1.msra.mxu0 0.0
  %4274 = vmatprep.subr.mxu0 0.0
  %4275 = vmatpush1.msra.mxu0 0.0
  %4276 = vmatprep.subr.mxu0 0.0
  %4277 = vmatpush1.msra.mxu0 0.0
  %4278 = vmatprep.subr.mxu0 0.0
  %4279 = vmatpush1.msra.mxu0 0.0
  %4280 = vmatprep.subr.mxu0 0.0
  %4281 = vmatpush1.msra.mxu0 0.0
  %4282 = vmatprep.subr.mxu0 0.0
  %4283 = vmatpush1.msra.mxu0 0.0
  %4284 = vmatprep.subr.mxu0 0.0
  %4285 = vmatpush1.msra.mxu0 0.0
  %4286 = vmatprep.subr.mxu0 0.0
  %4287 = vmatpush1.msra.mxu0 0.0
  %4288 = vmatprep.subr.mxu0 0.0
  %4289 = vmatpush1.msra.mxu0 0.0
  %4290 = vmatprep.subr.mxu0 0.0
  %4291 = vmatpush1.msra.mxu0 0.0
  %4292 = vmatprep.subr.mxu0 0.0
  %4293 = vmatpush1.msra.mxu0 0.0
  %4294 = vmatprep.subr.mxu0 0.0
  %4295 = vmatpush1.msra.mxu0 0.0
  %4296 = vmatprep.subr.mxu0 0.0
  %4297 = vmatpush1.msra.mxu0 0.0
  %4298 = vmatprep.subr.mxu0 0.0
  %4299 = vmatpush1.msra.mxu0 0.0
  %4300 = vmatprep.mubr.f32.mxu0 0.0
  %4301 = vmatmul.mubr.f32.gmra.mrb[0].mxu0 %v3611
  %v4302 = vpop.f32.mrb[0].mxu0
  %v4303 = vadd.f32 0.0, %v4302
  %v4304 = vpop.f32.mrb[0].mxu0
  %4305 = vmatprep.mubr.f32.mxu0 0.0
  %4306 = vmatmul.mubr.f32.gmra.mrb[0].mxu0 %v3613
  %v4307 = vpop.f32.mrb[0].mxu0
  %v4308 = vadd.f32 0.0, %v4307
  %v4309 = vpop.f32.mrb[0].mxu0
  %4310 = vdwg.mxu0
  %v4312 = vsel %vm3690, %v4303, 0
  %v4315 = vsel %vm3690, %v4308, 0
  %4317 = vmatprep.subr.mxu0 0.0
  %4318 = vmatpush1.msra.mxu0 %v3699
  %4319 = vmatprep.subr.mxu0 0.0
  %4320 = vmatpush1.msra.mxu0 0.0
  %4321 = vmatprep.subr.mxu0 0.0
  %4322 = vmatpush1.msra.mxu0 0.0
  %4323 = vmatprep.subr.mxu0 0.0
  %4324 = vmatpush1.msra.mxu0 0.0
  %4325 = vmatprep.subr.mxu0 0.0
  %4326 = vmatpush1.msra.mxu0 0.0
  %4327 = vmatprep.subr.mxu0 0.0
  %4328 = vmatpush1.msra.mxu0 0.0
  %4329 = vmatprep.subr.mxu0 0.0
  %4330 = vmatpush1.msra.mxu0 0.0
  %4331 = vmatprep.subr.mxu0 0.0
  %4332 = vmatpush1.msra.mxu0 0.0
  %4333 = vmatprep.subr.mxu0 0.0
  %4334 = vmatpush1.msra.mxu0 0.0
  %4335 = vmatprep.subr.mxu0 0.0
  %4336 = vmatpush1.msra.mxu0 0.0
  %4337 = vmatprep.subr.mxu0 0.0
  %4338 = vmatpush1.msra.mxu0 0.0
  %4339 = vmatprep.subr.mxu0 0.0
  %4340 = vmatpush1.msra.mxu0 0.0
  %4341 = vmatprep.subr.mxu0 0.0
  %4342 = vmatpush1.msra.mxu0 0.0
  %4343 = vmatprep.subr.mxu0 0.0
  %4344 = vmatpush1.msra.mxu0 0.0
  %4345 = vmatprep.subr.mxu0 0.0
  %4346 = vmatpush1.msra.mxu0 0.0
  %4347 = vmatprep.subr.mxu0 0.0
  %4348 = vmatpush1.msra.mxu0 0.0
  %4349 = vmatprep.subr.mxu0 0.0
  %4350 = vmatpush1.msra.mxu0 0.0
  %4351 = vmatprep.subr.mxu0 0.0
  %4352 = vmatpush1.msra.mxu0 0.0
  %4353 = vmatprep.subr.mxu0 0.0
  %4354 = vmatpush1.msra.mxu0 0.0
  %4355 = vmatprep.subr.mxu0 0.0
  %4356 = vmatpush1.msra.mxu0 0.0
  %4357 = vmatprep.subr.mxu0 0.0
  %4358 = vmatpush1.msra.mxu0 0.0
  %4359 = vmatprep.subr.mxu0 0.0
  %4360 = vmatpush1.msra.mxu0 0.0
  %4361 = vmatprep.subr.mxu0 0.0
  %4362 = vmatpush1.msra.mxu0 0.0
  %4363 = vmatprep.subr.mxu0 0.0
  %4364 = vmatpush1.msra.mxu0 0.0
  %4365 = vmatprep.subr.mxu0 0.0
  %4366 = vmatpush1.msra.mxu0 0.0
  %4367 = vmatprep.subr.mxu0 0.0
  %4368 = vmatpush1.msra.mxu0 0.0
  %4369 = vmatprep.subr.mxu0 0.0
  %4370 = vmatpush1.msra.mxu0 0.0
  %4371 = vmatprep.subr.mxu0 0.0
  %4372 = vmatpush1.msra.mxu0 0.0
  %4373 = vmatprep.subr.mxu0 0.0
  %4374 = vmatpush1.msra.mxu0 0.0
  %4375 = vmatprep.subr.mxu0 0.0
  %4376 = vmatpush1.msra.mxu0 0.0
  %4377 = vmatprep.subr.mxu0 0.0
  %4378 = vmatpush1.msra.mxu0 0.0
  %4379 = vmatprep.subr.mxu0 0.0
  %4380 = vmatpush1.msra.mxu0 0.0
  %4381 = vmatprep.mubr.f32.mxu0 0.0
  %4382 = vmatmul.mubr.f32.gmra.mrb[0].mxu0 %v4312
  %v4383 = vpop.f32.mrb[0].mxu0
  %v4384 = vadd.f32 0.0, %v4383
  %v4385 = vpop.f32.mrb[0].mxu0
  %4386 = vmatprep.mubr.f32.mxu0 0.0
  %4387 = vmatmul.mubr.f32.gmra.mrb[0].mxu0 %v4315
  %v4388 = vpop.f32.mrb[0].mxu0
  %v4389 = vadd.f32 0.0, %v4388
  %v4390 = vpop.f32.mrb[0].mxu0
  %4391 = vdwg.mxu0
  %4392 = vmatprep.subr.mxu0 0.0
  %4393 = vmatpush1.msra.mxu0 %v3526
  %4394 = vmatprep.subr.mxu0 0.0
  %4395 = vmatpush1.msra.mxu0 %v3527
  %4396 = vmatprep.subr.mxu0 0.0
  %4397 = vmatpush1.msra.mxu0 0.0
  %4398 = vmatprep.subr.mxu0 0.0
  %4399 = vmatpush1.msra.mxu0 0.0
  %4400 = vmatprep.subr.mxu0 0.0
  %4401 = vmatpush1.msra.mxu0 0.0
  %4402 = vmatprep.subr.mxu0 0.0
  %4403 = vmatpush1.msra.mxu0 0.0
  %4404 = vmatprep.subr.mxu0 0.0
  %4405 = vmatpush1.msra.mxu0 0.0
  %4406 = vmatprep.subr.mxu0 0.0
  %4407 = vmatpush1.msra.mxu0 0.0
  %4408 = vmatprep.subr.mxu0 0.0
  %4409 = vmatpush1.msra.mxu0 0.0
  %4410 = vmatprep.subr.mxu0 0.0
  %4411 = vmatpush1.msra.mxu0 0.0
  %4412 = vmatprep.subr.mxu0 0.0
  %4413 = vmatpush1.msra.mxu0 0.0
  %4414 = vmatprep.subr.mxu0 0.0
  %4415 = vmatpush1.msra.mxu0 0.0
  %4416 = vmatprep.subr.mxu0 0.0
  %4417 = vmatpush1.msra.mxu0 0.0
  %4418 = vmatprep.subr.mxu0 0.0
  %4419 = vmatpush1.msra.mxu0 0.0
  %4420 = vmatprep.subr.mxu0 0.0
  %4421 = vmatpush1.msra.mxu0 0.0
  %4422 = vmatprep.subr.mxu0 0.0
  %4423 = vmatpush1.msra.mxu0 0.0
  %4424 = vmatprep.subr.mxu0 0.0
  %4425 = vmatpush1.msra.mxu0 0.0
  %4426 = vmatprep.subr.mxu0 0.0
  %4427 = vmatpush1.msra.mxu0 0.0
  %4428 = vmatprep.subr.mxu0 0.0
  %4429 = vmatpush1.msra.mxu0 0.0
  %4430 = vmatprep.subr.mxu0 0.0
  %4431 = vmatpush1.msra.mxu0 0.0
  %4432 = vmatprep.subr.mxu0 0.0
  %4433 = vmatpush1.msra.mxu0 0.0
  %4434 = vmatprep.subr.mxu0 0.0
  %4435 = vmatpush1.msra.mxu0 0.0
  %4436 = vmatprep.subr.mxu0 0.0
  %4437 = vmatpush1.msra.mxu0 0.0
  %4438 = vmatprep.subr.mxu0 0.0
  %4439 = vmatpush1.msra.mxu0 0.0
  %4440 = vmatprep.subr.mxu0 0.0
  %4441 = vmatpush1.msra.mxu0 0.0
  %4442 = vmatprep.subr.mxu0 0.0
  %4443 = vmatpush1.msra.mxu0 0.0
  %4444 = vmatprep.subr.mxu0 0.0
  %4445 = vmatpush1.msra.mxu0 0.0
  %4446 = vmatprep.subr.mxu0 0.0
  %4447 = vmatpush1.msra.mxu0 0.0
  %4448 = vmatprep.subr.mxu0 0.0
  %4449 = vmatpush1.msra.mxu0 0.0
  %4450 = vmatprep.subr.mxu0 0.0
  %4451 = vmatpush1.msra.mxu0 0.0
  %4452 = vmatprep.subr.mxu0 0.0
  %4453 = vmatpush1.msra.mxu0 0.0
  %4454 = vmatprep.subr.mxu0 0.0
  %4455 = vmatpush1.msra.mxu0 0.0
  %4456 = vmatprep.mubr.f32.mxu0 0.0
  %4457 = vmatmul.mubr.f32.gmra.mrb[0].mxu0 %v3776
  %v4458 = vpop.f32.mrb[0].mxu0
  %v4459 = vadd.f32 %v4384, %v4458
  %v4460 = vpop.f32.mrb[0].mxu0
  %4461 = vmatprep.mubr.f32.mxu0 0.0
  %4462 = vmatmul.mubr.f32.gmra.mrb[0].mxu0 %v3778
  %v4463 = vpop.f32.mrb[0].mxu0
  %v4464 = vadd.f32 %v4389, %v4463
  %v4465 = vpop.f32.mrb[0].mxu0
  %4466 = vdwg.mxu0
  %v4467 = vld [vmem:[%s7] sm:$0xff]
  %v4468 = vld [vmem:[%s7 + $0x8] sm:$0xff]
  %v4470 = vsel %vm1629, %v4467, 0
  %v4473 = vsel %vm1629, %v4468, 0
  %4475 = vmatprep.subr.mxu0 0.0
  %4476 = vmatpush1.msra.mxu0 %v3847
  %4477 = vmatprep.subr.mxu0 0.0
  %4478 = vmatpush1.msra.mxu0 %v3852
  %4479 = vmatprep.subr.mxu0 0.0
  %4480 = vmatpush1.msra.mxu0 0.0
  %4481 = vmatprep.subr.mxu0 0.0
  %4482 = vmatpush1.msra.mxu0 0.0
  %4483 = vmatprep.subr.mxu0 0.0
  %4484 = vmatpush1.msra.mxu0 0.0
  %4485 = vmatprep.subr.mxu0 0.0
  %4486 = vmatpush1.msra.mxu0 0.0
  %4487 = vmatprep.subr.mxu0 0.0
  %4488 = vmatpush1.msra.mxu0 0.0
  %4489 = vmatprep.subr.mxu0 0.0
  %4490 = vmatpush1.msra.mxu0 0.0
  %4491 = vmatprep.subr.mxu0 0.0
  %4492 = vmatpush1.msra.mxu0 0.0
  %4493 = vmatprep.subr.mxu0 0.0
  %4494 = vmatpush1.msra.mxu0 0.0
  %4495 = vmatprep.subr.mxu0 0.0
  %4496 = vmatpush1.msra.mxu0 0.0
  %4497 = vmatprep.subr.mxu0 0.0
  %4498 = vmatpush1.msra.mxu0 0.0
  %4499 = vmatprep.subr.mxu0 0.0
  %4500 = vmatpush1.msra.mxu0 0.0
  %4501 = vmatprep.subr.mxu0 0.0
  %4502 = vmatpush1.msra.mxu0 0.0
  %4503 = vmatprep.subr.mxu0 0.0
  %4504 = vmatpush1.msra.mxu0 0.0
  %4505 = vmatprep.subr.mxu0 0.0
  %4506 = vmatpush1.msra.mxu0 0.0
  %4507 = vmatprep.subr.mxu0 0.0
  %4508 = vmatpush1.msra.mxu0 0.0
  %4509 = vmatprep.subr.mxu0 0.0
  %4510 = vmatpush1.msra.mxu0 0.0
  %4511 = vmatprep.subr.mxu0 0.0
  %4512 = vmatpush1.msra.mxu0 0.0
  %4513 = vmatprep.subr.mxu0 0.0
  %4514 = vmatpush1.msra.mxu0 0.0
  %4515 = vmatprep.subr.mxu0 0.0
  %4516 = vmatpush1.msra.mxu0 0.0
  %4517 = vmatprep.subr.mxu0 0.0
  %4518 = vmatpush1.msra.mxu0 0.0
  %4519 = vmatprep.subr.mxu0 0.0
  %4520 = vmatpush1.msra.mxu0 0.0
  %4521 = vmatprep.subr.mxu0 0.0
  %4522 = vmatpush1.msra.mxu0 0.0
  %4523 = vmatprep.subr.mxu0 0.0
  %4524 = vmatpush1.msra.mxu0 0.0
  %4525 = vmatprep.subr.mxu0 0.0
  %4526 = vmatpush1.msra.mxu0 0.0
  %4527 = vmatprep.subr.mxu0 0.0
  %4528 = vmatpush1.msra.mxu0 0.0
  %4529 = vmatprep.subr.mxu0 0.0
  %4530 = vmatpush1.msra.mxu0 0.0
  %4531 = vmatprep.subr.mxu0 0.0
  %4532 = vmatpush1.msra.mxu0 0.0
  %4533 = vmatprep.subr.mxu0 0.0
  %4534 = vmatpush1.msra.mxu0 0.0
  %4535 = vmatprep.subr.mxu0 0.0
  %4536 = vmatpush1.msra.mxu0 0.0
  %4537 = vmatprep.subr.mxu0 0.0
  %4538 = vmatpush1.msra.mxu0 0.0
  %4539 = vmatprep.mubr.f32.mxu0 0.0
  %4540 = vmatmul.mubr.f32.gmra.mrb[0].mxu0 %v4470
  %v4541 = vpop.f32.mrb[0].mxu0
  %v4542 = vadd.f32 0.0, %v4541
  %v4543 = vpop.f32.mrb[0].mxu0
  %4544 = vmatprep.mubr.f32.mxu0 0.0
  %4545 = vmatmul.mubr.f32.gmra.mrb[0].mxu0 %v4473
  %v4546 = vpop.f32.mrb[0].mxu0
  %v4547 = vadd.f32 0.0, %v4546
  %v4548 = vpop.f32.mrb[0].mxu0
  %4549 = vdwg.mxu0
  %4550 = vmatprep.subr.mxu0 0.0
  %4551 = vmatpush1.msra.mxu0 %v4153
  %4552 = vmatprep.subr.mxu0 0.0
  %4553 = vmatpush1.msra.mxu0 %v4158
  %4554 = vmatprep.subr.mxu0 0.0
  %4555 = vmatpush1.msra.mxu0 0.0
  %4556 = vmatprep.subr.mxu0 0.0
  %4557 = vmatpush1.msra.mxu0 0.0
  %4558 = vmatprep.subr.mxu0 0.0
  %4559 = vmatpush1.msra.mxu0 0.0
  %4560 = vmatprep.subr.mxu0 0.0
  %4561 = vmatpush1.msra.mxu0 0.0
  %4562 = vmatprep.subr.mxu0 0.0
  %4563 = vmatpush1.msra.mxu0 0.0
  %4564 = vmatprep.subr.mxu0 0.0
  %4565 = vmatpush1.msra.mxu0 0.0
  %4566 = vmatprep.subr.mxu0 0.0
  %4567 = vmatpush1.msra.mxu0 0.0
  %4568 = vmatprep.subr.mxu0 0.0
  %4569 = vmatpush1.msra.mxu0 0.0
  %4570 = vmatprep.subr.mxu0 0.0
  %4571 = vmatpush1.msra.mxu0 0.0
  %4572 = vmatprep.subr.mxu0 0.0
  %4573 = vmatpush1.msra.mxu0 0.0
  %4574 = vmatprep.subr.mxu0 0.0
  %4575 = vmatpush1.msra.mxu0 0.0
  %4576 = vmatprep.subr.mxu0 0.0
  %4577 = vmatpush1.msra.mxu0 0.0
  %4578 = vmatprep.subr.mxu0 0.0
  %4579 = vmatpush1.msra.mxu0 0.0
  %4580 = vmatprep.subr.mxu0 0.0
  %4581 = vmatpush1.msra.mxu0 0.0
  %4582 = vmatprep.subr.mxu0 0.0
  %4583 = vmatpush1.msra.mxu0 0.0
  %4584 = vmatprep.subr.mxu0 0.0
  %4585 = vmatpush1.msra.mxu0 0.0
  %4586 = vmatprep.subr.mxu0 0.0
  %4587 = vmatpush1.msra.mxu0 0.0
  %4588 = vmatprep.subr.mxu0 0.0
  %4589 = vmatpush1.msra.mxu0 0.0
  %4590 = vmatprep.subr.mxu0 0.0
  %4591 = vmatpush1.msra.mxu0 0.0
  %4592 = vmatprep.subr.mxu0 0.0
  %4593 = vmatpush1.msra.mxu0 0.0
  %4594 = vmatprep.subr.mxu0 0.0
  %4595 = vmatpush1.msra.mxu0 0.0
  %4596 = vmatprep.subr.mxu0 0.0
  %4597 = vmatpush1.msra.mxu0 0.0
  %4598 = vmatprep.subr.mxu0 0.0
  %4599 = vmatpush1.msra.mxu0 0.0
  %4600 = vmatprep.subr.mxu0 0.0
  %4601 = vmatpush1.msra.mxu0 0.0
  %4602 = vmatprep.subr.mxu0 0.0
  %4603 = vmatpush1.msra.mxu0 0.0
  %4604 = vmatprep.subr.mxu0 0.0
  %4605 = vmatpush1.msra.mxu0 0.0
  %4606 = vmatprep.subr.mxu0 0.0
  %4607 = vmatpush1.msra.mxu0 0.0
  %4608 = vmatprep.subr.mxu0 0.0
  %4609 = vmatpush1.msra.mxu0 0.0
  %4610 = vmatprep.subr.mxu0 0.0
  %4611 = vmatpush1.msra.mxu0 0.0
  %4612 = vmatprep.subr.mxu0 0.0
  %4613 = vmatpush1.msra.mxu0 0.0
  %4614 = vmatprep.mubr.f32.mxu0 0.0
  %4615 = vmatmul.mubr.f32.gmra.mrb[0].mxu0 %v4470
  %v4616 = vpop.f32.mrb[0].mxu0
  %v4617 = vadd.f32 0.0, %v4616
  %v4618 = vpop.f32.mrb[0].mxu0
  %4619 = vmatprep.mubr.f32.mxu0 0.0
  %4620 = vmatmul.mubr.f32.gmra.mrb[0].mxu0 %v4473
  %v4621 = vpop.f32.mrb[0].mxu0
  %v4622 = vadd.f32 0.0, %v4621
  %v4623 = vpop.f32.mrb[0].mxu0
  %4624 = vdwg.mxu0
  %4625 = vmatprep.subr.mxu0 0.0
  %4626 = vmatpush1.msra.mxu0 %v4459
  %4627 = vmatprep.subr.mxu0 0.0
  %4628 = vmatpush1.msra.mxu0 %v4464
  %4629 = vmatprep.subr.mxu0 0.0
  %4630 = vmatpush1.msra.mxu0 0.0
  %4631 = vmatprep.subr.mxu0 0.0
  %4632 = vmatpush1.msra.mxu0 0.0
  %4633 = vmatprep.subr.mxu0 0.0
  %4634 = vmatpush1.msra.mxu0 0.0
  %4635 = vmatprep.subr.mxu0 0.0
  %4636 = vmatpush1.msra.mxu0 0.0
  %4637 = vmatprep.subr.mxu0 0.0
  %4638 = vmatpush1.msra.mxu0 0.0
  %4639 = vmatprep.subr.mxu0 0.0
  %4640 = vmatpush1.msra.mxu0 0.0
  %4641 = vmatprep.subr.mxu0 0.0
  %4642 = vmatpush1.msra.mxu0 0.0
  %4643 = vmatprep.subr.mxu0 0.0
  %4644 = vmatpush1.msra.mxu0 0.0
  %4645 = vmatprep.subr.mxu0 0.0
  %4646 = vmatpush1.msra.mxu0 0.0
  %4647 = vmatprep.subr.mxu0 0.0
  %4648 = vmatpush1.msra.mxu0 0.0
  %4649 = vmatprep.subr.mxu0 0.0
  %4650 = vmatpush1.msra.mxu0 0.0
  %4651 = vmatprep.subr.mxu0 0.0
  %4652 = vmatpush1.msra.mxu0 0.0
  %4653 = vmatprep.subr.mxu0 0.0
  %4654 = vmatpush1.msra.mxu0 0.0
  %4655 = vmatprep.subr.mxu0 0.0
  %4656 = vmatpush1.msra.mxu0 0.0
  %4657 = vmatprep.subr.mxu0 0.0
  %4658 = vmatpush1.msra.mxu0 0.0
  %4659 = vmatprep.subr.mxu0 0.0
  %4660 = vmatpush1.msra.mxu0 0.0
  %4661 = vmatprep.subr.mxu0 0.0
  %4662 = vmatpush1.msra.mxu0 0.0
  %4663 = vmatprep.subr.mxu0 0.0
  %4664 = vmatpush1.msra.mxu0 0.0
  %4665 = vmatprep.subr.mxu0 0.0
  %4666 = vmatpush1.msra.mxu0 0.0
  %4667 = vmatprep.subr.mxu0 0.0
  %4668 = vmatpush1.msra.mxu0 0.0
  %4669 = vmatprep.subr.mxu0 0.0
  %4670 = vmatpush1.msra.mxu0 0.0
  %4671 = vmatprep.subr.mxu0 0.0
  %4672 = vmatpush1.msra.mxu0 0.0
  %4673 = vmatprep.subr.mxu0 0.0
  %4674 = vmatpush1.msra.mxu0 0.0
  %4675 = vmatprep.subr.mxu0 0.0
  %4676 = vmatpush1.msra.mxu0 0.0
  %4677 = vmatprep.subr.mxu0 0.0
  %4678 = vmatpush1.msra.mxu0 0.0
  %4679 = vmatprep.subr.mxu0 0.0
  %4680 = vmatpush1.msra.mxu0 0.0
  %4681 = vmatprep.subr.mxu0 0.0
  %4682 = vmatpush1.msra.mxu0 0.0
  %4683 = vmatprep.subr.mxu0 0.0
  %4684 = vmatpush1.msra.mxu0 0.0
  %4685 = vmatprep.subr.mxu0 0.0
  %4686 = vmatpush1.msra.mxu0 0.0
  %4687 = vmatprep.subr.mxu0 0.0
  %4688 = vmatpush1.msra.mxu0 0.0
  %4689 = vmatprep.mubr.f32.mxu0 0.0
  %4690 = vmatmul.mubr.f32.gmra.mrb[0].mxu0 %v4470
  %v4691 = vpop.f32.mrb[0].mxu0
  %v4692 = vadd.f32 0.0, %v4691
  %v4693 = vpop.f32.mrb[0].mxu0
  %4694 = vmatprep.mubr.f32.mxu0 0.0
  %4695 = vmatmul.mubr.f32.gmra.mrb[0].mxu0 %v4473
  %v4696 = vpop.f32.mrb[0].mxu0
  %v4697 = vadd.f32 0.0, %v4696
  %v4698 = vpop.f32.mrb[0].mxu0
  %4699 = vdwg.mxu0
  %v4700 = vmul.f32 %v4542, %v4542
  %v4701 = vmul.f32 %v4547, %v4547
  %v4702 = vmul.f32 %v4617, %v4617
  %v4703 = vmul.f32 %v4622, %v4622
  %v4704 = vadd.f32 %v4700, %v4702
  %v4705 = vadd.f32 %v4701, %v4703
  %v4706 = vmul.f32 %v4692, %v4692
  %v4707 = vmul.f32 %v4697, %v4697
  %v4708 = vadd.f32 %v4704, %v4706
  %v4709 = vadd.f32 %v4705, %v4707
  %v4710 = vmax.f32 %v4708, 1e-24
  %v4711 = vmax.f32 %v4709, 1e-24
  %v4712 = vrsqrt.pop %v4710
  %v4713 = vrsqrt.pop %v4711
  %v4714 = vmul.f32 %v4542, %v4712
  %v4715 = vmul.f32 %v4547, %v4713
  %v4716 = vmul.f32 %v4617, %v4712
  %v4717 = vmul.f32 %v4622, %v4713
  %v4718 = vmul.f32 %v4692, %v4712
  %v4719 = vmul.f32 %v4697, %v4713
  %v4720 = vmul.f32 %v3847, %v4714
  %v4721 = vmul.f32 %v3852, %v4715
  %v4722 = vmul.f32 %v4153, %v4716
  %v4723 = vmul.f32 %v4158, %v4717
  %v4724 = vadd.f32 %v4720, %v4722
  %v4725 = vadd.f32 %v4721, %v4723
  %v4726 = vmul.f32 %v4459, %v4718
  %v4727 = vmul.f32 %v4464, %v4719
  %v4728 = vadd.f32 %v4724, %v4726
  %v4729 = vadd.f32 %v4725, %v4727
  %vm4730 = vcmp.ge.f32.partialorder %v4728, 0.0
  %vm4731 = vcmp.ge.f32.partialorder %v4729, 0.0
  %v4732 = vmul.f32 %v4728, 0.2
  %v4733 = vmul.f32 %v4729, 0.2
  %v4734 = vsel %vm4730, %v4728, %v4732
  %v4735 = vsel %vm4731, %v4729, %v4733
  %v4736 = vsub.f32 %v4734, %v4728
  %v4737 = vsub.f32 %v4735, %v4729
  %v4738 = vmul.f32 %v4736, %v4714
  %v4739 = vmul.f32 %v4737, %v4715
  %v4740 = vadd.f32 %v3847, %v4738
  %v4741 = vadd.f32 %v3852, %v4739
  %v4742 = vmul.f32 %v4736, %v4716
  %v4743 = vmul.f32 %v4737, %v4717
  %v4744 = vadd.f32 %v4153, %v4742
  %v4745 = vadd.f32 %v4158, %v4743
  %v4746 = vmul.f32 %v4736, %v4718
  %v4747 = vmul.f32 %v4737, %v4719
  %v4748 = vadd.f32 %v4459, %v4746
  %v4749 = vadd.f32 %v4464, %v4747
  %4750 = vmatprep.subr.mxu0 0.0
  %4751 = vmatpush1.msra.mxu0 %v106
  %4752 = vmatprep.subr.mxu0 0.0
  %4753 = vmatpush1.msra.mxu0 %v107
  %4754 = vmatprep.subr.mxu0 0.0
  %4755 = vmatpush1.msra.mxu0 %v108
  %4756 = vmatprep.subr.mxu0 0.0
  %4757 = vmatpush1.msra.mxu0 %v109
  %4758 = vmatprep.subr.mxu0 0.0
  %4759 = vmatpush1.msra.mxu0 %v110
  %4760 = vmatprep.subr.mxu0 0.0
  %4761 = vmatpush1.msra.mxu0 %v111
  %4762 = vmatprep.subr.mxu0 0.0
  %4763 = vmatpush1.msra.mxu0 %v112
  %4764 = vmatprep.subr.mxu0 0.0
  %4765 = vmatpush1.msra.mxu0 %v113
  %4766 = vmatprep.subr.mxu0 0.0
  %4767 = vmatpush1.msra.mxu0 %v114
  %4768 = vmatprep.subr.mxu0 0.0
  %4769 = vmatpush1.msra.mxu0 %v115
  %4770 = vmatprep.subr.mxu0 0.0
  %4771 = vmatpush1.msra.mxu0 %v116
  %4772 = vmatprep.subr.mxu0 0.0
  %4773 = vmatpush1.msra.mxu0 %v117
  %4774 = vmatprep.subr.mxu0 0.0
  %4775 = vmatpush1.msra.mxu0 %v118
  %4776 = vmatprep.subr.mxu0 0.0
  %4777 = vmatpush1.msra.mxu0 %v119
  %4778 = vmatprep.subr.mxu0 0.0
  %4779 = vmatpush1.msra.mxu0 %v120
  %4780 = vmatprep.subr.mxu0 0.0
  %4781 = vmatpush1.msra.mxu0 %v121
  %4782 = vmatprep.subr.mxu0 0.0
  %4783 = vmatpush1.msra.mxu0 0.0
  %4784 = vmatprep.subr.mxu0 0.0
  %4785 = vmatpush1.msra.mxu0 0.0
  %4786 = vmatprep.subr.mxu0 0.0
  %4787 = vmatpush1.msra.mxu0 0.0
  %4788 = vmatprep.subr.mxu0 0.0
  %4789 = vmatpush1.msra.mxu0 0.0
  %4790 = vmatprep.subr.mxu0 0.0
  %4791 = vmatpush1.msra.mxu0 0.0
  %4792 = vmatprep.subr.mxu0 0.0
  %4793 = vmatpush1.msra.mxu0 0.0
  %4794 = vmatprep.subr.mxu0 0.0
  %4795 = vmatpush1.msra.mxu0 0.0
  %4796 = vmatprep.subr.mxu0 0.0
  %4797 = vmatpush1.msra.mxu0 0.0
  %4798 = vmatprep.subr.mxu0 0.0
  %4799 = vmatpush1.msra.mxu0 0.0
  %4800 = vmatprep.subr.mxu0 0.0
  %4801 = vmatpush1.msra.mxu0 0.0
  %4802 = vmatprep.subr.mxu0 0.0
  %4803 = vmatpush1.msra.mxu0 0.0
  %4804 = vmatprep.subr.mxu0 0.0
  %4805 = vmatpush1.msra.mxu0 0.0
  %4806 = vmatprep.subr.mxu0 0.0
  %4807 = vmatpush1.msra.mxu0 0.0
  %4808 = vmatprep.subr.mxu0 0.0
  %4809 = vmatpush1.msra.mxu0 0.0
  %4810 = vmatprep.subr.mxu0 0.0
  %4811 = vmatpush1.msra.mxu0 0.0
  %4812 = vmatprep.subr.mxu0 0.0
  %4813 = vmatpush1.msra.mxu0 0.0
  %4814 = vmatprep.mubr.f32.mxu0 0.0
  %4815 = vmatmul.mubr.f32.gmra.mrb[0].mxu0 %v4740
  %v4816 = vpop.f32.mrb[0].mxu0
  %v4817 = vadd.f32 0.0, %v4816
  %v4818 = vpop.f32.mrb[0].mxu0
  %4819 = vmatprep.mubr.f32.mxu0 0.0
  %4820 = vmatmul.mubr.f32.gmra.mrb[0].mxu0 %v4741
  %v4821 = vpop.f32.mrb[0].mxu0
  %v4822 = vadd.f32 0.0, %v4821
  %v4823 = vpop.f32.mrb[0].mxu0
  %4824 = vdwg.mxu0
  %4825 = vmatprep.subr.mxu0 0.0
  %4826 = vmatpush1.msra.mxu0 %v106
  %4827 = vmatprep.subr.mxu0 0.0
  %4828 = vmatpush1.msra.mxu0 %v107
  %4829 = vmatprep.subr.mxu0 0.0
  %4830 = vmatpush1.msra.mxu0 %v108
  %4831 = vmatprep.subr.mxu0 0.0
  %4832 = vmatpush1.msra.mxu0 %v109
  %4833 = vmatprep.subr.mxu0 0.0
  %4834 = vmatpush1.msra.mxu0 %v110
  %4835 = vmatprep.subr.mxu0 0.0
  %4836 = vmatpush1.msra.mxu0 %v111
  %4837 = vmatprep.subr.mxu0 0.0
  %4838 = vmatpush1.msra.mxu0 %v112
  %4839 = vmatprep.subr.mxu0 0.0
  %4840 = vmatpush1.msra.mxu0 %v113
  %4841 = vmatprep.subr.mxu0 0.0
  %4842 = vmatpush1.msra.mxu0 %v114
  %4843 = vmatprep.subr.mxu0 0.0
  %4844 = vmatpush1.msra.mxu0 %v115
  %4845 = vmatprep.subr.mxu0 0.0
  %4846 = vmatpush1.msra.mxu0 %v116
  %4847 = vmatprep.subr.mxu0 0.0
  %4848 = vmatpush1.msra.mxu0 %v117
  %4849 = vmatprep.subr.mxu0 0.0
  %4850 = vmatpush1.msra.mxu0 %v118
  %4851 = vmatprep.subr.mxu0 0.0
  %4852 = vmatpush1.msra.mxu0 %v119
  %4853 = vmatprep.subr.mxu0 0.0
  %4854 = vmatpush1.msra.mxu0 %v120
  %4855 = vmatprep.subr.mxu0 0.0
  %4856 = vmatpush1.msra.mxu0 %v121
  %4857 = vmatprep.subr.mxu0 0.0
  %4858 = vmatpush1.msra.mxu0 0.0
  %4859 = vmatprep.subr.mxu0 0.0
  %4860 = vmatpush1.msra.mxu0 0.0
  %4861 = vmatprep.subr.mxu0 0.0
  %4862 = vmatpush1.msra.mxu0 0.0
  %4863 = vmatprep.subr.mxu0 0.0
  %4864 = vmatpush1.msra.mxu0 0.0
  %4865 = vmatprep.subr.mxu0 0.0
  %4866 = vmatpush1.msra.mxu0 0.0
  %4867 = vmatprep.subr.mxu0 0.0
  %4868 = vmatpush1.msra.mxu0 0.0
  %4869 = vmatprep.subr.mxu0 0.0
  %4870 = vmatpush1.msra.mxu0 0.0
  %4871 = vmatprep.subr.mxu0 0.0
  %4872 = vmatpush1.msra.mxu0 0.0
  %4873 = vmatprep.subr.mxu0 0.0
  %4874 = vmatpush1.msra.mxu0 0.0
  %4875 = vmatprep.subr.mxu0 0.0
  %4876 = vmatpush1.msra.mxu0 0.0
  %4877 = vmatprep.subr.mxu0 0.0
  %4878 = vmatpush1.msra.mxu0 0.0
  %4879 = vmatprep.subr.mxu0 0.0
  %4880 = vmatpush1.msra.mxu0 0.0
  %4881 = vmatprep.subr.mxu0 0.0
  %4882 = vmatpush1.msra.mxu0 0.0
  %4883 = vmatprep.subr.mxu0 0.0
  %4884 = vmatpush1.msra.mxu0 0.0
  %4885 = vmatprep.subr.mxu0 0.0
  %4886 = vmatpush1.msra.mxu0 0.0
  %4887 = vmatprep.subr.mxu0 0.0
  %4888 = vmatpush1.msra.mxu0 0.0
  %4889 = vmatprep.mubr.f32.mxu0 0.0
  %4890 = vmatmul.mubr.f32.gmra.mrb[0].mxu0 %v4744
  %v4891 = vpop.f32.mrb[0].mxu0
  %v4892 = vadd.f32 0.0, %v4891
  %v4893 = vpop.f32.mrb[0].mxu0
  %4894 = vmatprep.mubr.f32.mxu0 0.0
  %4895 = vmatmul.mubr.f32.gmra.mrb[0].mxu0 %v4745
  %v4896 = vpop.f32.mrb[0].mxu0
  %v4897 = vadd.f32 0.0, %v4896
  %v4898 = vpop.f32.mrb[0].mxu0
  %4899 = vdwg.mxu0
  %4900 = vmatprep.subr.mxu0 0.0
  %4901 = vmatpush1.msra.mxu0 %v106
  %4902 = vmatprep.subr.mxu0 0.0
  %4903 = vmatpush1.msra.mxu0 %v107
  %4904 = vmatprep.subr.mxu0 0.0
  %4905 = vmatpush1.msra.mxu0 %v108
  %4906 = vmatprep.subr.mxu0 0.0
  %4907 = vmatpush1.msra.mxu0 %v109
  %4908 = vmatprep.subr.mxu0 0.0
  %4909 = vmatpush1.msra.mxu0 %v110
  %4910 = vmatprep.subr.mxu0 0.0
  %4911 = vmatpush1.msra.mxu0 %v111
  %4912 = vmatprep.subr.mxu0 0.0
  %4913 = vmatpush1.msra.mxu0 %v112
  %4914 = vmatprep.subr.mxu0 0.0
  %4915 = vmatpush1.msra.mxu0 %v113
  %4916 = vmatprep.subr.mxu0 0.0
  %4917 = vmatpush1.msra.mxu0 %v114
  %4918 = vmatprep.subr.mxu0 0.0
  %4919 = vmatpush1.msra.mxu0 %v115
  %4920 = vmatprep.subr.mxu0 0.0
  %4921 = vmatpush1.msra.mxu0 %v116
  %4922 = vmatprep.subr.mxu0 0.0
  %4923 = vmatpush1.msra.mxu0 %v117
  %4924 = vmatprep.subr.mxu0 0.0
  %4925 = vmatpush1.msra.mxu0 %v118
  %4926 = vmatprep.subr.mxu0 0.0
  %4927 = vmatpush1.msra.mxu0 %v119
  %4928 = vmatprep.subr.mxu0 0.0
  %4929 = vmatpush1.msra.mxu0 %v120
  %4930 = vmatprep.subr.mxu0 0.0
  %4931 = vmatpush1.msra.mxu0 %v121
  %4932 = vmatprep.subr.mxu0 0.0
  %4933 = vmatpush1.msra.mxu0 0.0
  %4934 = vmatprep.subr.mxu0 0.0
  %4935 = vmatpush1.msra.mxu0 0.0
  %4936 = vmatprep.subr.mxu0 0.0
  %4937 = vmatpush1.msra.mxu0 0.0
  %4938 = vmatprep.subr.mxu0 0.0
  %4939 = vmatpush1.msra.mxu0 0.0
  %4940 = vmatprep.subr.mxu0 0.0
  %4941 = vmatpush1.msra.mxu0 0.0
  %4942 = vmatprep.subr.mxu0 0.0
  %4943 = vmatpush1.msra.mxu0 0.0
  %4944 = vmatprep.subr.mxu0 0.0
  %4945 = vmatpush1.msra.mxu0 0.0
  %4946 = vmatprep.subr.mxu0 0.0
  %4947 = vmatpush1.msra.mxu0 0.0
  %4948 = vmatprep.subr.mxu0 0.0
  %4949 = vmatpush1.msra.mxu0 0.0
  %4950 = vmatprep.subr.mxu0 0.0
  %4951 = vmatpush1.msra.mxu0 0.0
  %4952 = vmatprep.subr.mxu0 0.0
  %4953 = vmatpush1.msra.mxu0 0.0
  %4954 = vmatprep.subr.mxu0 0.0
  %4955 = vmatpush1.msra.mxu0 0.0
  %4956 = vmatprep.subr.mxu0 0.0
  %4957 = vmatpush1.msra.mxu0 0.0
  %4958 = vmatprep.subr.mxu0 0.0
  %4959 = vmatpush1.msra.mxu0 0.0
  %4960 = vmatprep.subr.mxu0 0.0
  %4961 = vmatpush1.msra.mxu0 0.0
  %4962 = vmatprep.subr.mxu0 0.0
  %4963 = vmatpush1.msra.mxu0 0.0
  %4964 = vmatprep.mubr.f32.mxu0 0.0
  %4965 = vmatmul.mubr.f32.gmra.mrb[0].mxu0 %v4748
  %v4966 = vpop.f32.mrb[0].mxu0
  %v4967 = vadd.f32 0.0, %v4966
  %v4968 = vpop.f32.mrb[0].mxu0
  %4969 = vmatprep.mubr.f32.mxu0 0.0
  %4970 = vmatmul.mubr.f32.gmra.mrb[0].mxu0 %v4749
  %v4971 = vpop.f32.mrb[0].mxu0
  %v4972 = vadd.f32 0.0, %v4971
  %v4973 = vpop.f32.mrb[0].mxu0
  %4974 = vdwg.mxu0
  %s4975 = scalar_lea.vmem %s4, 16
  %v4976 = vld [vmem:[%s4975] sm:$0xff]
  %v4977 = vld [vmem:[%s4975 + $0x8] sm:$0xff]
  %v4979 = vsel %vm1629, %v4976, 0
  %v4982 = vsel %vm1629, %v4977, 0
  %4984 = vmatprep.subr.mxu0 0.0
  %4985 = vmatpush1.msra.mxu0 %v4740
  %4986 = vmatprep.subr.mxu0 0.0
  %4987 = vmatpush1.msra.mxu0 %v4741
  %4988 = vmatprep.subr.mxu0 0.0
  %4989 = vmatpush1.msra.mxu0 0.0
  %4990 = vmatprep.subr.mxu0 0.0
  %4991 = vmatpush1.msra.mxu0 0.0
  %4992 = vmatprep.subr.mxu0 0.0
  %4993 = vmatpush1.msra.mxu0 0.0
  %4994 = vmatprep.subr.mxu0 0.0
  %4995 = vmatpush1.msra.mxu0 0.0
  %4996 = vmatprep.subr.mxu0 0.0
  %4997 = vmatpush1.msra.mxu0 0.0
  %4998 = vmatprep.subr.mxu0 0.0
  %4999 = vmatpush1.msra.mxu0 0.0
  %5000 = vmatprep.subr.mxu0 0.0
  %5001 = vmatpush1.msra.mxu0 0.0
  %5002 = vmatprep.subr.mxu0 0.0
  %5003 = vmatpush1.msra.mxu0 0.0
  %5004 = vmatprep.subr.mxu0 0.0
  %5005 = vmatpush1.msra.mxu0 0.0
  %5006 = vmatprep.subr.mxu0 0.0
  %5007 = vmatpush1.msra.mxu0 0.0
  %5008 = vmatprep.subr.mxu0 0.0
  %5009 = vmatpush1.msra.mxu0 0.0
  %5010 = vmatprep.subr.mxu0 0.0
  %5011 = vmatpush1.msra.mxu0 0.0
  %5012 = vmatprep.subr.mxu0 0.0
  %5013 = vmatpush1.msra.mxu0 0.0
  %5014 = vmatprep.subr.mxu0 0.0
  %5015 = vmatpush1.msra.mxu0 0.0
  %5016 = vmatprep.subr.mxu0 0.0
  %5017 = vmatpush1.msra.mxu0 0.0
  %5018 = vmatprep.subr.mxu0 0.0
  %5019 = vmatpush1.msra.mxu0 0.0
  %5020 = vmatprep.subr.mxu0 0.0
  %5021 = vmatpush1.msra.mxu0 0.0
  %5022 = vmatprep.subr.mxu0 0.0
  %5023 = vmatpush1.msra.mxu0 0.0
  %5024 = vmatprep.subr.mxu0 0.0
  %5025 = vmatpush1.msra.mxu0 0.0
  %5026 = vmatprep.subr.mxu0 0.0
  %5027 = vmatpush1.msra.mxu0 0.0
  %5028 = vmatprep.subr.mxu0 0.0
  %5029 = vmatpush1.msra.mxu0 0.0
  %5030 = vmatprep.subr.mxu0 0.0
  %5031 = vmatpush1.msra.mxu0 0.0
  %5032 = vmatprep.subr.mxu0 0.0
  %5033 = vmatpush1.msra.mxu0 0.0
  %5034 = vmatprep.subr.mxu0 0.0
  %5035 = vmatpush1.msra.mxu0 0.0
  %5036 = vmatprep.subr.mxu0 0.0
  %5037 = vmatpush1.msra.mxu0 0.0
  %5038 = vmatprep.subr.mxu0 0.0
  %5039 = vmatpush1.msra.mxu0 0.0
  %5040 = vmatprep.subr.mxu0 0.0
  %5041 = vmatpush1.msra.mxu0 0.0
  %5042 = vmatprep.subr.mxu0 0.0
  %5043 = vmatpush1.msra.mxu0 0.0
  %5044 = vmatprep.subr.mxu0 0.0
  %5045 = vmatpush1.msra.mxu0 0.0
  %5046 = vmatprep.subr.mxu0 0.0
  %5047 = vmatpush1.msra.mxu0 0.0
  %5048 = vmatprep.mubr.f32.mxu0 0.0
  %5049 = vmatmul.mubr.f32.gmra.mrb[0].mxu0 %v4979
  %v5050 = vpop.f32.mrb[0].mxu0
  %v5051 = vadd.f32 0.0, %v5050
  %v5052 = vpop.f32.mrb[0].mxu0
  %5053 = vmatprep.mubr.f32.mxu0 0.0
  %5054 = vmatmul.mubr.f32.gmra.mrb[0].mxu0 %v4982
  %v5055 = vpop.f32.mrb[0].mxu0
  %v5056 = vadd.f32 0.0, %v5055
  %v5057 = vpop.f32.mrb[0].mxu0
  %5058 = vdwg.mxu0
  %5059 = vmatprep.subr.mxu0 0.0
  %5060 = vmatpush1.msra.mxu0 %v4744
  %5061 = vmatprep.subr.mxu0 0.0
  %5062 = vmatpush1.msra.mxu0 %v4745
  %5063 = vmatprep.subr.mxu0 0.0
  %5064 = vmatpush1.msra.mxu0 0.0
  %5065 = vmatprep.subr.mxu0 0.0
  %5066 = vmatpush1.msra.mxu0 0.0
  %5067 = vmatprep.subr.mxu0 0.0
  %5068 = vmatpush1.msra.mxu0 0.0
  %5069 = vmatprep.subr.mxu0 0.0
  %5070 = vmatpush1.msra.mxu0 0.0
  %5071 = vmatprep.subr.mxu0 0.0
  %5072 = vmatpush1.msra.mxu0 0.0
  %5073 = vmatprep.subr.mxu0 0.0
  %5074 = vmatpush1.msra.mxu0 0.0
  %5075 = vmatprep.subr.mxu0 0.0
  %5076 = vmatpush1.msra.mxu0 0.0
  %5077 = vmatprep.subr.mxu0 0.0
  %5078 = vmatpush1.msra.mxu0 0.0
  %5079 = vmatprep.subr.mxu0 0.0
  %5080 = vmatpush1.msra.mxu0 0.0
  %5081 = vmatprep.subr.mxu0 0.0
  %5082 = vmatpush1.msra.mxu0 0.0
  %5083 = vmatprep.subr.mxu0 0.0
  %5084 = vmatpush1.msra.mxu0 0.0
  %5085 = vmatprep.subr.mxu0 0.0
  %5086 = vmatpush1.msra.mxu0 0.0
  %5087 = vmatprep.subr.mxu0 0.0
  %5088 = vmatpush1.msra.mxu0 0.0
  %5089 = vmatprep.subr.mxu0 0.0
  %5090 = vmatpush1.msra.mxu0 0.0
  %5091 = vmatprep.subr.mxu0 0.0
  %5092 = vmatpush1.msra.mxu0 0.0
  %5093 = vmatprep.subr.mxu0 0.0
  %5094 = vmatpush1.msra.mxu0 0.0
  %5095 = vmatprep.subr.mxu0 0.0
  %5096 = vmatpush1.msra.mxu0 0.0
  %5097 = vmatprep.subr.mxu0 0.0
  %5098 = vmatpush1.msra.mxu0 0.0
  %5099 = vmatprep.subr.mxu0 0.0
  %5100 = vmatpush1.msra.mxu0 0.0
  %5101 = vmatprep.subr.mxu0 0.0
  %5102 = vmatpush1.msra.mxu0 0.0
  %5103 = vmatprep.subr.mxu0 0.0
  %5104 = vmatpush1.msra.mxu0 0.0
  %5105 = vmatprep.subr.mxu0 0.0
  %5106 = vmatpush1.msra.mxu0 0.0
  %5107 = vmatprep.subr.mxu0 0.0
  %5108 = vmatpush1.msra.mxu0 0.0
  %5109 = vmatprep.subr.mxu0 0.0
  %5110 = vmatpush1.msra.mxu0 0.0
  %5111 = vmatprep.subr.mxu0 0.0
  %5112 = vmatpush1.msra.mxu0 0.0
  %5113 = vmatprep.subr.mxu0 0.0
  %5114 = vmatpush1.msra.mxu0 0.0
  %5115 = vmatprep.subr.mxu0 0.0
  %5116 = vmatpush1.msra.mxu0 0.0
  %5117 = vmatprep.subr.mxu0 0.0
  %5118 = vmatpush1.msra.mxu0 0.0
  %5119 = vmatprep.subr.mxu0 0.0
  %5120 = vmatpush1.msra.mxu0 0.0
  %5121 = vmatprep.subr.mxu0 0.0
  %5122 = vmatpush1.msra.mxu0 0.0
  %5123 = vmatprep.mubr.f32.mxu0 0.0
  %5124 = vmatmul.mubr.f32.gmra.mrb[0].mxu0 %v4979
  %v5125 = vpop.f32.mrb[0].mxu0
  %v5126 = vadd.f32 0.0, %v5125
  %v5127 = vpop.f32.mrb[0].mxu0
  %5128 = vmatprep.mubr.f32.mxu0 0.0
  %5129 = vmatmul.mubr.f32.gmra.mrb[0].mxu0 %v4982
  %v5130 = vpop.f32.mrb[0].mxu0
  %v5131 = vadd.f32 0.0, %v5130
  %v5132 = vpop.f32.mrb[0].mxu0
  %5133 = vdwg.mxu0
  %5134 = vmatprep.subr.mxu0 0.0
  %5135 = vmatpush1.msra.mxu0 %v4748
  %5136 = vmatprep.subr.mxu0 0.0
  %5137 = vmatpush1.msra.mxu0 %v4749
  %5138 = vmatprep.subr.mxu0 0.0
  %5139 = vmatpush1.msra.mxu0 0.0
  %5140 = vmatprep.subr.mxu0 0.0
  %5141 = vmatpush1.msra.mxu0 0.0
  %5142 = vmatprep.subr.mxu0 0.0
  %5143 = vmatpush1.msra.mxu0 0.0
  %5144 = vmatprep.subr.mxu0 0.0
  %5145 = vmatpush1.msra.mxu0 0.0
  %5146 = vmatprep.subr.mxu0 0.0
  %5147 = vmatpush1.msra.mxu0 0.0
  %5148 = vmatprep.subr.mxu0 0.0
  %5149 = vmatpush1.msra.mxu0 0.0
  %5150 = vmatprep.subr.mxu0 0.0
  %5151 = vmatpush1.msra.mxu0 0.0
  %5152 = vmatprep.subr.mxu0 0.0
  %5153 = vmatpush1.msra.mxu0 0.0
  %5154 = vmatprep.subr.mxu0 0.0
  %5155 = vmatpush1.msra.mxu0 0.0
  %5156 = vmatprep.subr.mxu0 0.0
  %5157 = vmatpush1.msra.mxu0 0.0
  %5158 = vmatprep.subr.mxu0 0.0
  %5159 = vmatpush1.msra.mxu0 0.0
  %5160 = vmatprep.subr.mxu0 0.0
  %5161 = vmatpush1.msra.mxu0 0.0
  %5162 = vmatprep.subr.mxu0 0.0
  %5163 = vmatpush1.msra.mxu0 0.0
  %5164 = vmatprep.subr.mxu0 0.0
  %5165 = vmatpush1.msra.mxu0 0.0
  %5166 = vmatprep.subr.mxu0 0.0
  %5167 = vmatpush1.msra.mxu0 0.0
  %5168 = vmatprep.subr.mxu0 0.0
  %5169 = vmatpush1.msra.mxu0 0.0
  %5170 = vmatprep.subr.mxu0 0.0
  %5171 = vmatpush1.msra.mxu0 0.0
  %5172 = vmatprep.subr.mxu0 0.0
  %5173 = vmatpush1.msra.mxu0 0.0
  %5174 = vmatprep.subr.mxu0 0.0
  %5175 = vmatpush1.msra.mxu0 0.0
  %5176 = vmatprep.subr.mxu0 0.0
  %5177 = vmatpush1.msra.mxu0 0.0
  %5178 = vmatprep.subr.mxu0 0.0
  %5179 = vmatpush1.msra.mxu0 0.0
  %5180 = vmatprep.subr.mxu0 0.0
  %5181 = vmatpush1.msra.mxu0 0.0
  %5182 = vmatprep.subr.mxu0 0.0
  %5183 = vmatpush1.msra.mxu0 0.0
  %5184 = vmatprep.subr.mxu0 0.0
  %5185 = vmatpush1.msra.mxu0 0.0
  %5186 = vmatprep.subr.mxu0 0.0
  %5187 = vmatpush1.msra.mxu0 0.0
  %5188 = vmatprep.subr.mxu0 0.0
  %5189 = vmatpush1.msra.mxu0 0.0
  %5190 = vmatprep.subr.mxu0 0.0
  %5191 = vmatpush1.msra.mxu0 0.0
  %5192 = vmatprep.subr.mxu0 0.0
  %5193 = vmatpush1.msra.mxu0 0.0
  %5194 = vmatprep.subr.mxu0 0.0
  %5195 = vmatpush1.msra.mxu0 0.0
  %5196 = vmatprep.subr.mxu0 0.0
  %5197 = vmatpush1.msra.mxu0 0.0
  %5198 = vmatprep.mubr.f32.mxu0 0.0
  %5199 = vmatmul.mubr.f32.gmra.mrb[0].mxu0 %v4979
  %v5200 = vpop.f32.mrb[0].mxu0
  %v5201 = vadd.f32 0.0, %v5200
  %v5202 = vpop.f32.mrb[0].mxu0
  %5203 = vmatprep.mubr.f32.mxu0 0.0
  %5204 = vmatmul.mubr.f32.gmra.mrb[0].mxu0 %v4982
  %v5205 = vpop.f32.mrb[0].mxu0
  %v5206 = vadd.f32 0.0, %v5205
  %v5207 = vpop.f32.mrb[0].mxu0
  %5208 = vdwg.mxu0
  %s5209 = scalar_lea.vmem %s5, 16
  %v5210 = vld [vmem:[%s5209] sm:$0xff]
  %v5211 = vld [vmem:[%s5209 + $0x8] sm:$0xff]
  %v5213 = vsel %vm1629, %v5210, 0
  %v5216 = vsel %vm1629, %v5211, 0
  %5218 = vmatprep.subr.mxu0 0.0
  %5219 = vmatpush1.msra.mxu0 %v5051
  %5220 = vmatprep.subr.mxu0 0.0
  %5221 = vmatpush1.msra.mxu0 %v5056
  %5222 = vmatprep.subr.mxu0 0.0
  %5223 = vmatpush1.msra.mxu0 0.0
  %5224 = vmatprep.subr.mxu0 0.0
  %5225 = vmatpush1.msra.mxu0 0.0
  %5226 = vmatprep.subr.mxu0 0.0
  %5227 = vmatpush1.msra.mxu0 0.0
  %5228 = vmatprep.subr.mxu0 0.0
  %5229 = vmatpush1.msra.mxu0 0.0
  %5230 = vmatprep.subr.mxu0 0.0
  %5231 = vmatpush1.msra.mxu0 0.0
  %5232 = vmatprep.subr.mxu0 0.0
  %5233 = vmatpush1.msra.mxu0 0.0
  %5234 = vmatprep.subr.mxu0 0.0
  %5235 = vmatpush1.msra.mxu0 0.0
  %5236 = vmatprep.subr.mxu0 0.0
  %5237 = vmatpush1.msra.mxu0 0.0
  %5238 = vmatprep.subr.mxu0 0.0
  %5239 = vmatpush1.msra.mxu0 0.0
  %5240 = vmatprep.subr.mxu0 0.0
  %5241 = vmatpush1.msra.mxu0 0.0
  %5242 = vmatprep.subr.mxu0 0.0
  %5243 = vmatpush1.msra.mxu0 0.0
  %5244 = vmatprep.subr.mxu0 0.0
  %5245 = vmatpush1.msra.mxu0 0.0
  %5246 = vmatprep.subr.mxu0 0.0
  %5247 = vmatpush1.msra.mxu0 0.0
  %5248 = vmatprep.subr.mxu0 0.0
  %5249 = vmatpush1.msra.mxu0 0.0
  %5250 = vmatprep.subr.mxu0 0.0
  %5251 = vmatpush1.msra.mxu0 0.0
  %5252 = vmatprep.subr.mxu0 0.0
  %5253 = vmatpush1.msra.mxu0 0.0
  %5254 = vmatprep.subr.mxu0 0.0
  %5255 = vmatpush1.msra.mxu0 0.0
  %5256 = vmatprep.subr.mxu0 0.0
  %5257 = vmatpush1.msra.mxu0 0.0
  %5258 = vmatprep.subr.mxu0 0.0
  %5259 = vmatpush1.msra.mxu0 0.0
  %5260 = vmatprep.subr.mxu0 0.0
  %5261 = vmatpush1.msra.mxu0 0.0
  %5262 = vmatprep.subr.mxu0 0.0
  %5263 = vmatpush1.msra.mxu0 0.0
  %5264 = vmatprep.subr.mxu0 0.0
  %5265 = vmatpush1.msra.mxu0 0.0
  %5266 = vmatprep.subr.mxu0 0.0
  %5267 = vmatpush1.msra.mxu0 0.0
  %5268 = vmatprep.subr.mxu0 0.0
  %5269 = vmatpush1.msra.mxu0 0.0
  %5270 = vmatprep.subr.mxu0 0.0
  %5271 = vmatpush1.msra.mxu0 0.0
  %5272 = vmatprep.subr.mxu0 0.0
  %5273 = vmatpush1.msra.mxu0 0.0
  %5274 = vmatprep.subr.mxu0 0.0
  %5275 = vmatpush1.msra.mxu0 0.0
  %5276 = vmatprep.subr.mxu0 0.0
  %5277 = vmatpush1.msra.mxu0 0.0
  %5278 = vmatprep.subr.mxu0 0.0
  %5279 = vmatpush1.msra.mxu0 0.0
  %5280 = vmatprep.subr.mxu0 0.0
  %5281 = vmatpush1.msra.mxu0 0.0
  %5282 = vmatprep.mubr.f32.mxu0 0.0
  %5283 = vmatmul.mubr.f32.gmra.mrb[0].mxu0 %v5213
  %v5284 = vpop.f32.mrb[0].mxu0
  %v5285 = vadd.f32 0.0, %v5284
  %v5286 = vpop.f32.mrb[0].mxu0
  %5287 = vmatprep.mubr.f32.mxu0 0.0
  %5288 = vmatmul.mubr.f32.gmra.mrb[0].mxu0 %v5216
  %v5289 = vpop.f32.mrb[0].mxu0
  %v5290 = vadd.f32 0.0, %v5289
  %v5291 = vpop.f32.mrb[0].mxu0
  %5292 = vdwg.mxu0
  %5293 = vmatprep.subr.mxu0 0.0
  %5294 = vmatpush1.msra.mxu0 %v5126
  %5295 = vmatprep.subr.mxu0 0.0
  %5296 = vmatpush1.msra.mxu0 %v5131
  %5297 = vmatprep.subr.mxu0 0.0
  %5298 = vmatpush1.msra.mxu0 0.0
  %5299 = vmatprep.subr.mxu0 0.0
  %5300 = vmatpush1.msra.mxu0 0.0
  %5301 = vmatprep.subr.mxu0 0.0
  %5302 = vmatpush1.msra.mxu0 0.0
  %5303 = vmatprep.subr.mxu0 0.0
  %5304 = vmatpush1.msra.mxu0 0.0
  %5305 = vmatprep.subr.mxu0 0.0
  %5306 = vmatpush1.msra.mxu0 0.0
  %5307 = vmatprep.subr.mxu0 0.0
  %5308 = vmatpush1.msra.mxu0 0.0
  %5309 = vmatprep.subr.mxu0 0.0
  %5310 = vmatpush1.msra.mxu0 0.0
  %5311 = vmatprep.subr.mxu0 0.0
  %5312 = vmatpush1.msra.mxu0 0.0
  %5313 = vmatprep.subr.mxu0 0.0
  %5314 = vmatpush1.msra.mxu0 0.0
  %5315 = vmatprep.subr.mxu0 0.0
  %5316 = vmatpush1.msra.mxu0 0.0
  %5317 = vmatprep.subr.mxu0 0.0
  %5318 = vmatpush1.msra.mxu0 0.0
  %5319 = vmatprep.subr.mxu0 0.0
  %5320 = vmatpush1.msra.mxu0 0.0
  %5321 = vmatprep.subr.mxu0 0.0
  %5322 = vmatpush1.msra.mxu0 0.0
  %5323 = vmatprep.subr.mxu0 0.0
  %5324 = vmatpush1.msra.mxu0 0.0
  %5325 = vmatprep.subr.mxu0 0.0
  %5326 = vmatpush1.msra.mxu0 0.0
  %5327 = vmatprep.subr.mxu0 0.0
  %5328 = vmatpush1.msra.mxu0 0.0
  %5329 = vmatprep.subr.mxu0 0.0
  %5330 = vmatpush1.msra.mxu0 0.0
  %5331 = vmatprep.subr.mxu0 0.0
  %5332 = vmatpush1.msra.mxu0 0.0
  %5333 = vmatprep.subr.mxu0 0.0
  %5334 = vmatpush1.msra.mxu0 0.0
  %5335 = vmatprep.subr.mxu0 0.0
  %5336 = vmatpush1.msra.mxu0 0.0
  %5337 = vmatprep.subr.mxu0 0.0
  %5338 = vmatpush1.msra.mxu0 0.0
  %5339 = vmatprep.subr.mxu0 0.0
  %5340 = vmatpush1.msra.mxu0 0.0
  %5341 = vmatprep.subr.mxu0 0.0
  %5342 = vmatpush1.msra.mxu0 0.0
  %5343 = vmatprep.subr.mxu0 0.0
  %5344 = vmatpush1.msra.mxu0 0.0
  %5345 = vmatprep.subr.mxu0 0.0
  %5346 = vmatpush1.msra.mxu0 0.0
  %5347 = vmatprep.subr.mxu0 0.0
  %5348 = vmatpush1.msra.mxu0 0.0
  %5349 = vmatprep.subr.mxu0 0.0
  %5350 = vmatpush1.msra.mxu0 0.0
  %5351 = vmatprep.subr.mxu0 0.0
  %5352 = vmatpush1.msra.mxu0 0.0
  %5353 = vmatprep.subr.mxu0 0.0
  %5354 = vmatpush1.msra.mxu0 0.0
  %5355 = vmatprep.subr.mxu0 0.0
  %5356 = vmatpush1.msra.mxu0 0.0
  %5357 = vmatprep.mubr.f32.mxu0 0.0
  %5358 = vmatmul.mubr.f32.gmra.mrb[0].mxu0 %v5213
  %v5359 = vpop.f32.mrb[0].mxu0
  %v5360 = vadd.f32 0.0, %v5359
  %v5361 = vpop.f32.mrb[0].mxu0
  %5362 = vmatprep.mubr.f32.mxu0 0.0
  %5363 = vmatmul.mubr.f32.gmra.mrb[0].mxu0 %v5216
  %v5364 = vpop.f32.mrb[0].mxu0
  %v5365 = vadd.f32 0.0, %v5364
  %v5366 = vpop.f32.mrb[0].mxu0
  %5367 = vdwg.mxu0
  %5368 = vmatprep.subr.mxu0 0.0
  %5369 = vmatpush1.msra.mxu0 %v5201
  %5370 = vmatprep.subr.mxu0 0.0
  %5371 = vmatpush1.msra.mxu0 %v5206
  %5372 = vmatprep.subr.mxu0 0.0
  %5373 = vmatpush1.msra.mxu0 0.0
  %5374 = vmatprep.subr.mxu0 0.0
  %5375 = vmatpush1.msra.mxu0 0.0
  %5376 = vmatprep.subr.mxu0 0.0
  %5377 = vmatpush1.msra.mxu0 0.0
  %5378 = vmatprep.subr.mxu0 0.0
  %5379 = vmatpush1.msra.mxu0 0.0
  %5380 = vmatprep.subr.mxu0 0.0
  %5381 = vmatpush1.msra.mxu0 0.0
  %5382 = vmatprep.subr.mxu0 0.0
  %5383 = vmatpush1.msra.mxu0 0.0
  %5384 = vmatprep.subr.mxu0 0.0
  %5385 = vmatpush1.msra.mxu0 0.0
  %5386 = vmatprep.subr.mxu0 0.0
  %5387 = vmatpush1.msra.mxu0 0.0
  %5388 = vmatprep.subr.mxu0 0.0
  %5389 = vmatpush1.msra.mxu0 0.0
  %5390 = vmatprep.subr.mxu0 0.0
  %5391 = vmatpush1.msra.mxu0 0.0
  %5392 = vmatprep.subr.mxu0 0.0
  %5393 = vmatpush1.msra.mxu0 0.0
  %5394 = vmatprep.subr.mxu0 0.0
  %5395 = vmatpush1.msra.mxu0 0.0
  %5396 = vmatprep.subr.mxu0 0.0
  %5397 = vmatpush1.msra.mxu0 0.0
  %5398 = vmatprep.subr.mxu0 0.0
  %5399 = vmatpush1.msra.mxu0 0.0
  %5400 = vmatprep.subr.mxu0 0.0
  %5401 = vmatpush1.msra.mxu0 0.0
  %5402 = vmatprep.subr.mxu0 0.0
  %5403 = vmatpush1.msra.mxu0 0.0
  %5404 = vmatprep.subr.mxu0 0.0
  %5405 = vmatpush1.msra.mxu0 0.0
  %5406 = vmatprep.subr.mxu0 0.0
  %5407 = vmatpush1.msra.mxu0 0.0
  %5408 = vmatprep.subr.mxu0 0.0
  %5409 = vmatpush1.msra.mxu0 0.0
  %5410 = vmatprep.subr.mxu0 0.0
  %5411 = vmatpush1.msra.mxu0 0.0
  %5412 = vmatprep.subr.mxu0 0.0
  %5413 = vmatpush1.msra.mxu0 0.0
  %5414 = vmatprep.subr.mxu0 0.0
  %5415 = vmatpush1.msra.mxu0 0.0
  %5416 = vmatprep.subr.mxu0 0.0
  %5417 = vmatpush1.msra.mxu0 0.0
  %5418 = vmatprep.subr.mxu0 0.0
  %5419 = vmatpush1.msra.mxu0 0.0
  %5420 = vmatprep.subr.mxu0 0.0
  %5421 = vmatpush1.msra.mxu0 0.0
  %5422 = vmatprep.subr.mxu0 0.0
  %5423 = vmatpush1.msra.mxu0 0.0
  %5424 = vmatprep.subr.mxu0 0.0
  %5425 = vmatpush1.msra.mxu0 0.0
  %5426 = vmatprep.subr.mxu0 0.0
  %5427 = vmatpush1.msra.mxu0 0.0
  %5428 = vmatprep.subr.mxu0 0.0
  %5429 = vmatpush1.msra.mxu0 0.0
  %5430 = vmatprep.subr.mxu0 0.0
  %5431 = vmatpush1.msra.mxu0 0.0
  %5432 = vmatprep.mubr.f32.mxu0 0.0
  %5433 = vmatmul.mubr.f32.gmra.mrb[0].mxu0 %v5213
  %v5434 = vpop.f32.mrb[0].mxu0
  %v5435 = vadd.f32 0.0, %v5434
  %v5436 = vpop.f32.mrb[0].mxu0
  %5437 = vmatprep.mubr.f32.mxu0 0.0
  %5438 = vmatmul.mubr.f32.gmra.mrb[0].mxu0 %v5216
  %v5439 = vpop.f32.mrb[0].mxu0
  %v5440 = vadd.f32 0.0, %v5439
  %v5441 = vpop.f32.mrb[0].mxu0
  %5442 = vdwg.mxu0
  %v5443 = vmul.f32 %v5285, %v5285
  %v5444 = vmul.f32 %v5290, %v5290
  %v5445 = vmul.f32 %v5360, %v5360
  %v5446 = vmul.f32 %v5365, %v5365
  %v5447 = vadd.f32 %v5443, %v5445
  %v5448 = vadd.f32 %v5444, %v5446
  %v5449 = vmul.f32 %v5435, %v5435
  %v5450 = vmul.f32 %v5440, %v5440
  %v5451 = vadd.f32 %v5447, %v5449
  %v5452 = vadd.f32 %v5448, %v5450
  %v5453 = vmax.f32 %v5451, 1e-24
  %v5454 = vmax.f32 %v5452, 1e-24
  %v5455 = vrsqrt.pop %v5453
  %v5456 = vrsqrt.pop %v5454
  %v5457 = vmul.f32 %v5285, %v5455
  %v5458 = vmul.f32 %v5290, %v5456
  %v5459 = vmul.f32 %v5360, %v5455
  %v5460 = vmul.f32 %v5365, %v5456
  %v5461 = vmul.f32 %v5435, %v5455
  %v5462 = vmul.f32 %v5440, %v5456
  %v5463 = vmul.f32 %v5051, %v5457
  %v5464 = vmul.f32 %v5056, %v5458
  %v5465 = vmul.f32 %v5126, %v5459
  %v5466 = vmul.f32 %v5131, %v5460
  %v5467 = vadd.f32 %v5463, %v5465
  %v5468 = vadd.f32 %v5464, %v5466
  %v5469 = vmul.f32 %v5201, %v5461
  %v5470 = vmul.f32 %v5206, %v5462
  %v5471 = vadd.f32 %v5467, %v5469
  %v5472 = vadd.f32 %v5468, %v5470
  %vm5473 = vcmp.ge.f32.partialorder %v5471, 0.0
  %vm5474 = vcmp.ge.f32.partialorder %v5472, 0.0
  %v5475 = vmul.f32 %v5471, 0.2
  %v5476 = vmul.f32 %v5472, 0.2
  %v5477 = vsel %vm5473, %v5471, %v5475
  %v5478 = vsel %vm5474, %v5472, %v5476
  %v5479 = vsub.f32 %v5477, %v5471
  %v5480 = vsub.f32 %v5478, %v5472
  %v5481 = vmul.f32 %v5479, %v5457
  %v5482 = vmul.f32 %v5480, %v5458
  %v5483 = vadd.f32 %v5051, %v5481
  %v5484 = vadd.f32 %v5056, %v5482
  %v5485 = vmul.f32 %v5479, %v5459
  %v5486 = vmul.f32 %v5480, %v5460
  %v5487 = vadd.f32 %v5126, %v5485
  %v5488 = vadd.f32 %v5131, %v5486
  %v5489 = vmul.f32 %v5479, %v5461
  %v5490 = vmul.f32 %v5480, %v5462
  %v5491 = vadd.f32 %v5201, %v5489
  %v5492 = vadd.f32 %v5206, %v5490
  %s5493 = scalar_lea.vmem %s6, 16
  %v5494 = vld [vmem:[%s5493] sm:$0xff]
  %v5495 = vld [vmem:[%s5493 + $0x8] sm:$0xff]
  %5496 = vmatprep.subr.mxu0 0.0
  %5497 = vmatpush1.msra.mxu0 %v106
  %5498 = vmatprep.subr.mxu0 0.0
  %5499 = vmatpush1.msra.mxu0 %v107
  %5500 = vmatprep.subr.mxu0 0.0
  %5501 = vmatpush1.msra.mxu0 %v108
  %5502 = vmatprep.subr.mxu0 0.0
  %5503 = vmatpush1.msra.mxu0 %v109
  %5504 = vmatprep.subr.mxu0 0.0
  %5505 = vmatpush1.msra.mxu0 %v110
  %5506 = vmatprep.subr.mxu0 0.0
  %5507 = vmatpush1.msra.mxu0 %v111
  %5508 = vmatprep.subr.mxu0 0.0
  %5509 = vmatpush1.msra.mxu0 %v112
  %5510 = vmatprep.subr.mxu0 0.0
  %5511 = vmatpush1.msra.mxu0 %v113
  %5512 = vmatprep.subr.mxu0 0.0
  %5513 = vmatpush1.msra.mxu0 %v114
  %5514 = vmatprep.subr.mxu0 0.0
  %5515 = vmatpush1.msra.mxu0 %v115
  %5516 = vmatprep.subr.mxu0 0.0
  %5517 = vmatpush1.msra.mxu0 %v116
  %5518 = vmatprep.subr.mxu0 0.0
  %5519 = vmatpush1.msra.mxu0 %v117
  %5520 = vmatprep.subr.mxu0 0.0
  %5521 = vmatpush1.msra.mxu0 %v118
  %5522 = vmatprep.subr.mxu0 0.0
  %5523 = vmatpush1.msra.mxu0 %v119
  %5524 = vmatprep.subr.mxu0 0.0
  %5525 = vmatpush1.msra.mxu0 %v120
  %5526 = vmatprep.subr.mxu0 0.0
  %5527 = vmatpush1.msra.mxu0 %v121
  %5528 = vmatprep.subr.mxu0 0.0
  %5529 = vmatpush1.msra.mxu0 0.0
  %5530 = vmatprep.subr.mxu0 0.0
  %5531 = vmatpush1.msra.mxu0 0.0
  %5532 = vmatprep.subr.mxu0 0.0
  %5533 = vmatpush1.msra.mxu0 0.0
  %5534 = vmatprep.subr.mxu0 0.0
  %5535 = vmatpush1.msra.mxu0 0.0
  %5536 = vmatprep.subr.mxu0 0.0
  %5537 = vmatpush1.msra.mxu0 0.0
  %5538 = vmatprep.subr.mxu0 0.0
  %5539 = vmatpush1.msra.mxu0 0.0
  %5540 = vmatprep.subr.mxu0 0.0
  %5541 = vmatpush1.msra.mxu0 0.0
  %5542 = vmatprep.subr.mxu0 0.0
  %5543 = vmatpush1.msra.mxu0 0.0
  %5544 = vmatprep.subr.mxu0 0.0
  %5545 = vmatpush1.msra.mxu0 0.0
  %5546 = vmatprep.subr.mxu0 0.0
  %5547 = vmatpush1.msra.mxu0 0.0
  %5548 = vmatprep.subr.mxu0 0.0
  %5549 = vmatpush1.msra.mxu0 0.0
  %5550 = vmatprep.subr.mxu0 0.0
  %5551 = vmatpush1.msra.mxu0 0.0
  %5552 = vmatprep.subr.mxu0 0.0
  %5553 = vmatpush1.msra.mxu0 0.0
  %5554 = vmatprep.subr.mxu0 0.0
  %5555 = vmatpush1.msra.mxu0 0.0
  %5556 = vmatprep.subr.mxu0 0.0
  %5557 = vmatpush1.msra.mxu0 0.0
  %5558 = vmatprep.subr.mxu0 0.0
  %5559 = vmatpush1.msra.mxu0 0.0
  %5560 = vmatprep.mubr.f32.mxu0 0.0
  %5561 = vmatmul.mubr.f32.gmra.mrb[0].mxu0 %v5483
  %v5562 = vpop.f32.mrb[0].mxu0
  %v5563 = vadd.f32 0.0, %v5562
  %v5564 = vpop.f32.mrb[0].mxu0
  %5565 = vmatprep.mubr.f32.mxu0 0.0
  %5566 = vmatmul.mubr.f32.gmra.mrb[0].mxu0 %v5484
  %v5567 = vpop.f32.mrb[0].mxu0
  %v5568 = vadd.f32 0.0, %v5567
  %v5569 = vpop.f32.mrb[0].mxu0
  %5570 = vdwg.mxu0
  %5573 = vrot.lane.b32.xlu0 %v5494, 112
  %v5574 = vpop.permute.xlu0 %5573
  %5575 = vrot.lane.b32.xlu0 %v5495, 112
  %v5576 = vpop.permute.xlu0 %5575
  %v5577 = vsel %vm1629, %v5574, 0
  %v5579 = vsel %vm1629, %v5576, 0
  %5581 = vmatprep.subr.mxu0 0.0
  %5582 = vmatpush1.msra.mxu0 %v5563
  %5583 = vmatprep.subr.mxu0 0.0
  %5584 = vmatpush1.msra.mxu0 %v5568
  %5585 = vmatprep.subr.mxu0 0.0
  %5586 = vmatpush1.msra.mxu0 0.0
  %5587 = vmatprep.subr.mxu0 0.0
  %5588 = vmatpush1.msra.mxu0 0.0
  %5589 = vmatprep.subr.mxu0 0.0
  %5590 = vmatpush1.msra.mxu0 0.0
  %5591 = vmatprep.subr.mxu0 0.0
  %5592 = vmatpush1.msra.mxu0 0.0
  %5593 = vmatprep.subr.mxu0 0.0
  %5594 = vmatpush1.msra.mxu0 0.0
  %5595 = vmatprep.subr.mxu0 0.0
  %5596 = vmatpush1.msra.mxu0 0.0
  %5597 = vmatprep.subr.mxu0 0.0
  %5598 = vmatpush1.msra.mxu0 0.0
  %5599 = vmatprep.subr.mxu0 0.0
  %5600 = vmatpush1.msra.mxu0 0.0
  %5601 = vmatprep.subr.mxu0 0.0
  %5602 = vmatpush1.msra.mxu0 0.0
  %5603 = vmatprep.subr.mxu0 0.0
  %5604 = vmatpush1.msra.mxu0 0.0
  %5605 = vmatprep.subr.mxu0 0.0
  %5606 = vmatpush1.msra.mxu0 0.0
  %5607 = vmatprep.subr.mxu0 0.0
  %5608 = vmatpush1.msra.mxu0 0.0
  %5609 = vmatprep.subr.mxu0 0.0
  %5610 = vmatpush1.msra.mxu0 0.0
  %5611 = vmatprep.subr.mxu0 0.0
  %5612 = vmatpush1.msra.mxu0 0.0
  %5613 = vmatprep.subr.mxu0 0.0
  %5614 = vmatpush1.msra.mxu0 0.0
  %5615 = vmatprep.subr.mxu0 0.0
  %5616 = vmatpush1.msra.mxu0 0.0
  %5617 = vmatprep.subr.mxu0 0.0
  %5618 = vmatpush1.msra.mxu0 0.0
  %5619 = vmatprep.subr.mxu0 0.0
  %5620 = vmatpush1.msra.mxu0 0.0
  %5621 = vmatprep.subr.mxu0 0.0
  %5622 = vmatpush1.msra.mxu0 0.0
  %5623 = vmatprep.subr.mxu0 0.0
  %5624 = vmatpush1.msra.mxu0 0.0
  %5625 = vmatprep.subr.mxu0 0.0
  %5626 = vmatpush1.msra.mxu0 0.0
  %5627 = vmatprep.subr.mxu0 0.0
  %5628 = vmatpush1.msra.mxu0 0.0
  %5629 = vmatprep.subr.mxu0 0.0
  %5630 = vmatpush1.msra.mxu0 0.0
  %5631 = vmatprep.subr.mxu0 0.0
  %5632 = vmatpush1.msra.mxu0 0.0
  %5633 = vmatprep.subr.mxu0 0.0
  %5634 = vmatpush1.msra.mxu0 0.0
  %5635 = vmatprep.subr.mxu0 0.0
  %5636 = vmatpush1.msra.mxu0 0.0
  %5637 = vmatprep.subr.mxu0 0.0
  %5638 = vmatpush1.msra.mxu0 0.0
  %5639 = vmatprep.subr.mxu0 0.0
  %5640 = vmatpush1.msra.mxu0 0.0
  %5641 = vmatprep.subr.mxu0 0.0
  %5642 = vmatpush1.msra.mxu0 0.0
  %5643 = vmatprep.subr.mxu0 0.0
  %5644 = vmatpush1.msra.mxu0 0.0
  %5645 = vmatprep.mubr.f32.mxu0 0.0
  %5646 = vmatmul.mubr.f32.gmra.mrb[0].mxu0 %v5577
  %v5647 = vpop.f32.mrb[0].mxu0
  %v5648 = vadd.f32 0.0, %v5647
  %v5649 = vpop.f32.mrb[0].mxu0
  %5650 = vmatprep.mubr.f32.mxu0 0.0
  %5651 = vmatmul.mubr.f32.gmra.mrb[0].mxu0 %v5579
  %v5652 = vpop.f32.mrb[0].mxu0
  %v5653 = vadd.f32 0.0, %v5652
  %v5654 = vpop.f32.mrb[0].mxu0
  %5655 = vdwg.mxu0
  %v5657 = vsel %vm3690, %v5648, 0
  %v5660 = vsel %vm3690, %v5653, 0
  %5662 = vmatprep.subr.mxu0 0.0
  %5663 = vmatpush1.msra.mxu0 %v3699
  %5664 = vmatprep.subr.mxu0 0.0
  %5665 = vmatpush1.msra.mxu0 0.0
  %5666 = vmatprep.subr.mxu0 0.0
  %5667 = vmatpush1.msra.mxu0 0.0
  %5668 = vmatprep.subr.mxu0 0.0
  %5669 = vmatpush1.msra.mxu0 0.0
  %5670 = vmatprep.subr.mxu0 0.0
  %5671 = vmatpush1.msra.mxu0 0.0
  %5672 = vmatprep.subr.mxu0 0.0
  %5673 = vmatpush1.msra.mxu0 0.0
  %5674 = vmatprep.subr.mxu0 0.0
  %5675 = vmatpush1.msra.mxu0 0.0
  %5676 = vmatprep.subr.mxu0 0.0
  %5677 = vmatpush1.msra.mxu0 0.0
  %5678 = vmatprep.subr.mxu0 0.0
  %5679 = vmatpush1.msra.mxu0 0.0
  %5680 = vmatprep.subr.mxu0 0.0
  %5681 = vmatpush1.msra.mxu0 0.0
  %5682 = vmatprep.subr.mxu0 0.0
  %5683 = vmatpush1.msra.mxu0 0.0
  %5684 = vmatprep.subr.mxu0 0.0
  %5685 = vmatpush1.msra.mxu0 0.0
  %5686 = vmatprep.subr.mxu0 0.0
  %5687 = vmatpush1.msra.mxu0 0.0
  %5688 = vmatprep.subr.mxu0 0.0
  %5689 = vmatpush1.msra.mxu0 0.0
  %5690 = vmatprep.subr.mxu0 0.0
  %5691 = vmatpush1.msra.mxu0 0.0
  %5692 = vmatprep.subr.mxu0 0.0
  %5693 = vmatpush1.msra.mxu0 0.0
  %5694 = vmatprep.subr.mxu0 0.0
  %5695 = vmatpush1.msra.mxu0 0.0
  %5696 = vmatprep.subr.mxu0 0.0
  %5697 = vmatpush1.msra.mxu0 0.0
  %5698 = vmatprep.subr.mxu0 0.0
  %5699 = vmatpush1.msra.mxu0 0.0
  %5700 = vmatprep.subr.mxu0 0.0
  %5701 = vmatpush1.msra.mxu0 0.0
  %5702 = vmatprep.subr.mxu0 0.0
  %5703 = vmatpush1.msra.mxu0 0.0
  %5704 = vmatprep.subr.mxu0 0.0
  %5705 = vmatpush1.msra.mxu0 0.0
  %5706 = vmatprep.subr.mxu0 0.0
  %5707 = vmatpush1.msra.mxu0 0.0
  %5708 = vmatprep.subr.mxu0 0.0
  %5709 = vmatpush1.msra.mxu0 0.0
  %5710 = vmatprep.subr.mxu0 0.0
  %5711 = vmatpush1.msra.mxu0 0.0
  %5712 = vmatprep.subr.mxu0 0.0
  %5713 = vmatpush1.msra.mxu0 0.0
  %5714 = vmatprep.subr.mxu0 0.0
  %5715 = vmatpush1.msra.mxu0 0.0
  %5716 = vmatprep.subr.mxu0 0.0
  %5717 = vmatpush1.msra.mxu0 0.0
  %5718 = vmatprep.subr.mxu0 0.0
  %5719 = vmatpush1.msra.mxu0 0.0
  %5720 = vmatprep.subr.mxu0 0.0
  %5721 = vmatpush1.msra.mxu0 0.0
  %5722 = vmatprep.subr.mxu0 0.0
  %5723 = vmatpush1.msra.mxu0 0.0
  %5724 = vmatprep.subr.mxu0 0.0
  %5725 = vmatpush1.msra.mxu0 0.0
  %5726 = vmatprep.mubr.f32.mxu0 0.0
  %5727 = vmatmul.mubr.f32.gmra.mrb[0].mxu0 %v5657
  %v5728 = vpop.f32.mrb[0].mxu0
  %v5729 = vadd.f32 0.0, %v5728
  %v5730 = vpop.f32.mrb[0].mxu0
  %5731 = vmatprep.mubr.f32.mxu0 0.0
  %5732 = vmatmul.mubr.f32.gmra.mrb[0].mxu0 %v5660
  %v5733 = vpop.f32.mrb[0].mxu0
  %v5734 = vadd.f32 0.0, %v5733
  %v5735 = vpop.f32.mrb[0].mxu0
  %5736 = vdwg.mxu0
  %v5737 = vsel %vm1629, %v5494, 0
  %v5739 = vsel %vm1629, %v5495, 0
  %5741 = vmatprep.subr.mxu0 0.0
  %5742 = vmatpush1.msra.mxu0 %v5483
  %5743 = vmatprep.subr.mxu0 0.0
  %5744 = vmatpush1.msra.mxu0 %v5484
  %5745 = vmatprep.subr.mxu0 0.0
  %5746 = vmatpush1.msra.mxu0 0.0
  %5747 = vmatprep.subr.mxu0 0.0
  %5748 = vmatpush1.msra.mxu0 0.0
  %5749 = vmatprep.subr.mxu0 0.0
  %5750 = vmatpush1.msra.mxu0 0.0
  %5751 = vmatprep.subr.mxu0 0.0
  %5752 = vmatpush1.msra.mxu0 0.0
  %5753 = vmatprep.subr.mxu0 0.0
  %5754 = vmatpush1.msra.mxu0 0.0
  %5755 = vmatprep.subr.mxu0 0.0
  %5756 = vmatpush1.msra.mxu0 0.0
  %5757 = vmatprep.subr.mxu0 0.0
  %5758 = vmatpush1.msra.mxu0 0.0
  %5759 = vmatprep.subr.mxu0 0.0
  %5760 = vmatpush1.msra.mxu0 0.0
  %5761 = vmatprep.subr.mxu0 0.0
  %5762 = vmatpush1.msra.mxu0 0.0
  %5763 = vmatprep.subr.mxu0 0.0
  %5764 = vmatpush1.msra.mxu0 0.0
  %5765 = vmatprep.subr.mxu0 0.0
  %5766 = vmatpush1.msra.mxu0 0.0
  %5767 = vmatprep.subr.mxu0 0.0
  %5768 = vmatpush1.msra.mxu0 0.0
  %5769 = vmatprep.subr.mxu0 0.0
  %5770 = vmatpush1.msra.mxu0 0.0
  %5771 = vmatprep.subr.mxu0 0.0
  %5772 = vmatpush1.msra.mxu0 0.0
  %5773 = vmatprep.subr.mxu0 0.0
  %5774 = vmatpush1.msra.mxu0 0.0
  %5775 = vmatprep.subr.mxu0 0.0
  %5776 = vmatpush1.msra.mxu0 0.0
  %5777 = vmatprep.subr.mxu0 0.0
  %5778 = vmatpush1.msra.mxu0 0.0
  %5779 = vmatprep.subr.mxu0 0.0
  %5780 = vmatpush1.msra.mxu0 0.0
  %5781 = vmatprep.subr.mxu0 0.0
  %5782 = vmatpush1.msra.mxu0 0.0
  %5783 = vmatprep.subr.mxu0 0.0
  %5784 = vmatpush1.msra.mxu0 0.0
  %5785 = vmatprep.subr.mxu0 0.0
  %5786 = vmatpush1.msra.mxu0 0.0
  %5787 = vmatprep.subr.mxu0 0.0
  %5788 = vmatpush1.msra.mxu0 0.0
  %5789 = vmatprep.subr.mxu0 0.0
  %5790 = vmatpush1.msra.mxu0 0.0
  %5791 = vmatprep.subr.mxu0 0.0
  %5792 = vmatpush1.msra.mxu0 0.0
  %5793 = vmatprep.subr.mxu0 0.0
  %5794 = vmatpush1.msra.mxu0 0.0
  %5795 = vmatprep.subr.mxu0 0.0
  %5796 = vmatpush1.msra.mxu0 0.0
  %5797 = vmatprep.subr.mxu0 0.0
  %5798 = vmatpush1.msra.mxu0 0.0
  %5799 = vmatprep.subr.mxu0 0.0
  %5800 = vmatpush1.msra.mxu0 0.0
  %5801 = vmatprep.subr.mxu0 0.0
  %5802 = vmatpush1.msra.mxu0 0.0
  %5803 = vmatprep.subr.mxu0 0.0
  %5804 = vmatpush1.msra.mxu0 0.0
  %5805 = vmatprep.mubr.f32.mxu0 0.0
  %5806 = vmatmul.mubr.f32.gmra.mrb[0].mxu0 %v5737
  %v5807 = vpop.f32.mrb[0].mxu0
  %v5808 = vadd.f32 %v5729, %v5807
  %v5809 = vpop.f32.mrb[0].mxu0
  %5810 = vmatprep.mubr.f32.mxu0 0.0
  %5811 = vmatmul.mubr.f32.gmra.mrb[0].mxu0 %v5739
  %v5812 = vpop.f32.mrb[0].mxu0
  %v5813 = vadd.f32 %v5734, %v5812
  %v5814 = vpop.f32.mrb[0].mxu0
  %5815 = vdwg.mxu0
  %5816 = vmatprep.subr.mxu0 0.0
  %5817 = vmatpush1.msra.mxu0 %v106
  %5818 = vmatprep.subr.mxu0 0.0
  %5819 = vmatpush1.msra.mxu0 %v107
  %5820 = vmatprep.subr.mxu0 0.0
  %5821 = vmatpush1.msra.mxu0 %v108
  %5822 = vmatprep.subr.mxu0 0.0
  %5823 = vmatpush1.msra.mxu0 %v109
  %5824 = vmatprep.subr.mxu0 0.0
  %5825 = vmatpush1.msra.mxu0 %v110
  %5826 = vmatprep.subr.mxu0 0.0
  %5827 = vmatpush1.msra.mxu0 %v111
  %5828 = vmatprep.subr.mxu0 0.0
  %5829 = vmatpush1.msra.mxu0 %v112
  %5830 = vmatprep.subr.mxu0 0.0
  %5831 = vmatpush1.msra.mxu0 %v113
  %5832 = vmatprep.subr.mxu0 0.0
  %5833 = vmatpush1.msra.mxu0 %v114
  %5834 = vmatprep.subr.mxu0 0.0
  %5835 = vmatpush1.msra.mxu0 %v115
  %5836 = vmatprep.subr.mxu0 0.0
  %5837 = vmatpush1.msra.mxu0 %v116
  %5838 = vmatprep.subr.mxu0 0.0
  %5839 = vmatpush1.msra.mxu0 %v117
  %5840 = vmatprep.subr.mxu0 0.0
  %5841 = vmatpush1.msra.mxu0 %v118
  %5842 = vmatprep.subr.mxu0 0.0
  %5843 = vmatpush1.msra.mxu0 %v119
  %5844 = vmatprep.subr.mxu0 0.0
  %5845 = vmatpush1.msra.mxu0 %v120
  %5846 = vmatprep.subr.mxu0 0.0
  %5847 = vmatpush1.msra.mxu0 %v121
  %5848 = vmatprep.subr.mxu0 0.0
  %5849 = vmatpush1.msra.mxu0 0.0
  %5850 = vmatprep.subr.mxu0 0.0
  %5851 = vmatpush1.msra.mxu0 0.0
  %5852 = vmatprep.subr.mxu0 0.0
  %5853 = vmatpush1.msra.mxu0 0.0
  %5854 = vmatprep.subr.mxu0 0.0
  %5855 = vmatpush1.msra.mxu0 0.0
  %5856 = vmatprep.subr.mxu0 0.0
  %5857 = vmatpush1.msra.mxu0 0.0
  %5858 = vmatprep.subr.mxu0 0.0
  %5859 = vmatpush1.msra.mxu0 0.0
  %5860 = vmatprep.subr.mxu0 0.0
  %5861 = vmatpush1.msra.mxu0 0.0
  %5862 = vmatprep.subr.mxu0 0.0
  %5863 = vmatpush1.msra.mxu0 0.0
  %5864 = vmatprep.subr.mxu0 0.0
  %5865 = vmatpush1.msra.mxu0 0.0
  %5866 = vmatprep.subr.mxu0 0.0
  %5867 = vmatpush1.msra.mxu0 0.0
  %5868 = vmatprep.subr.mxu0 0.0
  %5869 = vmatpush1.msra.mxu0 0.0
  %5870 = vmatprep.subr.mxu0 0.0
  %5871 = vmatpush1.msra.mxu0 0.0
  %5872 = vmatprep.subr.mxu0 0.0
  %5873 = vmatpush1.msra.mxu0 0.0
  %5874 = vmatprep.subr.mxu0 0.0
  %5875 = vmatpush1.msra.mxu0 0.0
  %5876 = vmatprep.subr.mxu0 0.0
  %5877 = vmatpush1.msra.mxu0 0.0
  %5878 = vmatprep.subr.mxu0 0.0
  %5879 = vmatpush1.msra.mxu0 0.0
  %5880 = vmatprep.mubr.f32.mxu0 0.0
  %5881 = vmatmul.mubr.f32.gmra.mrb[0].mxu0 %v5487
  %v5882 = vpop.f32.mrb[0].mxu0
  %v5883 = vadd.f32 0.0, %v5882
  %v5884 = vpop.f32.mrb[0].mxu0
  %5885 = vmatprep.mubr.f32.mxu0 0.0
  %5886 = vmatmul.mubr.f32.gmra.mrb[0].mxu0 %v5488
  %v5887 = vpop.f32.mrb[0].mxu0
  %v5888 = vadd.f32 0.0, %v5887
  %v5889 = vpop.f32.mrb[0].mxu0
  %5890 = vdwg.mxu0
  %5891 = vmatprep.subr.mxu0 0.0
  %5892 = vmatpush1.msra.mxu0 %v5883
  %5893 = vmatprep.subr.mxu0 0.0
  %5894 = vmatpush1.msra.mxu0 %v5888
  %5895 = vmatprep.subr.mxu0 0.0
  %5896 = vmatpush1.msra.mxu0 0.0
  %5897 = vmatprep.subr.mxu0 0.0
  %5898 = vmatpush1.msra.mxu0 0.0
  %5899 = vmatprep.subr.mxu0 0.0
  %5900 = vmatpush1.msra.mxu0 0.0
  %5901 = vmatprep.subr.mxu0 0.0
  %5902 = vmatpush1.msra.mxu0 0.0
  %5903 = vmatprep.subr.mxu0 0.0
  %5904 = vmatpush1.msra.mxu0 0.0
  %5905 = vmatprep.subr.mxu0 0.0
  %5906 = vmatpush1.msra.mxu0 0.0
  %5907 = vmatprep.subr.mxu0 0.0
  %5908 = vmatpush1.msra.mxu0 0.0
  %5909 = vmatprep.subr.mxu0 0.0
  %5910 = vmatpush1.msra.mxu0 0.0
  %5911 = vmatprep.subr.mxu0 0.0
  %5912 = vmatpush1.msra.mxu0 0.0
  %5913 = vmatprep.subr.mxu0 0.0
  %5914 = vmatpush1.msra.mxu0 0.0
  %5915 = vmatprep.subr.mxu0 0.0
  %5916 = vmatpush1.msra.mxu0 0.0
  %5917 = vmatprep.subr.mxu0 0.0
  %5918 = vmatpush1.msra.mxu0 0.0
  %5919 = vmatprep.subr.mxu0 0.0
  %5920 = vmatpush1.msra.mxu0 0.0
  %5921 = vmatprep.subr.mxu0 0.0
  %5922 = vmatpush1.msra.mxu0 0.0
  %5923 = vmatprep.subr.mxu0 0.0
  %5924 = vmatpush1.msra.mxu0 0.0
  %5925 = vmatprep.subr.mxu0 0.0
  %5926 = vmatpush1.msra.mxu0 0.0
  %5927 = vmatprep.subr.mxu0 0.0
  %5928 = vmatpush1.msra.mxu0 0.0
  %5929 = vmatprep.subr.mxu0 0.0
  %5930 = vmatpush1.msra.mxu0 0.0
  %5931 = vmatprep.subr.mxu0 0.0
  %5932 = vmatpush1.msra.mxu0 0.0
  %5933 = vmatprep.subr.mxu0 0.0
  %5934 = vmatpush1.msra.mxu0 0.0
  %5935 = vmatprep.subr.mxu0 0.0
  %5936 = vmatpush1.msra.mxu0 0.0
  %5937 = vmatprep.subr.mxu0 0.0
  %5938 = vmatpush1.msra.mxu0 0.0
  %5939 = vmatprep.subr.mxu0 0.0
  %5940 = vmatpush1.msra.mxu0 0.0
  %5941 = vmatprep.subr.mxu0 0.0
  %5942 = vmatpush1.msra.mxu0 0.0
  %5943 = vmatprep.subr.mxu0 0.0
  %5944 = vmatpush1.msra.mxu0 0.0
  %5945 = vmatprep.subr.mxu0 0.0
  %5946 = vmatpush1.msra.mxu0 0.0
  %5947 = vmatprep.subr.mxu0 0.0
  %5948 = vmatpush1.msra.mxu0 0.0
  %5949 = vmatprep.subr.mxu0 0.0
  %5950 = vmatpush1.msra.mxu0 0.0
  %5951 = vmatprep.subr.mxu0 0.0
  %5952 = vmatpush1.msra.mxu0 0.0
  %5953 = vmatprep.subr.mxu0 0.0
  %5954 = vmatpush1.msra.mxu0 0.0
  %5955 = vmatprep.mubr.f32.mxu0 0.0
  %5956 = vmatmul.mubr.f32.gmra.mrb[0].mxu0 %v5577
  %v5957 = vpop.f32.mrb[0].mxu0
  %v5958 = vadd.f32 0.0, %v5957
  %v5959 = vpop.f32.mrb[0].mxu0
  %5960 = vmatprep.mubr.f32.mxu0 0.0
  %5961 = vmatmul.mubr.f32.gmra.mrb[0].mxu0 %v5579
  %v5962 = vpop.f32.mrb[0].mxu0
  %v5963 = vadd.f32 0.0, %v5962
  %v5964 = vpop.f32.mrb[0].mxu0
  %5965 = vdwg.mxu0
  %v5967 = vsel %vm3690, %v5958, 0
  %v5970 = vsel %vm3690, %v5963, 0
  %5972 = vmatprep.subr.mxu0 0.0
  %5973 = vmatpush1.msra.mxu0 %v3699
  %5974 = vmatprep.subr.mxu0 0.0
  %5975 = vmatpush1.msra.mxu0 0.0
  %5976 = vmatprep.subr.mxu0 0.0
  %5977 = vmatpush1.msra.mxu0 0.0
  %5978 = vmatprep.subr.mxu0 0.0
  %5979 = vmatpush1.msra.mxu0 0.0
  %5980 = vmatprep.subr.mxu0 0.0
  %5981 = vmatpush1.msra.mxu0 0.0
  %5982 = vmatprep.subr.mxu0 0.0
  %5983 = vmatpush1.msra.mxu0 0.0
  %5984 = vmatprep.subr.mxu0 0.0
  %5985 = vmatpush1.msra.mxu0 0.0
  %5986 = vmatprep.subr.mxu0 0.0
  %5987 = vmatpush1.msra.mxu0 0.0
  %5988 = vmatprep.subr.mxu0 0.0
  %5989 = vmatpush1.msra.mxu0 0.0
  %5990 = vmatprep.subr.mxu0 0.0
  %5991 = vmatpush1.msra.mxu0 0.0
  %5992 = vmatprep.subr.mxu0 0.0
  %5993 = vmatpush1.msra.mxu0 0.0
  %5994 = vmatprep.subr.mxu0 0.0
  %5995 = vmatpush1.msra.mxu0 0.0
  %5996 = vmatprep.subr.mxu0 0.0
  %5997 = vmatpush1.msra.mxu0 0.0
  %5998 = vmatprep.subr.mxu0 0.0
  %5999 = vmatpush1.msra.mxu0 0.0
  %6000 = vmatprep.subr.mxu0 0.0
  %6001 = vmatpush1.msra.mxu0 0.0
  %6002 = vmatprep.subr.mxu0 0.0
  %6003 = vmatpush1.msra.mxu0 0.0
  %6004 = vmatprep.subr.mxu0 0.0
  %6005 = vmatpush1.msra.mxu0 0.0
  %6006 = vmatprep.subr.mxu0 0.0
  %6007 = vmatpush1.msra.mxu0 0.0
  %6008 = vmatprep.subr.mxu0 0.0
  %6009 = vmatpush1.msra.mxu0 0.0
  %6010 = vmatprep.subr.mxu0 0.0
  %6011 = vmatpush1.msra.mxu0 0.0
  %6012 = vmatprep.subr.mxu0 0.0
  %6013 = vmatpush1.msra.mxu0 0.0
  %6014 = vmatprep.subr.mxu0 0.0
  %6015 = vmatpush1.msra.mxu0 0.0
  %6016 = vmatprep.subr.mxu0 0.0
  %6017 = vmatpush1.msra.mxu0 0.0
  %6018 = vmatprep.subr.mxu0 0.0
  %6019 = vmatpush1.msra.mxu0 0.0
  %6020 = vmatprep.subr.mxu0 0.0
  %6021 = vmatpush1.msra.mxu0 0.0
  %6022 = vmatprep.subr.mxu0 0.0
  %6023 = vmatpush1.msra.mxu0 0.0
  %6024 = vmatprep.subr.mxu0 0.0
  %6025 = vmatpush1.msra.mxu0 0.0
  %6026 = vmatprep.subr.mxu0 0.0
  %6027 = vmatpush1.msra.mxu0 0.0
  %6028 = vmatprep.subr.mxu0 0.0
  %6029 = vmatpush1.msra.mxu0 0.0
  %6030 = vmatprep.subr.mxu0 0.0
  %6031 = vmatpush1.msra.mxu0 0.0
  %6032 = vmatprep.subr.mxu0 0.0
  %6033 = vmatpush1.msra.mxu0 0.0
  %6034 = vmatprep.subr.mxu0 0.0
  %6035 = vmatpush1.msra.mxu0 0.0
  %6036 = vmatprep.mubr.f32.mxu0 0.0
  %6037 = vmatmul.mubr.f32.gmra.mrb[0].mxu0 %v5967
  %v6038 = vpop.f32.mrb[0].mxu0
  %v6039 = vadd.f32 0.0, %v6038
  %v6040 = vpop.f32.mrb[0].mxu0
  %6041 = vmatprep.mubr.f32.mxu0 0.0
  %6042 = vmatmul.mubr.f32.gmra.mrb[0].mxu0 %v5970
  %v6043 = vpop.f32.mrb[0].mxu0
  %v6044 = vadd.f32 0.0, %v6043
  %v6045 = vpop.f32.mrb[0].mxu0
  %6046 = vdwg.mxu0
  %6047 = vmatprep.subr.mxu0 0.0
  %6048 = vmatpush1.msra.mxu0 %v5487
  %6049 = vmatprep.subr.mxu0 0.0
  %6050 = vmatpush1.msra.mxu0 %v5488
  %6051 = vmatprep.subr.mxu0 0.0
  %6052 = vmatpush1.msra.mxu0 0.0
  %6053 = vmatprep.subr.mxu0 0.0
  %6054 = vmatpush1.msra.mxu0 0.0
  %6055 = vmatprep.subr.mxu0 0.0
  %6056 = vmatpush1.msra.mxu0 0.0
  %6057 = vmatprep.subr.mxu0 0.0
  %6058 = vmatpush1.msra.mxu0 0.0
  %6059 = vmatprep.subr.mxu0 0.0
  %6060 = vmatpush1.msra.mxu0 0.0
  %6061 = vmatprep.subr.mxu0 0.0
  %6062 = vmatpush1.msra.mxu0 0.0
  %6063 = vmatprep.subr.mxu0 0.0
  %6064 = vmatpush1.msra.mxu0 0.0
  %6065 = vmatprep.subr.mxu0 0.0
  %6066 = vmatpush1.msra.mxu0 0.0
  %6067 = vmatprep.subr.mxu0 0.0
  %6068 = vmatpush1.msra.mxu0 0.0
  %6069 = vmatprep.subr.mxu0 0.0
  %6070 = vmatpush1.msra.mxu0 0.0
  %6071 = vmatprep.subr.mxu0 0.0
  %6072 = vmatpush1.msra.mxu0 0.0
  %6073 = vmatprep.subr.mxu0 0.0
  %6074 = vmatpush1.msra.mxu0 0.0
  %6075 = vmatprep.subr.mxu0 0.0
  %6076 = vmatpush1.msra.mxu0 0.0
  %6077 = vmatprep.subr.mxu0 0.0
  %6078 = vmatpush1.msra.mxu0 0.0
  %6079 = vmatprep.subr.mxu0 0.0
  %6080 = vmatpush1.msra.mxu0 0.0
  %6081 = vmatprep.subr.mxu0 0.0
  %6082 = vmatpush1.msra.mxu0 0.0
  %6083 = vmatprep.subr.mxu0 0.0
  %6084 = vmatpush1.msra.mxu0 0.0
  %6085 = vmatprep.subr.mxu0 0.0
  %6086 = vmatpush1.msra.mxu0 0.0
  %6087 = vmatprep.subr.mxu0 0.0
  %6088 = vmatpush1.msra.mxu0 0.0
  %6089 = vmatprep.subr.mxu0 0.0
  %6090 = vmatpush1.msra.mxu0 0.0
  %6091 = vmatprep.subr.mxu0 0.0
  %6092 = vmatpush1.msra.mxu0 0.0
  %6093 = vmatprep.subr.mxu0 0.0
  %6094 = vmatpush1.msra.mxu0 0.0
  %6095 = vmatprep.subr.mxu0 0.0
  %6096 = vmatpush1.msra.mxu0 0.0
  %6097 = vmatprep.subr.mxu0 0.0
  %6098 = vmatpush1.msra.mxu0 0.0
  %6099 = vmatprep.subr.mxu0 0.0
  %6100 = vmatpush1.msra.mxu0 0.0
  %6101 = vmatprep.subr.mxu0 0.0
  %6102 = vmatpush1.msra.mxu0 0.0
  %6103 = vmatprep.subr.mxu0 0.0
  %6104 = vmatpush1.msra.mxu0 0.0
  %6105 = vmatprep.subr.mxu0 0.0
  %6106 = vmatpush1.msra.mxu0 0.0
  %6107 = vmatprep.subr.mxu0 0.0
  %6108 = vmatpush1.msra.mxu0 0.0
  %6109 = vmatprep.subr.mxu0 0.0
  %6110 = vmatpush1.msra.mxu0 0.0
  %6111 = vmatprep.mubr.f32.mxu0 0.0
  %6112 = vmatmul.mubr.f32.gmra.mrb[0].mxu0 %v5737
  %v6113 = vpop.f32.mrb[0].mxu0
  %v6114 = vadd.f32 %v6039, %v6113
  %v6115 = vpop.f32.mrb[0].mxu0
  %6116 = vmatprep.mubr.f32.mxu0 0.0
  %6117 = vmatmul.mubr.f32.gmra.mrb[0].mxu0 %v5739
  %v6118 = vpop.f32.mrb[0].mxu0
  %v6119 = vadd.f32 %v6044, %v6118
  %v6120 = vpop.f32.mrb[0].mxu0
  %6121 = vdwg.mxu0
  %6122 = vmatprep.subr.mxu0 0.0
  %6123 = vmatpush1.msra.mxu0 %v106
  %6124 = vmatprep.subr.mxu0 0.0
  %6125 = vmatpush1.msra.mxu0 %v107
  %6126 = vmatprep.subr.mxu0 0.0
  %6127 = vmatpush1.msra.mxu0 %v108
  %6128 = vmatprep.subr.mxu0 0.0
  %6129 = vmatpush1.msra.mxu0 %v109
  %6130 = vmatprep.subr.mxu0 0.0
  %6131 = vmatpush1.msra.mxu0 %v110
  %6132 = vmatprep.subr.mxu0 0.0
  %6133 = vmatpush1.msra.mxu0 %v111
  %6134 = vmatprep.subr.mxu0 0.0
  %6135 = vmatpush1.msra.mxu0 %v112
  %6136 = vmatprep.subr.mxu0 0.0
  %6137 = vmatpush1.msra.mxu0 %v113
  %6138 = vmatprep.subr.mxu0 0.0
  %6139 = vmatpush1.msra.mxu0 %v114
  %6140 = vmatprep.subr.mxu0 0.0
  %6141 = vmatpush1.msra.mxu0 %v115
  %6142 = vmatprep.subr.mxu0 0.0
  %6143 = vmatpush1.msra.mxu0 %v116
  %6144 = vmatprep.subr.mxu0 0.0
  %6145 = vmatpush1.msra.mxu0 %v117
  %6146 = vmatprep.subr.mxu0 0.0
  %6147 = vmatpush1.msra.mxu0 %v118
  %6148 = vmatprep.subr.mxu0 0.0
  %6149 = vmatpush1.msra.mxu0 %v119
  %6150 = vmatprep.subr.mxu0 0.0
  %6151 = vmatpush1.msra.mxu0 %v120
  %6152 = vmatprep.subr.mxu0 0.0
  %6153 = vmatpush1.msra.mxu0 %v121
  %6154 = vmatprep.subr.mxu0 0.0
  %6155 = vmatpush1.msra.mxu0 0.0
  %6156 = vmatprep.subr.mxu0 0.0
  %6157 = vmatpush1.msra.mxu0 0.0
  %6158 = vmatprep.subr.mxu0 0.0
  %6159 = vmatpush1.msra.mxu0 0.0
  %6160 = vmatprep.subr.mxu0 0.0
  %6161 = vmatpush1.msra.mxu0 0.0
  %6162 = vmatprep.subr.mxu0 0.0
  %6163 = vmatpush1.msra.mxu0 0.0
  %6164 = vmatprep.subr.mxu0 0.0
  %6165 = vmatpush1.msra.mxu0 0.0
  %6166 = vmatprep.subr.mxu0 0.0
  %6167 = vmatpush1.msra.mxu0 0.0
  %6168 = vmatprep.subr.mxu0 0.0
  %6169 = vmatpush1.msra.mxu0 0.0
  %6170 = vmatprep.subr.mxu0 0.0
  %6171 = vmatpush1.msra.mxu0 0.0
  %6172 = vmatprep.subr.mxu0 0.0
  %6173 = vmatpush1.msra.mxu0 0.0
  %6174 = vmatprep.subr.mxu0 0.0
  %6175 = vmatpush1.msra.mxu0 0.0
  %6176 = vmatprep.subr.mxu0 0.0
  %6177 = vmatpush1.msra.mxu0 0.0
  %6178 = vmatprep.subr.mxu0 0.0
  %6179 = vmatpush1.msra.mxu0 0.0
  %6180 = vmatprep.subr.mxu0 0.0
  %6181 = vmatpush1.msra.mxu0 0.0
  %6182 = vmatprep.subr.mxu0 0.0
  %6183 = vmatpush1.msra.mxu0 0.0
  %6184 = vmatprep.subr.mxu0 0.0
  %6185 = vmatpush1.msra.mxu0 0.0
  %6186 = vmatprep.mubr.f32.mxu0 0.0
  %6187 = vmatmul.mubr.f32.gmra.mrb[0].mxu0 %v5491
  %v6188 = vpop.f32.mrb[0].mxu0
  %v6189 = vadd.f32 0.0, %v6188
  %v6190 = vpop.f32.mrb[0].mxu0
  %6191 = vmatprep.mubr.f32.mxu0 0.0
  %6192 = vmatmul.mubr.f32.gmra.mrb[0].mxu0 %v5492
  %v6193 = vpop.f32.mrb[0].mxu0
  %v6194 = vadd.f32 0.0, %v6193
  %v6195 = vpop.f32.mrb[0].mxu0
  %6196 = vdwg.mxu0
  %6197 = vmatprep.subr.mxu0 0.0
  %6198 = vmatpush1.msra.mxu0 %v6189
  %6199 = vmatprep.subr.mxu0 0.0
  %6200 = vmatpush1.msra.mxu0 %v6194
  %6201 = vmatprep.subr.mxu0 0.0
  %6202 = vmatpush1.msra.mxu0 0.0
  %6203 = vmatprep.subr.mxu0 0.0
  %6204 = vmatpush1.msra.mxu0 0.0
  %6205 = vmatprep.subr.mxu0 0.0
  %6206 = vmatpush1.msra.mxu0 0.0
  %6207 = vmatprep.subr.mxu0 0.0
  %6208 = vmatpush1.msra.mxu0 0.0
  %6209 = vmatprep.subr.mxu0 0.0
  %6210 = vmatpush1.msra.mxu0 0.0
  %6211 = vmatprep.subr.mxu0 0.0
  %6212 = vmatpush1.msra.mxu0 0.0
  %6213 = vmatprep.subr.mxu0 0.0
  %6214 = vmatpush1.msra.mxu0 0.0
  %6215 = vmatprep.subr.mxu0 0.0
  %6216 = vmatpush1.msra.mxu0 0.0
  %6217 = vmatprep.subr.mxu0 0.0
  %6218 = vmatpush1.msra.mxu0 0.0
  %6219 = vmatprep.subr.mxu0 0.0
  %6220 = vmatpush1.msra.mxu0 0.0
  %6221 = vmatprep.subr.mxu0 0.0
  %6222 = vmatpush1.msra.mxu0 0.0
  %6223 = vmatprep.subr.mxu0 0.0
  %6224 = vmatpush1.msra.mxu0 0.0
  %6225 = vmatprep.subr.mxu0 0.0
  %6226 = vmatpush1.msra.mxu0 0.0
  %6227 = vmatprep.subr.mxu0 0.0
  %6228 = vmatpush1.msra.mxu0 0.0
  %6229 = vmatprep.subr.mxu0 0.0
  %6230 = vmatpush1.msra.mxu0 0.0
  %6231 = vmatprep.subr.mxu0 0.0
  %6232 = vmatpush1.msra.mxu0 0.0
  %6233 = vmatprep.subr.mxu0 0.0
  %6234 = vmatpush1.msra.mxu0 0.0
  %6235 = vmatprep.subr.mxu0 0.0
  %6236 = vmatpush1.msra.mxu0 0.0
  %6237 = vmatprep.subr.mxu0 0.0
  %6238 = vmatpush1.msra.mxu0 0.0
  %6239 = vmatprep.subr.mxu0 0.0
  %6240 = vmatpush1.msra.mxu0 0.0
  %6241 = vmatprep.subr.mxu0 0.0
  %6242 = vmatpush1.msra.mxu0 0.0
  %6243 = vmatprep.subr.mxu0 0.0
  %6244 = vmatpush1.msra.mxu0 0.0
  %6245 = vmatprep.subr.mxu0 0.0
  %6246 = vmatpush1.msra.mxu0 0.0
  %6247 = vmatprep.subr.mxu0 0.0
  %6248 = vmatpush1.msra.mxu0 0.0
  %6249 = vmatprep.subr.mxu0 0.0
  %6250 = vmatpush1.msra.mxu0 0.0
  %6251 = vmatprep.subr.mxu0 0.0
  %6252 = vmatpush1.msra.mxu0 0.0
  %6253 = vmatprep.subr.mxu0 0.0
  %6254 = vmatpush1.msra.mxu0 0.0
  %6255 = vmatprep.subr.mxu0 0.0
  %6256 = vmatpush1.msra.mxu0 0.0
  %6257 = vmatprep.subr.mxu0 0.0
  %6258 = vmatpush1.msra.mxu0 0.0
  %6259 = vmatprep.subr.mxu0 0.0
  %6260 = vmatpush1.msra.mxu0 0.0
  %6261 = vmatprep.mubr.f32.mxu0 0.0
  %6262 = vmatmul.mubr.f32.gmra.mrb[0].mxu0 %v5577
  %v6263 = vpop.f32.mrb[0].mxu0
  %v6264 = vadd.f32 0.0, %v6263
  %v6265 = vpop.f32.mrb[0].mxu0
  %6266 = vmatprep.mubr.f32.mxu0 0.0
  %6267 = vmatmul.mubr.f32.gmra.mrb[0].mxu0 %v5579
  %v6268 = vpop.f32.mrb[0].mxu0
  %v6269 = vadd.f32 0.0, %v6268
  %v6270 = vpop.f32.mrb[0].mxu0
  %6271 = vdwg.mxu0
  %v6273 = vsel %vm3690, %v6264, 0
  %v6276 = vsel %vm3690, %v6269, 0
  %6278 = vmatprep.subr.mxu0 0.0
  %6279 = vmatpush1.msra.mxu0 %v3699
  %6280 = vmatprep.subr.mxu0 0.0
  %6281 = vmatpush1.msra.mxu0 0.0
  %6282 = vmatprep.subr.mxu0 0.0
  %6283 = vmatpush1.msra.mxu0 0.0
  %6284 = vmatprep.subr.mxu0 0.0
  %6285 = vmatpush1.msra.mxu0 0.0
  %6286 = vmatprep.subr.mxu0 0.0
  %6287 = vmatpush1.msra.mxu0 0.0
  %6288 = vmatprep.subr.mxu0 0.0
  %6289 = vmatpush1.msra.mxu0 0.0
  %6290 = vmatprep.subr.mxu0 0.0
  %6291 = vmatpush1.msra.mxu0 0.0
  %6292 = vmatprep.subr.mxu0 0.0
  %6293 = vmatpush1.msra.mxu0 0.0
  %6294 = vmatprep.subr.mxu0 0.0
  %6295 = vmatpush1.msra.mxu0 0.0
  %6296 = vmatprep.subr.mxu0 0.0
  %6297 = vmatpush1.msra.mxu0 0.0
  %6298 = vmatprep.subr.mxu0 0.0
  %6299 = vmatpush1.msra.mxu0 0.0
  %6300 = vmatprep.subr.mxu0 0.0
  %6301 = vmatpush1.msra.mxu0 0.0
  %6302 = vmatprep.subr.mxu0 0.0
  %6303 = vmatpush1.msra.mxu0 0.0
  %6304 = vmatprep.subr.mxu0 0.0
  %6305 = vmatpush1.msra.mxu0 0.0
  %6306 = vmatprep.subr.mxu0 0.0
  %6307 = vmatpush1.msra.mxu0 0.0
  %6308 = vmatprep.subr.mxu0 0.0
  %6309 = vmatpush1.msra.mxu0 0.0
  %6310 = vmatprep.subr.mxu0 0.0
  %6311 = vmatpush1.msra.mxu0 0.0
  %6312 = vmatprep.subr.mxu0 0.0
  %6313 = vmatpush1.msra.mxu0 0.0
  %6314 = vmatprep.subr.mxu0 0.0
  %6315 = vmatpush1.msra.mxu0 0.0
  %6316 = vmatprep.subr.mxu0 0.0
  %6317 = vmatpush1.msra.mxu0 0.0
  %6318 = vmatprep.subr.mxu0 0.0
  %6319 = vmatpush1.msra.mxu0 0.0
  %6320 = vmatprep.subr.mxu0 0.0
  %6321 = vmatpush1.msra.mxu0 0.0
  %6322 = vmatprep.subr.mxu0 0.0
  %6323 = vmatpush1.msra.mxu0 0.0
  %6324 = vmatprep.subr.mxu0 0.0
  %6325 = vmatpush1.msra.mxu0 0.0
  %6326 = vmatprep.subr.mxu0 0.0
  %6327 = vmatpush1.msra.mxu0 0.0
  %6328 = vmatprep.subr.mxu0 0.0
  %6329 = vmatpush1.msra.mxu0 0.0
  %6330 = vmatprep.subr.mxu0 0.0
  %6331 = vmatpush1.msra.mxu0 0.0
  %6332 = vmatprep.subr.mxu0 0.0
  %6333 = vmatpush1.msra.mxu0 0.0
  %6334 = vmatprep.subr.mxu0 0.0
  %6335 = vmatpush1.msra.mxu0 0.0
  %6336 = vmatprep.subr.mxu0 0.0
  %6337 = vmatpush1.msra.mxu0 0.0
  %6338 = vmatprep.subr.mxu0 0.0
  %6339 = vmatpush1.msra.mxu0 0.0
  %6340 = vmatprep.subr.mxu0 0.0
  %6341 = vmatpush1.msra.mxu0 0.0
  %6342 = vmatprep.mubr.f32.mxu0 0.0
  %6343 = vmatmul.mubr.f32.gmra.mrb[0].mxu0 %v6273
  %v6344 = vpop.f32.mrb[0].mxu0
  %v6345 = vadd.f32 0.0, %v6344
  %v6346 = vpop.f32.mrb[0].mxu0
  %6347 = vmatprep.mubr.f32.mxu0 0.0
  %6348 = vmatmul.mubr.f32.gmra.mrb[0].mxu0 %v6276
  %v6349 = vpop.f32.mrb[0].mxu0
  %v6350 = vadd.f32 0.0, %v6349
  %v6351 = vpop.f32.mrb[0].mxu0
  %6352 = vdwg.mxu0
  %6353 = vmatprep.subr.mxu0 0.0
  %6354 = vmatpush1.msra.mxu0 %v5491
  %6355 = vmatprep.subr.mxu0 0.0
  %6356 = vmatpush1.msra.mxu0 %v5492
  %6357 = vmatprep.subr.mxu0 0.0
  %6358 = vmatpush1.msra.mxu0 0.0
  %6359 = vmatprep.subr.mxu0 0.0
  %6360 = vmatpush1.msra.mxu0 0.0
  %6361 = vmatprep.subr.mxu0 0.0
  %6362 = vmatpush1.msra.mxu0 0.0
  %6363 = vmatprep.subr.mxu0 0.0
  %6364 = vmatpush1.msra.mxu0 0.0
  %6365 = vmatprep.subr.mxu0 0.0
  %6366 = vmatpush1.msra.mxu0 0.0
  %6367 = vmatprep.subr.mxu0 0.0
  %6368 = vmatpush1.msra.mxu0 0.0
  %6369 = vmatprep.subr.mxu0 0.0
  %6370 = vmatpush1.msra.mxu0 0.0
  %6371 = vmatprep.subr.mxu0 0.0
  %6372 = vmatpush1.msra.mxu0 0.0
  %6373 = vmatprep.subr.mxu0 0.0
  %6374 = vmatpush1.msra.mxu0 0.0
  %6375 = vmatprep.subr.mxu0 0.0
  %6376 = vmatpush1.msra.mxu0 0.0
  %6377 = vmatprep.subr.mxu0 0.0
  %6378 = vmatpush1.msra.mxu0 0.0
  %6379 = vmatprep.subr.mxu0 0.0
  %6380 = vmatpush1.msra.mxu0 0.0
  %6381 = vmatprep.subr.mxu0 0.0
  %6382 = vmatpush1.msra.mxu0 0.0
  %6383 = vmatprep.subr.mxu0 0.0
  %6384 = vmatpush1.msra.mxu0 0.0
  %6385 = vmatprep.subr.mxu0 0.0
  %6386 = vmatpush1.msra.mxu0 0.0
  %6387 = vmatprep.subr.mxu0 0.0
  %6388 = vmatpush1.msra.mxu0 0.0
  %6389 = vmatprep.subr.mxu0 0.0
  %6390 = vmatpush1.msra.mxu0 0.0
  %6391 = vmatprep.subr.mxu0 0.0
  %6392 = vmatpush1.msra.mxu0 0.0
  %6393 = vmatprep.subr.mxu0 0.0
  %6394 = vmatpush1.msra.mxu0 0.0
  %6395 = vmatprep.subr.mxu0 0.0
  %6396 = vmatpush1.msra.mxu0 0.0
  %6397 = vmatprep.subr.mxu0 0.0
  %6398 = vmatpush1.msra.mxu0 0.0
  %6399 = vmatprep.subr.mxu0 0.0
  %6400 = vmatpush1.msra.mxu0 0.0
  %6401 = vmatprep.subr.mxu0 0.0
  %6402 = vmatpush1.msra.mxu0 0.0
  %6403 = vmatprep.subr.mxu0 0.0
  %6404 = vmatpush1.msra.mxu0 0.0
  %6405 = vmatprep.subr.mxu0 0.0
  %6406 = vmatpush1.msra.mxu0 0.0
  %6407 = vmatprep.subr.mxu0 0.0
  %6408 = vmatpush1.msra.mxu0 0.0
  %6409 = vmatprep.subr.mxu0 0.0
  %6410 = vmatpush1.msra.mxu0 0.0
  %6411 = vmatprep.subr.mxu0 0.0
  %6412 = vmatpush1.msra.mxu0 0.0
  %6413 = vmatprep.subr.mxu0 0.0
  %6414 = vmatpush1.msra.mxu0 0.0
  %6415 = vmatprep.subr.mxu0 0.0
  %6416 = vmatpush1.msra.mxu0 0.0
  %6417 = vmatprep.mubr.f32.mxu0 0.0
  %6418 = vmatmul.mubr.f32.gmra.mrb[0].mxu0 %v5737
  %v6419 = vpop.f32.mrb[0].mxu0
  %v6420 = vadd.f32 %v6345, %v6419
  %v6421 = vpop.f32.mrb[0].mxu0
  %6422 = vmatprep.mubr.f32.mxu0 0.0
  %6423 = vmatmul.mubr.f32.gmra.mrb[0].mxu0 %v5739
  %v6424 = vpop.f32.mrb[0].mxu0
  %v6425 = vadd.f32 %v6350, %v6424
  %v6426 = vpop.f32.mrb[0].mxu0
  %6427 = vdwg.mxu0
  %s6428 = scalar_lea.vmem %s7, 16
  %v6429 = vld [vmem:[%s6428] sm:$0xff]
  %v6430 = vld [vmem:[%s6428 + $0x8] sm:$0xff]
  %v6432 = vsel %vm1629, %v6429, 0
  %v6435 = vsel %vm1629, %v6430, 0
  %6437 = vmatprep.subr.mxu0 0.0
  %6438 = vmatpush1.msra.mxu0 %v5808
  %6439 = vmatprep.subr.mxu0 0.0
  %6440 = vmatpush1.msra.mxu0 %v5813
  %6441 = vmatprep.subr.mxu0 0.0
  %6442 = vmatpush1.msra.mxu0 0.0
  %6443 = vmatprep.subr.mxu0 0.0
  %6444 = vmatpush1.msra.mxu0 0.0
  %6445 = vmatprep.subr.mxu0 0.0
  %6446 = vmatpush1.msra.mxu0 0.0
  %6447 = vmatprep.subr.mxu0 0.0
  %6448 = vmatpush1.msra.mxu0 0.0
  %6449 = vmatprep.subr.mxu0 0.0
  %6450 = vmatpush1.msra.mxu0 0.0
  %6451 = vmatprep.subr.mxu0 0.0
  %6452 = vmatpush1.msra.mxu0 0.0
  %6453 = vmatprep.subr.mxu0 0.0
  %6454 = vmatpush1.msra.mxu0 0.0
  %6455 = vmatprep.subr.mxu0 0.0
  %6456 = vmatpush1.msra.mxu0 0.0
  %6457 = vmatprep.subr.mxu0 0.0
  %6458 = vmatpush1.msra.mxu0 0.0
  %6459 = vmatprep.subr.mxu0 0.0
  %6460 = vmatpush1.msra.mxu0 0.0
  %6461 = vmatprep.subr.mxu0 0.0
  %6462 = vmatpush1.msra.mxu0 0.0
  %6463 = vmatprep.subr.mxu0 0.0
  %6464 = vmatpush1.msra.mxu0 0.0
  %6465 = vmatprep.subr.mxu0 0.0
  %6466 = vmatpush1.msra.mxu0 0.0
  %6467 = vmatprep.subr.mxu0 0.0
  %6468 = vmatpush1.msra.mxu0 0.0
  %6469 = vmatprep.subr.mxu0 0.0
  %6470 = vmatpush1.msra.mxu0 0.0
  %6471 = vmatprep.subr.mxu0 0.0
  %6472 = vmatpush1.msra.mxu0 0.0
  %6473 = vmatprep.subr.mxu0 0.0
  %6474 = vmatpush1.msra.mxu0 0.0
  %6475 = vmatprep.subr.mxu0 0.0
  %6476 = vmatpush1.msra.mxu0 0.0
  %6477 = vmatprep.subr.mxu0 0.0
  %6478 = vmatpush1.msra.mxu0 0.0
  %6479 = vmatprep.subr.mxu0 0.0
  %6480 = vmatpush1.msra.mxu0 0.0
  %6481 = vmatprep.subr.mxu0 0.0
  %6482 = vmatpush1.msra.mxu0 0.0
  %6483 = vmatprep.subr.mxu0 0.0
  %6484 = vmatpush1.msra.mxu0 0.0
  %6485 = vmatprep.subr.mxu0 0.0
  %6486 = vmatpush1.msra.mxu0 0.0
  %6487 = vmatprep.subr.mxu0 0.0
  %6488 = vmatpush1.msra.mxu0 0.0
  %6489 = vmatprep.subr.mxu0 0.0
  %6490 = vmatpush1.msra.mxu0 0.0
  %6491 = vmatprep.subr.mxu0 0.0
  %6492 = vmatpush1.msra.mxu0 0.0
  %6493 = vmatprep.subr.mxu0 0.0
  %6494 = vmatpush1.msra.mxu0 0.0
  %6495 = vmatprep.subr.mxu0 0.0
  %6496 = vmatpush1.msra.mxu0 0.0
  %6497 = vmatprep.subr.mxu0 0.0
  %6498 = vmatpush1.msra.mxu0 0.0
  %6499 = vmatprep.subr.mxu0 0.0
  %6500 = vmatpush1.msra.mxu0 0.0
  %6501 = vmatprep.mubr.f32.mxu0 0.0
  %6502 = vmatmul.mubr.f32.gmra.mrb[0].mxu0 %v6432
  %v6503 = vpop.f32.mrb[0].mxu0
  %v6504 = vadd.f32 0.0, %v6503
  %v6505 = vpop.f32.mrb[0].mxu0
  %6506 = vmatprep.mubr.f32.mxu0 0.0
  %6507 = vmatmul.mubr.f32.gmra.mrb[0].mxu0 %v6435
  %v6508 = vpop.f32.mrb[0].mxu0
  %v6509 = vadd.f32 0.0, %v6508
  %v6510 = vpop.f32.mrb[0].mxu0
  %6511 = vdwg.mxu0
  %6512 = vmatprep.subr.mxu0 0.0
  %6513 = vmatpush1.msra.mxu0 %v6114
  %6514 = vmatprep.subr.mxu0 0.0
  %6515 = vmatpush1.msra.mxu0 %v6119
  %6516 = vmatprep.subr.mxu0 0.0
  %6517 = vmatpush1.msra.mxu0 0.0
  %6518 = vmatprep.subr.mxu0 0.0
  %6519 = vmatpush1.msra.mxu0 0.0
  %6520 = vmatprep.subr.mxu0 0.0
  %6521 = vmatpush1.msra.mxu0 0.0
  %6522 = vmatprep.subr.mxu0 0.0
  %6523 = vmatpush1.msra.mxu0 0.0
  %6524 = vmatprep.subr.mxu0 0.0
  %6525 = vmatpush1.msra.mxu0 0.0
  %6526 = vmatprep.subr.mxu0 0.0
  %6527 = vmatpush1.msra.mxu0 0.0
  %6528 = vmatprep.subr.mxu0 0.0
  %6529 = vmatpush1.msra.mxu0 0.0
  %6530 = vmatprep.subr.mxu0 0.0
  %6531 = vmatpush1.msra.mxu0 0.0
  %6532 = vmatprep.subr.mxu0 0.0
  %6533 = vmatpush1.msra.mxu0 0.0
  %6534 = vmatprep.subr.mxu0 0.0
  %6535 = vmatpush1.msra.mxu0 0.0
  %6536 = vmatprep.subr.mxu0 0.0
  %6537 = vmatpush1.msra.mxu0 0.0
  %6538 = vmatprep.subr.mxu0 0.0
  %6539 = vmatpush1.msra.mxu0 0.0
  %6540 = vmatprep.subr.mxu0 0.0
  %6541 = vmatpush1.msra.mxu0 0.0
  %6542 = vmatprep.subr.mxu0 0.0
  %6543 = vmatpush1.msra.mxu0 0.0
  %6544 = vmatprep.subr.mxu0 0.0
  %6545 = vmatpush1.msra.mxu0 0.0
  %6546 = vmatprep.subr.mxu0 0.0
  %6547 = vmatpush1.msra.mxu0 0.0
  %6548 = vmatprep.subr.mxu0 0.0
  %6549 = vmatpush1.msra.mxu0 0.0
  %6550 = vmatprep.subr.mxu0 0.0
  %6551 = vmatpush1.msra.mxu0 0.0
  %6552 = vmatprep.subr.mxu0 0.0
  %6553 = vmatpush1.msra.mxu0 0.0
  %6554 = vmatprep.subr.mxu0 0.0
  %6555 = vmatpush1.msra.mxu0 0.0
  %6556 = vmatprep.subr.mxu0 0.0
  %6557 = vmatpush1.msra.mxu0 0.0
  %6558 = vmatprep.subr.mxu0 0.0
  %6559 = vmatpush1.msra.mxu0 0.0
  %6560 = vmatprep.subr.mxu0 0.0
  %6561 = vmatpush1.msra.mxu0 0.0
  %6562 = vmatprep.subr.mxu0 0.0
  %6563 = vmatpush1.msra.mxu0 0.0
  %6564 = vmatprep.subr.mxu0 0.0
  %6565 = vmatpush1.msra.mxu0 0.0
  %6566 = vmatprep.subr.mxu0 0.0
  %6567 = vmatpush1.msra.mxu0 0.0
  %6568 = vmatprep.subr.mxu0 0.0
  %6569 = vmatpush1.msra.mxu0 0.0
  %6570 = vmatprep.subr.mxu0 0.0
  %6571 = vmatpush1.msra.mxu0 0.0
  %6572 = vmatprep.subr.mxu0 0.0
  %6573 = vmatpush1.msra.mxu0 0.0
  %6574 = vmatprep.subr.mxu0 0.0
  %6575 = vmatpush1.msra.mxu0 0.0
  %6576 = vmatprep.mubr.f32.mxu0 0.0
  %6577 = vmatmul.mubr.f32.gmra.mrb[0].mxu0 %v6432
  %v6578 = vpop.f32.mrb[0].mxu0
  %v6579 = vadd.f32 0.0, %v6578
  %v6580 = vpop.f32.mrb[0].mxu0
  %6581 = vmatprep.mubr.f32.mxu0 0.0
  %6582 = vmatmul.mubr.f32.gmra.mrb[0].mxu0 %v6435
  %v6583 = vpop.f32.mrb[0].mxu0
  %v6584 = vadd.f32 0.0, %v6583
  %v6585 = vpop.f32.mrb[0].mxu0
  %6586 = vdwg.mxu0
  %6587 = vmatprep.subr.mxu0 0.0
  %6588 = vmatpush1.msra.mxu0 %v6420
  %6589 = vmatprep.subr.mxu0 0.0
  %6590 = vmatpush1.msra.mxu0 %v6425
  %6591 = vmatprep.subr.mxu0 0.0
  %6592 = vmatpush1.msra.mxu0 0.0
  %6593 = vmatprep.subr.mxu0 0.0
  %6594 = vmatpush1.msra.mxu0 0.0
  %6595 = vmatprep.subr.mxu0 0.0
  %6596 = vmatpush1.msra.mxu0 0.0
  %6597 = vmatprep.subr.mxu0 0.0
  %6598 = vmatpush1.msra.mxu0 0.0
  %6599 = vmatprep.subr.mxu0 0.0
  %6600 = vmatpush1.msra.mxu0 0.0
  %6601 = vmatprep.subr.mxu0 0.0
  %6602 = vmatpush1.msra.mxu0 0.0
  %6603 = vmatprep.subr.mxu0 0.0
  %6604 = vmatpush1.msra.mxu0 0.0
  %6605 = vmatprep.subr.mxu0 0.0
  %6606 = vmatpush1.msra.mxu0 0.0
  %6607 = vmatprep.subr.mxu0 0.0
  %6608 = vmatpush1.msra.mxu0 0.0
  %6609 = vmatprep.subr.mxu0 0.0
  %6610 = vmatpush1.msra.mxu0 0.0
  %6611 = vmatprep.subr.mxu0 0.0
  %6612 = vmatpush1.msra.mxu0 0.0
  %6613 = vmatprep.subr.mxu0 0.0
  %6614 = vmatpush1.msra.mxu0 0.0
  %6615 = vmatprep.subr.mxu0 0.0
  %6616 = vmatpush1.msra.mxu0 0.0
  %6617 = vmatprep.subr.mxu0 0.0
  %6618 = vmatpush1.msra.mxu0 0.0
  %6619 = vmatprep.subr.mxu0 0.0
  %6620 = vmatpush1.msra.mxu0 0.0
  %6621 = vmatprep.subr.mxu0 0.0
  %6622 = vmatpush1.msra.mxu0 0.0
  %6623 = vmatprep.subr.mxu0 0.0
  %6624 = vmatpush1.msra.mxu0 0.0
  %6625 = vmatprep.subr.mxu0 0.0
  %6626 = vmatpush1.msra.mxu0 0.0
  %6627 = vmatprep.subr.mxu0 0.0
  %6628 = vmatpush1.msra.mxu0 0.0
  %6629 = vmatprep.subr.mxu0 0.0
  %6630 = vmatpush1.msra.mxu0 0.0
  %6631 = vmatprep.subr.mxu0 0.0
  %6632 = vmatpush1.msra.mxu0 0.0
  %6633 = vmatprep.subr.mxu0 0.0
  %6634 = vmatpush1.msra.mxu0 0.0
  %6635 = vmatprep.subr.mxu0 0.0
  %6636 = vmatpush1.msra.mxu0 0.0
  %6637 = vmatprep.subr.mxu0 0.0
  %6638 = vmatpush1.msra.mxu0 0.0
  %6639 = vmatprep.subr.mxu0 0.0
  %6640 = vmatpush1.msra.mxu0 0.0
  %6641 = vmatprep.subr.mxu0 0.0
  %6642 = vmatpush1.msra.mxu0 0.0
  %6643 = vmatprep.subr.mxu0 0.0
  %6644 = vmatpush1.msra.mxu0 0.0
  %6645 = vmatprep.subr.mxu0 0.0
  %6646 = vmatpush1.msra.mxu0 0.0
  %6647 = vmatprep.subr.mxu0 0.0
  %6648 = vmatpush1.msra.mxu0 0.0
  %6649 = vmatprep.subr.mxu0 0.0
  %6650 = vmatpush1.msra.mxu0 0.0
  %6651 = vmatprep.mubr.f32.mxu0 0.0
  %6652 = vmatmul.mubr.f32.gmra.mrb[0].mxu0 %v6432
  %v6653 = vpop.f32.mrb[0].mxu0
  %v6654 = vadd.f32 0.0, %v6653
  %v6655 = vpop.f32.mrb[0].mxu0
  %6656 = vmatprep.mubr.f32.mxu0 0.0
  %6657 = vmatmul.mubr.f32.gmra.mrb[0].mxu0 %v6435
  %v6658 = vpop.f32.mrb[0].mxu0
  %v6659 = vadd.f32 0.0, %v6658
  %v6660 = vpop.f32.mrb[0].mxu0
  %6661 = vdwg.mxu0
  %v6662 = vmul.f32 %v6504, %v6504
  %v6663 = vmul.f32 %v6509, %v6509
  %v6664 = vmul.f32 %v6579, %v6579
  %v6665 = vmul.f32 %v6584, %v6584
  %v6666 = vadd.f32 %v6662, %v6664
  %v6667 = vadd.f32 %v6663, %v6665
  %v6668 = vmul.f32 %v6654, %v6654
  %v6669 = vmul.f32 %v6659, %v6659
  %v6670 = vadd.f32 %v6666, %v6668
  %v6671 = vadd.f32 %v6667, %v6669
  %v6672 = vmax.f32 %v6670, 1e-24
  %v6673 = vmax.f32 %v6671, 1e-24
  %v6674 = vrsqrt.pop %v6672
  %v6675 = vrsqrt.pop %v6673
  %v6676 = vmul.f32 %v6504, %v6674
  %v6677 = vmul.f32 %v6509, %v6675
  %v6678 = vmul.f32 %v6579, %v6674
  %v6679 = vmul.f32 %v6584, %v6675
  %v6680 = vmul.f32 %v6654, %v6674
  %v6681 = vmul.f32 %v6659, %v6675
  %v6682 = vmul.f32 %v5808, %v6676
  %v6683 = vmul.f32 %v5813, %v6677
  %v6684 = vmul.f32 %v6114, %v6678
  %v6685 = vmul.f32 %v6119, %v6679
  %v6686 = vadd.f32 %v6682, %v6684
  %v6687 = vadd.f32 %v6683, %v6685
  %v6688 = vmul.f32 %v6420, %v6680
  %v6689 = vmul.f32 %v6425, %v6681
  %v6690 = vadd.f32 %v6686, %v6688
  %v6691 = vadd.f32 %v6687, %v6689
  %vm6692 = vcmp.ge.f32.partialorder %v6690, 0.0
  %vm6693 = vcmp.ge.f32.partialorder %v6691, 0.0
  %v6694 = vmul.f32 %v6690, 0.2
  %v6695 = vmul.f32 %v6691, 0.2
  %v6696 = vsel %vm6692, %v6690, %v6694
  %v6697 = vsel %vm6693, %v6691, %v6695
  %v6698 = vsub.f32 %v6696, %v6690
  %v6699 = vsub.f32 %v6697, %v6691
  %v6700 = vmul.f32 %v6698, %v6676
  %v6701 = vmul.f32 %v6699, %v6677
  %v6702 = vadd.f32 %v5808, %v6700
  %v6703 = vadd.f32 %v5813, %v6701
  %v6704 = vmul.f32 %v6698, %v6678
  %v6705 = vmul.f32 %v6699, %v6679
  %v6706 = vadd.f32 %v6114, %v6704
  %v6707 = vadd.f32 %v6119, %v6705
  %v6708 = vmul.f32 %v6698, %v6680
  %v6709 = vmul.f32 %v6699, %v6681
  %v6710 = vadd.f32 %v6420, %v6708
  %v6711 = vadd.f32 %v6425, %v6709
  %6712 = vmatprep.subr.mxu0 0.0
  %6713 = vmatpush1.msra.mxu0 %v106
  %6714 = vmatprep.subr.mxu0 0.0
  %6715 = vmatpush1.msra.mxu0 %v107
  %6716 = vmatprep.subr.mxu0 0.0
  %6717 = vmatpush1.msra.mxu0 %v108
  %6718 = vmatprep.subr.mxu0 0.0
  %6719 = vmatpush1.msra.mxu0 %v109
  %6720 = vmatprep.subr.mxu0 0.0
  %6721 = vmatpush1.msra.mxu0 %v110
  %6722 = vmatprep.subr.mxu0 0.0
  %6723 = vmatpush1.msra.mxu0 %v111
  %6724 = vmatprep.subr.mxu0 0.0
  %6725 = vmatpush1.msra.mxu0 %v112
  %6726 = vmatprep.subr.mxu0 0.0
  %6727 = vmatpush1.msra.mxu0 %v113
  %6728 = vmatprep.subr.mxu0 0.0
  %6729 = vmatpush1.msra.mxu0 %v114
  %6730 = vmatprep.subr.mxu0 0.0
  %6731 = vmatpush1.msra.mxu0 %v115
  %6732 = vmatprep.subr.mxu0 0.0
  %6733 = vmatpush1.msra.mxu0 %v116
  %6734 = vmatprep.subr.mxu0 0.0
  %6735 = vmatpush1.msra.mxu0 %v117
  %6736 = vmatprep.subr.mxu0 0.0
  %6737 = vmatpush1.msra.mxu0 %v118
  %6738 = vmatprep.subr.mxu0 0.0
  %6739 = vmatpush1.msra.mxu0 %v119
  %6740 = vmatprep.subr.mxu0 0.0
  %6741 = vmatpush1.msra.mxu0 %v120
  %6742 = vmatprep.subr.mxu0 0.0
  %6743 = vmatpush1.msra.mxu0 %v121
  %6744 = vmatprep.subr.mxu0 0.0
  %6745 = vmatpush1.msra.mxu0 0.0
  %6746 = vmatprep.subr.mxu0 0.0
  %6747 = vmatpush1.msra.mxu0 0.0
  %6748 = vmatprep.subr.mxu0 0.0
  %6749 = vmatpush1.msra.mxu0 0.0
  %6750 = vmatprep.subr.mxu0 0.0
  %6751 = vmatpush1.msra.mxu0 0.0
  %6752 = vmatprep.subr.mxu0 0.0
  %6753 = vmatpush1.msra.mxu0 0.0
  %6754 = vmatprep.subr.mxu0 0.0
  %6755 = vmatpush1.msra.mxu0 0.0
  %6756 = vmatprep.subr.mxu0 0.0
  %6757 = vmatpush1.msra.mxu0 0.0
  %6758 = vmatprep.subr.mxu0 0.0
  %6759 = vmatpush1.msra.mxu0 0.0
  %6760 = vmatprep.subr.mxu0 0.0
  %6761 = vmatpush1.msra.mxu0 0.0
  %6762 = vmatprep.subr.mxu0 0.0
  %6763 = vmatpush1.msra.mxu0 0.0
  %6764 = vmatprep.subr.mxu0 0.0
  %6765 = vmatpush1.msra.mxu0 0.0
  %6766 = vmatprep.subr.mxu0 0.0
  %6767 = vmatpush1.msra.mxu0 0.0
  %6768 = vmatprep.subr.mxu0 0.0
  %6769 = vmatpush1.msra.mxu0 0.0
  %6770 = vmatprep.subr.mxu0 0.0
  %6771 = vmatpush1.msra.mxu0 0.0
  %6772 = vmatprep.subr.mxu0 0.0
  %6773 = vmatpush1.msra.mxu0 0.0
  %6774 = vmatprep.subr.mxu0 0.0
  %6775 = vmatpush1.msra.mxu0 0.0
  %6776 = vmatprep.mubr.f32.mxu0 0.0
  %6777 = vmatmul.mubr.f32.gmra.mrb[0].mxu0 %v6702
  %v6778 = vpop.f32.mrb[0].mxu0
  %v6779 = vadd.f32 0.0, %v6778
  %v6780 = vpop.f32.mrb[0].mxu0
  %6781 = vmatprep.mubr.f32.mxu0 0.0
  %6782 = vmatmul.mubr.f32.gmra.mrb[0].mxu0 %v6703
  %v6783 = vpop.f32.mrb[0].mxu0
  %v6784 = vadd.f32 0.0, %v6783
  %v6785 = vpop.f32.mrb[0].mxu0
  %6786 = vdwg.mxu0
  %6791 = vrot.lane.b32.xlu0 %v3008, 112
  %v6792 = vpop.permute.xlu0 %6791
  %6793 = vrot.lane.b32.xlu0 %v3009, 112
  %v6794 = vpop.permute.xlu0 %6793
  %6795 = vrot.lane.b32.xlu0 %v3010, 112
  %v6796 = vpop.permute.xlu0 %6795
  %6797 = vrot.lane.b32.xlu0 %v3011, 112
  %v6798 = vpop.permute.xlu0 %6797
  %v6799 = vsel %vm1629, %v6792, 0
  %v6801 = vsel %vm1629, %v6794, 0
  %v6803 = vsel %vm1629, %v6796, 0
  %v6805 = vsel %vm1629, %v6798, 0
  %6807 = vmatprep.subr.mxu0 0.0
  %6808 = vmatpush1.msra.mxu0 %v6779
  %6809 = vmatprep.subr.mxu0 0.0
  %6810 = vmatpush1.msra.mxu0 %v6784
  %6811 = vmatprep.subr.mxu0 0.0
  %6812 = vmatpush1.msra.mxu0 0.0
  %6813 = vmatprep.subr.mxu0 0.0
  %6814 = vmatpush1.msra.mxu0 0.0
  %6815 = vmatprep.subr.mxu0 0.0
  %6816 = vmatpush1.msra.mxu0 0.0
  %6817 = vmatprep.subr.mxu0 0.0
  %6818 = vmatpush1.msra.mxu0 0.0
  %6819 = vmatprep.subr.mxu0 0.0
  %6820 = vmatpush1.msra.mxu0 0.0
  %6821 = vmatprep.subr.mxu0 0.0
  %6822 = vmatpush1.msra.mxu0 0.0
  %6823 = vmatprep.subr.mxu0 0.0
  %6824 = vmatpush1.msra.mxu0 0.0
  %6825 = vmatprep.subr.mxu0 0.0
  %6826 = vmatpush1.msra.mxu0 0.0
  %6827 = vmatprep.subr.mxu0 0.0
  %6828 = vmatpush1.msra.mxu0 0.0
  %6829 = vmatprep.subr.mxu0 0.0
  %6830 = vmatpush1.msra.mxu0 0.0
  %6831 = vmatprep.subr.mxu0 0.0
  %6832 = vmatpush1.msra.mxu0 0.0
  %6833 = vmatprep.subr.mxu0 0.0
  %6834 = vmatpush1.msra.mxu0 0.0
  %6835 = vmatprep.subr.mxu0 0.0
  %6836 = vmatpush1.msra.mxu0 0.0
  %6837 = vmatprep.subr.mxu0 0.0
  %6838 = vmatpush1.msra.mxu0 0.0
  %6839 = vmatprep.subr.mxu0 0.0
  %6840 = vmatpush1.msra.mxu0 0.0
  %6841 = vmatprep.subr.mxu0 0.0
  %6842 = vmatpush1.msra.mxu0 0.0
  %6843 = vmatprep.subr.mxu0 0.0
  %6844 = vmatpush1.msra.mxu0 0.0
  %6845 = vmatprep.subr.mxu0 0.0
  %6846 = vmatpush1.msra.mxu0 0.0
  %6847 = vmatprep.subr.mxu0 0.0
  %6848 = vmatpush1.msra.mxu0 0.0
  %6849 = vmatprep.subr.mxu0 0.0
  %6850 = vmatpush1.msra.mxu0 0.0
  %6851 = vmatprep.subr.mxu0 0.0
  %6852 = vmatpush1.msra.mxu0 0.0
  %6853 = vmatprep.subr.mxu0 0.0
  %6854 = vmatpush1.msra.mxu0 0.0
  %6855 = vmatprep.subr.mxu0 0.0
  %6856 = vmatpush1.msra.mxu0 0.0
  %6857 = vmatprep.subr.mxu0 0.0
  %6858 = vmatpush1.msra.mxu0 0.0
  %6859 = vmatprep.subr.mxu0 0.0
  %6860 = vmatpush1.msra.mxu0 0.0
  %6861 = vmatprep.subr.mxu0 0.0
  %6862 = vmatpush1.msra.mxu0 0.0
  %6863 = vmatprep.subr.mxu0 0.0
  %6864 = vmatpush1.msra.mxu0 0.0
  %6865 = vmatprep.subr.mxu0 0.0
  %6866 = vmatpush1.msra.mxu0 0.0
  %6867 = vmatprep.subr.mxu0 0.0
  %6868 = vmatpush1.msra.mxu0 0.0
  %6869 = vmatprep.subr.mxu0 0.0
  %6870 = vmatpush1.msra.mxu0 0.0
  %6871 = vmatprep.mubr.f32.mxu0 0.0
  %6872 = vmatmul.mubr.f32.gmra.mrb[0].mxu0 %v6799
  %v6873 = vpop.f32.mrb[0].mxu0
  %v6874 = vadd.f32 0.0, %v6873
  %v6875 = vpop.f32.mrb[0].mxu0
  %6876 = vmatprep.mubr.f32.mxu0 0.0
  %6877 = vmatmul.mubr.f32.gmra.mrb[0].mxu0 %v6801
  %v6878 = vpop.f32.mrb[0].mxu0
  %v6879 = vadd.f32 0.0, %v6878
  %v6880 = vpop.f32.mrb[0].mxu0
  %6881 = vmatprep.mubr.f32.mxu0 0.0
  %6882 = vmatmul.mubr.f32.gmra.mrb[0].mxu0 %v6803
  %v6883 = vpop.f32.mrb[0].mxu0
  %v6884 = vadd.f32 0.0, %v6883
  %v6885 = vpop.f32.mrb[0].mxu0
  %6886 = vmatprep.mubr.f32.mxu0 0.0
  %6887 = vmatmul.mubr.f32.gmra.mrb[0].mxu0 %v6805
  %v6888 = vpop.f32.mrb[0].mxu0
  %v6889 = vadd.f32 0.0, %v6888
  %v6890 = vpop.f32.mrb[0].mxu0
  %6891 = vdwg.mxu0
  %6892 = vmatprep.subr.mxu0 0.0
  %6893 = vmatpush1.msra.mxu0 %v106
  %6894 = vmatprep.subr.mxu0 0.0
  %6895 = vmatpush1.msra.mxu0 %v107
  %6896 = vmatprep.subr.mxu0 0.0
  %6897 = vmatpush1.msra.mxu0 %v108
  %6898 = vmatprep.subr.mxu0 0.0
  %6899 = vmatpush1.msra.mxu0 %v109
  %6900 = vmatprep.subr.mxu0 0.0
  %6901 = vmatpush1.msra.mxu0 %v110
  %6902 = vmatprep.subr.mxu0 0.0
  %6903 = vmatpush1.msra.mxu0 %v111
  %6904 = vmatprep.subr.mxu0 0.0
  %6905 = vmatpush1.msra.mxu0 %v112
  %6906 = vmatprep.subr.mxu0 0.0
  %6907 = vmatpush1.msra.mxu0 %v113
  %6908 = vmatprep.subr.mxu0 0.0
  %6909 = vmatpush1.msra.mxu0 %v114
  %6910 = vmatprep.subr.mxu0 0.0
  %6911 = vmatpush1.msra.mxu0 %v115
  %6912 = vmatprep.subr.mxu0 0.0
  %6913 = vmatpush1.msra.mxu0 %v116
  %6914 = vmatprep.subr.mxu0 0.0
  %6915 = vmatpush1.msra.mxu0 %v117
  %6916 = vmatprep.subr.mxu0 0.0
  %6917 = vmatpush1.msra.mxu0 %v118
  %6918 = vmatprep.subr.mxu0 0.0
  %6919 = vmatpush1.msra.mxu0 %v119
  %6920 = vmatprep.subr.mxu0 0.0
  %6921 = vmatpush1.msra.mxu0 %v120
  %6922 = vmatprep.subr.mxu0 0.0
  %6923 = vmatpush1.msra.mxu0 %v121
  %6924 = vmatprep.subr.mxu0 0.0
  %6925 = vmatpush1.msra.mxu0 0.0
  %6926 = vmatprep.subr.mxu0 0.0
  %6927 = vmatpush1.msra.mxu0 0.0
  %6928 = vmatprep.subr.mxu0 0.0
  %6929 = vmatpush1.msra.mxu0 0.0
  %6930 = vmatprep.subr.mxu0 0.0
  %6931 = vmatpush1.msra.mxu0 0.0
  %6932 = vmatprep.subr.mxu0 0.0
  %6933 = vmatpush1.msra.mxu0 0.0
  %6934 = vmatprep.subr.mxu0 0.0
  %6935 = vmatpush1.msra.mxu0 0.0
  %6936 = vmatprep.subr.mxu0 0.0
  %6937 = vmatpush1.msra.mxu0 0.0
  %6938 = vmatprep.subr.mxu0 0.0
  %6939 = vmatpush1.msra.mxu0 0.0
  %6940 = vmatprep.subr.mxu0 0.0
  %6941 = vmatpush1.msra.mxu0 0.0
  %6942 = vmatprep.subr.mxu0 0.0
  %6943 = vmatpush1.msra.mxu0 0.0
  %6944 = vmatprep.subr.mxu0 0.0
  %6945 = vmatpush1.msra.mxu0 0.0
  %6946 = vmatprep.subr.mxu0 0.0
  %6947 = vmatpush1.msra.mxu0 0.0
  %6948 = vmatprep.subr.mxu0 0.0
  %6949 = vmatpush1.msra.mxu0 0.0
  %6950 = vmatprep.subr.mxu0 0.0
  %6951 = vmatpush1.msra.mxu0 0.0
  %6952 = vmatprep.subr.mxu0 0.0
  %6953 = vmatpush1.msra.mxu0 0.0
  %6954 = vmatprep.subr.mxu0 0.0
  %6955 = vmatpush1.msra.mxu0 0.0
  %6956 = vmatprep.mubr.f32.mxu0 0.0
  %6957 = vmatmul.mubr.f32.gmra.mrb[0].mxu0 %v6706
  %v6958 = vpop.f32.mrb[0].mxu0
  %v6959 = vadd.f32 0.0, %v6958
  %v6960 = vpop.f32.mrb[0].mxu0
  %6961 = vmatprep.mubr.f32.mxu0 0.0
  %6962 = vmatmul.mubr.f32.gmra.mrb[0].mxu0 %v6707
  %v6963 = vpop.f32.mrb[0].mxu0
  %v6964 = vadd.f32 0.0, %v6963
  %v6965 = vpop.f32.mrb[0].mxu0
  %6966 = vdwg.mxu0
  %6967 = vmatprep.subr.mxu0 0.0
  %6968 = vmatpush1.msra.mxu0 %v6959
  %6969 = vmatprep.subr.mxu0 0.0
  %6970 = vmatpush1.msra.mxu0 %v6964
  %6971 = vmatprep.subr.mxu0 0.0
  %6972 = vmatpush1.msra.mxu0 0.0
  %6973 = vmatprep.subr.mxu0 0.0
  %6974 = vmatpush1.msra.mxu0 0.0
  %6975 = vmatprep.subr.mxu0 0.0
  %6976 = vmatpush1.msra.mxu0 0.0
  %6977 = vmatprep.subr.mxu0 0.0
  %6978 = vmatpush1.msra.mxu0 0.0
  %6979 = vmatprep.subr.mxu0 0.0
  %6980 = vmatpush1.msra.mxu0 0.0
  %6981 = vmatprep.subr.mxu0 0.0
  %6982 = vmatpush1.msra.mxu0 0.0
  %6983 = vmatprep.subr.mxu0 0.0
  %6984 = vmatpush1.msra.mxu0 0.0
  %6985 = vmatprep.subr.mxu0 0.0
  %6986 = vmatpush1.msra.mxu0 0.0
  %6987 = vmatprep.subr.mxu0 0.0
  %6988 = vmatpush1.msra.mxu0 0.0
  %6989 = vmatprep.subr.mxu0 0.0
  %6990 = vmatpush1.msra.mxu0 0.0
  %6991 = vmatprep.subr.mxu0 0.0
  %6992 = vmatpush1.msra.mxu0 0.0
  %6993 = vmatprep.subr.mxu0 0.0
  %6994 = vmatpush1.msra.mxu0 0.0
  %6995 = vmatprep.subr.mxu0 0.0
  %6996 = vmatpush1.msra.mxu0 0.0
  %6997 = vmatprep.subr.mxu0 0.0
  %6998 = vmatpush1.msra.mxu0 0.0
  %6999 = vmatprep.subr.mxu0 0.0
  %7000 = vmatpush1.msra.mxu0 0.0
  %7001 = vmatprep.subr.mxu0 0.0
  %7002 = vmatpush1.msra.mxu0 0.0
  %7003 = vmatprep.subr.mxu0 0.0
  %7004 = vmatpush1.msra.mxu0 0.0
  %7005 = vmatprep.subr.mxu0 0.0
  %7006 = vmatpush1.msra.mxu0 0.0
  %7007 = vmatprep.subr.mxu0 0.0
  %7008 = vmatpush1.msra.mxu0 0.0
  %7009 = vmatprep.subr.mxu0 0.0
  %7010 = vmatpush1.msra.mxu0 0.0
  %7011 = vmatprep.subr.mxu0 0.0
  %7012 = vmatpush1.msra.mxu0 0.0
  %7013 = vmatprep.subr.mxu0 0.0
  %7014 = vmatpush1.msra.mxu0 0.0
  %7015 = vmatprep.subr.mxu0 0.0
  %7016 = vmatpush1.msra.mxu0 0.0
  %7017 = vmatprep.subr.mxu0 0.0
  %7018 = vmatpush1.msra.mxu0 0.0
  %7019 = vmatprep.subr.mxu0 0.0
  %7020 = vmatpush1.msra.mxu0 0.0
  %7021 = vmatprep.subr.mxu0 0.0
  %7022 = vmatpush1.msra.mxu0 0.0
  %7023 = vmatprep.subr.mxu0 0.0
  %7024 = vmatpush1.msra.mxu0 0.0
  %7025 = vmatprep.subr.mxu0 0.0
  %7026 = vmatpush1.msra.mxu0 0.0
  %7027 = vmatprep.subr.mxu0 0.0
  %7028 = vmatpush1.msra.mxu0 0.0
  %7029 = vmatprep.subr.mxu0 0.0
  %7030 = vmatpush1.msra.mxu0 0.0
  %7031 = vmatprep.mubr.f32.mxu0 0.0
  %7032 = vmatmul.mubr.f32.gmra.mrb[0].mxu0 %v6799
  %v7033 = vpop.f32.mrb[0].mxu0
  %v7034 = vadd.f32 0.0, %v7033
  %v7035 = vpop.f32.mrb[0].mxu0
  %7036 = vmatprep.mubr.f32.mxu0 0.0
  %7037 = vmatmul.mubr.f32.gmra.mrb[0].mxu0 %v6801
  %v7038 = vpop.f32.mrb[0].mxu0
  %v7039 = vadd.f32 0.0, %v7038
  %v7040 = vpop.f32.mrb[0].mxu0
  %7041 = vmatprep.mubr.f32.mxu0 0.0
  %7042 = vmatmul.mubr.f32.gmra.mrb[0].mxu0 %v6803
  %v7043 = vpop.f32.mrb[0].mxu0
  %v7044 = vadd.f32 0.0, %v7043
  %v7045 = vpop.f32.mrb[0].mxu0
  %7046 = vmatprep.mubr.f32.mxu0 0.0
  %7047 = vmatmul.mubr.f32.gmra.mrb[0].mxu0 %v6805
  %v7048 = vpop.f32.mrb[0].mxu0
  %v7049 = vadd.f32 0.0, %v7048
  %v7050 = vpop.f32.mrb[0].mxu0
  %7051 = vdwg.mxu0
  %7052 = vmatprep.subr.mxu0 0.0
  %7053 = vmatpush1.msra.mxu0 %v106
  %7054 = vmatprep.subr.mxu0 0.0
  %7055 = vmatpush1.msra.mxu0 %v107
  %7056 = vmatprep.subr.mxu0 0.0
  %7057 = vmatpush1.msra.mxu0 %v108
  %7058 = vmatprep.subr.mxu0 0.0
  %7059 = vmatpush1.msra.mxu0 %v109
  %7060 = vmatprep.subr.mxu0 0.0
  %7061 = vmatpush1.msra.mxu0 %v110
  %7062 = vmatprep.subr.mxu0 0.0
  %7063 = vmatpush1.msra.mxu0 %v111
  %7064 = vmatprep.subr.mxu0 0.0
  %7065 = vmatpush1.msra.mxu0 %v112
  %7066 = vmatprep.subr.mxu0 0.0
  %7067 = vmatpush1.msra.mxu0 %v113
  %7068 = vmatprep.subr.mxu0 0.0
  %7069 = vmatpush1.msra.mxu0 %v114
  %7070 = vmatprep.subr.mxu0 0.0
  %7071 = vmatpush1.msra.mxu0 %v115
  %7072 = vmatprep.subr.mxu0 0.0
  %7073 = vmatpush1.msra.mxu0 %v116
  %7074 = vmatprep.subr.mxu0 0.0
  %7075 = vmatpush1.msra.mxu0 %v117
  %7076 = vmatprep.subr.mxu0 0.0
  %7077 = vmatpush1.msra.mxu0 %v118
  %7078 = vmatprep.subr.mxu0 0.0
  %7079 = vmatpush1.msra.mxu0 %v119
  %7080 = vmatprep.subr.mxu0 0.0
  %7081 = vmatpush1.msra.mxu0 %v120
  %7082 = vmatprep.subr.mxu0 0.0
  %7083 = vmatpush1.msra.mxu0 %v121
  %7084 = vmatprep.subr.mxu0 0.0
  %7085 = vmatpush1.msra.mxu0 0.0
  %7086 = vmatprep.subr.mxu0 0.0
  %7087 = vmatpush1.msra.mxu0 0.0
  %7088 = vmatprep.subr.mxu0 0.0
  %7089 = vmatpush1.msra.mxu0 0.0
  %7090 = vmatprep.subr.mxu0 0.0
  %7091 = vmatpush1.msra.mxu0 0.0
  %7092 = vmatprep.subr.mxu0 0.0
  %7093 = vmatpush1.msra.mxu0 0.0
  %7094 = vmatprep.subr.mxu0 0.0
  %7095 = vmatpush1.msra.mxu0 0.0
  %7096 = vmatprep.subr.mxu0 0.0
  %7097 = vmatpush1.msra.mxu0 0.0
  %7098 = vmatprep.subr.mxu0 0.0
  %7099 = vmatpush1.msra.mxu0 0.0
  %7100 = vmatprep.subr.mxu0 0.0
  %7101 = vmatpush1.msra.mxu0 0.0
  %7102 = vmatprep.subr.mxu0 0.0
  %7103 = vmatpush1.msra.mxu0 0.0
  %7104 = vmatprep.subr.mxu0 0.0
  %7105 = vmatpush1.msra.mxu0 0.0
  %7106 = vmatprep.subr.mxu0 0.0
  %7107 = vmatpush1.msra.mxu0 0.0
  %7108 = vmatprep.subr.mxu0 0.0
  %7109 = vmatpush1.msra.mxu0 0.0
  %7110 = vmatprep.subr.mxu0 0.0
  %7111 = vmatpush1.msra.mxu0 0.0
  %7112 = vmatprep.subr.mxu0 0.0
  %7113 = vmatpush1.msra.mxu0 0.0
  %7114 = vmatprep.subr.mxu0 0.0
  %7115 = vmatpush1.msra.mxu0 0.0
  %7116 = vmatprep.mubr.f32.mxu0 0.0
  %7117 = vmatmul.mubr.f32.gmra.mrb[0].mxu0 %v6710
  %v7118 = vpop.f32.mrb[0].mxu0
  %v7119 = vadd.f32 0.0, %v7118
  %v7120 = vpop.f32.mrb[0].mxu0
  %7121 = vmatprep.mubr.f32.mxu0 0.0
  %7122 = vmatmul.mubr.f32.gmra.mrb[0].mxu0 %v6711
  %v7123 = vpop.f32.mrb[0].mxu0
  %v7124 = vadd.f32 0.0, %v7123
  %v7125 = vpop.f32.mrb[0].mxu0
  %7126 = vdwg.mxu0
  %7127 = vmatprep.subr.mxu0 0.0
  %7128 = vmatpush1.msra.mxu0 %v7119
  %7129 = vmatprep.subr.mxu0 0.0
  %7130 = vmatpush1.msra.mxu0 %v7124
  %7131 = vmatprep.subr.mxu0 0.0
  %7132 = vmatpush1.msra.mxu0 0.0
  %7133 = vmatprep.subr.mxu0 0.0
  %7134 = vmatpush1.msra.mxu0 0.0
  %7135 = vmatprep.subr.mxu0 0.0
  %7136 = vmatpush1.msra.mxu0 0.0
  %7137 = vmatprep.subr.mxu0 0.0
  %7138 = vmatpush1.msra.mxu0 0.0
  %7139 = vmatprep.subr.mxu0 0.0
  %7140 = vmatpush1.msra.mxu0 0.0
  %7141 = vmatprep.subr.mxu0 0.0
  %7142 = vmatpush1.msra.mxu0 0.0
  %7143 = vmatprep.subr.mxu0 0.0
  %7144 = vmatpush1.msra.mxu0 0.0
  %7145 = vmatprep.subr.mxu0 0.0
  %7146 = vmatpush1.msra.mxu0 0.0
  %7147 = vmatprep.subr.mxu0 0.0
  %7148 = vmatpush1.msra.mxu0 0.0
  %7149 = vmatprep.subr.mxu0 0.0
  %7150 = vmatpush1.msra.mxu0 0.0
  %7151 = vmatprep.subr.mxu0 0.0
  %7152 = vmatpush1.msra.mxu0 0.0
  %7153 = vmatprep.subr.mxu0 0.0
  %7154 = vmatpush1.msra.mxu0 0.0
  %7155 = vmatprep.subr.mxu0 0.0
  %7156 = vmatpush1.msra.mxu0 0.0
  %7157 = vmatprep.subr.mxu0 0.0
  %7158 = vmatpush1.msra.mxu0 0.0
  %7159 = vmatprep.subr.mxu0 0.0
  %7160 = vmatpush1.msra.mxu0 0.0
  %7161 = vmatprep.subr.mxu0 0.0
  %7162 = vmatpush1.msra.mxu0 0.0
  %7163 = vmatprep.subr.mxu0 0.0
  %7164 = vmatpush1.msra.mxu0 0.0
  %7165 = vmatprep.subr.mxu0 0.0
  %7166 = vmatpush1.msra.mxu0 0.0
  %7167 = vmatprep.subr.mxu0 0.0
  %7168 = vmatpush1.msra.mxu0 0.0
  %7169 = vmatprep.subr.mxu0 0.0
  %7170 = vmatpush1.msra.mxu0 0.0
  %7171 = vmatprep.subr.mxu0 0.0
  %7172 = vmatpush1.msra.mxu0 0.0
  %7173 = vmatprep.subr.mxu0 0.0
  %7174 = vmatpush1.msra.mxu0 0.0
  %7175 = vmatprep.subr.mxu0 0.0
  %7176 = vmatpush1.msra.mxu0 0.0
  %7177 = vmatprep.subr.mxu0 0.0
  %7178 = vmatpush1.msra.mxu0 0.0
  %7179 = vmatprep.subr.mxu0 0.0
  %7180 = vmatpush1.msra.mxu0 0.0
  %7181 = vmatprep.subr.mxu0 0.0
  %7182 = vmatpush1.msra.mxu0 0.0
  %7183 = vmatprep.subr.mxu0 0.0
  %7184 = vmatpush1.msra.mxu0 0.0
  %7185 = vmatprep.subr.mxu0 0.0
  %7186 = vmatpush1.msra.mxu0 0.0
  %7187 = vmatprep.subr.mxu0 0.0
  %7188 = vmatpush1.msra.mxu0 0.0
  %7189 = vmatprep.subr.mxu0 0.0
  %7190 = vmatpush1.msra.mxu0 0.0
  %7191 = vmatprep.mubr.f32.mxu0 0.0
  %7192 = vmatmul.mubr.f32.gmra.mrb[0].mxu0 %v6799
  %v7193 = vpop.f32.mrb[0].mxu0
  %v7194 = vadd.f32 0.0, %v7193
  %v7195 = vpop.f32.mrb[0].mxu0
  %7196 = vmatprep.mubr.f32.mxu0 0.0
  %7197 = vmatmul.mubr.f32.gmra.mrb[0].mxu0 %v6801
  %v7198 = vpop.f32.mrb[0].mxu0
  %v7199 = vadd.f32 0.0, %v7198
  %v7200 = vpop.f32.mrb[0].mxu0
  %7201 = vmatprep.mubr.f32.mxu0 0.0
  %7202 = vmatmul.mubr.f32.gmra.mrb[0].mxu0 %v6803
  %v7203 = vpop.f32.mrb[0].mxu0
  %v7204 = vadd.f32 0.0, %v7203
  %v7205 = vpop.f32.mrb[0].mxu0
  %7206 = vmatprep.mubr.f32.mxu0 0.0
  %7207 = vmatmul.mubr.f32.gmra.mrb[0].mxu0 %v6805
  %v7208 = vpop.f32.mrb[0].mxu0
  %v7209 = vadd.f32 0.0, %v7208
  %v7210 = vpop.f32.mrb[0].mxu0
  %7211 = vdwg.mxu0
  %v7212 = vsel %vm1629, %v3008, 0
  %v7214 = vsel %vm1629, %v3009, 0
  %v7216 = vsel %vm1629, %v3010, 0
  %v7218 = vsel %vm1629, %v3011, 0
  %7220 = vmatprep.subr.mxu0 0.0
  %7221 = vmatpush1.msra.mxu0 %v4817
  %7222 = vmatprep.subr.mxu0 0.0
  %7223 = vmatpush1.msra.mxu0 %v4822
  %7224 = vmatprep.subr.mxu0 0.0
  %7225 = vmatpush1.msra.mxu0 0.0
  %7226 = vmatprep.subr.mxu0 0.0
  %7227 = vmatpush1.msra.mxu0 0.0
  %7228 = vmatprep.subr.mxu0 0.0
  %7229 = vmatpush1.msra.mxu0 0.0
  %7230 = vmatprep.subr.mxu0 0.0
  %7231 = vmatpush1.msra.mxu0 0.0
  %7232 = vmatprep.subr.mxu0 0.0
  %7233 = vmatpush1.msra.mxu0 0.0
  %7234 = vmatprep.subr.mxu0 0.0
  %7235 = vmatpush1.msra.mxu0 0.0
  %7236 = vmatprep.subr.mxu0 0.0
  %7237 = vmatpush1.msra.mxu0 0.0
  %7238 = vmatprep.subr.mxu0 0.0
  %7239 = vmatpush1.msra.mxu0 0.0
  %7240 = vmatprep.subr.mxu0 0.0
  %7241 = vmatpush1.msra.mxu0 0.0
  %7242 = vmatprep.subr.mxu0 0.0
  %7243 = vmatpush1.msra.mxu0 0.0
  %7244 = vmatprep.subr.mxu0 0.0
  %7245 = vmatpush1.msra.mxu0 0.0
  %7246 = vmatprep.subr.mxu0 0.0
  %7247 = vmatpush1.msra.mxu0 0.0
  %7248 = vmatprep.subr.mxu0 0.0
  %7249 = vmatpush1.msra.mxu0 0.0
  %7250 = vmatprep.subr.mxu0 0.0
  %7251 = vmatpush1.msra.mxu0 0.0
  %7252 = vmatprep.subr.mxu0 0.0
  %7253 = vmatpush1.msra.mxu0 0.0
  %7254 = vmatprep.subr.mxu0 0.0
  %7255 = vmatpush1.msra.mxu0 0.0
  %7256 = vmatprep.subr.mxu0 0.0
  %7257 = vmatpush1.msra.mxu0 0.0
  %7258 = vmatprep.subr.mxu0 0.0
  %7259 = vmatpush1.msra.mxu0 0.0
  %7260 = vmatprep.subr.mxu0 0.0
  %7261 = vmatpush1.msra.mxu0 0.0
  %7262 = vmatprep.subr.mxu0 0.0
  %7263 = vmatpush1.msra.mxu0 0.0
  %7264 = vmatprep.subr.mxu0 0.0
  %7265 = vmatpush1.msra.mxu0 0.0
  %7266 = vmatprep.subr.mxu0 0.0
  %7267 = vmatpush1.msra.mxu0 0.0
  %7268 = vmatprep.subr.mxu0 0.0
  %7269 = vmatpush1.msra.mxu0 0.0
  %7270 = vmatprep.subr.mxu0 0.0
  %7271 = vmatpush1.msra.mxu0 0.0
  %7272 = vmatprep.subr.mxu0 0.0
  %7273 = vmatpush1.msra.mxu0 0.0
  %7274 = vmatprep.subr.mxu0 0.0
  %7275 = vmatpush1.msra.mxu0 0.0
  %7276 = vmatprep.subr.mxu0 0.0
  %7277 = vmatpush1.msra.mxu0 0.0
  %7278 = vmatprep.subr.mxu0 0.0
  %7279 = vmatpush1.msra.mxu0 0.0
  %7280 = vmatprep.subr.mxu0 0.0
  %7281 = vmatpush1.msra.mxu0 0.0
  %7282 = vmatprep.subr.mxu0 0.0
  %7283 = vmatpush1.msra.mxu0 0.0
  %7284 = vmatprep.mubr.f32.mxu0 0.0
  %7285 = vmatmul.mubr.f32.gmra.mrb[0].mxu0 %v7212
  %v7286 = vpop.f32.mrb[0].mxu0
  %v7287 = vadd.f32 %v6874, %v7286
  %v7288 = vpop.f32.mrb[0].mxu0
  %7289 = vmatprep.mubr.f32.mxu0 0.0
  %7290 = vmatmul.mubr.f32.gmra.mrb[0].mxu0 %v7214
  %v7291 = vpop.f32.mrb[0].mxu0
  %v7292 = vadd.f32 %v6879, %v7291
  %v7293 = vpop.f32.mrb[0].mxu0
  %7294 = vmatprep.mubr.f32.mxu0 0.0
  %7295 = vmatmul.mubr.f32.gmra.mrb[0].mxu0 %v7216
  %v7296 = vpop.f32.mrb[0].mxu0
  %v7297 = vadd.f32 %v6884, %v7296
  %v7298 = vpop.f32.mrb[0].mxu0
  %7299 = vmatprep.mubr.f32.mxu0 0.0
  %7300 = vmatmul.mubr.f32.gmra.mrb[0].mxu0 %v7218
  %v7301 = vpop.f32.mrb[0].mxu0
  %v7302 = vadd.f32 %v6889, %v7301
  %v7303 = vpop.f32.mrb[0].mxu0
  %7304 = vdwg.mxu0
  %7305 = vmatprep.subr.mxu0 0.0
  %7306 = vmatpush1.msra.mxu0 %v4892
  %7307 = vmatprep.subr.mxu0 0.0
  %7308 = vmatpush1.msra.mxu0 %v4897
  %7309 = vmatprep.subr.mxu0 0.0
  %7310 = vmatpush1.msra.mxu0 0.0
  %7311 = vmatprep.subr.mxu0 0.0
  %7312 = vmatpush1.msra.mxu0 0.0
  %7313 = vmatprep.subr.mxu0 0.0
  %7314 = vmatpush1.msra.mxu0 0.0
  %7315 = vmatprep.subr.mxu0 0.0
  %7316 = vmatpush1.msra.mxu0 0.0
  %7317 = vmatprep.subr.mxu0 0.0
  %7318 = vmatpush1.msra.mxu0 0.0
  %7319 = vmatprep.subr.mxu0 0.0
  %7320 = vmatpush1.msra.mxu0 0.0
  %7321 = vmatprep.subr.mxu0 0.0
  %7322 = vmatpush1.msra.mxu0 0.0
  %7323 = vmatprep.subr.mxu0 0.0
  %7324 = vmatpush1.msra.mxu0 0.0
  %7325 = vmatprep.subr.mxu0 0.0
  %7326 = vmatpush1.msra.mxu0 0.0
  %7327 = vmatprep.subr.mxu0 0.0
  %7328 = vmatpush1.msra.mxu0 0.0
  %7329 = vmatprep.subr.mxu0 0.0
  %7330 = vmatpush1.msra.mxu0 0.0
  %7331 = vmatprep.subr.mxu0 0.0
  %7332 = vmatpush1.msra.mxu0 0.0
  %7333 = vmatprep.subr.mxu0 0.0
  %7334 = vmatpush1.msra.mxu0 0.0
  %7335 = vmatprep.subr.mxu0 0.0
  %7336 = vmatpush1.msra.mxu0 0.0
  %7337 = vmatprep.subr.mxu0 0.0
  %7338 = vmatpush1.msra.mxu0 0.0
  %7339 = vmatprep.subr.mxu0 0.0
  %7340 = vmatpush1.msra.mxu0 0.0
  %7341 = vmatprep.subr.mxu0 0.0
  %7342 = vmatpush1.msra.mxu0 0.0
  %7343 = vmatprep.subr.mxu0 0.0
  %7344 = vmatpush1.msra.mxu0 0.0
  %7345 = vmatprep.subr.mxu0 0.0
  %7346 = vmatpush1.msra.mxu0 0.0
  %7347 = vmatprep.subr.mxu0 0.0
  %7348 = vmatpush1.msra.mxu0 0.0
  %7349 = vmatprep.subr.mxu0 0.0
  %7350 = vmatpush1.msra.mxu0 0.0
  %7351 = vmatprep.subr.mxu0 0.0
  %7352 = vmatpush1.msra.mxu0 0.0
  %7353 = vmatprep.subr.mxu0 0.0
  %7354 = vmatpush1.msra.mxu0 0.0
  %7355 = vmatprep.subr.mxu0 0.0
  %7356 = vmatpush1.msra.mxu0 0.0
  %7357 = vmatprep.subr.mxu0 0.0
  %7358 = vmatpush1.msra.mxu0 0.0
  %7359 = vmatprep.subr.mxu0 0.0
  %7360 = vmatpush1.msra.mxu0 0.0
  %7361 = vmatprep.subr.mxu0 0.0
  %7362 = vmatpush1.msra.mxu0 0.0
  %7363 = vmatprep.subr.mxu0 0.0
  %7364 = vmatpush1.msra.mxu0 0.0
  %7365 = vmatprep.subr.mxu0 0.0
  %7366 = vmatpush1.msra.mxu0 0.0
  %7367 = vmatprep.subr.mxu0 0.0
  %7368 = vmatpush1.msra.mxu0 0.0
  %7369 = vmatprep.mubr.f32.mxu0 0.0
  %7370 = vmatmul.mubr.f32.gmra.mrb[0].mxu0 %v7212
  %v7371 = vpop.f32.mrb[0].mxu0
  %v7372 = vadd.f32 %v7034, %v7371
  %v7373 = vpop.f32.mrb[0].mxu0
  %7374 = vmatprep.mubr.f32.mxu0 0.0
  %7375 = vmatmul.mubr.f32.gmra.mrb[0].mxu0 %v7214
  %v7376 = vpop.f32.mrb[0].mxu0
  %v7377 = vadd.f32 %v7039, %v7376
  %v7378 = vpop.f32.mrb[0].mxu0
  %7379 = vmatprep.mubr.f32.mxu0 0.0
  %7380 = vmatmul.mubr.f32.gmra.mrb[0].mxu0 %v7216
  %v7381 = vpop.f32.mrb[0].mxu0
  %v7382 = vadd.f32 %v7044, %v7381
  %v7383 = vpop.f32.mrb[0].mxu0
  %7384 = vmatprep.mubr.f32.mxu0 0.0
  %7385 = vmatmul.mubr.f32.gmra.mrb[0].mxu0 %v7218
  %v7386 = vpop.f32.mrb[0].mxu0
  %v7387 = vadd.f32 %v7049, %v7386
  %v7388 = vpop.f32.mrb[0].mxu0
  %7389 = vdwg.mxu0
  %7390 = vmatprep.subr.mxu0 0.0
  %7391 = vmatpush1.msra.mxu0 %v4967
  %7392 = vmatprep.subr.mxu0 0.0
  %7393 = vmatpush1.msra.mxu0 %v4972
  %7394 = vmatprep.subr.mxu0 0.0
  %7395 = vmatpush1.msra.mxu0 0.0
  %7396 = vmatprep.subr.mxu0 0.0
  %7397 = vmatpush1.msra.mxu0 0.0
  %7398 = vmatprep.subr.mxu0 0.0
  %7399 = vmatpush1.msra.mxu0 0.0
  %7400 = vmatprep.subr.mxu0 0.0
  %7401 = vmatpush1.msra.mxu0 0.0
  %7402 = vmatprep.subr.mxu0 0.0
  %7403 = vmatpush1.msra.mxu0 0.0
  %7404 = vmatprep.subr.mxu0 0.0
  %7405 = vmatpush1.msra.mxu0 0.0
  %7406 = vmatprep.subr.mxu0 0.0
  %7407 = vmatpush1.msra.mxu0 0.0
  %7408 = vmatprep.subr.mxu0 0.0
  %7409 = vmatpush1.msra.mxu0 0.0
  %7410 = vmatprep.subr.mxu0 0.0
  %7411 = vmatpush1.msra.mxu0 0.0
  %7412 = vmatprep.subr.mxu0 0.0
  %7413 = vmatpush1.msra.mxu0 0.0
  %7414 = vmatprep.subr.mxu0 0.0
  %7415 = vmatpush1.msra.mxu0 0.0
  %7416 = vmatprep.subr.mxu0 0.0
  %7417 = vmatpush1.msra.mxu0 0.0
  %7418 = vmatprep.subr.mxu0 0.0
  %7419 = vmatpush1.msra.mxu0 0.0
  %7420 = vmatprep.subr.mxu0 0.0
  %7421 = vmatpush1.msra.mxu0 0.0
  %7422 = vmatprep.subr.mxu0 0.0
  %7423 = vmatpush1.msra.mxu0 0.0
  %7424 = vmatprep.subr.mxu0 0.0
  %7425 = vmatpush1.msra.mxu0 0.0
  %7426 = vmatprep.subr.mxu0 0.0
  %7427 = vmatpush1.msra.mxu0 0.0
  %7428 = vmatprep.subr.mxu0 0.0
  %7429 = vmatpush1.msra.mxu0 0.0
  %7430 = vmatprep.subr.mxu0 0.0
  %7431 = vmatpush1.msra.mxu0 0.0
  %7432 = vmatprep.subr.mxu0 0.0
  %7433 = vmatpush1.msra.mxu0 0.0
  %7434 = vmatprep.subr.mxu0 0.0
  %7435 = vmatpush1.msra.mxu0 0.0
  %7436 = vmatprep.subr.mxu0 0.0
  %7437 = vmatpush1.msra.mxu0 0.0
  %7438 = vmatprep.subr.mxu0 0.0
  %7439 = vmatpush1.msra.mxu0 0.0
  %7440 = vmatprep.subr.mxu0 0.0
  %7441 = vmatpush1.msra.mxu0 0.0
  %7442 = vmatprep.subr.mxu0 0.0
  %7443 = vmatpush1.msra.mxu0 0.0
  %7444 = vmatprep.subr.mxu0 0.0
  %7445 = vmatpush1.msra.mxu0 0.0
  %7446 = vmatprep.subr.mxu0 0.0
  %7447 = vmatpush1.msra.mxu0 0.0
  %7448 = vmatprep.subr.mxu0 0.0
  %7449 = vmatpush1.msra.mxu0 0.0
  %7450 = vmatprep.subr.mxu0 0.0
  %7451 = vmatpush1.msra.mxu0 0.0
  %7452 = vmatprep.subr.mxu0 0.0
  %7453 = vmatpush1.msra.mxu0 0.0
  %7454 = vmatprep.mubr.f32.mxu0 0.0
  %7455 = vmatmul.mubr.f32.gmra.mrb[0].mxu0 %v7212
  %v7456 = vpop.f32.mrb[0].mxu0
  %v7457 = vadd.f32 %v7194, %v7456
  %v7458 = vpop.f32.mrb[0].mxu0
  %7459 = vmatprep.mubr.f32.mxu0 0.0
  %7460 = vmatmul.mubr.f32.gmra.mrb[0].mxu0 %v7214
  %v7461 = vpop.f32.mrb[0].mxu0
  %v7462 = vadd.f32 %v7199, %v7461
  %v7463 = vpop.f32.mrb[0].mxu0
  %7464 = vmatprep.mubr.f32.mxu0 0.0
  %7465 = vmatmul.mubr.f32.gmra.mrb[0].mxu0 %v7216
  %v7466 = vpop.f32.mrb[0].mxu0
  %v7467 = vadd.f32 %v7204, %v7466
  %v7468 = vpop.f32.mrb[0].mxu0
  %7469 = vmatprep.mubr.f32.mxu0 0.0
  %7470 = vmatmul.mubr.f32.gmra.mrb[0].mxu0 %v7218
  %v7471 = vpop.f32.mrb[0].mxu0
  %v7472 = vadd.f32 %v7209, %v7471
  %v7473 = vpop.f32.mrb[0].mxu0
  %7474 = vdwg.mxu0
  %7475 = vst.msk [vmem:[%s10] sm:$0xff] %vm3690, %v7287
  %7476 = vst.msk [vmem:[%s10 + $0x8] sm:$0xff] %vm3690, %v7292
  %7477 = vst.msk [vmem:[%s10 + $0x10] sm:$0xff] %vm3690, %v7297
  %7478 = vst.msk [vmem:[%s10 + $0x18] sm:$0xff] %vm3690, %v7302
  %s7479 = scalar_lea.vmem %s10, 32
  %7480 = vst.msk [vmem:[%s7479] sm:$0xff] %vm3690, %v7372
  %7481 = vst.msk [vmem:[%s7479 + $0x8] sm:$0xff] %vm3690, %v7377
  %7482 = vst.msk [vmem:[%s7479 + $0x10] sm:$0xff] %vm3690, %v7382
  %7483 = vst.msk [vmem:[%s7479 + $0x18] sm:$0xff] %vm3690, %v7387
  %s7484 = scalar_lea.vmem %s10, 64
  %7485 = vst.msk [vmem:[%s7484] sm:$0xff] %vm3690, %v7457
  %7486 = vst.msk [vmem:[%s7484 + $0x8] sm:$0xff] %vm3690, %v7462
  %7487 = vst.msk [vmem:[%s7484 + $0x10] sm:$0xff] %vm3690, %v7467
  %7488 = vst.msk [vmem:[%s7484 + $0x18] sm:$0xff] %vm3690, %v7472
  %v7489 = vld [vmem:[%s9] sm:$0xff]
  %v7490 = vld [vmem:[%s9 + $0x8] sm:$0xff]
  %v7491 = vld [vmem:[%s9 + $0x10] sm:$0xff]
  %v7492 = vld [vmem:[%s9 + $0x18] sm:$0xff]
  %vm7493 = vcmask 261120
  %v7495 = vsel %vm7493, %v7489, 0
  %v7498 = vsel %vm7493, %v7490, 0
  %v7501 = vsel %vm7493, %v7491, 0
  %v7504 = vsel %vm7493, %v7492, 0
  %7506 = vmatprep.subr.mxu0 0.0
  %7507 = vmatpush1.msra.mxu0 %v7287
  %7508 = vmatprep.subr.mxu0 0.0
  %7509 = vmatpush1.msra.mxu0 %v7292
  %7510 = vmatprep.subr.mxu0 0.0
  %7511 = vmatpush1.msra.mxu0 %v7297
  %7512 = vmatprep.subr.mxu0 0.0
  %7513 = vmatpush1.msra.mxu0 %v7302
  %7514 = vmatprep.subr.mxu0 0.0
  %7515 = vmatpush1.msra.mxu0 0.0
  %7516 = vmatprep.subr.mxu0 0.0
  %7517 = vmatpush1.msra.mxu0 0.0
  %7518 = vmatprep.subr.mxu0 0.0
  %7519 = vmatpush1.msra.mxu0 0.0
  %7520 = vmatprep.subr.mxu0 0.0
  %7521 = vmatpush1.msra.mxu0 0.0
  %7522 = vmatprep.subr.mxu0 0.0
  %7523 = vmatpush1.msra.mxu0 0.0
  %7524 = vmatprep.subr.mxu0 0.0
  %7525 = vmatpush1.msra.mxu0 0.0
  %7526 = vmatprep.subr.mxu0 0.0
  %7527 = vmatpush1.msra.mxu0 0.0
  %7528 = vmatprep.subr.mxu0 0.0
  %7529 = vmatpush1.msra.mxu0 0.0
  %7530 = vmatprep.subr.mxu0 0.0
  %7531 = vmatpush1.msra.mxu0 0.0
  %7532 = vmatprep.subr.mxu0 0.0
  %7533 = vmatpush1.msra.mxu0 0.0
  %7534 = vmatprep.subr.mxu0 0.0
  %7535 = vmatpush1.msra.mxu0 0.0
  %7536 = vmatprep.subr.mxu0 0.0
  %7537 = vmatpush1.msra.mxu0 0.0
  %7538 = vmatprep.subr.mxu0 0.0
  %7539 = vmatpush1.msra.mxu0 0.0
  %7540 = vmatprep.subr.mxu0 0.0
  %7541 = vmatpush1.msra.mxu0 0.0
  %7542 = vmatprep.subr.mxu0 0.0
  %7543 = vmatpush1.msra.mxu0 0.0
  %7544 = vmatprep.subr.mxu0 0.0
  %7545 = vmatpush1.msra.mxu0 0.0
  %7546 = vmatprep.subr.mxu0 0.0
  %7547 = vmatpush1.msra.mxu0 0.0
  %7548 = vmatprep.subr.mxu0 0.0
  %7549 = vmatpush1.msra.mxu0 0.0
  %7550 = vmatprep.subr.mxu0 0.0
  %7551 = vmatpush1.msra.mxu0 0.0
  %7552 = vmatprep.subr.mxu0 0.0
  %7553 = vmatpush1.msra.mxu0 0.0
  %7554 = vmatprep.subr.mxu0 0.0
  %7555 = vmatpush1.msra.mxu0 0.0
  %7556 = vmatprep.subr.mxu0 0.0
  %7557 = vmatpush1.msra.mxu0 0.0
  %7558 = vmatprep.subr.mxu0 0.0
  %7559 = vmatpush1.msra.mxu0 0.0
  %7560 = vmatprep.subr.mxu0 0.0
  %7561 = vmatpush1.msra.mxu0 0.0
  %7562 = vmatprep.subr.mxu0 0.0
  %7563 = vmatpush1.msra.mxu0 0.0
  %7564 = vmatprep.subr.mxu0 0.0
  %7565 = vmatpush1.msra.mxu0 0.0
  %7566 = vmatprep.subr.mxu0 0.0
  %7567 = vmatpush1.msra.mxu0 0.0
  %7568 = vmatprep.subr.mxu0 0.0
  %7569 = vmatpush1.msra.mxu0 0.0
  %7570 = vmatprep.mubr.f32.mxu0 0.0
  %7571 = vmatmul.mubr.f32.gmra.mrb[0].mxu0 %v7495
  %v7572 = vpop.f32.mrb[0].mxu0
  %v7573 = vadd.f32 0.0, %v7572
  %v7574 = vpop.f32.mrb[0].mxu0
  %7575 = vmatprep.mubr.f32.mxu0 0.0
  %7576 = vmatmul.mubr.f32.gmra.mrb[0].mxu0 %v7498
  %v7577 = vpop.f32.mrb[0].mxu0
  %v7578 = vadd.f32 0.0, %v7577
  %v7579 = vpop.f32.mrb[0].mxu0
  %7580 = vmatprep.mubr.f32.mxu0 0.0
  %7581 = vmatmul.mubr.f32.gmra.mrb[0].mxu0 %v7501
  %v7582 = vpop.f32.mrb[0].mxu0
  %v7583 = vadd.f32 0.0, %v7582
  %v7584 = vpop.f32.mrb[0].mxu0
  %7585 = vmatprep.mubr.f32.mxu0 0.0
  %7586 = vmatmul.mubr.f32.gmra.mrb[0].mxu0 %v7504
  %v7587 = vpop.f32.mrb[0].mxu0
  %v7588 = vadd.f32 0.0, %v7587
  %v7589 = vpop.f32.mrb[0].mxu0
  %7590 = vdwg.mxu0
  %7591 = vmatprep.subr.mxu0 0.0
  %7592 = vmatpush1.msra.mxu0 %v7372
  %7593 = vmatprep.subr.mxu0 0.0
  %7594 = vmatpush1.msra.mxu0 %v7377
  %7595 = vmatprep.subr.mxu0 0.0
  %7596 = vmatpush1.msra.mxu0 %v7382
  %7597 = vmatprep.subr.mxu0 0.0
  %7598 = vmatpush1.msra.mxu0 %v7387
  %7599 = vmatprep.subr.mxu0 0.0
  %7600 = vmatpush1.msra.mxu0 0.0
  %7601 = vmatprep.subr.mxu0 0.0
  %7602 = vmatpush1.msra.mxu0 0.0
  %7603 = vmatprep.subr.mxu0 0.0
  %7604 = vmatpush1.msra.mxu0 0.0
  %7605 = vmatprep.subr.mxu0 0.0
  %7606 = vmatpush1.msra.mxu0 0.0
  %7607 = vmatprep.subr.mxu0 0.0
  %7608 = vmatpush1.msra.mxu0 0.0
  %7609 = vmatprep.subr.mxu0 0.0
  %7610 = vmatpush1.msra.mxu0 0.0
  %7611 = vmatprep.subr.mxu0 0.0
  %7612 = vmatpush1.msra.mxu0 0.0
  %7613 = vmatprep.subr.mxu0 0.0
  %7614 = vmatpush1.msra.mxu0 0.0
  %7615 = vmatprep.subr.mxu0 0.0
  %7616 = vmatpush1.msra.mxu0 0.0
  %7617 = vmatprep.subr.mxu0 0.0
  %7618 = vmatpush1.msra.mxu0 0.0
  %7619 = vmatprep.subr.mxu0 0.0
  %7620 = vmatpush1.msra.mxu0 0.0
  %7621 = vmatprep.subr.mxu0 0.0
  %7622 = vmatpush1.msra.mxu0 0.0
  %7623 = vmatprep.subr.mxu0 0.0
  %7624 = vmatpush1.msra.mxu0 0.0
  %7625 = vmatprep.subr.mxu0 0.0
  %7626 = vmatpush1.msra.mxu0 0.0
  %7627 = vmatprep.subr.mxu0 0.0
  %7628 = vmatpush1.msra.mxu0 0.0
  %7629 = vmatprep.subr.mxu0 0.0
  %7630 = vmatpush1.msra.mxu0 0.0
  %7631 = vmatprep.subr.mxu0 0.0
  %7632 = vmatpush1.msra.mxu0 0.0
  %7633 = vmatprep.subr.mxu0 0.0
  %7634 = vmatpush1.msra.mxu0 0.0
  %7635 = vmatprep.subr.mxu0 0.0
  %7636 = vmatpush1.msra.mxu0 0.0
  %7637 = vmatprep.subr.mxu0 0.0
  %7638 = vmatpush1.msra.mxu0 0.0
  %7639 = vmatprep.subr.mxu0 0.0
  %7640 = vmatpush1.msra.mxu0 0.0
  %7641 = vmatprep.subr.mxu0 0.0
  %7642 = vmatpush1.msra.mxu0 0.0
  %7643 = vmatprep.subr.mxu0 0.0
  %7644 = vmatpush1.msra.mxu0 0.0
  %7645 = vmatprep.subr.mxu0 0.0
  %7646 = vmatpush1.msra.mxu0 0.0
  %7647 = vmatprep.subr.mxu0 0.0
  %7648 = vmatpush1.msra.mxu0 0.0
  %7649 = vmatprep.subr.mxu0 0.0
  %7650 = vmatpush1.msra.mxu0 0.0
  %7651 = vmatprep.subr.mxu0 0.0
  %7652 = vmatpush1.msra.mxu0 0.0
  %7653 = vmatprep.subr.mxu0 0.0
  %7654 = vmatpush1.msra.mxu0 0.0
  %7655 = vmatprep.mubr.f32.mxu0 0.0
  %7656 = vmatmul.mubr.f32.gmra.mrb[0].mxu0 %v7495
  %v7657 = vpop.f32.mrb[0].mxu0
  %v7658 = vadd.f32 0.0, %v7657
  %v7659 = vpop.f32.mrb[0].mxu0
  %7660 = vmatprep.mubr.f32.mxu0 0.0
  %7661 = vmatmul.mubr.f32.gmra.mrb[0].mxu0 %v7498
  %v7662 = vpop.f32.mrb[0].mxu0
  %v7663 = vadd.f32 0.0, %v7662
  %v7664 = vpop.f32.mrb[0].mxu0
  %7665 = vmatprep.mubr.f32.mxu0 0.0
  %7666 = vmatmul.mubr.f32.gmra.mrb[0].mxu0 %v7501
  %v7667 = vpop.f32.mrb[0].mxu0
  %v7668 = vadd.f32 0.0, %v7667
  %v7669 = vpop.f32.mrb[0].mxu0
  %7670 = vmatprep.mubr.f32.mxu0 0.0
  %7671 = vmatmul.mubr.f32.gmra.mrb[0].mxu0 %v7504
  %v7672 = vpop.f32.mrb[0].mxu0
  %v7673 = vadd.f32 0.0, %v7672
  %v7674 = vpop.f32.mrb[0].mxu0
  %7675 = vdwg.mxu0
  %7676 = vmatprep.subr.mxu0 0.0
  %7677 = vmatpush1.msra.mxu0 %v7457
  %7678 = vmatprep.subr.mxu0 0.0
  %7679 = vmatpush1.msra.mxu0 %v7462
  %7680 = vmatprep.subr.mxu0 0.0
  %7681 = vmatpush1.msra.mxu0 %v7467
  %7682 = vmatprep.subr.mxu0 0.0
  %7683 = vmatpush1.msra.mxu0 %v7472
  %7684 = vmatprep.subr.mxu0 0.0
  %7685 = vmatpush1.msra.mxu0 0.0
  %7686 = vmatprep.subr.mxu0 0.0
  %7687 = vmatpush1.msra.mxu0 0.0
  %7688 = vmatprep.subr.mxu0 0.0
  %7689 = vmatpush1.msra.mxu0 0.0
  %7690 = vmatprep.subr.mxu0 0.0
  %7691 = vmatpush1.msra.mxu0 0.0
  %7692 = vmatprep.subr.mxu0 0.0
  %7693 = vmatpush1.msra.mxu0 0.0
  %7694 = vmatprep.subr.mxu0 0.0
  %7695 = vmatpush1.msra.mxu0 0.0
  %7696 = vmatprep.subr.mxu0 0.0
  %7697 = vmatpush1.msra.mxu0 0.0
  %7698 = vmatprep.subr.mxu0 0.0
  %7699 = vmatpush1.msra.mxu0 0.0
  %7700 = vmatprep.subr.mxu0 0.0
  %7701 = vmatpush1.msra.mxu0 0.0
  %7702 = vmatprep.subr.mxu0 0.0
  %7703 = vmatpush1.msra.mxu0 0.0
  %7704 = vmatprep.subr.mxu0 0.0
  %7705 = vmatpush1.msra.mxu0 0.0
  %7706 = vmatprep.subr.mxu0 0.0
  %7707 = vmatpush1.msra.mxu0 0.0
  %7708 = vmatprep.subr.mxu0 0.0
  %7709 = vmatpush1.msra.mxu0 0.0
  %7710 = vmatprep.subr.mxu0 0.0
  %7711 = vmatpush1.msra.mxu0 0.0
  %7712 = vmatprep.subr.mxu0 0.0
  %7713 = vmatpush1.msra.mxu0 0.0
  %7714 = vmatprep.subr.mxu0 0.0
  %7715 = vmatpush1.msra.mxu0 0.0
  %7716 = vmatprep.subr.mxu0 0.0
  %7717 = vmatpush1.msra.mxu0 0.0
  %7718 = vmatprep.subr.mxu0 0.0
  %7719 = vmatpush1.msra.mxu0 0.0
  %7720 = vmatprep.subr.mxu0 0.0
  %7721 = vmatpush1.msra.mxu0 0.0
  %7722 = vmatprep.subr.mxu0 0.0
  %7723 = vmatpush1.msra.mxu0 0.0
  %7724 = vmatprep.subr.mxu0 0.0
  %7725 = vmatpush1.msra.mxu0 0.0
  %7726 = vmatprep.subr.mxu0 0.0
  %7727 = vmatpush1.msra.mxu0 0.0
  %7728 = vmatprep.subr.mxu0 0.0
  %7729 = vmatpush1.msra.mxu0 0.0
  %7730 = vmatprep.subr.mxu0 0.0
  %7731 = vmatpush1.msra.mxu0 0.0
  %7732 = vmatprep.subr.mxu0 0.0
  %7733 = vmatpush1.msra.mxu0 0.0
  %7734 = vmatprep.subr.mxu0 0.0
  %7735 = vmatpush1.msra.mxu0 0.0
  %7736 = vmatprep.subr.mxu0 0.0
  %7737 = vmatpush1.msra.mxu0 0.0
  %7738 = vmatprep.subr.mxu0 0.0
  %7739 = vmatpush1.msra.mxu0 0.0
  %7740 = vmatprep.mubr.f32.mxu0 0.0
  %7741 = vmatmul.mubr.f32.gmra.mrb[0].mxu0 %v7495
  %v7742 = vpop.f32.mrb[0].mxu0
  %v7743 = vadd.f32 0.0, %v7742
  %v7744 = vpop.f32.mrb[0].mxu0
  %7745 = vmatprep.mubr.f32.mxu0 0.0
  %7746 = vmatmul.mubr.f32.gmra.mrb[0].mxu0 %v7498
  %v7747 = vpop.f32.mrb[0].mxu0
  %v7748 = vadd.f32 0.0, %v7747
  %v7749 = vpop.f32.mrb[0].mxu0
  %7750 = vmatprep.mubr.f32.mxu0 0.0
  %7751 = vmatmul.mubr.f32.gmra.mrb[0].mxu0 %v7501
  %v7752 = vpop.f32.mrb[0].mxu0
  %v7753 = vadd.f32 0.0, %v7752
  %v7754 = vpop.f32.mrb[0].mxu0
  %7755 = vmatprep.mubr.f32.mxu0 0.0
  %7756 = vmatmul.mubr.f32.gmra.mrb[0].mxu0 %v7504
  %v7757 = vpop.f32.mrb[0].mxu0
  %v7758 = vadd.f32 0.0, %v7757
  %v7759 = vpop.f32.mrb[0].mxu0
  %7760 = vdwg.mxu0
  %v7761 = vmul.f32 %v7573, %v7287
  %v7762 = vmul.f32 %v7578, %v7292
  %v7763 = vmul.f32 %v7583, %v7297
  %v7764 = vmul.f32 %v7588, %v7302
  %v7765 = vmul.f32 %v7658, %v7372
  %v7766 = vmul.f32 %v7663, %v7377
  %v7767 = vmul.f32 %v7668, %v7382
  %v7768 = vmul.f32 %v7673, %v7387
  %v7769 = vadd.f32 %v7761, %v7765
  %v7770 = vadd.f32 %v7762, %v7766
  %v7771 = vadd.f32 %v7763, %v7767
  %v7772 = vadd.f32 %v7764, %v7768
  %v7773 = vmul.f32 %v7743, %v7457
  %v7774 = vmul.f32 %v7748, %v7462
  %v7775 = vmul.f32 %v7753, %v7467
  %v7776 = vmul.f32 %v7758, %v7472
  %v7777 = vadd.f32 %v7769, %v7773
  %v7778 = vadd.f32 %v7770, %v7774
  %v7779 = vadd.f32 %v7771, %v7775
  %v7780 = vadd.f32 %v7772, %v7776
  %7781 = vst.msk [vmem:[%s11] sm:$0xff] %vm3690, %v7777
  %7782 = vst.msk [vmem:[%s11 + $0x8] sm:$0xff] %vm3690, %v7778
  %7783 = vst.msk [vmem:[%s11 + $0x10] sm:$0xff] %vm3690, %v7779
  %7784 = vst.msk [vmem:[%s11 + $0x18] sm:$0xff] %vm3690, %v7780
  // Predicated region
  $region42: #{_lambda_.3} parent=0 // pred_check
    _
  $region43: #{_lambda_.3} parent=0 // pred_check_branch
    %7786 = sbr.rel (0) target = $region45
  $region44: #{_lambda_.3} parent=0 // pred_region
    _
  $region45: #{_lambda_.3} parent=0 // pred_fallthru
    _
  // Predicated region
  $region46: #{_lambda_.3} parent=0 // pred_check
    _
  $region47: #{_lambda_.3} parent=0 // pred_check_branch
    %7788 = sbr.rel (0) target = $region49
  $region48: #{_lambda_.3} parent=0 // pred_region
    _
  $region49: #{_lambda_.3} parent=0 // pred_fallthru
    _
  // Predicated region
  $region50: #{_lambda_.3} parent=0 // pred_check
    _
  $region51: #{_lambda_.3} parent=0 // pred_check_branch
    %7790 = sbr.rel (0) target = $region53
  $region52: #{_lambda_.3} parent=0 // pred_region
    _
  $region53: #{_lambda_.3} parent=0 // pred_fallthru
    _
  // Predicated region
  $region54: #{_lambda_.3} parent=0 // pred_check
    _
  $region55: #{_lambda_.3} parent=0 // pred_check_branch
    %7792 = sbr.rel (0) target = $region57
  $region56: #{_lambda_.3} parent=0 // pred_region
    _
  $region57: #{_lambda_.3} parent=0 // pred_fallthru
    _

</llo_original>
